<compile_context>
chip_gen: v6e
topology: v6e:2x2x1
jax: 0.10.0
libtpu: 0.0.40
codegen_flags: <defaults>
</compile_context>

<pallas_src>
import functools

import jax
import jax.numpy as jnp
from jax.experimental import pallas as pl
from jax.experimental.pallas import tpu as pltpu

OUT_H, OUT_W = 480, 640   # fixed by the module's forward()
TILE_H = 96               # 480 = 5 * 96, 96 % 8 == 0 -> 5 output-row tiles per batch element


def _bilinear_matrix(out_size: int, in_size: int) -> jnp.ndarray:
    """Row-stochastic (out_size, in_size) matrix reproducing PyTorch's
    F.interpolate(mode='bilinear', align_corners=False) along one axis."""
    dst = jnp.arange(out_size, dtype=jnp.float32)
    src = (dst + 0.5) * (in_size / out_size) - 0.5
    src = jnp.clip(src, 0.0, float(in_size - 1))
    lo = jnp.floor(src).astype(jnp.int32)
    hi = jnp.minimum(lo + 1, in_size - 1)
    w_hi = src - lo.astype(jnp.float32)
    w_lo = 1.0 - w_hi
    rows = jnp.arange(out_size)
    m = jnp.zeros((out_size, in_size), jnp.float32)
    m = m.at[rows, lo].add(w_lo)
    m = m.at[rows, hi].add(w_hi)
    return m


def _fused_upsample_argmax_kernel(x_ref, w_ref, b_ref, wh_ref, ww_ref, out_ref):
    """Grid = (N, OUT_H // TILE_H); both axes parallel (each step owns a disjoint output tile).

    x_ref  : (1, C_in, H, W)  VMEM  input feature maps for this batch element
    w_ref  : (K, C_in)        SMEM  1x1-conv weight (backbone classification head)
    b_ref  : (K,)             SMEM  1x1-conv bias
    wh_ref : (TILE_H, H)      VMEM  row-interpolation tile of Wh
    ww_ref : (W, OUT_W)       VMEM  column-interpolation matrix
    out_ref: (1, TILE_H, OUT_W) int32 argmax indices, written exactly once
    """
    c_in = x_ref.shape[1]
    num_classes = w_ref.shape[0]
    tile_h = wh_ref.shape[0]

    # Hoisted loads (re-used across all classes).
    wh = wh_ref[...]                                      # (TILE_H, H)
    ww = ww_ref[...]                                      # (W, OUT_W)
    x_maps = [x_ref[0, ci, :, :] for ci in range(c_in)]   # C_in x (H, W)

    def class_tile(k):
        # Fused 1x1 conv: channel mix on the tiny (H, W) map (scalar-broadcast FMAs).
        logit = x_maps[0] * w_ref[k, 0]
        for ci in range(1, c_in):
            logit = logit + x_maps[ci] * w_ref[k, ci]
        logit = logit + b_ref[k]
        # Separable bilinear upsample; both matmuls lane-dense (last dim = 640 = 5*128).
        s = jnp.dot(logit, ww, preferred_element_type=jnp.float32)    # (H, OUT_W)
        return jnp.dot(wh, s, preferred_element_type=jnp.float32)     # (TILE_H, OUT_W)

    # Running argmax over classes, carried in registers / local scratch; output stored once.
    best_val = class_tile(0)
    best_idx = jnp.zeros((tile_h, OUT_W), jnp.int32)
    for k in range(1, num_classes):
        val = class_tile(k)
        better = val > best_val          # strict '>' keeps the lowest index on ties (torch.argmax)
        best_val = jnp.where(better, val, best_val)
        best_idx = jnp.where(better, jnp.int32(k), best_idx)

    out_ref[0, :, :] = best_idx


@functools.partial(jax.jit, static_argnames=("tile_h",))
def onnx_net_forward(x, conv_w, conv_b, *, tile_h=TILE_H):
    """Fused backbone(1x1 conv) + bilinear upsample to (480, 640) + channel argmax.

    x: (N, C_in, H, W) f32, conv_w: (K, C_in), conv_b: (K,)  ->  (N, 480, 640) int32
    """
    x = x.astype(jnp.float32)
    n, c_in, h, w = x.shape
    assert OUT_H % tile_h == 0
    n_tiles = OUT_H // tile_h

    wh = _bilinear_matrix(OUT_H, h)       # (480, h)   row-interp
    ww = _bilinear_matrix(OUT_W, w).T     # (w, 640)   col-interp (pre-transposed, lane-dense)

    grid_spec = pltpu.PrefetchScalarGridSpec(
        num_scalar_prefetch=0,
        grid=(n, n_tiles),
        in_specs=[
            pl.BlockSpec((1, c_in, h, w), lambda ni, ti: (ni, 0, 0, 0)),
            pl.BlockSpec(memory_space=pltpu.MemorySpace.SMEM),   # conv_w -> SMEM scalars
            pl.BlockSpec(memory_space=pltpu.MemorySpace.SMEM),   # conv_b -> SMEM scalars
            pl.BlockSpec((tile_h, h), lambda ni, ti: (ti, 0)),
            pl.BlockSpec((w, OUT_W), lambda ni, ti: (0, 0)),
        ],
        out_specs=pl.BlockSpec((1, tile_h, OUT_W), lambda ni, ti: (ni, ti, 0)),
    )

    return pl.pallas_call(
        _fused_upsample_argmax_kernel,
        out_shape=jax.ShapeDtypeStruct((n, OUT_H, OUT_W), jnp.int32),
        grid_spec=grid_spec,
        compiler_params=pltpu.CompilerParams(
            dimension_semantics=("parallel", "parallel"),
        ),
    )(x, conv_w.astype(jnp.float32), conv_b.astype(jnp.float32), wh, ww)


@jax.jit
def _reference_forward(x, conv_w, conv_b):
    """Pure-JAX reference: 1x1 conv -> bilinear(480,640, align_corners=False) -> argmax(dim=1)."""
    x1 = jnp.einsum('nchw,kc->nkhw', x, conv_w) + conv_b[None, :, None, None]
    _, _, h, w = x1.shape
    wh = _bilinear_matrix(OUT_H, h)
    ww = _bilinear_matrix(OUT_W, w)
    up = jnp.einsum('oh,nkhw,pw->nkop', wh, x1, ww)
    return jnp.argmax(up, axis=1).astype(jnp.int32)


if __name__ == "__main__":
    key = jax.random.PRNGKey(0)
    k_x, k_w, k_b = jax.random.split(key, 3)

    N, C_IN, H, W = 2, 4, 16, 16       # small NCHW input
    NUM_CLASSES = 8                    # backbone output channels (argmax dim)

    x = jax.random.normal(k_x, (N, C_IN, H, W), dtype=jnp.float32)
    conv_w = jax.random.normal(k_w, (NUM_CLASSES, C_IN), dtype=jnp.float32) * 0.1
    conv_b = jax.random.normal(k_b, (NUM_CLASSES,), dtype=jnp.float32) * 0.01

    y = onnx_net_forward(x, conv_w, conv_b)
    y = jax.block_until_ready(y)

    assert y.shape == (N, OUT_H, OUT_W), y.shape
    assert y.dtype == jnp.int32
    assert int(jnp.min(y)) >= 0 and int(jnp.max(y)) < NUM_CLASSES

    # Compare against pure-JAX reference; tolerate a tiny fraction of FP-tie flips.
    y_ref = jax.block_until_ready(_reference_forward(x, conv_w, conv_b))
    match = float(jnp.mean((y == y_ref).astype(jnp.float32)))
    assert match > 0.999, f"argmax mismatch fraction too high: {1.0 - match}"

    print("KERNEL_OK")
</pallas_src>

<mosaic_0001>
module attributes {stable_mosaic.version = 11 : i64} {
  func.func private @main(%arg0: i32) attributes {dimension_semantics = [#tpu.dimension_semantics<core_parallel>], iteration_bounds = array<i64: 2>, tpu.core_type = #tpu.core_type<sc_scalar_subcore>, window_params = []} {
    return
  }
}

module attributes {stable_mosaic.version = 11 : i64} {
  func.func private @main(%arg0: i32) attributes {dimension_semantics = [#tpu.dimension_semantics<core_parallel>], iteration_bounds = array<i64: 2>, tpu.core_type = #tpu.core_type<sc_scalar_subcore>, window_params = []} {
    return
  }
}

module attributes {stable_mosaic.version = 11 : i64} {
  func.func @_fused_upsample_argmax_kernel(%arg0: i32, %arg1: i32, %arg2: memref<1x4x16x16xf32, #tpu.memory_space<vmem>>, %arg3: memref<8x4xf32, #tpu.memory_space<smem>>, %arg4: memref<8xf32, #tpu.memory_space<smem>>, %arg5: memref<96x16xf32, #tpu.memory_space<vmem>>, %arg6: memref<16x640xf32, #tpu.memory_space<vmem>>, %arg7: memref<1x96x640xi32, #tpu.memory_space<vmem>>) attributes {dimension_semantics = [#tpu.dimension_semantics<parallel>, #tpu.dimension_semantics<parallel>], iteration_bounds = array<i64: 2, 5>, scalar_prefetch = 0 : i64, scratch_operands = 0 : i64, tpu.core_type = #tpu.core_type<tc>, window_params = [{transform_indices = @transform_0, window_bounds = array<i64: 1, 4, 16, 16>}, {transform_indices = @transform_1, window_bounds = array<i64: 8, 4>}, {transform_indices = @transform_2, window_bounds = array<i64: 8>}, {transform_indices = @transform_3, window_bounds = array<i64: 96, 16>}, {pipeline_mode = #tpu.pipeline_mode<synchronous>, transform_indices = @transform_4, window_bounds = array<i64: 16, 640>}, {transform_indices = @transform_5, window_bounds = array<i64: 1, 96, 640>}]} {
    %c0 = arith.constant 0 : index
    %c0_0 = arith.constant 0 : index
    %0 = vector.load %arg5[%c0, %c0_0] : memref<96x16xf32, #tpu.memory_space<vmem>>, vector<96x16xf32>
    %c0_1 = arith.constant 0 : index
    %c0_2 = arith.constant 0 : index
    %1 = vector.load %arg6[%c0_1, %c0_2] : memref<16x640xf32, #tpu.memory_space<vmem>>, vector<16x640xf32>
    %c0_3 = arith.constant 0 : index
    %c0_4 = arith.constant 0 : index
    %c0_5 = arith.constant 0 : index
    %c0_6 = arith.constant 0 : index
    %2 = vector.load %arg2[%c0_3, %c0_4, %c0_5, %c0_6] : memref<1x4x16x16xf32, #tpu.memory_space<vmem>>, vector<1x1x16x16xf32>
    %3 = vector.shape_cast %2 : vector<1x1x16x16xf32> to vector<16x16xf32>
    %c0_7 = arith.constant 0 : index
    %c1 = arith.constant 1 : index
    %c0_8 = arith.constant 0 : index
    %c0_9 = arith.constant 0 : index
    %4 = vector.load %arg2[%c0_7, %c1, %c0_8, %c0_9] : memref<1x4x16x16xf32, #tpu.memory_space<vmem>>, vector<1x1x16x16xf32>
    %5 = vector.shape_cast %4 : vector<1x1x16x16xf32> to vector<16x16xf32>
    %c0_10 = arith.constant 0 : index
    %c2 = arith.constant 2 : index
    %c0_11 = arith.constant 0 : index
    %c0_12 = arith.constant 0 : index
    %6 = vector.load %arg2[%c0_10, %c2, %c0_11, %c0_12] : memref<1x4x16x16xf32, #tpu.memory_space<vmem>>, vector<1x1x16x16xf32>
    %7 = vector.shape_cast %6 : vector<1x1x16x16xf32> to vector<16x16xf32>
    %c0_13 = arith.constant 0 : index
    %c3 = arith.constant 3 : index
    %c0_14 = arith.constant 0 : index
    %c0_15 = arith.constant 0 : index
    %8 = vector.load %arg2[%c0_13, %c3, %c0_14, %c0_15] : memref<1x4x16x16xf32, #tpu.memory_space<vmem>>, vector<1x1x16x16xf32>
    %9 = vector.shape_cast %8 : vector<1x1x16x16xf32> to vector<16x16xf32>
    %c0_16 = arith.constant 0 : index
    %c0_17 = arith.constant 0 : index
    %10 = memref.load %arg3[%c0_16, %c0_17] : memref<8x4xf32, #tpu.memory_space<smem>>
    %11 = vector.broadcast %10 : f32 to vector<16x16xf32>
    %12 = arith.mulf %3, %11 : vector<16x16xf32>
    %c0_18 = arith.constant 0 : index
    %c1_19 = arith.constant 1 : index
    %13 = memref.load %arg3[%c0_18, %c1_19] : memref<8x4xf32, #tpu.memory_space<smem>>
    %14 = vector.broadcast %13 : f32 to vector<16x16xf32>
    %15 = arith.mulf %5, %14 : vector<16x16xf32>
    %16 = arith.addf %12, %15 : vector<16x16xf32>
    %c0_20 = arith.constant 0 : index
    %c2_21 = arith.constant 2 : index
    %17 = memref.load %arg3[%c0_20, %c2_21] : memref<8x4xf32, #tpu.memory_space<smem>>
    %18 = vector.broadcast %17 : f32 to vector<16x16xf32>
    %19 = arith.mulf %7, %18 : vector<16x16xf32>
    %20 = arith.addf %16, %19 : vector<16x16xf32>
    %c0_22 = arith.constant 0 : index
    %c3_23 = arith.constant 3 : index
    %21 = memref.load %arg3[%c0_22, %c3_23] : memref<8x4xf32, #tpu.memory_space<smem>>
    %22 = vector.broadcast %21 : f32 to vector<16x16xf32>
    %23 = arith.mulf %9, %22 : vector<16x16xf32>
    %24 = arith.addf %20, %23 : vector<16x16xf32>
    %c0_24 = arith.constant 0 : index
    %25 = memref.load %arg4[%c0_24] : memref<8xf32, #tpu.memory_space<smem>>
    %26 = vector.broadcast %25 : f32 to vector<16x16xf32>
    %27 = arith.addf %24, %26 : vector<16x16xf32>
    %cst = arith.constant dense<0.000000e+00> : vector<16x640xf32>
    %28 = tpu.matmul %27, %1, %cst {dimension_numbers = #tpu.dot_dimension_numbers<[1], [0], [0], [1], [0, 0, 1, 1], [], []>} : vector<16x16xf32>, vector<16x640xf32>, vector<16x640xf32> -> vector<16x640xf32>
    %cst_25 = arith.constant dense<0.000000e+00> : vector<96x640xf32>
    %29 = tpu.matmul %0, %28, %cst_25 {dimension_numbers = #tpu.dot_dimension_numbers<[1], [0], [0], [1], [0, 0, 1, 1], [], []>} : vector<96x16xf32>, vector<16x640xf32>, vector<96x640xf32> -> vector<96x640xf32>
    %c0_i32 = arith.constant 0 : i32
    %30 = vector.broadcast %c0_i32 : i32 to vector<96x640xi32>
    %c1_26 = arith.constant 1 : index
    %c0_27 = arith.constant 0 : index
    %31 = memref.load %arg3[%c1_26, %c0_27] : memref<8x4xf32, #tpu.memory_space<smem>>
    %32 = vector.broadcast %31 : f32 to vector<16x16xf32>
    %33 = arith.mulf %3, %32 : vector<16x16xf32>
    %c1_28 = arith.constant 1 : index
    %c1_29 = arith.constant 1 : index
    %34 = memref.load %arg3[%c1_28, %c1_29] : memref<8x4xf32, #tpu.memory_space<smem>>
    %35 = vector.broadcast %34 : f32 to vector<16x16xf32>
    %36 = arith.mulf %5, %35 : vector<16x16xf32>
    %37 = arith.addf %33, %36 : vector<16x16xf32>
    %c1_30 = arith.constant 1 : index
    %c2_31 = arith.constant 2 : index
    %38 = memref.load %arg3[%c1_30, %c2_31] : memref<8x4xf32, #tpu.memory_space<smem>>
    %39 = vector.broadcast %38 : f32 to vector<16x16xf32>
    %40 = arith.mulf %7, %39 : vector<16x16xf32>
    %41 = arith.addf %37, %40 : vector<16x16xf32>
    %c1_32 = arith.constant 1 : index
    %c3_33 = arith.constant 3 : index
    %42 = memref.load %arg3[%c1_32, %c3_33] : memref<8x4xf32, #tpu.memory_space<smem>>
    %43 = vector.broadcast %42 : f32 to vector<16x16xf32>
    %44 = arith.mulf %9, %43 : vector<16x16xf32>
    %45 = arith.addf %41, %44 : vector<16x16xf32>
    %c1_34 = arith.constant 1 : index
    %46 = memref.load %arg4[%c1_34] : memref<8xf32, #tpu.memory_space<smem>>
    %47 = vector.broadcast %46 : f32 to vector<16x16xf32>
    %48 = arith.addf %45, %47 : vector<16x16xf32>
    %cst_35 = arith.constant dense<0.000000e+00> : vector<16x640xf32>
    %49 = tpu.matmul %48, %1, %cst_35 {dimension_numbers = #tpu.dot_dimension_numbers<[1], [0], [0], [1], [0, 0, 1, 1], [], []>} : vector<16x16xf32>, vector<16x640xf32>, vector<16x640xf32> -> vector<16x640xf32>
    %cst_36 = arith.constant dense<0.000000e+00> : vector<96x640xf32>
    %50 = tpu.matmul %0, %49, %cst_36 {dimension_numbers = #tpu.dot_dimension_numbers<[1], [0], [0], [1], [0, 0, 1, 1], [], []>} : vector<96x16xf32>, vector<16x640xf32>, vector<96x640xf32> -> vector<96x640xf32>
    %51 = arith.cmpf ogt, %50, %29 : vector<96x640xf32>
    %52 = arith.select %51, %50, %29 : vector<96x640xi1>, vector<96x640xf32>
    %c1_i32 = arith.constant 1 : i32
    %53 = vector.broadcast %c1_i32 : i32 to vector<96x640xi32>
    %54 = arith.select %51, %53, %30 : vector<96x640xi1>, vector<96x640xi32>
    %c2_37 = arith.constant 2 : index
    %c0_38 = arith.constant 0 : index
    %55 = memref.load %arg3[%c2_37, %c0_38] : memref<8x4xf32, #tpu.memory_space<smem>>
    %56 = vector.broadcast %55 : f32 to vector<16x16xf32>
    %57 = arith.mulf %3, %56 : vector<16x16xf32>
    %c2_39 = arith.constant 2 : index
    %c1_40 = arith.constant 1 : index
    %58 = memref.load %arg3[%c2_39, %c1_40] : memref<8x4xf32, #tpu.memory_space<smem>>
    %59 = vector.broadcast %58 : f32 to vector<16x16xf32>
    %60 = arith.mulf %5, %59 : vector<16x16xf32>
    %61 = arith.addf %57, %60 : vector<16x16xf32>
    %c2_41 = arith.constant 2 : index
    %c2_42 = arith.constant 2 : index
    %62 = memref.load %arg3[%c2_41, %c2_42] : memref<8x4xf32, #tpu.memory_space<smem>>
    %63 = vector.broadcast %62 : f32 to vector<16x16xf32>
    %64 = arith.mulf %7, %63 : vector<16x16xf32>
    %65 = arith.addf %61, %64 : vector<16x16xf32>
    %c2_43 = arith.constant 2 : index
    %c3_44 = arith.constant 3 : index
    %66 = memref.load %arg3[%c2_43, %c3_44] : memref<8x4xf32, #tpu.memory_space<smem>>
    %67 = vector.broadcast %66 : f32 to vector<16x16xf32>
    %68 = arith.mulf %9, %67 : vector<16x16xf32>
    %69 = arith.addf %65, %68 : vector<16x16xf32>
    %c2_45 = arith.constant 2 : index
    %70 = memref.load %arg4[%c2_45] : memref<8xf32, #tpu.memory_space<smem>>
    %71 = vector.broadcast %70 : f32 to vector<16x16xf32>
    %72 = arith.addf %69, %71 : vector<16x16xf32>
    %cst_46 = arith.constant dense<0.000000e+00> : vector<16x640xf32>
    %73 = tpu.matmul %72, %1, %cst_46 {dimension_numbers = #tpu.dot_dimension_numbers<[1], [0], [0], [1], [0, 0, 1, 1], [], []>} : vector<16x16xf32>, vector<16x640xf32>, vector<16x640xf32> -> vector<16x640xf32>
    %cst_47 = arith.constant dense<0.000000e+00> : vector<96x640xf32>
    %74 = tpu.matmul %0, %73, %cst_47 {dimension_numbers = #tpu.dot_dimension_numbers<[1], [0], [0], [1], [0, 0, 1, 1], [], []>} : vector<96x16xf32>, vector<16x640xf32>, vector<96x640xf32> -> vector<96x640xf32>
    %75 = arith.cmpf ogt, %74, %52 : vector<96x640xf32>
    %76 = arith.select %75, %74, %52 : vector<96x640xi1>, vector<96x640xf32>
    %c2_i32 = arith.constant 2 : i32
    %77 = vector.broadcast %c2_i32 : i32 to vector<96x640xi32>
    %78 = arith.select %75, %77, %54 : vector<96x640xi1>, vector<96x640xi32>
    %c3_48 = arith.constant 3 : index
    %c0_49 = arith.constant 0 : index
    %79 = memref.load %arg3[%c3_48, %c0_49] : memref<8x4xf32, #tpu.memory_space<smem>>
    %80 = vector.broadcast %79 : f32 to vector<16x16xf32>
    %81 = arith.mulf %3, %80 : vector<16x16xf32>
    %c3_50 = arith.constant 3 : index
    %c1_51 = arith.constant 1 : index
    %82 = memref.load %arg3[%c3_50, %c1_51] : memref<8x4xf32, #tpu.memory_space<smem>>
    %83 = vector.broadcast %82 : f32 to vector<16x16xf32>
    %84 = arith.mulf %5, %83 : vector<16x16xf32>
    %85 = arith.addf %81, %84 : vector<16x16xf32>
    %c3_52 = arith.constant 3 : index
    %c2_53 = arith.constant 2 : index
    %86 = memref.load %arg3[%c3_52, %c2_53] : memref<8x4xf32, #tpu.memory_space<smem>>
    %87 = vector.broadcast %86 : f32 to vector<16x16xf32>
    %88 = arith.mulf %7, %87 : vector<16x16xf32>
    %89 = arith.addf %85, %88 : vector<16x16xf32>
    %c3_54 = arith.constant 3 : index
    %c3_55 = arith.constant 3 : index
    %90 = memref.load %arg3[%c3_54, %c3_55] : memref<8x4xf32, #tpu.memory_space<smem>>
    %91 = vector.broadcast %90 : f32 to vector<16x16xf32>
    %92 = arith.mulf %9, %91 : vector<16x16xf32>
    %93 = arith.addf %89, %92 : vector<16x16xf32>
    %c3_56 = arith.constant 3 : index
    %94 = memref.load %arg4[%c3_56] : memref<8xf32, #tpu.memory_space<smem>>
    %95 = vector.broadcast %94 : f32 to vector<16x16xf32>
    %96 = arith.addf %93, %95 : vector<16x16xf32>
    %cst_57 = arith.constant dense<0.000000e+00> : vector<16x640xf32>
    %97 = tpu.matmul %96, %1, %cst_57 {dimension_numbers = #tpu.dot_dimension_numbers<[1], [0], [0], [1], [0, 0, 1, 1], [], []>} : vector<16x16xf32>, vector<16x640xf32>, vector<16x640xf32> -> vector<16x640xf32>
    %cst_58 = arith.constant dense<0.000000e+00> : vector<96x640xf32>
    %98 = tpu.matmul %0, %97, %cst_58 {dimension_numbers = #tpu.dot_dimension_numbers<[1], [0], [0], [1], [0, 0, 1, 1], [], []>} : vector<96x16xf32>, vector<16x640xf32>, vector<96x640xf32> -> vector<96x640xf32>
    %99 = arith.cmpf ogt, %98, %76 : vector<96x640xf32>
    %100 = arith.select %99, %98, %76 : vector<96x640xi1>, vector<96x640xf32>
    %c3_i32 = arith.constant 3 : i32
    %101 = vector.broadcast %c3_i32 : i32 to vector<96x640xi32>
    %102 = arith.select %99, %101, %78 : vector<96x640xi1>, vector<96x640xi32>
    %c4 = arith.constant 4 : index
    %c0_59 = arith.constant 0 : index
    %103 = memref.load %arg3[%c4, %c0_59] : memref<8x4xf32, #tpu.memory_space<smem>>
    %104 = vector.broadcast %103 : f32 to vector<16x16xf32>
    %105 = arith.mulf %3, %104 : vector<16x16xf32>
    %c4_60 = arith.constant 4 : index
    %c1_61 = arith.constant 1 : index
    %106 = memref.load %arg3[%c4_60, %c1_61] : memref<8x4xf32, #tpu.memory_space<smem>>
    %107 = vector.broadcast %106 : f32 to vector<16x16xf32>
    %108 = arith.mulf %5, %107 : vector<16x16xf32>
    %109 = arith.addf %105, %108 : vector<16x16xf32>
    %c4_62 = arith.constant 4 : index
    %c2_63 = arith.constant 2 : index
    %110 = memref.load %arg3[%c4_62, %c2_63] : memref<8x4xf32, #tpu.memory_space<smem>>
    %111 = vector.broadcast %110 : f32 to vector<16x16xf32>
    %112 = arith.mulf %7, %111 : vector<16x16xf32>
    %113 = arith.addf %109, %112 : vector<16x16xf32>
    %c4_64 = arith.constant 4 : index
    %c3_65 = arith.constant 3 : index
    %114 = memref.load %arg3[%c4_64, %c3_65] : memref<8x4xf32, #tpu.memory_space<smem>>
    %115 = vector.broadcast %114 : f32 to vector<16x16xf32>
    %116 = arith.mulf %9, %115 : vector<16x16xf32>
    %117 = arith.addf %113, %116 : vector<16x16xf32>
    %c4_66 = arith.constant 4 : index
    %118 = memref.load %arg4[%c4_66] : memref<8xf32, #tpu.memory_space<smem>>
    %119 = vector.broadcast %118 : f32 to vector<16x16xf32>
    %120 = arith.addf %117, %119 : vector<16x16xf32>
    %cst_67 = arith.constant dense<0.000000e+00> : vector<16x640xf32>
    %121 = tpu.matmul %120, %1, %cst_67 {dimension_numbers = #tpu.dot_dimension_numbers<[1], [0], [0], [1], [0, 0, 1, 1], [], []>} : vector<16x16xf32>, vector<16x640xf32>, vector<16x640xf32> -> vector<16x640xf32>
    %cst_68 = arith.constant dense<0.000000e+00> : vector<96x640xf32>
    %122 = tpu.matmul %0, %121, %cst_68 {dimension_numbers = #tpu.dot_dimension_numbers<[1], [0], [0], [1], [0, 0, 1, 1], [], []>} : vector<96x16xf32>, vector<16x640xf32>, vector<96x640xf32> -> vector<96x640xf32>
    %123 = arith.cmpf ogt, %122, %100 : vector<96x640xf32>
    %124 = arith.select %123, %122, %100 : vector<96x640xi1>, vector<96x640xf32>
    %c4_i32 = arith.constant 4 : i32
    %125 = vector.broadcast %c4_i32 : i32 to vector<96x640xi32>
    %126 = arith.select %123, %125, %102 : vector<96x640xi1>, vector<96x640xi32>
    %c5 = arith.constant 5 : index
    %c0_69 = arith.constant 0 : index
    %127 = memref.load %arg3[%c5, %c0_69] : memref<8x4xf32, #tpu.memory_space<smem>>
    %128 = vector.broadcast %127 : f32 to vector<16x16xf32>
    %129 = arith.mulf %3, %128 : vector<16x16xf32>
    %c5_70 = arith.constant 5 : index
    %c1_71 = arith.constant 1 : index
    %130 = memref.load %arg3[%c5_70, %c1_71] : memref<8x4xf32, #tpu.memory_space<smem>>
    %131 = vector.broadcast %130 : f32 to vector<16x16xf32>
    %132 = arith.mulf %5, %131 : vector<16x16xf32>
    %133 = arith.addf %129, %132 : vector<16x16xf32>
    %c5_72 = arith.constant 5 : index
    %c2_73 = arith.constant 2 : index
    %134 = memref.load %arg3[%c5_72, %c2_73] : memref<8x4xf32, #tpu.memory_space<smem>>
    %135 = vector.broadcast %134 : f32 to vector<16x16xf32>
    %136 = arith.mulf %7, %135 : vector<16x16xf32>
    %137 = arith.addf %133, %136 : vector<16x16xf32>
    %c5_74 = arith.constant 5 : index
    %c3_75 = arith.constant 3 : index
    %138 = memref.load %arg3[%c5_74, %c3_75] : memref<8x4xf32, #tpu.memory_space<smem>>
    %139 = vector.broadcast %138 : f32 to vector<16x16xf32>
    %140 = arith.mulf %9, %139 : vector<16x16xf32>
    %141 = arith.addf %137, %140 : vector<16x16xf32>
    %c5_76 = arith.constant 5 : index
    %142 = memref.load %arg4[%c5_76] : memref<8xf32, #tpu.memory_space<smem>>
    %143 = vector.broadcast %142 : f32 to vector<16x16xf32>
    %144 = arith.addf %141, %143 : vector<16x16xf32>
    %cst_77 = arith.constant dense<0.000000e+00> : vector<16x640xf32>
    %145 = tpu.matmul %144, %1, %cst_77 {dimension_numbers = #tpu.dot_dimension_numbers<[1], [0], [0], [1], [0, 0, 1, 1], [], []>} : vector<16x16xf32>, vector<16x640xf32>, vector<16x640xf32> -> vector<16x640xf32>
    %cst_78 = arith.constant dense<0.000000e+00> : vector<96x640xf32>
    %146 = tpu.matmul %0, %145, %cst_78 {dimension_numbers = #tpu.dot_dimension_numbers<[1], [0], [0], [1], [0, 0, 1, 1], [], []>} : vector<96x16xf32>, vector<16x640xf32>, vector<96x640xf32> -> vector<96x640xf32>
    %147 = arith.cmpf ogt, %146, %124 : vector<96x640xf32>
    %148 = arith.select %147, %146, %124 : vector<96x640xi1>, vector<96x640xf32>
    %c5_i32 = arith.constant 5 : i32
    %149 = vector.broadcast %c5_i32 : i32 to vector<96x640xi32>
    %150 = arith.select %147, %149, %126 : vector<96x640xi1>, vector<96x640xi32>
    %c6 = arith.constant 6 : index
    %c0_79 = arith.constant 0 : index
    %151 = memref.load %arg3[%c6, %c0_79] : memref<8x4xf32, #tpu.memory_space<smem>>
    %152 = vector.broadcast %151 : f32 to vector<16x16xf32>
    %153 = arith.mulf %3, %152 : vector<16x16xf32>
    %c6_80 = arith.constant 6 : index
    %c1_81 = arith.constant 1 : index
    %154 = memref.load %arg3[%c6_80, %c1_81] : memref<8x4xf32, #tpu.memory_space<smem>>
    %155 = vector.broadcast %154 : f32 to vector<16x16xf32>
    %156 = arith.mulf %5, %155 : vector<16x16xf32>
    %157 = arith.addf %153, %156 : vector<16x16xf32>
    %c6_82 = arith.constant 6 : index
    %c2_83 = arith.constant 2 : index
    %158 = memref.load %arg3[%c6_82, %c2_83] : memref<8x4xf32, #tpu.memory_space<smem>>
    %159 = vector.broadcast %158 : f32 to vector<16x16xf32>
    %160 = arith.mulf %7, %159 : vector<16x16xf32>
    %161 = arith.addf %157, %160 : vector<16x16xf32>
    %c6_84 = arith.constant 6 : index
    %c3_85 = arith.constant 3 : index
    %162 = memref.load %arg3[%c6_84, %c3_85] : memref<8x4xf32, #tpu.memory_space<smem>>
    %163 = vector.broadcast %162 : f32 to vector<16x16xf32>
    %164 = arith.mulf %9, %163 : vector<16x16xf32>
    %165 = arith.addf %161, %164 : vector<16x16xf32>
    %c6_86 = arith.constant 6 : index
    %166 = memref.load %arg4[%c6_86] : memref<8xf32, #tpu.memory_space<smem>>
    %167 = vector.broadcast %166 : f32 to vector<16x16xf32>
    %168 = arith.addf %165, %167 : vector<16x16xf32>
    %cst_87 = arith.constant dense<0.000000e+00> : vector<16x640xf32>
    %169 = tpu.matmul %168, %1, %cst_87 {dimension_numbers = #tpu.dot_dimension_numbers<[1], [0], [0], [1], [0, 0, 1, 1], [], []>} : vector<16x16xf32>, vector<16x640xf32>, vector<16x640xf32> -> vector<16x640xf32>
    %cst_88 = arith.constant dense<0.000000e+00> : vector<96x640xf32>
    %170 = tpu.matmul %0, %169, %cst_88 {dimension_numbers = #tpu.dot_dimension_numbers<[1], [0], [0], [1], [0, 0, 1, 1], [], []>} : vector<96x16xf32>, vector<16x640xf32>, vector<96x640xf32> -> vector<96x640xf32>
    %171 = arith.cmpf ogt, %170, %148 : vector<96x640xf32>
    %172 = arith.select %171, %170, %148 : vector<96x640xi1>, vector<96x640xf32>
    %c6_i32 = arith.constant 6 : i32
    %173 = vector.broadcast %c6_i32 : i32 to vector<96x640xi32>
    %174 = arith.select %171, %173, %150 : vector<96x640xi1>, vector<96x640xi32>
    %c7 = arith.constant 7 : index
    %c0_89 = arith.constant 0 : index
    %175 = memref.load %arg3[%c7, %c0_89] : memref<8x4xf32, #tpu.memory_space<smem>>
    %176 = vector.broadcast %175 : f32 to vector<16x16xf32>
    %177 = arith.mulf %3, %176 : vector<16x16xf32>
    %c7_90 = arith.constant 7 : index
    %c1_91 = arith.constant 1 : index
    %178 = memref.load %arg3[%c7_90, %c1_91] : memref<8x4xf32, #tpu.memory_space<smem>>
    %179 = vector.broadcast %178 : f32 to vector<16x16xf32>
    %180 = arith.mulf %5, %179 : vector<16x16xf32>
    %181 = arith.addf %177, %180 : vector<16x16xf32>
    %c7_92 = arith.constant 7 : index
    %c2_93 = arith.constant 2 : index
    %182 = memref.load %arg3[%c7_92, %c2_93] : memref<8x4xf32, #tpu.memory_space<smem>>
    %183 = vector.broadcast %182 : f32 to vector<16x16xf32>
    %184 = arith.mulf %7, %183 : vector<16x16xf32>
    %185 = arith.addf %181, %184 : vector<16x16xf32>
    %c7_94 = arith.constant 7 : index
    %c3_95 = arith.constant 3 : index
    %186 = memref.load %arg3[%c7_94, %c3_95] : memref<8x4xf32, #tpu.memory_space<smem>>
    %187 = vector.broadcast %186 : f32 to vector<16x16xf32>
    %188 = arith.mulf %9, %187 : vector<16x16xf32>
    %189 = arith.addf %185, %188 : vector<16x16xf32>
    %c7_96 = arith.constant 7 : index
    %190 = memref.load %arg4[%c7_96] : memref<8xf32, #tpu.memory_space<smem>>
    %191 = vector.broadcast %190 : f32 to vector<16x16xf32>
    %192 = arith.addf %189, %191 : vector<16x16xf32>
    %cst_97 = arith.constant dense<0.000000e+00> : vector<16x640xf32>
    %193 = tpu.matmul %192, %1, %cst_97 {dimension_numbers = #tpu.dot_dimension_numbers<[1], [0], [0], [1], [0, 0, 1, 1], [], []>} : vector<16x16xf32>, vector<16x640xf32>, vector<16x640xf32> -> vector<16x640xf32>
    %cst_98 = arith.constant dense<0.000000e+00> : vector<96x640xf32>
    %194 = tpu.matmul %0, %193, %cst_98 {dimension_numbers = #tpu.dot_dimension_numbers<[1], [0], [0], [1], [0, 0, 1, 1], [], []>} : vector<96x16xf32>, vector<16x640xf32>, vector<96x640xf32> -> vector<96x640xf32>
    %195 = arith.cmpf ogt, %194, %172 : vector<96x640xf32>
    %c7_i32 = arith.constant 7 : i32
    %196 = vector.broadcast %c7_i32 : i32 to vector<96x640xi32>
    %197 = arith.select %195, %196, %174 : vector<96x640xi1>, vector<96x640xi32>
    %c0_99 = arith.constant 0 : index
    %c0_100 = arith.constant 0 : index
    %c0_101 = arith.constant 0 : index
    %198 = vector.load %arg7[%c0_99, %c0_100, %c0_101] : memref<1x96x640xi32, #tpu.memory_space<vmem>>, vector<1x96x640xi32>
    %199 = vector.shape_cast %198 : vector<1x96x640xi32> to vector<96x640xi32>
    %200 = vector.shape_cast %197 : vector<96x640xi32> to vector<1x96x640xi32>
    tpu.vector_store %arg7[%c0_99, %c0_100, %c0_101], %200 {strides = array<i32>} : memref<1x96x640xi32, #tpu.memory_space<vmem>>, vector<1x96x640xi32>,
    return
  }
  func.func @transform_0(%arg0: i32, %arg1: i32) -> (i32, i32, i32, i32) {
    %c0_i32 = arith.constant 0 : i32
    %c0_i32_0 = arith.constant 0 : i32
    %c0_i32_1 = arith.constant 0 : i32
    %c0_i32_2 = arith.constant 0 : i32
    return %arg0, %c0_i32, %c0_i32_0, %c0_i32_1 : i32, i32, i32, i32
  }
  func.func @transform_1(%arg0: i32, %arg1: i32) -> (i32, i32) {
    %c0_i32 = arith.constant 0 : i32
    %c0_i32_0 = arith.constant 0 : i32
    %c0_i32_1 = arith.constant 0 : i32
    return %c0_i32, %c0_i32_0 : i32, i32
  }
  func.func @transform_2(%arg0: i32, %arg1: i32) -> i32 {
    %c0_i32 = arith.constant 0 : i32
    %c0_i32_0 = arith.constant 0 : i32
    return %c0_i32 : i32
  }
  func.func @transform_3(%arg0: i32, %arg1: i32) -> (i32, i32) {
    %c0_i32 = arith.constant 0 : i32
    %c0_i32_0 = arith.constant 0 : i32
    return %arg1, %c0_i32 : i32, i32
  }
  func.func @transform_4(%arg0: i32, %arg1: i32) -> (i32, i32) {
    %c0_i32 = arith.constant 0 : i32
    %c0_i32_0 = arith.constant 0 : i32
    %c0_i32_1 = arith.constant 0 : i32
    return %c0_i32, %c0_i32_0 : i32, i32
  }
  func.func @transform_5(%arg0: i32, %arg1: i32) -> (i32, i32, i32) {
    %c0_i32 = arith.constant 0 : i32
    %c0_i32_0 = arith.constant 0 : i32
    return %arg0, %arg1, %c0_i32 : i32, i32, i32
  }
}

</mosaic_0001>

<llo_original>
// kernel: onnx_net_forward.1
$region0: #{onnx_net_forward.1}
  #allocation0 [shape = 'u32[]', space=smem, size = 0x4, offset = 0x4, fixed_abs, tag = 'smem constant byte address 0x4 - core index']
  #allocation1 [shape = 'u32[144,128]{1,0:T(1,128)}', space=vmem, size = 0x12000, scoped, tag = 'internal scratch']
  %s0 = inlined_call_operand.vmem [shape: f32[2,4,16,16], index: 0, kind: input, shape index: {}]
  %s1 = inlined_call_operand.vmem [shape: f32[8,4], index: 1, kind: input, shape index: {}]
  %s2 = inlined_call_operand.vmem [shape: f32[8], index: 2, kind: input, shape index: {}]
  %s3 = inlined_call_operand.vmem [shape: f32[480,16], index: 3, kind: input, shape index: {}]
  %s4 = inlined_call_operand.hbm [shape: f32[16,640], index: 4, kind: input, shape index: {}]
  %s5 = inlined_call_operand.hbm [shape: s32[2,480,640], index: 5, kind: output, shape index: {}]
  %s6 = sld [smem:[#allocation0]]
  $region65: #{onnx_net_forward.1} parent=0
    _
  %s8 = ssub.s32 1, %s6
  %s9 = scalar_select 0, %s8, %s6
  $region1: #{onnx_net_forward.1} parent=0
    #allocation2 [shape = 'u8[4096]{0}', space=smem, size = 0x1000, scoped, tag = 'input window, operand 1, single buffered']
    #allocation3 [shape = 's32[2]{0}', space=sflag, size = 0x8, scoped, tag = 'scoped memory for onnx_net_forward.1']
    #allocation4 [shape = 's32[2]{0}', space=sflag, size = 0x8, scoped, tag = 'scoped memory for onnx_net_forward.1']
    #allocation5 [shape = 's32[2]{0}', space=sflag, size = 0x8, scoped, tag = 'scoped memory for onnx_net_forward.1']
    #allocation6 [shape = 'u8[512]{0}', space=smem, size = 0x200, scoped, tag = 'input window, operand 2, single buffered']
    #allocation7 [shape = 's32[1]{0}', space=sflag, size = 0x4, scoped, tag = 'scoped memory for onnx_net_forward.1']
    #allocation8 [shape = 'u8[40960]{0}', space=vmem, size = 0xa000, scoped, tag = 'input window, operand 4, single buffered']
    #allocation9 [shape = 'u8[491520]{0}', space=vmem, size = 0x78000, scoped, tag = 'output window, operand 0']
    %10 = vsyncpa [#allocation5], 0
    %11 = vsyncpa [#allocation7], 0
    %12 = vsyncpa [#allocation3], 0
    %13 = vsyncpa [#allocation4], 0
    %s14 = scalar_lea.sflag [#allocation4], 1
    %15 = vsyncpa %s14, 0
    loop: start=0, step=1, limit=12
    $region2: #{onnx_net_forward.1} parent=1 // loop_pre_header
      _
    $region3: #{onnx_net_forward.1} parent=1 // loop_header
      %s17 = sphi 0, %s21
      %p18 = scmp.ge.s32.totalorder %s17, 12
      %s24 = sphi 0, %s36
      %s25 = sphi 0, %s32
      %s26 = sphi 0, %s24
      %s27 = sphi 0, %s25
      %s28 = sphi 0, %s26
      %s29 = sphi 0, %s27
      %s39 = sphi 0, %s41
      %s42 = sphi 0, %s39
      %s43 = sphi 0, %s42
      %s59 = sphi 0, %s43
      %s63 = sphi 0, %s63
      %s65 = sphi 0, %s63
      %s66 = sphi 0, %s65
      %s80 = sphi 0, %s66
      %s84 = sphi 0, %s84
      %s86 = sphi 0, %s84
      %s87 = sphi 0, %s86
      %s101 = sphi 0, %s87
      %s107 = sphi 0, %s109
      %s110 = sphi 0, %s107
      %s111 = sphi 0, %s110
      %s127 = sphi 0, %s111
      %s131 = sphi 0, %s131
      %s133 = sphi 0, %s131
      %s134 = sphi 0, %s133
      %s148 = sphi 0, %s134
      %s156 = sphi 0, %s158
      %s159 = sphi 0, %s156
      %s160 = sphi 0, %s159
      %s176 = sphi 0, %s160
    $region4: #{onnx_net_forward.1} parent=1 // loop_header_branch
      %20 = sbr.rel (%p18) target = $region8
    $region5: #{onnx_net_forward.1} parent=1 // loop_body
      %s22 = ssub.s32 %s17, 1
      %s23 = ssub.s32 %s17, 2
      %s30 = sadd.s32 1, %s25
      %p31 = scmp.ge.s32.totalorder %s30, 5
      %s32 = scalar_select %p31, 0, %s30
      %s33 = sadd.s32 1, %s24
      %s34 = scalar_select %p31, %s33, %s24
      %p35 = scmp.ge.s32.totalorder %s34, 2
      %s36 = scalar_select %p35, 0, %s34
      %s37 = ssub.s32 %s24, %s36
      %p38 = scmp.eq.s32.totalorder %s37, 0
      %s40 = sadd.s32 %s39, 1
      %s41 = scalar_select %p38, %s39, %s40
      %p44 = pneg %p38
      %p45 = scmp.eq.s32.totalorder %s17, 9
      %p46 = por %p44, %p45
      %p47 = scmp.ne.s32.totalorder %s39, %s42
      %p48 = scmp.eq.s32.totalorder %s17, 0
      %p49 = por %p47, %p48
      %p50 = scmp.ne.s32.totalorder %s39, %s42
      %p51 = scmp.eq.s32.totalorder %s22, 9
      %p52 = por %p50, %p51
      %p53 = scmp.ne.s32.totalorder %s42, %s43
      %p54 = scmp.eq.s32.totalorder %s22, 0
      %p55 = por %p53, %p54
      %p56 = scmp.ne.s32.totalorder %s42, %s43
      %p57 = scmp.eq.s32.totalorder %s23, 9
      %p58 = por %p56, %p57
      %p60 = scmp.ne.s32.totalorder %s43, %s59
      %p61 = scmp.eq.s32.totalorder %s23, 0
      %p62 = por %p60, %p61
      %s64 = sadd.s32 %s63, 1
      %p67 = scmp.eq.s32.totalorder %s17, 9
      %p68 = scmp.ne.s32.totalorder %s63, %s65
      %p69 = scmp.eq.s32.totalorder %s17, 0
      %p70 = por %p68, %p69
      %p71 = scmp.ne.s32.totalorder %s63, %s65
      %p72 = scmp.eq.s32.totalorder %s22, 9
      %p73 = por %p71, %p72
      %p74 = scmp.ne.s32.totalorder %s65, %s66
      %p75 = scmp.eq.s32.totalorder %s22, 0
      %p76 = por %p74, %p75
      %p77 = scmp.ne.s32.totalorder %s65, %s66
      %p78 = scmp.eq.s32.totalorder %s23, 9
      %p79 = por %p77, %p78
      %p81 = scmp.ne.s32.totalorder %s66, %s80
      %p82 = scmp.eq.s32.totalorder %s23, 0
      %p83 = por %p81, %p82
      %s85 = sadd.s32 %s84, 1
      %p88 = scmp.eq.s32.totalorder %s17, 9
      %p89 = scmp.ne.s32.totalorder %s84, %s86
      %p90 = scmp.eq.s32.totalorder %s17, 0
      %p91 = por %p89, %p90
      %p92 = scmp.ne.s32.totalorder %s84, %s86
      %p93 = scmp.eq.s32.totalorder %s22, 9
      %p94 = por %p92, %p93
      %p95 = scmp.ne.s32.totalorder %s86, %s87
      %p96 = scmp.eq.s32.totalorder %s22, 0
      %p97 = por %p95, %p96
      %p98 = scmp.ne.s32.totalorder %s86, %s87
      %p99 = scmp.eq.s32.totalorder %s23, 9
      %p100 = por %p98, %p99
      %p102 = scmp.ne.s32.totalorder %s87, %s101
      %p103 = scmp.eq.s32.totalorder %s23, 0
      %p104 = por %p102, %p103
      %s105 = ssub.s32 %s25, %s32
      %p106 = scmp.eq.s32.totalorder %s105, 0
      %s108 = sadd.s32 %s107, 1
      %s109 = scalar_select %p106, %s107, %s108
      %p112 = pneg %p106
      %p113 = scmp.eq.s32.totalorder %s17, 9
      %p114 = por %p112, %p113
      %p115 = scmp.ne.s32.totalorder %s107, %s110
      %p116 = scmp.eq.s32.totalorder %s17, 0
      %p117 = por %p115, %p116
      %p118 = scmp.ne.s32.totalorder %s107, %s110
      %p119 = scmp.eq.s32.totalorder %s22, 9
      %p120 = por %p118, %p119
      %p121 = scmp.ne.s32.totalorder %s110, %s111
      %p122 = scmp.eq.s32.totalorder %s22, 0
      %p123 = por %p121, %p122
      %p124 = scmp.ne.s32.totalorder %s110, %s111
      %p125 = scmp.eq.s32.totalorder %s23, 9
      %p126 = por %p124, %p125
      %p128 = scmp.ne.s32.totalorder %s111, %s127
      %p129 = scmp.eq.s32.totalorder %s23, 0
      %p130 = por %p128, %p129
      %s132 = sadd.s32 %s131, 1
      %p135 = scmp.eq.s32.totalorder %s17, 9
      %p136 = scmp.ne.s32.totalorder %s131, %s133
      %p137 = scmp.eq.s32.totalorder %s17, 0
      %p138 = por %p136, %p137
      %p139 = scmp.ne.s32.totalorder %s131, %s133
      %p140 = scmp.eq.s32.totalorder %s22, 9
      %p141 = por %p139, %p140
      %p142 = scmp.ne.s32.totalorder %s133, %s134
      %p143 = scmp.eq.s32.totalorder %s22, 0
      %p144 = por %p142, %p143
      %p145 = scmp.ne.s32.totalorder %s133, %s134
      %p146 = scmp.eq.s32.totalorder %s23, 9
      %p147 = por %p145, %p146
      %p149 = scmp.ne.s32.totalorder %s134, %s148
      %p150 = scmp.eq.s32.totalorder %s23, 0
      %p151 = por %p149, %p150
      %s152 = ssub.s32 %s24, %s36
      %s153 = ssub.s32 %s25, %s32
      %s154 = sor.u32 %s152, %s153
      %p155 = scmp.eq.s32.totalorder %s154, 0
      %s157 = sadd.s32 %s156, 1
      %s158 = scalar_select %p155, %s156, %s157
      %p161 = pneg %p155
      %p162 = scmp.eq.s32.totalorder %s17, 9
      %p163 = por %p161, %p162
      %p164 = scmp.ne.s32.totalorder %s156, %s159
      %p165 = scmp.eq.s32.totalorder %s17, 0
      %p166 = por %p164, %p165
      %p167 = scmp.ne.s32.totalorder %s156, %s159
      %p168 = scmp.eq.s32.totalorder %s22, 9
      %p169 = por %p167, %p168
      %p170 = scmp.ne.s32.totalorder %s159, %s160
      %p171 = scmp.eq.s32.totalorder %s22, 0
      %p172 = por %p170, %p171
      %p173 = scmp.ne.s32.totalorder %s159, %s160
      %p174 = scmp.eq.s32.totalorder %s23, 9
      %p175 = por %p173, %p174
      %p177 = scmp.ne.s32.totalorder %s160, %s176
      %p178 = scmp.eq.s32.totalorder %s23, 0
      %p179 = por %p177, %p178
      %p180 = scmp.le.s32.totalorder 1, %s17
      %p181 = scmp.lt.s32.totalorder %s17, 11
      %p182 = pnand %p180, %p181
      %p183 = pneg %p182
      // Predicated region
      $region9: #{onnx_net_forward.1} parent=5 // pred_check
        _
      $region10: #{onnx_net_forward.1} parent=5 // pred_check_branch
        %185 = sbr.rel (%p182) target = $region12
      $region11: #{onnx_net_forward.1} parent=5 // pred_region
        %s186 = ssub.s32 %s17, 1
        // Predicated region
        $region13: #{onnx_net_forward.1} parent=11 // pred_check
          %p187 = pneg %p76
        $region14: #{onnx_net_forward.1} parent=11 // pred_check_branch
          %189 = sbr.rel (%p187) target = $region16
        $region15: #{onnx_net_forward.1} parent=11 // pred_region
          %s191 = ssub.s32 128, 128
          %192 = vsyncadd [#allocation5], %s191
          %s194 = sshll.u32 %s1, 4
          %s195 = int_to_ptr.vmem [resolvable:$true] %s194
          %197 = dma.vmem_to_smem %s195, 128, [#allocation2], [#allocation5]
        $region16: #{onnx_net_forward.1} parent=11 // pred_fallthru
          _
        // Predicated region
        $region17: #{onnx_net_forward.1} parent=11 // pred_check
          %p198 = pneg %p97
        $region18: #{onnx_net_forward.1} parent=11 // pred_check_branch
          %200 = sbr.rel (%p198) target = $region20
        $region19: #{onnx_net_forward.1} parent=11 // pred_region
          %s202 = ssub.s32 16, 16
          %203 = vsyncadd [#allocation7], %s202
          %s205 = sshll.u32 %s2, 4
          %s206 = int_to_ptr.vmem [resolvable:$true] %s205
          %208 = dma.vmem_to_smem %s206, 16, [#allocation6], [#allocation7]
        $region20: #{onnx_net_forward.1} parent=11 // pred_fallthru
          _
        // Predicated region
        $region21: #{onnx_net_forward.1} parent=11 // pred_check
          %p209 = pneg %p144
        $region22: #{onnx_net_forward.1} parent=11 // pred_check_branch
          %211 = sbr.rel (%p209) target = $region24
        $region23: #{onnx_net_forward.1} parent=11 // pred_region
          %s213 = ssub.s32 1280, 1280
          %214 = vsyncadd [#allocation3], %s213
          %s215 = sshll.u32 [#allocation8], 4
          %s216 = int_to_ptr.vmem [resolvable:$true] %s215
          %221 = dma.hbm_to_vmem [thread:$0]  %s4, 1280, %s216, [#allocation3], 640, 640, 40
        $region24: #{onnx_net_forward.1} parent=11 // pred_fallthru
          _
      $region12: #{onnx_net_forward.1} parent=5 // pred_fallthru
        _
      %p222 = scmp.lt.s32.totalorder %s17, 10
      // Predicated region
      $region25: #{onnx_net_forward.1} parent=5 // pred_check
        %p223 = pneg %p222
      $region26: #{onnx_net_forward.1} parent=5 // pred_check_branch
        %225 = sbr.rel (%p223) target = $region28
      $region27: #{onnx_net_forward.1} parent=5 // pred_region
        // Predicated region
        $region29: #{onnx_net_forward.1} parent=27 // pred_check
          %p226 = pneg %p49
        $region30: #{onnx_net_forward.1} parent=27 // pred_check_branch
          %228 = sbr.rel (%p226) target = $region32
        $region31: #{onnx_net_forward.1} parent=27 // pred_region
          %p229 = scmp.lt.s32.totalorder %s24, 1
          %s230 = scalar_select %p229, %s24, 1
          %s231 = smul.addr %s230, 8
          %s232 = smul.addr %s231, 8
          %s233 = scalar_lea.vmem %s0, %s232
        $region32: #{onnx_net_forward.1} parent=27 // pred_fallthru
          _
        // Predicated region
        $region33: #{onnx_net_forward.1} parent=27 // pred_check
          %p234 = pneg %p117
        $region34: #{onnx_net_forward.1} parent=27 // pred_check_branch
          %236 = sbr.rel (%p234) target = $region36
        $region35: #{onnx_net_forward.1} parent=27 // pred_region
          %s237 = smul.u32 12, %s25
          %p238 = scmp.lt.s32.totalorder %s237, 59
          %s239 = scalar_select %p238, %s237, 59
          %s240 = smul.addr %s239, 8
          %s241 = scalar_lea.vmem %s3, %s240
          %s242 = smul.u32 12, %s25
        $region36: #{onnx_net_forward.1} parent=27 // pred_fallthru
          _
      $region28: #{onnx_net_forward.1} parent=5 // pred_fallthru
        _
      %p243 = scmp.le.s32.totalorder 1, %s17
      %p244 = scmp.lt.s32.totalorder %s17, 11
      %p245 = pnand %p243, %p244
      %p246 = pneg %p245
      // Predicated region
      $region37: #{onnx_net_forward.1} parent=5 // pred_check
        _
      $region38: #{onnx_net_forward.1} parent=5 // pred_check_branch
        %248 = sbr.rel (%p245) target = $region40
      $region39: #{onnx_net_forward.1} parent=5 // pred_region
        %s249 = ssub.s32 %s17, 1
        // Predicated region
        $region41: #{onnx_net_forward.1} parent=39 // pred_check
          %p250 = pneg %p76
        $region42: #{onnx_net_forward.1} parent=39 // pred_check_branch
          %252 = sbr.rel (%p250) target = $region44
        $region43: #{onnx_net_forward.1} parent=39 // pred_region
          %253 = dma.done [#allocation5], 128
        $region44: #{onnx_net_forward.1} parent=39 // pred_fallthru
          _
        // Predicated region
        $region45: #{onnx_net_forward.1} parent=39 // pred_check
          %p254 = pneg %p97
        $region46: #{onnx_net_forward.1} parent=39 // pred_check_branch
          %256 = sbr.rel (%p254) target = $region48
        $region47: #{onnx_net_forward.1} parent=39 // pred_region
          %257 = dma.done [#allocation7], 16
        $region48: #{onnx_net_forward.1} parent=39 // pred_fallthru
          _
        // Predicated region
        $region49: #{onnx_net_forward.1} parent=39 // pred_check
          %p258 = pneg %p144
        $region50: #{onnx_net_forward.1} parent=39 // pred_check_branch
          %260 = sbr.rel (%p258) target = $region52
        $region51: #{onnx_net_forward.1} parent=39 // pred_region
          %261 = dma.done [#allocation3], 1280
        $region52: #{onnx_net_forward.1} parent=39 // pred_fallthru
          _
        %262 = sfence
        %p263 = scmp.lt.s32.totalorder %s26, 1
        %s264 = scalar_select %p263, %s26, 1
        %s265 = smul.addr %s264, 8
        %s266 = smul.addr %s265, 8
        %s267 = scalar_lea.vmem %s0, %s266
        %p268 = pneg %p55
        %p269 = pneg %p52
        %p270 = pneg %p76
        %p271 = pneg %p73
        %p272 = pneg %p97
        %p273 = pneg %p94
        %s274 = smul.u32 12, %s27
        %p275 = scmp.lt.s32.totalorder %s274, 59
        %s276 = scalar_select %p275, %s274, 59
        %s277 = smul.addr %s276, 8
        %s278 = scalar_lea.vmem %s3, %s277
        %p279 = pneg %p123
        %p280 = pneg %p120
        %p281 = pneg %p144
        %p282 = pneg %p141
        %p283 = pneg %p172
        %p284 = pneg %p169
        %s285 = sand.u32 %s159, 1
        %s286 = scalar_lea.sflag [#allocation4], %s285
        %s287 = sand.u32 %s159, 1
        %s288 = smul.addr %s287, 480
        %s289 = scalar_lea.vmem [#allocation9], %s288
        %p290 = scmp.lt.s32.totalorder %s26, 1
        %s291 = scalar_select %p290, %s26, 1
        %s292 = smul.addr %s291, 8
        %s293 = smul.addr %s292, 8
        %s294 = scalar_lea.vmem %s0, %s293
        %s295 = smul.u32 12, %s27
        %p296 = scmp.lt.s32.totalorder %s295, 59
        %s297 = scalar_select %p296, %s295, 59
        %s298 = smul.addr %s297, 8
        %s299 = scalar_lea.vmem %s3, %s298
        %s300 = smul.u32 12, %s27
        %s301 = smul.u32 12, %s27
        %v302 = vld [vmem:[%s299] sm:$0xff]
        %v303 = vld [vmem:[%s299 + $0x8] sm:$0xff]
        %v304 = vld [vmem:[%s299 + $0x10] sm:$0xff]
        %v305 = vld [vmem:[%s299 + $0x18] sm:$0xff]
        %v306 = vld [vmem:[%s299 + $0x20] sm:$0xff]
        %v307 = vld [vmem:[%s299 + $0x28] sm:$0xff]
        %v308 = vld [vmem:[%s299 + $0x30] sm:$0xff]
        %v309 = vld [vmem:[%s299 + $0x38] sm:$0xff]
        %v310 = vld [vmem:[%s299 + $0x40] sm:$0xff]
        %v311 = vld [vmem:[%s299 + $0x48] sm:$0xff]
        %v312 = vld [vmem:[%s299 + $0x50] sm:$0xff]
        %v313 = vld [vmem:[%s299 + $0x58] sm:$0xff]
        %v314 = vld [vmem:[#allocation8] sm:$0xff]
        %v315 = vld [vmem:[#allocation8 + $0x8] sm:$0xff]
        %v316 = vld [vmem:[#allocation8 + $0x10] sm:$0xff]
        %v317 = vld [vmem:[#allocation8 + $0x18] sm:$0xff]
        %v318 = vld [vmem:[#allocation8 + $0x20] sm:$0xff]
        %v319 = vld [vmem:[#allocation8 + $0x28] sm:$0xff]
        %v320 = vld [vmem:[#allocation8 + $0x30] sm:$0xff]
        %v321 = vld [vmem:[#allocation8 + $0x38] sm:$0xff]
        %v322 = vld [vmem:[#allocation8 + $0x40] sm:$0xff]
        %v323 = vld [vmem:[#allocation8 + $0x48] sm:$0xff]
        %v324 = vld [vmem:[%s294] sm:$0xff]
        %v325 = vld [vmem:[%s294 + $0x8] sm:$0xff]
        %s326 = scalar_lea.vmem %s294, 16
        %v327 = vld [vmem:[%s326] sm:$0xff]
        %v328 = vld [vmem:[%s326 + $0x8] sm:$0xff]
        %s329 = scalar_lea.vmem %s294, 32
        %v330 = vld [vmem:[%s329] sm:$0xff]
        %v331 = vld [vmem:[%s329 + $0x8] sm:$0xff]
        %s332 = scalar_lea.vmem %s294, 48
        %v333 = vld [vmem:[%s332] sm:$0xff]
        %v334 = vld [vmem:[%s332 + $0x8] sm:$0xff]
        %s335 = sld [smem:[#allocation2]]
        %v336 = vstv %s335
        %v337 = vmul.f32 %v324, %v336
        %v338 = vmul.f32 %v325, %v336
        %s339 = sld [smem:[#allocation2 + $0x1]]
        %v340 = vstv %s339
        %v341 = vmul.f32 %v327, %v340
        %v342 = vmul.f32 %v328, %v340
        %v343 = vadd.f32 %v337, %v341
        %v344 = vadd.f32 %v338, %v342
        %s345 = sld [smem:[#allocation2 + $0x2]]
        %v346 = vstv %s345
        %v347 = vmul.f32 %v330, %v346
        %v348 = vmul.f32 %v331, %v346
        %v349 = vadd.f32 %v343, %v347
        %v350 = vadd.f32 %v344, %v348
        %s351 = sld [smem:[#allocation2 + $0x3]]
        %v352 = vstv %s351
        %v353 = vmul.f32 %v333, %v352
        %v354 = vmul.f32 %v334, %v352
        %v355 = vadd.f32 %v349, %v353
        %v356 = vadd.f32 %v350, %v354
        %s357 = sld [smem:[#allocation6]]
        %v358 = vstv %s357
        %v359 = vadd.f32 %v355, %v358
        %v360 = vadd.f32 %v356, %v358
        %vm361 = vcmask 130048
        %v363 = vsel %vm361, %v359, 0
        %v366 = vsel %vm361, %v360, 0
        %368 = vmatprep.subr.mxu0 0.0
        %369 = vmatpush1.msra.mxu0 0.0
        %370 = vmatprep.subr.mxu0 0.0
        %371 = vmatpush1.msra.mxu0 0.0
        %372 = vmatprep.subr.mxu0 0.0
        %373 = vmatpush1.msra.mxu0 0.0
        %374 = vmatprep.subr.mxu0 0.0
        %375 = vmatpush1.msra.mxu0 0.0
        %376 = vmatprep.subr.mxu0 0.0
        %377 = vmatpush1.msra.mxu0 0.0
        %378 = vmatprep.subr.mxu0 0.0
        %379 = vmatpush1.msra.mxu0 0.0
        %380 = vmatprep.subr.mxu0 0.0
        %381 = vmatpush1.msra.mxu0 0.0
        %382 = vmatprep.subr.mxu0 0.0
        %383 = vmatpush1.msra.mxu0 0.0
        %384 = vmatprep.subr.mxu0 0.0
        %385 = vmatpush1.msra.mxu0 0.0
        %386 = vmatprep.subr.mxu0 0.0
        %387 = vmatpush1.msra.mxu0 0.0
        %388 = vmatprep.subr.mxu0 0.0
        %389 = vmatpush1.msra.mxu0 0.0
        %390 = vmatprep.subr.mxu0 0.0
        %391 = vmatpush1.msra.mxu0 0.0
        %392 = vmatprep.subr.mxu0 0.0
        %393 = vmatpush1.msra.mxu0 0.0
        %394 = vmatprep.subr.mxu0 0.0
        %395 = vmatpush1.msra.mxu0 0.0
        %396 = vmatprep.subr.mxu0 %v320
        %397 = vmatpush1.msra.mxu0 %v319
        %398 = vmatprep.subr.mxu0 %v315
        %399 = vmatpush1.msra.mxu0 %v314
        %400 = vmatprep.subr.mxu0 0.0
        %401 = vmatpush2.msra.mxu0 0.0
        %402 = vmatprep.subr.mxu0 0.0
        %403 = vmatpush2.msra.mxu0 0.0
        %404 = vmatprep.subr.mxu0 0.0
        %405 = vmatpush2.msra.mxu0 0.0
        %406 = vmatprep.subr.mxu0 0.0
        %407 = vmatpush2.msra.mxu0 0.0
        %408 = vmatprep.subr.mxu0 0.0
        %409 = vmatpush2.msra.mxu0 0.0
        %410 = vmatprep.subr.mxu0 0.0
        %411 = vmatpush2.msra.mxu0 0.0
        %412 = vmatprep.subr.mxu0 0.0
        %413 = vmatpush2.msra.mxu0 0.0
        %414 = vmatprep.subr.mxu0 0.0
        %415 = vmatpush2.msra.mxu0 0.0
        %416 = vmatprep.subr.mxu0 0.0
        %417 = vmatpush2.msra.mxu0 0.0
        %418 = vmatprep.subr.mxu0 0.0
        %419 = vmatpush2.msra.mxu0 0.0
        %420 = vmatprep.subr.mxu0 0.0
        %421 = vmatpush2.msra.mxu0 0.0
        %422 = vmatprep.subr.mxu0 0.0
        %423 = vmatpush2.msra.mxu0 0.0
        %424 = vmatprep.subr.mxu0 0.0
        %425 = vmatpush2.msra.mxu0 0.0
        %426 = vmatprep.subr.mxu0 0.0
        %427 = vmatpush2.msra.mxu0 0.0
        %428 = vmatprep.subr.mxu0 0.0
        %429 = vmatpush2.msra.mxu0 0.0
        %430 = vmatprep.subr.mxu0 0.0
        %431 = vmatpush2.msra.mxu0 0.0
        %432 = vmatprep.mubr.f32.mxu0 0.0
        %433 = vmatmul.mubr.f32.gmra.mxu0 %v363
        %v434 = vpop.f32.mrf.mxu0
        %v435 = vadd.f32 0.0, %v434
        %v436 = vpop.f32.mrf.mxu0
        %v437 = vadd.f32 0.0, %v436
        %438 = vmatprep.mubr.f32.mxu0 0.0
        %439 = vmatmul.mubr.f32.gmra.mxu0 %v366
        %v440 = vpop.f32.mrf.mxu0
        %v441 = vadd.f32 0.0, %v440
        %v442 = vpop.f32.mrf.mxu0
        %v443 = vadd.f32 0.0, %v442
        %444 = vdwg.mxu0
        %445 = vmatprep.subr.mxu0 0.0
        %446 = vmatpush1.msra.mxu0 0.0
        %447 = vmatprep.subr.mxu0 0.0
        %448 = vmatpush1.msra.mxu0 0.0
        %449 = vmatprep.subr.mxu0 0.0
        %450 = vmatpush1.msra.mxu0 0.0
        %451 = vmatprep.subr.mxu0 0.0
        %452 = vmatpush1.msra.mxu0 0.0
        %453 = vmatprep.subr.mxu0 0.0
        %454 = vmatpush1.msra.mxu0 0.0
        %455 = vmatprep.subr.mxu0 0.0
        %456 = vmatpush1.msra.mxu0 0.0
        %457 = vmatprep.subr.mxu0 0.0
        %458 = vmatpush1.msra.mxu0 0.0
        %459 = vmatprep.subr.mxu0 0.0
        %460 = vmatpush1.msra.mxu0 0.0
        %461 = vmatprep.subr.mxu0 0.0
        %462 = vmatpush1.msra.mxu0 0.0
        %463 = vmatprep.subr.mxu0 0.0
        %464 = vmatpush1.msra.mxu0 0.0
        %465 = vmatprep.subr.mxu0 0.0
        %466 = vmatpush1.msra.mxu0 0.0
        %467 = vmatprep.subr.mxu0 0.0
        %468 = vmatpush1.msra.mxu0 0.0
        %469 = vmatprep.subr.mxu0 0.0
        %470 = vmatpush1.msra.mxu0 0.0
        %471 = vmatprep.subr.mxu0 0.0
        %472 = vmatpush1.msra.mxu0 0.0
        %473 = vmatprep.subr.mxu0 %v322
        %474 = vmatpush1.msra.mxu0 %v321
        %475 = vmatprep.subr.mxu0 %v317
        %476 = vmatpush1.msra.mxu0 %v316
        %477 = vmatprep.subr.mxu0 0.0
        %478 = vmatpush2.msra.mxu0 0.0
        %479 = vmatprep.subr.mxu0 0.0
        %480 = vmatpush2.msra.mxu0 0.0
        %481 = vmatprep.subr.mxu0 0.0
        %482 = vmatpush2.msra.mxu0 0.0
        %483 = vmatprep.subr.mxu0 0.0
        %484 = vmatpush2.msra.mxu0 0.0
        %485 = vmatprep.subr.mxu0 0.0
        %486 = vmatpush2.msra.mxu0 0.0
        %487 = vmatprep.subr.mxu0 0.0
        %488 = vmatpush2.msra.mxu0 0.0
        %489 = vmatprep.subr.mxu0 0.0
        %490 = vmatpush2.msra.mxu0 0.0
        %491 = vmatprep.subr.mxu0 0.0
        %492 = vmatpush2.msra.mxu0 0.0
        %493 = vmatprep.subr.mxu0 0.0
        %494 = vmatpush2.msra.mxu0 0.0
        %495 = vmatprep.subr.mxu0 0.0
        %496 = vmatpush2.msra.mxu0 0.0
        %497 = vmatprep.subr.mxu0 0.0
        %498 = vmatpush2.msra.mxu0 0.0
        %499 = vmatprep.subr.mxu0 0.0
        %500 = vmatpush2.msra.mxu0 0.0
        %501 = vmatprep.subr.mxu0 0.0
        %502 = vmatpush2.msra.mxu0 0.0
        %503 = vmatprep.subr.mxu0 0.0
        %504 = vmatpush2.msra.mxu0 0.0
        %505 = vmatprep.subr.mxu0 0.0
        %506 = vmatpush2.msra.mxu0 0.0
        %507 = vmatprep.subr.mxu0 0.0
        %508 = vmatpush2.msra.mxu0 0.0
        %509 = vmatprep.mubr.f32.mxu0 0.0
        %510 = vmatmul.mubr.f32.gmra.mxu0 %v363
        %v511 = vpop.f32.mrf.mxu0
        %v512 = vadd.f32 0.0, %v511
        %v513 = vpop.f32.mrf.mxu0
        %v514 = vadd.f32 0.0, %v513
        %515 = vmatprep.mubr.f32.mxu0 0.0
        %516 = vmatmul.mubr.f32.gmra.mxu0 %v366
        %v517 = vpop.f32.mrf.mxu0
        %v518 = vadd.f32 0.0, %v517
        %v519 = vpop.f32.mrf.mxu0
        %v520 = vadd.f32 0.0, %v519
        %521 = vdwg.mxu0
        %522 = vmatprep.subr.mxu0 0.0
        %523 = vmatpush1.msra.mxu0 0.0
        %524 = vmatprep.subr.mxu0 0.0
        %525 = vmatpush1.msra.mxu0 0.0
        %526 = vmatprep.subr.mxu0 0.0
        %527 = vmatpush1.msra.mxu0 0.0
        %528 = vmatprep.subr.mxu0 0.0
        %529 = vmatpush1.msra.mxu0 0.0
        %530 = vmatprep.subr.mxu0 0.0
        %531 = vmatpush1.msra.mxu0 0.0
        %532 = vmatprep.subr.mxu0 0.0
        %533 = vmatpush1.msra.mxu0 0.0
        %534 = vmatprep.subr.mxu0 0.0
        %535 = vmatpush1.msra.mxu0 0.0
        %536 = vmatprep.subr.mxu0 0.0
        %537 = vmatpush1.msra.mxu0 0.0
        %538 = vmatprep.subr.mxu0 0.0
        %539 = vmatpush1.msra.mxu0 0.0
        %540 = vmatprep.subr.mxu0 0.0
        %541 = vmatpush1.msra.mxu0 0.0
        %542 = vmatprep.subr.mxu0 0.0
        %543 = vmatpush1.msra.mxu0 0.0
        %544 = vmatprep.subr.mxu0 0.0
        %545 = vmatpush1.msra.mxu0 0.0
        %546 = vmatprep.subr.mxu0 0.0
        %547 = vmatpush1.msra.mxu0 0.0
        %548 = vmatprep.subr.mxu0 0.0
        %549 = vmatpush1.msra.mxu0 0.0
        %550 = vmatprep.subr.mxu0 0.0
        %551 = vmatpush1.msra.mxu0 %v323
        %552 = vmatprep.subr.mxu0 0.0
        %553 = vmatpush1.msra.mxu0 %v318
        %554 = vmatprep.subr.mxu0 0.0
        %555 = vmatpush2.msra.mxu0 0.0
        %556 = vmatprep.subr.mxu0 0.0
        %557 = vmatpush2.msra.mxu0 0.0
        %558 = vmatprep.subr.mxu0 0.0
        %559 = vmatpush2.msra.mxu0 0.0
        %560 = vmatprep.subr.mxu0 0.0
        %561 = vmatpush2.msra.mxu0 0.0
        %562 = vmatprep.subr.mxu0 0.0
        %563 = vmatpush2.msra.mxu0 0.0
        %564 = vmatprep.subr.mxu0 0.0
        %565 = vmatpush2.msra.mxu0 0.0
        %566 = vmatprep.subr.mxu0 0.0
        %567 = vmatpush2.msra.mxu0 0.0
        %568 = vmatprep.subr.mxu0 0.0
        %569 = vmatpush2.msra.mxu0 0.0
        %570 = vmatprep.subr.mxu0 0.0
        %571 = vmatpush2.msra.mxu0 0.0
        %572 = vmatprep.subr.mxu0 0.0
        %573 = vmatpush2.msra.mxu0 0.0
        %574 = vmatprep.subr.mxu0 0.0
        %575 = vmatpush2.msra.mxu0 0.0
        %576 = vmatprep.subr.mxu0 0.0
        %577 = vmatpush2.msra.mxu0 0.0
        %578 = vmatprep.subr.mxu0 0.0
        %579 = vmatpush2.msra.mxu0 0.0
        %580 = vmatprep.subr.mxu0 0.0
        %581 = vmatpush2.msra.mxu0 0.0
        %582 = vmatprep.subr.mxu0 0.0
        %583 = vmatpush2.msra.mxu0 0.0
        %584 = vmatprep.subr.mxu0 0.0
        %585 = vmatpush2.msra.mxu0 0.0
        %586 = vmatprep.mubr.f32.mxu0 0.0
        %587 = vmatmul.mubr.f32.gmra.mxu0 %v363
        %v588 = vpop.f32.mrf.mxu0
        %v589 = vadd.f32 0.0, %v588
        %v590 = vpop.f32.mrf.mxu0
        %591 = vmatprep.mubr.f32.mxu0 0.0
        %592 = vmatmul.mubr.f32.gmra.mxu0 %v366
        %v593 = vpop.f32.mrf.mxu0
        %v594 = vadd.f32 0.0, %v593
        %v595 = vpop.f32.mrf.mxu0
        %596 = vdwg.mxu0
        %v598 = vsel %vm361, %v302, 0
        %v601 = vsel %vm361, %v303, 0
        %v604 = vsel %vm361, %v304, 0
        %v607 = vsel %vm361, %v305, 0
        %v610 = vsel %vm361, %v306, 0
        %v613 = vsel %vm361, %v307, 0
        %v616 = vsel %vm361, %v308, 0
        %v619 = vsel %vm361, %v309, 0
        %v622 = vsel %vm361, %v310, 0
        %v625 = vsel %vm361, %v311, 0
        %v628 = vsel %vm361, %v312, 0
        %v631 = vsel %vm361, %v313, 0
        %633 = vmatprep.subr.mxu0 0.0
        %634 = vmatpush1.msra.mxu0 0.0
        %635 = vmatprep.subr.mxu0 0.0
        %636 = vmatpush1.msra.mxu0 0.0
        %637 = vmatprep.subr.mxu0 0.0
        %638 = vmatpush1.msra.mxu0 0.0
        %639 = vmatprep.subr.mxu0 0.0
        %640 = vmatpush1.msra.mxu0 0.0
        %641 = vmatprep.subr.mxu0 0.0
        %642 = vmatpush1.msra.mxu0 0.0
        %643 = vmatprep.subr.mxu0 0.0
        %644 = vmatpush1.msra.mxu0 0.0
        %645 = vmatprep.subr.mxu0 0.0
        %646 = vmatpush1.msra.mxu0 0.0
        %647 = vmatprep.subr.mxu0 0.0
        %648 = vmatpush1.msra.mxu0 0.0
        %649 = vmatprep.subr.mxu0 0.0
        %650 = vmatpush1.msra.mxu0 0.0
        %651 = vmatprep.subr.mxu0 0.0
        %652 = vmatpush1.msra.mxu0 0.0
        %653 = vmatprep.subr.mxu0 0.0
        %654 = vmatpush1.msra.mxu0 0.0
        %655 = vmatprep.subr.mxu0 0.0
        %656 = vmatpush1.msra.mxu0 0.0
        %657 = vmatprep.subr.mxu0 0.0
        %658 = vmatpush1.msra.mxu0 0.0
        %659 = vmatprep.subr.mxu0 0.0
        %660 = vmatpush1.msra.mxu0 0.0
        %661 = vmatprep.subr.mxu0 %v443
        %662 = vmatpush1.msra.mxu0 %v441
        %663 = vmatprep.subr.mxu0 %v437
        %664 = vmatpush1.msra.mxu0 %v435
        %665 = vmatprep.subr.mxu0 0.0
        %666 = vmatpush2.msra.mxu0 0.0
        %667 = vmatprep.subr.mxu0 0.0
        %668 = vmatpush2.msra.mxu0 0.0
        %669 = vmatprep.subr.mxu0 0.0
        %670 = vmatpush2.msra.mxu0 0.0
        %671 = vmatprep.subr.mxu0 0.0
        %672 = vmatpush2.msra.mxu0 0.0
        %673 = vmatprep.subr.mxu0 0.0
        %674 = vmatpush2.msra.mxu0 0.0
        %675 = vmatprep.subr.mxu0 0.0
        %676 = vmatpush2.msra.mxu0 0.0
        %677 = vmatprep.subr.mxu0 0.0
        %678 = vmatpush2.msra.mxu0 0.0
        %679 = vmatprep.subr.mxu0 0.0
        %680 = vmatpush2.msra.mxu0 0.0
        %681 = vmatprep.subr.mxu0 0.0
        %682 = vmatpush2.msra.mxu0 0.0
        %683 = vmatprep.subr.mxu0 0.0
        %684 = vmatpush2.msra.mxu0 0.0
        %685 = vmatprep.subr.mxu0 0.0
        %686 = vmatpush2.msra.mxu0 0.0
        %687 = vmatprep.subr.mxu0 0.0
        %688 = vmatpush2.msra.mxu0 0.0
        %689 = vmatprep.subr.mxu0 0.0
        %690 = vmatpush2.msra.mxu0 0.0
        %691 = vmatprep.subr.mxu0 0.0
        %692 = vmatpush2.msra.mxu0 0.0
        %693 = vmatprep.subr.mxu0 0.0
        %694 = vmatpush2.msra.mxu0 0.0
        %695 = vmatprep.subr.mxu0 0.0
        %696 = vmatpush2.msra.mxu0 0.0
        %697 = vmatprep.mubr.f32.mxu0 0.0
        %698 = vmatmul.mubr.f32.gmra.mxu0 %v598
        %v699 = vpop.f32.mrf.mxu0
        %v700 = vadd.f32 0.0, %v699
        %v701 = vpop.f32.mrf.mxu0
        %v702 = vadd.f32 0.0, %v701
        %703 = vmatprep.mubr.f32.mxu0 0.0
        %704 = vmatmul.mubr.f32.gmra.mxu0 %v601
        %v705 = vpop.f32.mrf.mxu0
        %v706 = vadd.f32 0.0, %v705
        %v707 = vpop.f32.mrf.mxu0
        %v708 = vadd.f32 0.0, %v707
        %709 = vmatprep.mubr.f32.mxu0 0.0
        %710 = vmatmul.mubr.f32.gmra.mxu0 %v604
        %v711 = vpop.f32.mrf.mxu0
        %v712 = vadd.f32 0.0, %v711
        %v713 = vpop.f32.mrf.mxu0
        %v714 = vadd.f32 0.0, %v713
        %715 = vmatprep.mubr.f32.mxu0 0.0
        %716 = vmatmul.mubr.f32.gmra.mxu0 %v607
        %v717 = vpop.f32.mrf.mxu0
        %v718 = vadd.f32 0.0, %v717
        %v719 = vpop.f32.mrf.mxu0
        %v720 = vadd.f32 0.0, %v719
        %721 = vmatprep.mubr.f32.mxu0 0.0
        %722 = vmatmul.mubr.f32.gmra.mxu0 %v610
        %v723 = vpop.f32.mrf.mxu0
        %v724 = vadd.f32 0.0, %v723
        %v725 = vpop.f32.mrf.mxu0
        %v726 = vadd.f32 0.0, %v725
        %727 = vmatprep.mubr.f32.mxu0 0.0
        %728 = vmatmul.mubr.f32.gmra.mxu0 %v613
        %v729 = vpop.f32.mrf.mxu0
        %v730 = vadd.f32 0.0, %v729
        %v731 = vpop.f32.mrf.mxu0
        %v732 = vadd.f32 0.0, %v731
        %733 = vmatprep.mubr.f32.mxu0 0.0
        %734 = vmatmul.mubr.f32.gmra.mxu0 %v616
        %v735 = vpop.f32.mrf.mxu0
        %v736 = vadd.f32 0.0, %v735
        %v737 = vpop.f32.mrf.mxu0
        %v738 = vadd.f32 0.0, %v737
        %739 = vmatprep.mubr.f32.mxu0 0.0
        %740 = vmatmul.mubr.f32.gmra.mxu0 %v619
        %v741 = vpop.f32.mrf.mxu0
        %v742 = vadd.f32 0.0, %v741
        %v743 = vpop.f32.mrf.mxu0
        %v744 = vadd.f32 0.0, %v743
        %745 = vmatprep.mubr.f32.mxu0 0.0
        %746 = vmatmul.mubr.f32.gmra.mxu0 %v622
        %v747 = vpop.f32.mrf.mxu0
        %v748 = vadd.f32 0.0, %v747
        %v749 = vpop.f32.mrf.mxu0
        %v750 = vadd.f32 0.0, %v749
        %751 = vmatprep.mubr.f32.mxu0 0.0
        %752 = vmatmul.mubr.f32.gmra.mxu0 %v625
        %v753 = vpop.f32.mrf.mxu0
        %v754 = vadd.f32 0.0, %v753
        %v755 = vpop.f32.mrf.mxu0
        %v756 = vadd.f32 0.0, %v755
        %757 = vmatprep.mubr.f32.mxu0 0.0
        %758 = vmatmul.mubr.f32.gmra.mxu0 %v628
        %v759 = vpop.f32.mrf.mxu0
        %v760 = vadd.f32 0.0, %v759
        %v761 = vpop.f32.mrf.mxu0
        %v762 = vadd.f32 0.0, %v761
        %763 = vmatprep.mubr.f32.mxu0 0.0
        %764 = vmatmul.mubr.f32.gmra.mxu0 %v631
        %v765 = vpop.f32.mrf.mxu0
        %v766 = vadd.f32 0.0, %v765
        %v767 = vpop.f32.mrf.mxu0
        %v768 = vadd.f32 0.0, %v767
        %769 = vdwg.mxu0
        %770 = vmatprep.subr.mxu0 0.0
        %771 = vmatpush1.msra.mxu0 0.0
        %772 = vmatprep.subr.mxu0 0.0
        %773 = vmatpush1.msra.mxu0 0.0
        %774 = vmatprep.subr.mxu0 0.0
        %775 = vmatpush1.msra.mxu0 0.0
        %776 = vmatprep.subr.mxu0 0.0
        %777 = vmatpush1.msra.mxu0 0.0
        %778 = vmatprep.subr.mxu0 0.0
        %779 = vmatpush1.msra.mxu0 0.0
        %780 = vmatprep.subr.mxu0 0.0
        %781 = vmatpush1.msra.mxu0 0.0
        %782 = vmatprep.subr.mxu0 0.0
        %783 = vmatpush1.msra.mxu0 0.0
        %784 = vmatprep.subr.mxu0 0.0
        %785 = vmatpush1.msra.mxu0 0.0
        %786 = vmatprep.subr.mxu0 0.0
        %787 = vmatpush1.msra.mxu0 0.0
        %788 = vmatprep.subr.mxu0 0.0
        %789 = vmatpush1.msra.mxu0 0.0
        %790 = vmatprep.subr.mxu0 0.0
        %791 = vmatpush1.msra.mxu0 0.0
        %792 = vmatprep.subr.mxu0 0.0
        %793 = vmatpush1.msra.mxu0 0.0
        %794 = vmatprep.subr.mxu0 0.0
        %795 = vmatpush1.msra.mxu0 0.0
        %796 = vmatprep.subr.mxu0 0.0
        %797 = vmatpush1.msra.mxu0 0.0
        %798 = vmatprep.subr.mxu0 %v520
        %799 = vmatpush1.msra.mxu0 %v518
        %800 = vmatprep.subr.mxu0 %v514
        %801 = vmatpush1.msra.mxu0 %v512
        %802 = vmatprep.subr.mxu0 0.0
        %803 = vmatpush2.msra.mxu0 0.0
        %804 = vmatprep.subr.mxu0 0.0
        %805 = vmatpush2.msra.mxu0 0.0
        %806 = vmatprep.subr.mxu0 0.0
        %807 = vmatpush2.msra.mxu0 0.0
        %808 = vmatprep.subr.mxu0 0.0
        %809 = vmatpush2.msra.mxu0 0.0
        %810 = vmatprep.subr.mxu0 0.0
        %811 = vmatpush2.msra.mxu0 0.0
        %812 = vmatprep.subr.mxu0 0.0
        %813 = vmatpush2.msra.mxu0 0.0
        %814 = vmatprep.subr.mxu0 0.0
        %815 = vmatpush2.msra.mxu0 0.0
        %816 = vmatprep.subr.mxu0 0.0
        %817 = vmatpush2.msra.mxu0 0.0
        %818 = vmatprep.subr.mxu0 0.0
        %819 = vmatpush2.msra.mxu0 0.0
        %820 = vmatprep.subr.mxu0 0.0
        %821 = vmatpush2.msra.mxu0 0.0
        %822 = vmatprep.subr.mxu0 0.0
        %823 = vmatpush2.msra.mxu0 0.0
        %824 = vmatprep.subr.mxu0 0.0
        %825 = vmatpush2.msra.mxu0 0.0
        %826 = vmatprep.subr.mxu0 0.0
        %827 = vmatpush2.msra.mxu0 0.0
        %828 = vmatprep.subr.mxu0 0.0
        %829 = vmatpush2.msra.mxu0 0.0
        %830 = vmatprep.subr.mxu0 0.0
        %831 = vmatpush2.msra.mxu0 0.0
        %832 = vmatprep.subr.mxu0 0.0
        %833 = vmatpush2.msra.mxu0 0.0
        %834 = vmatprep.mubr.f32.mxu0 0.0
        %835 = vmatmul.mubr.f32.gmra.mxu0 %v598
        %v836 = vpop.f32.mrf.mxu0
        %v837 = vadd.f32 0.0, %v836
        %v838 = vpop.f32.mrf.mxu0
        %v839 = vadd.f32 0.0, %v838
        %840 = vmatprep.mubr.f32.mxu0 0.0
        %841 = vmatmul.mubr.f32.gmra.mxu0 %v601
        %v842 = vpop.f32.mrf.mxu0
        %v843 = vadd.f32 0.0, %v842
        %v844 = vpop.f32.mrf.mxu0
        %v845 = vadd.f32 0.0, %v844
        %846 = vmatprep.mubr.f32.mxu0 0.0
        %847 = vmatmul.mubr.f32.gmra.mxu0 %v604
        %v848 = vpop.f32.mrf.mxu0
        %v849 = vadd.f32 0.0, %v848
        %v850 = vpop.f32.mrf.mxu0
        %v851 = vadd.f32 0.0, %v850
        %852 = vmatprep.mubr.f32.mxu0 0.0
        %853 = vmatmul.mubr.f32.gmra.mxu0 %v607
        %v854 = vpop.f32.mrf.mxu0
        %v855 = vadd.f32 0.0, %v854
        %v856 = vpop.f32.mrf.mxu0
        %v857 = vadd.f32 0.0, %v856
        %858 = vmatprep.mubr.f32.mxu0 0.0
        %859 = vmatmul.mubr.f32.gmra.mxu0 %v610
        %v860 = vpop.f32.mrf.mxu0
        %v861 = vadd.f32 0.0, %v860
        %v862 = vpop.f32.mrf.mxu0
        %v863 = vadd.f32 0.0, %v862
        %864 = vmatprep.mubr.f32.mxu0 0.0
        %865 = vmatmul.mubr.f32.gmra.mxu0 %v613
        %v866 = vpop.f32.mrf.mxu0
        %v867 = vadd.f32 0.0, %v866
        %v868 = vpop.f32.mrf.mxu0
        %v869 = vadd.f32 0.0, %v868
        %870 = vmatprep.mubr.f32.mxu0 0.0
        %871 = vmatmul.mubr.f32.gmra.mxu0 %v616
        %v872 = vpop.f32.mrf.mxu0
        %v873 = vadd.f32 0.0, %v872
        %v874 = vpop.f32.mrf.mxu0
        %v875 = vadd.f32 0.0, %v874
        %876 = vmatprep.mubr.f32.mxu0 0.0
        %877 = vmatmul.mubr.f32.gmra.mxu0 %v619
        %v878 = vpop.f32.mrf.mxu0
        %v879 = vadd.f32 0.0, %v878
        %v880 = vpop.f32.mrf.mxu0
        %v881 = vadd.f32 0.0, %v880
        %882 = vmatprep.mubr.f32.mxu0 0.0
        %883 = vmatmul.mubr.f32.gmra.mxu0 %v622
        %v884 = vpop.f32.mrf.mxu0
        %v885 = vadd.f32 0.0, %v884
        %v886 = vpop.f32.mrf.mxu0
        %v887 = vadd.f32 0.0, %v886
        %888 = vmatprep.mubr.f32.mxu0 0.0
        %889 = vmatmul.mubr.f32.gmra.mxu0 %v625
        %v890 = vpop.f32.mrf.mxu0
        %v891 = vadd.f32 0.0, %v890
        %v892 = vpop.f32.mrf.mxu0
        %v893 = vadd.f32 0.0, %v892
        %894 = vmatprep.mubr.f32.mxu0 0.0
        %895 = vmatmul.mubr.f32.gmra.mxu0 %v628
        %v896 = vpop.f32.mrf.mxu0
        %v897 = vadd.f32 0.0, %v896
        %v898 = vpop.f32.mrf.mxu0
        %v899 = vadd.f32 0.0, %v898
        %900 = vmatprep.mubr.f32.mxu0 0.0
        %901 = vmatmul.mubr.f32.gmra.mxu0 %v631
        %v902 = vpop.f32.mrf.mxu0
        %v903 = vadd.f32 0.0, %v902
        %v904 = vpop.f32.mrf.mxu0
        %v905 = vadd.f32 0.0, %v904
        %906 = vdwg.mxu0
        %907 = vmatprep.subr.mxu0 0.0
        %908 = vmatpush1.msra.mxu0 0.0
        %909 = vmatprep.subr.mxu0 0.0
        %910 = vmatpush1.msra.mxu0 0.0
        %911 = vmatprep.subr.mxu0 0.0
        %912 = vmatpush1.msra.mxu0 0.0
        %913 = vmatprep.subr.mxu0 0.0
        %914 = vmatpush1.msra.mxu0 0.0
        %915 = vmatprep.subr.mxu0 0.0
        %916 = vmatpush1.msra.mxu0 0.0
        %917 = vmatprep.subr.mxu0 0.0
        %918 = vmatpush1.msra.mxu0 0.0
        %919 = vmatprep.subr.mxu0 0.0
        %920 = vmatpush1.msra.mxu0 0.0
        %921 = vmatprep.subr.mxu0 0.0
        %922 = vmatpush1.msra.mxu0 0.0
        %923 = vmatprep.subr.mxu0 0.0
        %924 = vmatpush1.msra.mxu0 0.0
        %925 = vmatprep.subr.mxu0 0.0
        %926 = vmatpush1.msra.mxu0 0.0
        %927 = vmatprep.subr.mxu0 0.0
        %928 = vmatpush1.msra.mxu0 0.0
        %929 = vmatprep.subr.mxu0 0.0
        %930 = vmatpush1.msra.mxu0 0.0
        %931 = vmatprep.subr.mxu0 0.0
        %932 = vmatpush1.msra.mxu0 0.0
        %933 = vmatprep.subr.mxu0 0.0
        %934 = vmatpush1.msra.mxu0 0.0
        %935 = vmatprep.subr.mxu0 0.0
        %936 = vmatpush1.msra.mxu0 %v594
        %937 = vmatprep.subr.mxu0 0.0
        %938 = vmatpush1.msra.mxu0 %v589
        %939 = vmatprep.subr.mxu0 0.0
        %940 = vmatpush2.msra.mxu0 0.0
        %941 = vmatprep.subr.mxu0 0.0
        %942 = vmatpush2.msra.mxu0 0.0
        %943 = vmatprep.subr.mxu0 0.0
        %944 = vmatpush2.msra.mxu0 0.0
        %945 = vmatprep.subr.mxu0 0.0
        %946 = vmatpush2.msra.mxu0 0.0
        %947 = vmatprep.subr.mxu0 0.0
        %948 = vmatpush2.msra.mxu0 0.0
        %949 = vmatprep.subr.mxu0 0.0
        %950 = vmatpush2.msra.mxu0 0.0
        %951 = vmatprep.subr.mxu0 0.0
        %952 = vmatpush2.msra.mxu0 0.0
        %953 = vmatprep.subr.mxu0 0.0
        %954 = vmatpush2.msra.mxu0 0.0
        %955 = vmatprep.subr.mxu0 0.0
        %956 = vmatpush2.msra.mxu0 0.0
        %957 = vmatprep.subr.mxu0 0.0
        %958 = vmatpush2.msra.mxu0 0.0
        %959 = vmatprep.subr.mxu0 0.0
        %960 = vmatpush2.msra.mxu0 0.0
        %961 = vmatprep.subr.mxu0 0.0
        %962 = vmatpush2.msra.mxu0 0.0
        %963 = vmatprep.subr.mxu0 0.0
        %964 = vmatpush2.msra.mxu0 0.0
        %965 = vmatprep.subr.mxu0 0.0
        %966 = vmatpush2.msra.mxu0 0.0
        %967 = vmatprep.subr.mxu0 0.0
        %968 = vmatpush2.msra.mxu0 0.0
        %969 = vmatprep.subr.mxu0 0.0
        %970 = vmatpush2.msra.mxu0 0.0
        %971 = vmatprep.mubr.f32.mxu0 0.0
        %972 = vmatmul.mubr.f32.gmra.mxu0 %v598
        %v973 = vpop.f32.mrf.mxu0
        %v974 = vadd.f32 0.0, %v973
        %v975 = vpop.f32.mrf.mxu0
        %976 = vmatprep.mubr.f32.mxu0 0.0
        %977 = vmatmul.mubr.f32.gmra.mxu0 %v601
        %v978 = vpop.f32.mrf.mxu0
        %v979 = vadd.f32 0.0, %v978
        %v980 = vpop.f32.mrf.mxu0
        %981 = vmatprep.mubr.f32.mxu0 0.0
        %982 = vmatmul.mubr.f32.gmra.mxu0 %v604
        %v983 = vpop.f32.mrf.mxu0
        %v984 = vadd.f32 0.0, %v983
        %v985 = vpop.f32.mrf.mxu0
        %986 = vmatprep.mubr.f32.mxu0 0.0
        %987 = vmatmul.mubr.f32.gmra.mxu0 %v607
        %v988 = vpop.f32.mrf.mxu0
        %v989 = vadd.f32 0.0, %v988
        %v990 = vpop.f32.mrf.mxu0
        %991 = vmatprep.mubr.f32.mxu0 0.0
        %992 = vmatmul.mubr.f32.gmra.mxu0 %v610
        %v993 = vpop.f32.mrf.mxu0
        %v994 = vadd.f32 0.0, %v993
        %v995 = vpop.f32.mrf.mxu0
        %996 = vmatprep.mubr.f32.mxu0 0.0
        %997 = vmatmul.mubr.f32.gmra.mxu0 %v613
        %v998 = vpop.f32.mrf.mxu0
        %v999 = vadd.f32 0.0, %v998
        %v1000 = vpop.f32.mrf.mxu0
        %1001 = vmatprep.mubr.f32.mxu0 0.0
        %1002 = vmatmul.mubr.f32.gmra.mxu0 %v616
        %v1003 = vpop.f32.mrf.mxu0
        %v1004 = vadd.f32 0.0, %v1003
        %v1005 = vpop.f32.mrf.mxu0
        %1006 = vmatprep.mubr.f32.mxu0 0.0
        %1007 = vmatmul.mubr.f32.gmra.mxu0 %v619
        %v1008 = vpop.f32.mrf.mxu0
        %v1009 = vadd.f32 0.0, %v1008
        %v1010 = vpop.f32.mrf.mxu0
        %1011 = vmatprep.mubr.f32.mxu0 0.0
        %1012 = vmatmul.mubr.f32.gmra.mxu0 %v622
        %v1013 = vpop.f32.mrf.mxu0
        %v1014 = vadd.f32 0.0, %v1013
        %v1015 = vpop.f32.mrf.mxu0
        %1016 = vmatprep.mubr.f32.mxu0 0.0
        %1017 = vmatmul.mubr.f32.gmra.mxu0 %v625
        %v1018 = vpop.f32.mrf.mxu0
        %v1019 = vadd.f32 0.0, %v1018
        %v1020 = vpop.f32.mrf.mxu0
        %1021 = vmatprep.mubr.f32.mxu0 0.0
        %1022 = vmatmul.mubr.f32.gmra.mxu0 %v628
        %v1023 = vpop.f32.mrf.mxu0
        %v1024 = vadd.f32 0.0, %v1023
        %v1025 = vpop.f32.mrf.mxu0
        %1026 = vmatprep.mubr.f32.mxu0 0.0
        %1027 = vmatmul.mubr.f32.gmra.mxu0 %v631
        %v1028 = vpop.f32.mrf.mxu0
        %v1029 = vadd.f32 0.0, %v1028
        %v1030 = vpop.f32.mrf.mxu0
        %1031 = vdwg.mxu0
        %s1032 = sld [smem:[#allocation2 + $0x80]]
        %v1033 = vstv %s1032
        %v1034 = vmul.f32 %v324, %v1033
        %v1035 = vmul.f32 %v325, %v1033
        %s1036 = sld [smem:[#allocation2 + $0x81]]
        %v1037 = vstv %s1036
        %v1038 = vmul.f32 %v327, %v1037
        %v1039 = vmul.f32 %v328, %v1037
        %v1040 = vadd.f32 %v1034, %v1038
        %v1041 = vadd.f32 %v1035, %v1039
        %s1042 = sld [smem:[#allocation2 + $0x82]]
        %v1043 = vstv %s1042
        %v1044 = vmul.f32 %v330, %v1043
        %v1045 = vmul.f32 %v331, %v1043
        %v1046 = vadd.f32 %v1040, %v1044
        %v1047 = vadd.f32 %v1041, %v1045
        %s1048 = sld [smem:[#allocation2 + $0x83]]
        %v1049 = vstv %s1048
        %v1050 = vmul.f32 %v333, %v1049
        %v1051 = vmul.f32 %v334, %v1049
        %v1052 = vadd.f32 %v1046, %v1050
        %v1053 = vadd.f32 %v1047, %v1051
        %s1054 = sld [smem:[#allocation6 + $0x1]]
        %v1055 = vstv %s1054
        %v1056 = vadd.f32 %v1052, %v1055
        %v1057 = vadd.f32 %v1053, %v1055
        %v1059 = vsel %vm361, %v1056, 0
        %v1062 = vsel %vm361, %v1057, 0
        %1064 = vmatprep.subr.mxu0 0.0
        %1065 = vmatpush1.msra.mxu0 0.0
        %1066 = vmatprep.subr.mxu0 0.0
        %1067 = vmatpush1.msra.mxu0 0.0
        %1068 = vmatprep.subr.mxu0 0.0
        %1069 = vmatpush1.msra.mxu0 0.0
        %1070 = vmatprep.subr.mxu0 0.0
        %1071 = vmatpush1.msra.mxu0 0.0
        %1072 = vmatprep.subr.mxu0 0.0
        %1073 = vmatpush1.msra.mxu0 0.0
        %1074 = vmatprep.subr.mxu0 0.0
        %1075 = vmatpush1.msra.mxu0 0.0
        %1076 = vmatprep.subr.mxu0 0.0
        %1077 = vmatpush1.msra.mxu0 0.0
        %1078 = vmatprep.subr.mxu0 0.0
        %1079 = vmatpush1.msra.mxu0 0.0
        %1080 = vmatprep.subr.mxu0 0.0
        %1081 = vmatpush1.msra.mxu0 0.0
        %1082 = vmatprep.subr.mxu0 0.0
        %1083 = vmatpush1.msra.mxu0 0.0
        %1084 = vmatprep.subr.mxu0 0.0
        %1085 = vmatpush1.msra.mxu0 0.0
        %1086 = vmatprep.subr.mxu0 0.0
        %1087 = vmatpush1.msra.mxu0 0.0
        %1088 = vmatprep.subr.mxu0 0.0
        %1089 = vmatpush1.msra.mxu0 0.0
        %1090 = vmatprep.subr.mxu0 0.0
        %1091 = vmatpush1.msra.mxu0 0.0
        %1092 = vmatprep.subr.mxu0 %v320
        %1093 = vmatpush1.msra.mxu0 %v319
        %1094 = vmatprep.subr.mxu0 %v315
        %1095 = vmatpush1.msra.mxu0 %v314
        %1096 = vmatprep.subr.mxu0 0.0
        %1097 = vmatpush2.msra.mxu0 0.0
        %1098 = vmatprep.subr.mxu0 0.0
        %1099 = vmatpush2.msra.mxu0 0.0
        %1100 = vmatprep.subr.mxu0 0.0
        %1101 = vmatpush2.msra.mxu0 0.0
        %1102 = vmatprep.subr.mxu0 0.0
        %1103 = vmatpush2.msra.mxu0 0.0
        %1104 = vmatprep.subr.mxu0 0.0
        %1105 = vmatpush2.msra.mxu0 0.0
        %1106 = vmatprep.subr.mxu0 0.0
        %1107 = vmatpush2.msra.mxu0 0.0
        %1108 = vmatprep.subr.mxu0 0.0
        %1109 = vmatpush2.msra.mxu0 0.0
        %1110 = vmatprep.subr.mxu0 0.0
        %1111 = vmatpush2.msra.mxu0 0.0
        %1112 = vmatprep.subr.mxu0 0.0
        %1113 = vmatpush2.msra.mxu0 0.0
        %1114 = vmatprep.subr.mxu0 0.0
        %1115 = vmatpush2.msra.mxu0 0.0
        %1116 = vmatprep.subr.mxu0 0.0
        %1117 = vmatpush2.msra.mxu0 0.0
        %1118 = vmatprep.subr.mxu0 0.0
        %1119 = vmatpush2.msra.mxu0 0.0
        %1120 = vmatprep.subr.mxu0 0.0
        %1121 = vmatpush2.msra.mxu0 0.0
        %1122 = vmatprep.subr.mxu0 0.0
        %1123 = vmatpush2.msra.mxu0 0.0
        %1124 = vmatprep.subr.mxu0 0.0
        %1125 = vmatpush2.msra.mxu0 0.0
        %1126 = vmatprep.subr.mxu0 0.0
        %1127 = vmatpush2.msra.mxu0 0.0
        %1128 = vmatprep.mubr.f32.mxu0 0.0
        %1129 = vmatmul.mubr.f32.gmra.mxu0 %v1059
        %v1130 = vpop.f32.mrf.mxu0
        %v1131 = vadd.f32 0.0, %v1130
        %v1132 = vpop.f32.mrf.mxu0
        %v1133 = vadd.f32 0.0, %v1132
        %1134 = vmatprep.mubr.f32.mxu0 0.0
        %1135 = vmatmul.mubr.f32.gmra.mxu0 %v1062
        %v1136 = vpop.f32.mrf.mxu0
        %v1137 = vadd.f32 0.0, %v1136
        %v1138 = vpop.f32.mrf.mxu0
        %v1139 = vadd.f32 0.0, %v1138
        %1140 = vdwg.mxu0
        %1141 = vmatprep.subr.mxu0 0.0
        %1142 = vmatpush1.msra.mxu0 0.0
        %1143 = vmatprep.subr.mxu0 0.0
        %1144 = vmatpush1.msra.mxu0 0.0
        %1145 = vmatprep.subr.mxu0 0.0
        %1146 = vmatpush1.msra.mxu0 0.0
        %1147 = vmatprep.subr.mxu0 0.0
        %1148 = vmatpush1.msra.mxu0 0.0
        %1149 = vmatprep.subr.mxu0 0.0
        %1150 = vmatpush1.msra.mxu0 0.0
        %1151 = vmatprep.subr.mxu0 0.0
        %1152 = vmatpush1.msra.mxu0 0.0
        %1153 = vmatprep.subr.mxu0 0.0
        %1154 = vmatpush1.msra.mxu0 0.0
        %1155 = vmatprep.subr.mxu0 0.0
        %1156 = vmatpush1.msra.mxu0 0.0
        %1157 = vmatprep.subr.mxu0 0.0
        %1158 = vmatpush1.msra.mxu0 0.0
        %1159 = vmatprep.subr.mxu0 0.0
        %1160 = vmatpush1.msra.mxu0 0.0
        %1161 = vmatprep.subr.mxu0 0.0
        %1162 = vmatpush1.msra.mxu0 0.0
        %1163 = vmatprep.subr.mxu0 0.0
        %1164 = vmatpush1.msra.mxu0 0.0
        %1165 = vmatprep.subr.mxu0 0.0
        %1166 = vmatpush1.msra.mxu0 0.0
        %1167 = vmatprep.subr.mxu0 0.0
        %1168 = vmatpush1.msra.mxu0 0.0
        %1169 = vmatprep.subr.mxu0 %v322
        %1170 = vmatpush1.msra.mxu0 %v321
        %1171 = vmatprep.subr.mxu0 %v317
        %1172 = vmatpush1.msra.mxu0 %v316
        %1173 = vmatprep.subr.mxu0 0.0
        %1174 = vmatpush2.msra.mxu0 0.0
        %1175 = vmatprep.subr.mxu0 0.0
        %1176 = vmatpush2.msra.mxu0 0.0
        %1177 = vmatprep.subr.mxu0 0.0
        %1178 = vmatpush2.msra.mxu0 0.0
        %1179 = vmatprep.subr.mxu0 0.0
        %1180 = vmatpush2.msra.mxu0 0.0
        %1181 = vmatprep.subr.mxu0 0.0
        %1182 = vmatpush2.msra.mxu0 0.0
        %1183 = vmatprep.subr.mxu0 0.0
        %1184 = vmatpush2.msra.mxu0 0.0
        %1185 = vmatprep.subr.mxu0 0.0
        %1186 = vmatpush2.msra.mxu0 0.0
        %1187 = vmatprep.subr.mxu0 0.0
        %1188 = vmatpush2.msra.mxu0 0.0
        %1189 = vmatprep.subr.mxu0 0.0
        %1190 = vmatpush2.msra.mxu0 0.0
        %1191 = vmatprep.subr.mxu0 0.0
        %1192 = vmatpush2.msra.mxu0 0.0
        %1193 = vmatprep.subr.mxu0 0.0
        %1194 = vmatpush2.msra.mxu0 0.0
        %1195 = vmatprep.subr.mxu0 0.0
        %1196 = vmatpush2.msra.mxu0 0.0
        %1197 = vmatprep.subr.mxu0 0.0
        %1198 = vmatpush2.msra.mxu0 0.0
        %1199 = vmatprep.subr.mxu0 0.0
        %1200 = vmatpush2.msra.mxu0 0.0
        %1201 = vmatprep.subr.mxu0 0.0
        %1202 = vmatpush2.msra.mxu0 0.0
        %1203 = vmatprep.subr.mxu0 0.0
        %1204 = vmatpush2.msra.mxu0 0.0
        %1205 = vmatprep.mubr.f32.mxu0 0.0
        %1206 = vmatmul.mubr.f32.gmra.mxu0 %v1059
        %v1207 = vpop.f32.mrf.mxu0
        %v1208 = vadd.f32 0.0, %v1207
        %v1209 = vpop.f32.mrf.mxu0
        %v1210 = vadd.f32 0.0, %v1209
        %1211 = vmatprep.mubr.f32.mxu0 0.0
        %1212 = vmatmul.mubr.f32.gmra.mxu0 %v1062
        %v1213 = vpop.f32.mrf.mxu0
        %v1214 = vadd.f32 0.0, %v1213
        %v1215 = vpop.f32.mrf.mxu0
        %v1216 = vadd.f32 0.0, %v1215
        %1217 = vdwg.mxu0
        %1218 = vmatprep.subr.mxu0 0.0
        %1219 = vmatpush1.msra.mxu0 0.0
        %1220 = vmatprep.subr.mxu0 0.0
        %1221 = vmatpush1.msra.mxu0 0.0
        %1222 = vmatprep.subr.mxu0 0.0
        %1223 = vmatpush1.msra.mxu0 0.0
        %1224 = vmatprep.subr.mxu0 0.0
        %1225 = vmatpush1.msra.mxu0 0.0
        %1226 = vmatprep.subr.mxu0 0.0
        %1227 = vmatpush1.msra.mxu0 0.0
        %1228 = vmatprep.subr.mxu0 0.0
        %1229 = vmatpush1.msra.mxu0 0.0
        %1230 = vmatprep.subr.mxu0 0.0
        %1231 = vmatpush1.msra.mxu0 0.0
        %1232 = vmatprep.subr.mxu0 0.0
        %1233 = vmatpush1.msra.mxu0 0.0
        %1234 = vmatprep.subr.mxu0 0.0
        %1235 = vmatpush1.msra.mxu0 0.0
        %1236 = vmatprep.subr.mxu0 0.0
        %1237 = vmatpush1.msra.mxu0 0.0
        %1238 = vmatprep.subr.mxu0 0.0
        %1239 = vmatpush1.msra.mxu0 0.0
        %1240 = vmatprep.subr.mxu0 0.0
        %1241 = vmatpush1.msra.mxu0 0.0
        %1242 = vmatprep.subr.mxu0 0.0
        %1243 = vmatpush1.msra.mxu0 0.0
        %1244 = vmatprep.subr.mxu0 0.0
        %1245 = vmatpush1.msra.mxu0 0.0
        %1246 = vmatprep.subr.mxu0 0.0
        %1247 = vmatpush1.msra.mxu0 %v323
        %1248 = vmatprep.subr.mxu0 0.0
        %1249 = vmatpush1.msra.mxu0 %v318
        %1250 = vmatprep.subr.mxu0 0.0
        %1251 = vmatpush2.msra.mxu0 0.0
        %1252 = vmatprep.subr.mxu0 0.0
        %1253 = vmatpush2.msra.mxu0 0.0
        %1254 = vmatprep.subr.mxu0 0.0
        %1255 = vmatpush2.msra.mxu0 0.0
        %1256 = vmatprep.subr.mxu0 0.0
        %1257 = vmatpush2.msra.mxu0 0.0
        %1258 = vmatprep.subr.mxu0 0.0
        %1259 = vmatpush2.msra.mxu0 0.0
        %1260 = vmatprep.subr.mxu0 0.0
        %1261 = vmatpush2.msra.mxu0 0.0
        %1262 = vmatprep.subr.mxu0 0.0
        %1263 = vmatpush2.msra.mxu0 0.0
        %1264 = vmatprep.subr.mxu0 0.0
        %1265 = vmatpush2.msra.mxu0 0.0
        %1266 = vmatprep.subr.mxu0 0.0
        %1267 = vmatpush2.msra.mxu0 0.0
        %1268 = vmatprep.subr.mxu0 0.0
        %1269 = vmatpush2.msra.mxu0 0.0
        %1270 = vmatprep.subr.mxu0 0.0
        %1271 = vmatpush2.msra.mxu0 0.0
        %1272 = vmatprep.subr.mxu0 0.0
        %1273 = vmatpush2.msra.mxu0 0.0
        %1274 = vmatprep.subr.mxu0 0.0
        %1275 = vmatpush2.msra.mxu0 0.0
        %1276 = vmatprep.subr.mxu0 0.0
        %1277 = vmatpush2.msra.mxu0 0.0
        %1278 = vmatprep.subr.mxu0 0.0
        %1279 = vmatpush2.msra.mxu0 0.0
        %1280 = vmatprep.subr.mxu0 0.0
        %1281 = vmatpush2.msra.mxu0 0.0
        %1282 = vmatprep.mubr.f32.mxu0 0.0
        %1283 = vmatmul.mubr.f32.gmra.mxu0 %v1059
        %v1284 = vpop.f32.mrf.mxu0
        %v1285 = vadd.f32 0.0, %v1284
        %v1286 = vpop.f32.mrf.mxu0
        %1287 = vmatprep.mubr.f32.mxu0 0.0
        %1288 = vmatmul.mubr.f32.gmra.mxu0 %v1062
        %v1289 = vpop.f32.mrf.mxu0
        %v1290 = vadd.f32 0.0, %v1289
        %v1291 = vpop.f32.mrf.mxu0
        %1292 = vdwg.mxu0
        %1293 = vmatprep.subr.mxu0 0.0
        %1294 = vmatpush1.msra.mxu0 0.0
        %1295 = vmatprep.subr.mxu0 0.0
        %1296 = vmatpush1.msra.mxu0 0.0
        %1297 = vmatprep.subr.mxu0 0.0
        %1298 = vmatpush1.msra.mxu0 0.0
        %1299 = vmatprep.subr.mxu0 0.0
        %1300 = vmatpush1.msra.mxu0 0.0
        %1301 = vmatprep.subr.mxu0 0.0
        %1302 = vmatpush1.msra.mxu0 0.0
        %1303 = vmatprep.subr.mxu0 0.0
        %1304 = vmatpush1.msra.mxu0 0.0
        %1305 = vmatprep.subr.mxu0 0.0
        %1306 = vmatpush1.msra.mxu0 0.0
        %1307 = vmatprep.subr.mxu0 0.0
        %1308 = vmatpush1.msra.mxu0 0.0
        %1309 = vmatprep.subr.mxu0 0.0
        %1310 = vmatpush1.msra.mxu0 0.0
        %1311 = vmatprep.subr.mxu0 0.0
        %1312 = vmatpush1.msra.mxu0 0.0
        %1313 = vmatprep.subr.mxu0 0.0
        %1314 = vmatpush1.msra.mxu0 0.0
        %1315 = vmatprep.subr.mxu0 0.0
        %1316 = vmatpush1.msra.mxu0 0.0
        %1317 = vmatprep.subr.mxu0 0.0
        %1318 = vmatpush1.msra.mxu0 0.0
        %1319 = vmatprep.subr.mxu0 0.0
        %1320 = vmatpush1.msra.mxu0 0.0
        %1321 = vmatprep.subr.mxu0 %v1139
        %1322 = vmatpush1.msra.mxu0 %v1137
        %1323 = vmatprep.subr.mxu0 %v1133
        %1324 = vmatpush1.msra.mxu0 %v1131
        %1325 = vmatprep.subr.mxu0 0.0
        %1326 = vmatpush2.msra.mxu0 0.0
        %1327 = vmatprep.subr.mxu0 0.0
        %1328 = vmatpush2.msra.mxu0 0.0
        %1329 = vmatprep.subr.mxu0 0.0
        %1330 = vmatpush2.msra.mxu0 0.0
        %1331 = vmatprep.subr.mxu0 0.0
        %1332 = vmatpush2.msra.mxu0 0.0
        %1333 = vmatprep.subr.mxu0 0.0
        %1334 = vmatpush2.msra.mxu0 0.0
        %1335 = vmatprep.subr.mxu0 0.0
        %1336 = vmatpush2.msra.mxu0 0.0
        %1337 = vmatprep.subr.mxu0 0.0
        %1338 = vmatpush2.msra.mxu0 0.0
        %1339 = vmatprep.subr.mxu0 0.0
        %1340 = vmatpush2.msra.mxu0 0.0
        %1341 = vmatprep.subr.mxu0 0.0
        %1342 = vmatpush2.msra.mxu0 0.0
        %1343 = vmatprep.subr.mxu0 0.0
        %1344 = vmatpush2.msra.mxu0 0.0
        %1345 = vmatprep.subr.mxu0 0.0
        %1346 = vmatpush2.msra.mxu0 0.0
        %1347 = vmatprep.subr.mxu0 0.0
        %1348 = vmatpush2.msra.mxu0 0.0
        %1349 = vmatprep.subr.mxu0 0.0
        %1350 = vmatpush2.msra.mxu0 0.0
        %1351 = vmatprep.subr.mxu0 0.0
        %1352 = vmatpush2.msra.mxu0 0.0
        %1353 = vmatprep.subr.mxu0 0.0
        %1354 = vmatpush2.msra.mxu0 0.0
        %1355 = vmatprep.subr.mxu0 0.0
        %1356 = vmatpush2.msra.mxu0 0.0
        %1357 = vmatprep.mubr.f32.mxu0 0.0
        %1358 = vmatmul.mubr.f32.gmra.mxu0 %v598
        %v1359 = vpop.f32.mrf.mxu0
        %v1360 = vadd.f32 0.0, %v1359
        %v1361 = vpop.f32.mrf.mxu0
        %v1362 = vadd.f32 0.0, %v1361
        %1363 = vmatprep.mubr.f32.mxu0 0.0
        %1364 = vmatmul.mubr.f32.gmra.mxu0 %v601
        %v1365 = vpop.f32.mrf.mxu0
        %v1366 = vadd.f32 0.0, %v1365
        %v1367 = vpop.f32.mrf.mxu0
        %v1368 = vadd.f32 0.0, %v1367
        %1369 = vmatprep.mubr.f32.mxu0 0.0
        %1370 = vmatmul.mubr.f32.gmra.mxu0 %v604
        %v1371 = vpop.f32.mrf.mxu0
        %v1372 = vadd.f32 0.0, %v1371
        %v1373 = vpop.f32.mrf.mxu0
        %v1374 = vadd.f32 0.0, %v1373
        %1375 = vmatprep.mubr.f32.mxu0 0.0
        %1376 = vmatmul.mubr.f32.gmra.mxu0 %v607
        %v1377 = vpop.f32.mrf.mxu0
        %v1378 = vadd.f32 0.0, %v1377
        %v1379 = vpop.f32.mrf.mxu0
        %v1380 = vadd.f32 0.0, %v1379
        %1381 = vmatprep.mubr.f32.mxu0 0.0
        %1382 = vmatmul.mubr.f32.gmra.mxu0 %v610
        %v1383 = vpop.f32.mrf.mxu0
        %v1384 = vadd.f32 0.0, %v1383
        %v1385 = vpop.f32.mrf.mxu0
        %v1386 = vadd.f32 0.0, %v1385
        %1387 = vmatprep.mubr.f32.mxu0 0.0
        %1388 = vmatmul.mubr.f32.gmra.mxu0 %v613
        %v1389 = vpop.f32.mrf.mxu0
        %v1390 = vadd.f32 0.0, %v1389
        %v1391 = vpop.f32.mrf.mxu0
        %v1392 = vadd.f32 0.0, %v1391
        %1393 = vmatprep.mubr.f32.mxu0 0.0
        %1394 = vmatmul.mubr.f32.gmra.mxu0 %v616
        %v1395 = vpop.f32.mrf.mxu0
        %v1396 = vadd.f32 0.0, %v1395
        %v1397 = vpop.f32.mrf.mxu0
        %v1398 = vadd.f32 0.0, %v1397
        %1399 = vmatprep.mubr.f32.mxu0 0.0
        %1400 = vmatmul.mubr.f32.gmra.mxu0 %v619
        %v1401 = vpop.f32.mrf.mxu0
        %v1402 = vadd.f32 0.0, %v1401
        %v1403 = vpop.f32.mrf.mxu0
        %v1404 = vadd.f32 0.0, %v1403
        %1405 = vmatprep.mubr.f32.mxu0 0.0
        %1406 = vmatmul.mubr.f32.gmra.mxu0 %v622
        %v1407 = vpop.f32.mrf.mxu0
        %v1408 = vadd.f32 0.0, %v1407
        %v1409 = vpop.f32.mrf.mxu0
        %v1410 = vadd.f32 0.0, %v1409
        %1411 = vmatprep.mubr.f32.mxu0 0.0
        %1412 = vmatmul.mubr.f32.gmra.mxu0 %v625
        %v1413 = vpop.f32.mrf.mxu0
        %v1414 = vadd.f32 0.0, %v1413
        %v1415 = vpop.f32.mrf.mxu0
        %v1416 = vadd.f32 0.0, %v1415
        %1417 = vmatprep.mubr.f32.mxu0 0.0
        %1418 = vmatmul.mubr.f32.gmra.mxu0 %v628
        %v1419 = vpop.f32.mrf.mxu0
        %v1420 = vadd.f32 0.0, %v1419
        %v1421 = vpop.f32.mrf.mxu0
        %v1422 = vadd.f32 0.0, %v1421
        %1423 = vmatprep.mubr.f32.mxu0 0.0
        %1424 = vmatmul.mubr.f32.gmra.mxu0 %v631
        %v1425 = vpop.f32.mrf.mxu0
        %v1426 = vadd.f32 0.0, %v1425
        %v1427 = vpop.f32.mrf.mxu0
        %v1428 = vadd.f32 0.0, %v1427
        %1429 = vdwg.mxu0
        %1430 = vmatprep.subr.mxu0 0.0
        %1431 = vmatpush1.msra.mxu0 0.0
        %1432 = vmatprep.subr.mxu0 0.0
        %1433 = vmatpush1.msra.mxu0 0.0
        %1434 = vmatprep.subr.mxu0 0.0
        %1435 = vmatpush1.msra.mxu0 0.0
        %1436 = vmatprep.subr.mxu0 0.0
        %1437 = vmatpush1.msra.mxu0 0.0
        %1438 = vmatprep.subr.mxu0 0.0
        %1439 = vmatpush1.msra.mxu0 0.0
        %1440 = vmatprep.subr.mxu0 0.0
        %1441 = vmatpush1.msra.mxu0 0.0
        %1442 = vmatprep.subr.mxu0 0.0
        %1443 = vmatpush1.msra.mxu0 0.0
        %1444 = vmatprep.subr.mxu0 0.0
        %1445 = vmatpush1.msra.mxu0 0.0
        %1446 = vmatprep.subr.mxu0 0.0
        %1447 = vmatpush1.msra.mxu0 0.0
        %1448 = vmatprep.subr.mxu0 0.0
        %1449 = vmatpush1.msra.mxu0 0.0
        %1450 = vmatprep.subr.mxu0 0.0
        %1451 = vmatpush1.msra.mxu0 0.0
        %1452 = vmatprep.subr.mxu0 0.0
        %1453 = vmatpush1.msra.mxu0 0.0
        %1454 = vmatprep.subr.mxu0 0.0
        %1455 = vmatpush1.msra.mxu0 0.0
        %1456 = vmatprep.subr.mxu0 0.0
        %1457 = vmatpush1.msra.mxu0 0.0
        %1458 = vmatprep.subr.mxu0 %v1216
        %1459 = vmatpush1.msra.mxu0 %v1214
        %1460 = vmatprep.subr.mxu0 %v1210
        %1461 = vmatpush1.msra.mxu0 %v1208
        %1462 = vmatprep.subr.mxu0 0.0
        %1463 = vmatpush2.msra.mxu0 0.0
        %1464 = vmatprep.subr.mxu0 0.0
        %1465 = vmatpush2.msra.mxu0 0.0
        %1466 = vmatprep.subr.mxu0 0.0
        %1467 = vmatpush2.msra.mxu0 0.0
        %1468 = vmatprep.subr.mxu0 0.0
        %1469 = vmatpush2.msra.mxu0 0.0
        %1470 = vmatprep.subr.mxu0 0.0
        %1471 = vmatpush2.msra.mxu0 0.0
        %1472 = vmatprep.subr.mxu0 0.0
        %1473 = vmatpush2.msra.mxu0 0.0
        %1474 = vmatprep.subr.mxu0 0.0
        %1475 = vmatpush2.msra.mxu0 0.0
        %1476 = vmatprep.subr.mxu0 0.0
        %1477 = vmatpush2.msra.mxu0 0.0
        %1478 = vmatprep.subr.mxu0 0.0
        %1479 = vmatpush2.msra.mxu0 0.0
        %1480 = vmatprep.subr.mxu0 0.0
        %1481 = vmatpush2.msra.mxu0 0.0
        %1482 = vmatprep.subr.mxu0 0.0
        %1483 = vmatpush2.msra.mxu0 0.0
        %1484 = vmatprep.subr.mxu0 0.0
        %1485 = vmatpush2.msra.mxu0 0.0
        %1486 = vmatprep.subr.mxu0 0.0
        %1487 = vmatpush2.msra.mxu0 0.0
        %1488 = vmatprep.subr.mxu0 0.0
        %1489 = vmatpush2.msra.mxu0 0.0
        %1490 = vmatprep.subr.mxu0 0.0
        %1491 = vmatpush2.msra.mxu0 0.0
        %1492 = vmatprep.subr.mxu0 0.0
        %1493 = vmatpush2.msra.mxu0 0.0
        %1494 = vmatprep.mubr.f32.mxu0 0.0
        %1495 = vmatmul.mubr.f32.gmra.mxu0 %v598
        %v1496 = vpop.f32.mrf.mxu0
        %v1497 = vadd.f32 0.0, %v1496
        %v1498 = vpop.f32.mrf.mxu0
        %v1499 = vadd.f32 0.0, %v1498
        %1500 = vmatprep.mubr.f32.mxu0 0.0
        %1501 = vmatmul.mubr.f32.gmra.mxu0 %v601
        %v1502 = vpop.f32.mrf.mxu0
        %v1503 = vadd.f32 0.0, %v1502
        %v1504 = vpop.f32.mrf.mxu0
        %v1505 = vadd.f32 0.0, %v1504
        %1506 = vmatprep.mubr.f32.mxu0 0.0
        %1507 = vmatmul.mubr.f32.gmra.mxu0 %v604
        %v1508 = vpop.f32.mrf.mxu0
        %v1509 = vadd.f32 0.0, %v1508
        %v1510 = vpop.f32.mrf.mxu0
        %v1511 = vadd.f32 0.0, %v1510
        %1512 = vmatprep.mubr.f32.mxu0 0.0
        %1513 = vmatmul.mubr.f32.gmra.mxu0 %v607
        %v1514 = vpop.f32.mrf.mxu0
        %v1515 = vadd.f32 0.0, %v1514
        %v1516 = vpop.f32.mrf.mxu0
        %v1517 = vadd.f32 0.0, %v1516
        %1518 = vmatprep.mubr.f32.mxu0 0.0
        %1519 = vmatmul.mubr.f32.gmra.mxu0 %v610
        %v1520 = vpop.f32.mrf.mxu0
        %v1521 = vadd.f32 0.0, %v1520
        %v1522 = vpop.f32.mrf.mxu0
        %v1523 = vadd.f32 0.0, %v1522
        %1524 = vmatprep.mubr.f32.mxu0 0.0
        %1525 = vmatmul.mubr.f32.gmra.mxu0 %v613
        %v1526 = vpop.f32.mrf.mxu0
        %v1527 = vadd.f32 0.0, %v1526
        %v1528 = vpop.f32.mrf.mxu0
        %v1529 = vadd.f32 0.0, %v1528
        %1530 = vmatprep.mubr.f32.mxu0 0.0
        %1531 = vmatmul.mubr.f32.gmra.mxu0 %v616
        %v1532 = vpop.f32.mrf.mxu0
        %v1533 = vadd.f32 0.0, %v1532
        %v1534 = vpop.f32.mrf.mxu0
        %v1535 = vadd.f32 0.0, %v1534
        %1536 = vmatprep.mubr.f32.mxu0 0.0
        %1537 = vmatmul.mubr.f32.gmra.mxu0 %v619
        %v1538 = vpop.f32.mrf.mxu0
        %v1539 = vadd.f32 0.0, %v1538
        %v1540 = vpop.f32.mrf.mxu0
        %v1541 = vadd.f32 0.0, %v1540
        %1542 = vmatprep.mubr.f32.mxu0 0.0
        %1543 = vmatmul.mubr.f32.gmra.mxu0 %v622
        %v1544 = vpop.f32.mrf.mxu0
        %v1545 = vadd.f32 0.0, %v1544
        %v1546 = vpop.f32.mrf.mxu0
        %v1547 = vadd.f32 0.0, %v1546
        %1548 = vmatprep.mubr.f32.mxu0 0.0
        %1549 = vmatmul.mubr.f32.gmra.mxu0 %v625
        %v1550 = vpop.f32.mrf.mxu0
        %v1551 = vadd.f32 0.0, %v1550
        %v1552 = vpop.f32.mrf.mxu0
        %v1553 = vadd.f32 0.0, %v1552
        %1554 = vmatprep.mubr.f32.mxu0 0.0
        %1555 = vmatmul.mubr.f32.gmra.mxu0 %v628
        %v1556 = vpop.f32.mrf.mxu0
        %v1557 = vadd.f32 0.0, %v1556
        %v1558 = vpop.f32.mrf.mxu0
        %v1559 = vadd.f32 0.0, %v1558
        %1560 = vmatprep.mubr.f32.mxu0 0.0
        %1561 = vmatmul.mubr.f32.gmra.mxu0 %v631
        %v1562 = vpop.f32.mrf.mxu0
        %v1563 = vadd.f32 0.0, %v1562
        %v1564 = vpop.f32.mrf.mxu0
        %v1565 = vadd.f32 0.0, %v1564
        %1566 = vdwg.mxu0
        %1567 = vmatprep.subr.mxu0 0.0
        %1568 = vmatpush1.msra.mxu0 0.0
        %1569 = vmatprep.subr.mxu0 0.0
        %1570 = vmatpush1.msra.mxu0 0.0
        %1571 = vmatprep.subr.mxu0 0.0
        %1572 = vmatpush1.msra.mxu0 0.0
        %1573 = vmatprep.subr.mxu0 0.0
        %1574 = vmatpush1.msra.mxu0 0.0
        %1575 = vmatprep.subr.mxu0 0.0
        %1576 = vmatpush1.msra.mxu0 0.0
        %1577 = vmatprep.subr.mxu0 0.0
        %1578 = vmatpush1.msra.mxu0 0.0
        %1579 = vmatprep.subr.mxu0 0.0
        %1580 = vmatpush1.msra.mxu0 0.0
        %1581 = vmatprep.subr.mxu0 0.0
        %1582 = vmatpush1.msra.mxu0 0.0
        %1583 = vmatprep.subr.mxu0 0.0
        %1584 = vmatpush1.msra.mxu0 0.0
        %1585 = vmatprep.subr.mxu0 0.0
        %1586 = vmatpush1.msra.mxu0 0.0
        %1587 = vmatprep.subr.mxu0 0.0
        %1588 = vmatpush1.msra.mxu0 0.0
        %1589 = vmatprep.subr.mxu0 0.0
        %1590 = vmatpush1.msra.mxu0 0.0
        %1591 = vmatprep.subr.mxu0 0.0
        %1592 = vmatpush1.msra.mxu0 0.0
        %1593 = vmatprep.subr.mxu0 0.0
        %1594 = vmatpush1.msra.mxu0 0.0
        %1595 = vmatprep.subr.mxu0 0.0
        %1596 = vmatpush1.msra.mxu0 %v1290
        %1597 = vmatprep.subr.mxu0 0.0
        %1598 = vmatpush1.msra.mxu0 %v1285
        %1599 = vmatprep.subr.mxu0 0.0
        %1600 = vmatpush2.msra.mxu0 0.0
        %1601 = vmatprep.subr.mxu0 0.0
        %1602 = vmatpush2.msra.mxu0 0.0
        %1603 = vmatprep.subr.mxu0 0.0
        %1604 = vmatpush2.msra.mxu0 0.0
        %1605 = vmatprep.subr.mxu0 0.0
        %1606 = vmatpush2.msra.mxu0 0.0
        %1607 = vmatprep.subr.mxu0 0.0
        %1608 = vmatpush2.msra.mxu0 0.0
        %1609 = vmatprep.subr.mxu0 0.0
        %1610 = vmatpush2.msra.mxu0 0.0
        %1611 = vmatprep.subr.mxu0 0.0
        %1612 = vmatpush2.msra.mxu0 0.0
        %1613 = vmatprep.subr.mxu0 0.0
        %1614 = vmatpush2.msra.mxu0 0.0
        %1615 = vmatprep.subr.mxu0 0.0
        %1616 = vmatpush2.msra.mxu0 0.0
        %1617 = vmatprep.subr.mxu0 0.0
        %1618 = vmatpush2.msra.mxu0 0.0
        %1619 = vmatprep.subr.mxu0 0.0
        %1620 = vmatpush2.msra.mxu0 0.0
        %1621 = vmatprep.subr.mxu0 0.0
        %1622 = vmatpush2.msra.mxu0 0.0
        %1623 = vmatprep.subr.mxu0 0.0
        %1624 = vmatpush2.msra.mxu0 0.0
        %1625 = vmatprep.subr.mxu0 0.0
        %1626 = vmatpush2.msra.mxu0 0.0
        %1627 = vmatprep.subr.mxu0 0.0
        %1628 = vmatpush2.msra.mxu0 0.0
        %1629 = vmatprep.subr.mxu0 0.0
        %1630 = vmatpush2.msra.mxu0 0.0
        %1631 = vmatprep.mubr.f32.mxu0 0.0
        %1632 = vmatmul.mubr.f32.gmra.mxu0 %v598
        %v1633 = vpop.f32.mrf.mxu0
        %v1634 = vadd.f32 0.0, %v1633
        %v1635 = vpop.f32.mrf.mxu0
        %1636 = vmatprep.mubr.f32.mxu0 0.0
        %1637 = vmatmul.mubr.f32.gmra.mxu0 %v601
        %v1638 = vpop.f32.mrf.mxu0
        %v1639 = vadd.f32 0.0, %v1638
        %v1640 = vpop.f32.mrf.mxu0
        %1641 = vmatprep.mubr.f32.mxu0 0.0
        %1642 = vmatmul.mubr.f32.gmra.mxu0 %v604
        %v1643 = vpop.f32.mrf.mxu0
        %v1644 = vadd.f32 0.0, %v1643
        %v1645 = vpop.f32.mrf.mxu0
        %1646 = vmatprep.mubr.f32.mxu0 0.0
        %1647 = vmatmul.mubr.f32.gmra.mxu0 %v607
        %v1648 = vpop.f32.mrf.mxu0
        %v1649 = vadd.f32 0.0, %v1648
        %v1650 = vpop.f32.mrf.mxu0
        %1651 = vmatprep.mubr.f32.mxu0 0.0
        %1652 = vmatmul.mubr.f32.gmra.mxu0 %v610
        %v1653 = vpop.f32.mrf.mxu0
        %v1654 = vadd.f32 0.0, %v1653
        %v1655 = vpop.f32.mrf.mxu0
        %1656 = vmatprep.mubr.f32.mxu0 0.0
        %1657 = vmatmul.mubr.f32.gmra.mxu0 %v613
        %v1658 = vpop.f32.mrf.mxu0
        %v1659 = vadd.f32 0.0, %v1658
        %v1660 = vpop.f32.mrf.mxu0
        %1661 = vmatprep.mubr.f32.mxu0 0.0
        %1662 = vmatmul.mubr.f32.gmra.mxu0 %v616
        %v1663 = vpop.f32.mrf.mxu0
        %v1664 = vadd.f32 0.0, %v1663
        %v1665 = vpop.f32.mrf.mxu0
        %1666 = vmatprep.mubr.f32.mxu0 0.0
        %1667 = vmatmul.mubr.f32.gmra.mxu0 %v619
        %v1668 = vpop.f32.mrf.mxu0
        %v1669 = vadd.f32 0.0, %v1668
        %v1670 = vpop.f32.mrf.mxu0
        %1671 = vmatprep.mubr.f32.mxu0 0.0
        %1672 = vmatmul.mubr.f32.gmra.mxu0 %v622
        %v1673 = vpop.f32.mrf.mxu0
        %v1674 = vadd.f32 0.0, %v1673
        %v1675 = vpop.f32.mrf.mxu0
        %1676 = vmatprep.mubr.f32.mxu0 0.0
        %1677 = vmatmul.mubr.f32.gmra.mxu0 %v625
        %v1678 = vpop.f32.mrf.mxu0
        %v1679 = vadd.f32 0.0, %v1678
        %v1680 = vpop.f32.mrf.mxu0
        %1681 = vmatprep.mubr.f32.mxu0 0.0
        %1682 = vmatmul.mubr.f32.gmra.mxu0 %v628
        %v1683 = vpop.f32.mrf.mxu0
        %v1684 = vadd.f32 0.0, %v1683
        %v1685 = vpop.f32.mrf.mxu0
        %1686 = vmatprep.mubr.f32.mxu0 0.0
        %1687 = vmatmul.mubr.f32.gmra.mxu0 %v631
        %v1688 = vpop.f32.mrf.mxu0
        %v1689 = vadd.f32 0.0, %v1688
        %v1690 = vpop.f32.mrf.mxu0
        %1691 = vdwg.mxu0
        %vm1692 = vcmp.gt.f32.partialorder %v1360, %v700
        %vm1693 = vcmp.gt.f32.partialorder %v1362, %v702
        %vm1694 = vcmp.gt.f32.partialorder %v1497, %v837
        %vm1695 = vcmp.gt.f32.partialorder %v1499, %v839
        %vm1696 = vcmp.gt.f32.partialorder %v1634, %v974
        %vm1697 = vcmp.gt.f32.partialorder %v1366, %v706
        %vm1698 = vcmp.gt.f32.partialorder %v1368, %v708
        %vm1699 = vcmp.gt.f32.partialorder %v1503, %v843
        %vm1700 = vcmp.gt.f32.partialorder %v1505, %v845
        %vm1701 = vcmp.gt.f32.partialorder %v1639, %v979
        %vm1702 = vcmp.gt.f32.partialorder %v1372, %v712
        %vm1703 = vcmp.gt.f32.partialorder %v1374, %v714
        %vm1704 = vcmp.gt.f32.partialorder %v1509, %v849
        %vm1705 = vcmp.gt.f32.partialorder %v1511, %v851
        %vm1706 = vcmp.gt.f32.partialorder %v1644, %v984
        %vm1707 = vcmp.gt.f32.partialorder %v1378, %v718
        %vm1708 = vcmp.gt.f32.partialorder %v1380, %v720
        %vm1709 = vcmp.gt.f32.partialorder %v1515, %v855
        %vm1710 = vcmp.gt.f32.partialorder %v1517, %v857
        %vm1711 = vcmp.gt.f32.partialorder %v1649, %v989
        %vm1712 = vcmp.gt.f32.partialorder %v1384, %v724
        %vm1713 = vcmp.gt.f32.partialorder %v1386, %v726
        %vm1714 = vcmp.gt.f32.partialorder %v1521, %v861
        %vm1715 = vcmp.gt.f32.partialorder %v1523, %v863
        %vm1716 = vcmp.gt.f32.partialorder %v1654, %v994
        %vm1717 = vcmp.gt.f32.partialorder %v1390, %v730
        %vm1718 = vcmp.gt.f32.partialorder %v1392, %v732
        %vm1719 = vcmp.gt.f32.partialorder %v1527, %v867
        %vm1720 = vcmp.gt.f32.partialorder %v1529, %v869
        %vm1721 = vcmp.gt.f32.partialorder %v1659, %v999
        %vm1722 = vcmp.gt.f32.partialorder %v1396, %v736
        %vm1723 = vcmp.gt.f32.partialorder %v1398, %v738
        %vm1724 = vcmp.gt.f32.partialorder %v1533, %v873
        %vm1725 = vcmp.gt.f32.partialorder %v1535, %v875
        %vm1726 = vcmp.gt.f32.partialorder %v1664, %v1004
        %vm1727 = vcmp.gt.f32.partialorder %v1402, %v742
        %vm1728 = vcmp.gt.f32.partialorder %v1404, %v744
        %vm1729 = vcmp.gt.f32.partialorder %v1539, %v879
        %vm1730 = vcmp.gt.f32.partialorder %v1541, %v881
        %vm1731 = vcmp.gt.f32.partialorder %v1669, %v1009
        %vm1732 = vcmp.gt.f32.partialorder %v1408, %v748
        %vm1733 = vcmp.gt.f32.partialorder %v1410, %v750
        %vm1734 = vcmp.gt.f32.partialorder %v1545, %v885
        %vm1735 = vcmp.gt.f32.partialorder %v1547, %v887
        %vm1736 = vcmp.gt.f32.partialorder %v1674, %v1014
        %vm1737 = vcmp.gt.f32.partialorder %v1414, %v754
        %vm1738 = vcmp.gt.f32.partialorder %v1416, %v756
        %vm1739 = vcmp.gt.f32.partialorder %v1551, %v891
        %vm1740 = vcmp.gt.f32.partialorder %v1553, %v893
        %vm1741 = vcmp.gt.f32.partialorder %v1679, %v1019
        %vm1742 = vcmp.gt.f32.partialorder %v1420, %v760
        %vm1743 = vcmp.gt.f32.partialorder %v1422, %v762
        %vm1744 = vcmp.gt.f32.partialorder %v1557, %v897
        %vm1745 = vcmp.gt.f32.partialorder %v1559, %v899
        %vm1746 = vcmp.gt.f32.partialorder %v1684, %v1024
        %vm1747 = vcmp.gt.f32.partialorder %v1426, %v766
        %vm1748 = vcmp.gt.f32.partialorder %v1428, %v768
        %vm1749 = vcmp.gt.f32.partialorder %v1563, %v903
        %vm1750 = vcmp.gt.f32.partialorder %v1565, %v905
        %vm1751 = vcmp.gt.f32.partialorder %v1689, %v1029
        %v1752 = vsel %vm1692, %v1360, %v700
        %v1753 = vsel %vm1693, %v1362, %v702
        %v1754 = vsel %vm1694, %v1497, %v837
        %v1755 = vsel %vm1695, %v1499, %v839
        %v1756 = vsel %vm1696, %v1634, %v974
        %v1757 = vsel %vm1697, %v1366, %v706
        %v1758 = vsel %vm1698, %v1368, %v708
        %v1759 = vsel %vm1699, %v1503, %v843
        %v1760 = vsel %vm1700, %v1505, %v845
        %v1761 = vsel %vm1701, %v1639, %v979
        %v1762 = vsel %vm1702, %v1372, %v712
        %v1763 = vsel %vm1703, %v1374, %v714
        %v1764 = vsel %vm1704, %v1509, %v849
        %v1765 = vsel %vm1705, %v1511, %v851
        %v1766 = vsel %vm1706, %v1644, %v984
        %v1767 = vsel %vm1707, %v1378, %v718
        %v1768 = vsel %vm1708, %v1380, %v720
        %v1769 = vsel %vm1709, %v1515, %v855
        %v1770 = vsel %vm1710, %v1517, %v857
        %v1771 = vsel %vm1711, %v1649, %v989
        %v1772 = vsel %vm1712, %v1384, %v724
        %v1773 = vsel %vm1713, %v1386, %v726
        %v1774 = vsel %vm1714, %v1521, %v861
        %v1775 = vsel %vm1715, %v1523, %v863
        %v1776 = vsel %vm1716, %v1654, %v994
        %v1777 = vsel %vm1717, %v1390, %v730
        %v1778 = vsel %vm1718, %v1392, %v732
        %v1779 = vsel %vm1719, %v1527, %v867
        %v1780 = vsel %vm1720, %v1529, %v869
        %v1781 = vsel %vm1721, %v1659, %v999
        %v1782 = vsel %vm1722, %v1396, %v736
        %v1783 = vsel %vm1723, %v1398, %v738
        %v1784 = vsel %vm1724, %v1533, %v873
        %v1785 = vsel %vm1725, %v1535, %v875
        %v1786 = vsel %vm1726, %v1664, %v1004
        %v1787 = vsel %vm1727, %v1402, %v742
        %v1788 = vsel %vm1728, %v1404, %v744
        %v1789 = vsel %vm1729, %v1539, %v879
        %v1790 = vsel %vm1730, %v1541, %v881
        %v1791 = vsel %vm1731, %v1669, %v1009
        %v1792 = vsel %vm1732, %v1408, %v748
        %v1793 = vsel %vm1733, %v1410, %v750
        %v1794 = vsel %vm1734, %v1545, %v885
        %v1795 = vsel %vm1735, %v1547, %v887
        %v1796 = vsel %vm1736, %v1674, %v1014
        %v1797 = vsel %vm1737, %v1414, %v754
        %v1798 = vsel %vm1738, %v1416, %v756
        %v1799 = vsel %vm1739, %v1551, %v891
        %v1800 = vsel %vm1740, %v1553, %v893
        %v1801 = vsel %vm1741, %v1679, %v1019
        %v1802 = vsel %vm1742, %v1420, %v760
        %v1803 = vsel %vm1743, %v1422, %v762
        %v1804 = vsel %vm1744, %v1557, %v897
        %v1805 = vsel %vm1745, %v1559, %v899
        %v1806 = vsel %vm1746, %v1684, %v1024
        %v1807 = vsel %vm1747, %v1426, %v766
        %v1808 = vsel %vm1748, %v1428, %v768
        %v1809 = vsel %vm1749, %v1563, %v903
        %v1810 = vsel %vm1750, %v1565, %v905
        %v1811 = vsel %vm1751, %v1689, %v1029
        %v1812 = vsel %vm1692, 1, 0
        %v1813 = vsel %vm1693, 1, 0
        %v1814 = vsel %vm1694, 1, 0
        %v1815 = vsel %vm1695, 1, 0
        %v1816 = vsel %vm1696, 1, 0
        %v1817 = vsel %vm1697, 1, 0
        %v1818 = vsel %vm1698, 1, 0
        %v1819 = vsel %vm1699, 1, 0
        %v1820 = vsel %vm1700, 1, 0
        %v1821 = vsel %vm1701, 1, 0
        %v1822 = vsel %vm1702, 1, 0
        %v1823 = vsel %vm1703, 1, 0
        %v1824 = vsel %vm1704, 1, 0
        %v1825 = vsel %vm1705, 1, 0
        %v1826 = vsel %vm1706, 1, 0
        %v1827 = vsel %vm1707, 1, 0
        %v1828 = vsel %vm1708, 1, 0
        %v1829 = vsel %vm1709, 1, 0
        %v1830 = vsel %vm1710, 1, 0
        %v1831 = vsel %vm1711, 1, 0
        %v1832 = vsel %vm1712, 1, 0
        %v1833 = vsel %vm1713, 1, 0
        %v1834 = vsel %vm1714, 1, 0
        %v1835 = vsel %vm1715, 1, 0
        %v1836 = vsel %vm1716, 1, 0
        %v1837 = vsel %vm1717, 1, 0
        %v1838 = vsel %vm1718, 1, 0
        %v1839 = vsel %vm1719, 1, 0
        %v1840 = vsel %vm1720, 1, 0
        %v1841 = vsel %vm1721, 1, 0
        %v1842 = vsel %vm1722, 1, 0
        %v1843 = vsel %vm1723, 1, 0
        %v1844 = vsel %vm1724, 1, 0
        %v1845 = vsel %vm1725, 1, 0
        %v1846 = vsel %vm1726, 1, 0
        %v1847 = vsel %vm1727, 1, 0
        %v1848 = vsel %vm1728, 1, 0
        %v1849 = vsel %vm1729, 1, 0
        %v1850 = vsel %vm1730, 1, 0
        %v1851 = vsel %vm1731, 1, 0
        %v1852 = vsel %vm1732, 1, 0
        %v1853 = vsel %vm1733, 1, 0
        %v1854 = vsel %vm1734, 1, 0
        %v1855 = vsel %vm1735, 1, 0
        %v1856 = vsel %vm1736, 1, 0
        %v1857 = vsel %vm1737, 1, 0
        %v1858 = vsel %vm1738, 1, 0
        %v1859 = vsel %vm1739, 1, 0
        %v1860 = vsel %vm1740, 1, 0
        %v1861 = vsel %vm1741, 1, 0
        %v1862 = vsel %vm1742, 1, 0
        %v1863 = vsel %vm1743, 1, 0
        %v1864 = vsel %vm1744, 1, 0
        %v1865 = vsel %vm1745, 1, 0
        %v1866 = vsel %vm1746, 1, 0
        %v1867 = vsel %vm1747, 1, 0
        %v1868 = vsel %vm1748, 1, 0
        %v1869 = vsel %vm1749, 1, 0
        %v1870 = vsel %vm1750, 1, 0
        %v1871 = vsel %vm1751, 1, 0
        %s1872 = sld [smem:[#allocation2 + $0x100]]
        %v1873 = vstv %s1872
        %v1874 = vmul.f32 %v324, %v1873
        %v1875 = vmul.f32 %v325, %v1873
        %s1876 = sld [smem:[#allocation2 + $0x101]]
        %v1877 = vstv %s1876
        %v1878 = vmul.f32 %v327, %v1877
        %v1879 = vmul.f32 %v328, %v1877
        %v1880 = vadd.f32 %v1874, %v1878
        %v1881 = vadd.f32 %v1875, %v1879
        %s1882 = sld [smem:[#allocation2 + $0x102]]
        %v1883 = vstv %s1882
        %v1884 = vmul.f32 %v330, %v1883
        %v1885 = vmul.f32 %v331, %v1883
        %v1886 = vadd.f32 %v1880, %v1884
        %v1887 = vadd.f32 %v1881, %v1885
        %s1888 = sld [smem:[#allocation2 + $0x103]]
        %v1889 = vstv %s1888
        %v1890 = vmul.f32 %v333, %v1889
        %v1891 = vmul.f32 %v334, %v1889
        %v1892 = vadd.f32 %v1886, %v1890
        %v1893 = vadd.f32 %v1887, %v1891
        %s1894 = sld [smem:[#allocation6 + $0x2]]
        %v1895 = vstv %s1894
        %v1896 = vadd.f32 %v1892, %v1895
        %v1897 = vadd.f32 %v1893, %v1895
        %v1899 = vsel %vm361, %v1896, 0
        %v1902 = vsel %vm361, %v1897, 0
        %1904 = vmatprep.subr.mxu0 0.0
        %1905 = vmatpush1.msra.mxu0 0.0
        %1906 = vmatprep.subr.mxu0 0.0
        %1907 = vmatpush1.msra.mxu0 0.0
        %1908 = vmatprep.subr.mxu0 0.0
        %1909 = vmatpush1.msra.mxu0 0.0
        %1910 = vmatprep.subr.mxu0 0.0
        %1911 = vmatpush1.msra.mxu0 0.0
        %1912 = vmatprep.subr.mxu0 0.0
        %1913 = vmatpush1.msra.mxu0 0.0
        %1914 = vmatprep.subr.mxu0 0.0
        %1915 = vmatpush1.msra.mxu0 0.0
        %1916 = vmatprep.subr.mxu0 0.0
        %1917 = vmatpush1.msra.mxu0 0.0
        %1918 = vmatprep.subr.mxu0 0.0
        %1919 = vmatpush1.msra.mxu0 0.0
        %1920 = vmatprep.subr.mxu0 0.0
        %1921 = vmatpush1.msra.mxu0 0.0
        %1922 = vmatprep.subr.mxu0 0.0
        %1923 = vmatpush1.msra.mxu0 0.0
        %1924 = vmatprep.subr.mxu0 0.0
        %1925 = vmatpush1.msra.mxu0 0.0
        %1926 = vmatprep.subr.mxu0 0.0
        %1927 = vmatpush1.msra.mxu0 0.0
        %1928 = vmatprep.subr.mxu0 0.0
        %1929 = vmatpush1.msra.mxu0 0.0
        %1930 = vmatprep.subr.mxu0 0.0
        %1931 = vmatpush1.msra.mxu0 0.0
        %1932 = vmatprep.subr.mxu0 %v320
        %1933 = vmatpush1.msra.mxu0 %v319
        %1934 = vmatprep.subr.mxu0 %v315
        %1935 = vmatpush1.msra.mxu0 %v314
        %1936 = vmatprep.subr.mxu0 0.0
        %1937 = vmatpush2.msra.mxu0 0.0
        %1938 = vmatprep.subr.mxu0 0.0
        %1939 = vmatpush2.msra.mxu0 0.0
        %1940 = vmatprep.subr.mxu0 0.0
        %1941 = vmatpush2.msra.mxu0 0.0
        %1942 = vmatprep.subr.mxu0 0.0
        %1943 = vmatpush2.msra.mxu0 0.0
        %1944 = vmatprep.subr.mxu0 0.0
        %1945 = vmatpush2.msra.mxu0 0.0
        %1946 = vmatprep.subr.mxu0 0.0
        %1947 = vmatpush2.msra.mxu0 0.0
        %1948 = vmatprep.subr.mxu0 0.0
        %1949 = vmatpush2.msra.mxu0 0.0
        %1950 = vmatprep.subr.mxu0 0.0
        %1951 = vmatpush2.msra.mxu0 0.0
        %1952 = vmatprep.subr.mxu0 0.0
        %1953 = vmatpush2.msra.mxu0 0.0
        %1954 = vmatprep.subr.mxu0 0.0
        %1955 = vmatpush2.msra.mxu0 0.0
        %1956 = vmatprep.subr.mxu0 0.0
        %1957 = vmatpush2.msra.mxu0 0.0
        %1958 = vmatprep.subr.mxu0 0.0
        %1959 = vmatpush2.msra.mxu0 0.0
        %1960 = vmatprep.subr.mxu0 0.0
        %1961 = vmatpush2.msra.mxu0 0.0
        %1962 = vmatprep.subr.mxu0 0.0
        %1963 = vmatpush2.msra.mxu0 0.0
        %1964 = vmatprep.subr.mxu0 0.0
        %1965 = vmatpush2.msra.mxu0 0.0
        %1966 = vmatprep.subr.mxu0 0.0
        %1967 = vmatpush2.msra.mxu0 0.0
        %1968 = vmatprep.mubr.f32.mxu0 0.0
        %1969 = vmatmul.mubr.f32.gmra.mxu0 %v1899
        %v1970 = vpop.f32.mrf.mxu0
        %v1971 = vadd.f32 0.0, %v1970
        %v1972 = vpop.f32.mrf.mxu0
        %v1973 = vadd.f32 0.0, %v1972
        %1974 = vmatprep.mubr.f32.mxu0 0.0
        %1975 = vmatmul.mubr.f32.gmra.mxu0 %v1902
        %v1976 = vpop.f32.mrf.mxu0
        %v1977 = vadd.f32 0.0, %v1976
        %v1978 = vpop.f32.mrf.mxu0
        %v1979 = vadd.f32 0.0, %v1978
        %1980 = vdwg.mxu0
        %1981 = vmatprep.subr.mxu0 0.0
        %1982 = vmatpush1.msra.mxu0 0.0
        %1983 = vmatprep.subr.mxu0 0.0
        %1984 = vmatpush1.msra.mxu0 0.0
        %1985 = vmatprep.subr.mxu0 0.0
        %1986 = vmatpush1.msra.mxu0 0.0
        %1987 = vmatprep.subr.mxu0 0.0
        %1988 = vmatpush1.msra.mxu0 0.0
        %1989 = vmatprep.subr.mxu0 0.0
        %1990 = vmatpush1.msra.mxu0 0.0
        %1991 = vmatprep.subr.mxu0 0.0
        %1992 = vmatpush1.msra.mxu0 0.0
        %1993 = vmatprep.subr.mxu0 0.0
        %1994 = vmatpush1.msra.mxu0 0.0
        %1995 = vmatprep.subr.mxu0 0.0
        %1996 = vmatpush1.msra.mxu0 0.0
        %1997 = vmatprep.subr.mxu0 0.0
        %1998 = vmatpush1.msra.mxu0 0.0
        %1999 = vmatprep.subr.mxu0 0.0
        %2000 = vmatpush1.msra.mxu0 0.0
        %2001 = vmatprep.subr.mxu0 0.0
        %2002 = vmatpush1.msra.mxu0 0.0
        %2003 = vmatprep.subr.mxu0 0.0
        %2004 = vmatpush1.msra.mxu0 0.0
        %2005 = vmatprep.subr.mxu0 0.0
        %2006 = vmatpush1.msra.mxu0 0.0
        %2007 = vmatprep.subr.mxu0 0.0
        %2008 = vmatpush1.msra.mxu0 0.0
        %2009 = vmatprep.subr.mxu0 %v322
        %2010 = vmatpush1.msra.mxu0 %v321
        %2011 = vmatprep.subr.mxu0 %v317
        %2012 = vmatpush1.msra.mxu0 %v316
        %2013 = vmatprep.subr.mxu0 0.0
        %2014 = vmatpush2.msra.mxu0 0.0
        %2015 = vmatprep.subr.mxu0 0.0
        %2016 = vmatpush2.msra.mxu0 0.0
        %2017 = vmatprep.subr.mxu0 0.0
        %2018 = vmatpush2.msra.mxu0 0.0
        %2019 = vmatprep.subr.mxu0 0.0
        %2020 = vmatpush2.msra.mxu0 0.0
        %2021 = vmatprep.subr.mxu0 0.0
        %2022 = vmatpush2.msra.mxu0 0.0
        %2023 = vmatprep.subr.mxu0 0.0
        %2024 = vmatpush2.msra.mxu0 0.0
        %2025 = vmatprep.subr.mxu0 0.0
        %2026 = vmatpush2.msra.mxu0 0.0
        %2027 = vmatprep.subr.mxu0 0.0
        %2028 = vmatpush2.msra.mxu0 0.0
        %2029 = vmatprep.subr.mxu0 0.0
        %2030 = vmatpush2.msra.mxu0 0.0
        %2031 = vmatprep.subr.mxu0 0.0
        %2032 = vmatpush2.msra.mxu0 0.0
        %2033 = vmatprep.subr.mxu0 0.0
        %2034 = vmatpush2.msra.mxu0 0.0
        %2035 = vmatprep.subr.mxu0 0.0
        %2036 = vmatpush2.msra.mxu0 0.0
        %2037 = vmatprep.subr.mxu0 0.0
        %2038 = vmatpush2.msra.mxu0 0.0
        %2039 = vmatprep.subr.mxu0 0.0
        %2040 = vmatpush2.msra.mxu0 0.0
        %2041 = vmatprep.subr.mxu0 0.0
        %2042 = vmatpush2.msra.mxu0 0.0
        %2043 = vmatprep.subr.mxu0 0.0
        %2044 = vmatpush2.msra.mxu0 0.0
        %2045 = vmatprep.mubr.f32.mxu0 0.0
        %2046 = vmatmul.mubr.f32.gmra.mxu0 %v1899
        %v2047 = vpop.f32.mrf.mxu0
        %v2048 = vadd.f32 0.0, %v2047
        %v2049 = vpop.f32.mrf.mxu0
        %v2050 = vadd.f32 0.0, %v2049
        %2051 = vmatprep.mubr.f32.mxu0 0.0
        %2052 = vmatmul.mubr.f32.gmra.mxu0 %v1902
        %v2053 = vpop.f32.mrf.mxu0
        %v2054 = vadd.f32 0.0, %v2053
        %v2055 = vpop.f32.mrf.mxu0
        %v2056 = vadd.f32 0.0, %v2055
        %2057 = vdwg.mxu0
        %2058 = vmatprep.subr.mxu0 0.0
        %2059 = vmatpush1.msra.mxu0 0.0
        %2060 = vmatprep.subr.mxu0 0.0
        %2061 = vmatpush1.msra.mxu0 0.0
        %2062 = vmatprep.subr.mxu0 0.0
        %2063 = vmatpush1.msra.mxu0 0.0
        %2064 = vmatprep.subr.mxu0 0.0
        %2065 = vmatpush1.msra.mxu0 0.0
        %2066 = vmatprep.subr.mxu0 0.0
        %2067 = vmatpush1.msra.mxu0 0.0
        %2068 = vmatprep.subr.mxu0 0.0
        %2069 = vmatpush1.msra.mxu0 0.0
        %2070 = vmatprep.subr.mxu0 0.0
        %2071 = vmatpush1.msra.mxu0 0.0
        %2072 = vmatprep.subr.mxu0 0.0
        %2073 = vmatpush1.msra.mxu0 0.0
        %2074 = vmatprep.subr.mxu0 0.0
        %2075 = vmatpush1.msra.mxu0 0.0
        %2076 = vmatprep.subr.mxu0 0.0
        %2077 = vmatpush1.msra.mxu0 0.0
        %2078 = vmatprep.subr.mxu0 0.0
        %2079 = vmatpush1.msra.mxu0 0.0
        %2080 = vmatprep.subr.mxu0 0.0
        %2081 = vmatpush1.msra.mxu0 0.0
        %2082 = vmatprep.subr.mxu0 0.0
        %2083 = vmatpush1.msra.mxu0 0.0
        %2084 = vmatprep.subr.mxu0 0.0
        %2085 = vmatpush1.msra.mxu0 0.0
        %2086 = vmatprep.subr.mxu0 0.0
        %2087 = vmatpush1.msra.mxu0 %v323
        %2088 = vmatprep.subr.mxu0 0.0
        %2089 = vmatpush1.msra.mxu0 %v318
        %2090 = vmatprep.subr.mxu0 0.0
        %2091 = vmatpush2.msra.mxu0 0.0
        %2092 = vmatprep.subr.mxu0 0.0
        %2093 = vmatpush2.msra.mxu0 0.0
        %2094 = vmatprep.subr.mxu0 0.0
        %2095 = vmatpush2.msra.mxu0 0.0
        %2096 = vmatprep.subr.mxu0 0.0
        %2097 = vmatpush2.msra.mxu0 0.0
        %2098 = vmatprep.subr.mxu0 0.0
        %2099 = vmatpush2.msra.mxu0 0.0
        %2100 = vmatprep.subr.mxu0 0.0
        %2101 = vmatpush2.msra.mxu0 0.0
        %2102 = vmatprep.subr.mxu0 0.0
        %2103 = vmatpush2.msra.mxu0 0.0
        %2104 = vmatprep.subr.mxu0 0.0
        %2105 = vmatpush2.msra.mxu0 0.0
        %2106 = vmatprep.subr.mxu0 0.0
        %2107 = vmatpush2.msra.mxu0 0.0
        %2108 = vmatprep.subr.mxu0 0.0
        %2109 = vmatpush2.msra.mxu0 0.0
        %2110 = vmatprep.subr.mxu0 0.0
        %2111 = vmatpush2.msra.mxu0 0.0
        %2112 = vmatprep.subr.mxu0 0.0
        %2113 = vmatpush2.msra.mxu0 0.0
        %2114 = vmatprep.subr.mxu0 0.0
        %2115 = vmatpush2.msra.mxu0 0.0
        %2116 = vmatprep.subr.mxu0 0.0
        %2117 = vmatpush2.msra.mxu0 0.0
        %2118 = vmatprep.subr.mxu0 0.0
        %2119 = vmatpush2.msra.mxu0 0.0
        %2120 = vmatprep.subr.mxu0 0.0
        %2121 = vmatpush2.msra.mxu0 0.0
        %2122 = vmatprep.mubr.f32.mxu0 0.0
        %2123 = vmatmul.mubr.f32.gmra.mxu0 %v1899
        %v2124 = vpop.f32.mrf.mxu0
        %v2125 = vadd.f32 0.0, %v2124
        %v2126 = vpop.f32.mrf.mxu0
        %2127 = vmatprep.mubr.f32.mxu0 0.0
        %2128 = vmatmul.mubr.f32.gmra.mxu0 %v1902
        %v2129 = vpop.f32.mrf.mxu0
        %v2130 = vadd.f32 0.0, %v2129
        %v2131 = vpop.f32.mrf.mxu0
        %2132 = vdwg.mxu0
        %2133 = vmatprep.subr.mxu0 0.0
        %2134 = vmatpush1.msra.mxu0 0.0
        %2135 = vmatprep.subr.mxu0 0.0
        %2136 = vmatpush1.msra.mxu0 0.0
        %2137 = vmatprep.subr.mxu0 0.0
        %2138 = vmatpush1.msra.mxu0 0.0
        %2139 = vmatprep.subr.mxu0 0.0
        %2140 = vmatpush1.msra.mxu0 0.0
        %2141 = vmatprep.subr.mxu0 0.0
        %2142 = vmatpush1.msra.mxu0 0.0
        %2143 = vmatprep.subr.mxu0 0.0
        %2144 = vmatpush1.msra.mxu0 0.0
        %2145 = vmatprep.subr.mxu0 0.0
        %2146 = vmatpush1.msra.mxu0 0.0
        %2147 = vmatprep.subr.mxu0 0.0
        %2148 = vmatpush1.msra.mxu0 0.0
        %2149 = vmatprep.subr.mxu0 0.0
        %2150 = vmatpush1.msra.mxu0 0.0
        %2151 = vmatprep.subr.mxu0 0.0
        %2152 = vmatpush1.msra.mxu0 0.0
        %2153 = vmatprep.subr.mxu0 0.0
        %2154 = vmatpush1.msra.mxu0 0.0
        %2155 = vmatprep.subr.mxu0 0.0
        %2156 = vmatpush1.msra.mxu0 0.0
        %2157 = vmatprep.subr.mxu0 0.0
        %2158 = vmatpush1.msra.mxu0 0.0
        %2159 = vmatprep.subr.mxu0 0.0
        %2160 = vmatpush1.msra.mxu0 0.0
        %2161 = vmatprep.subr.mxu0 %v1979
        %2162 = vmatpush1.msra.mxu0 %v1977
        %2163 = vmatprep.subr.mxu0 %v1973
        %2164 = vmatpush1.msra.mxu0 %v1971
        %2165 = vmatprep.subr.mxu0 0.0
        %2166 = vmatpush2.msra.mxu0 0.0
        %2167 = vmatprep.subr.mxu0 0.0
        %2168 = vmatpush2.msra.mxu0 0.0
        %2169 = vmatprep.subr.mxu0 0.0
        %2170 = vmatpush2.msra.mxu0 0.0
        %2171 = vmatprep.subr.mxu0 0.0
        %2172 = vmatpush2.msra.mxu0 0.0
        %2173 = vmatprep.subr.mxu0 0.0
        %2174 = vmatpush2.msra.mxu0 0.0
        %2175 = vmatprep.subr.mxu0 0.0
        %2176 = vmatpush2.msra.mxu0 0.0
        %2177 = vmatprep.subr.mxu0 0.0
        %2178 = vmatpush2.msra.mxu0 0.0
        %2179 = vmatprep.subr.mxu0 0.0
        %2180 = vmatpush2.msra.mxu0 0.0
        %2181 = vmatprep.subr.mxu0 0.0
        %2182 = vmatpush2.msra.mxu0 0.0
        %2183 = vmatprep.subr.mxu0 0.0
        %2184 = vmatpush2.msra.mxu0 0.0
        %2185 = vmatprep.subr.mxu0 0.0
        %2186 = vmatpush2.msra.mxu0 0.0
        %2187 = vmatprep.subr.mxu0 0.0
        %2188 = vmatpush2.msra.mxu0 0.0
        %2189 = vmatprep.subr.mxu0 0.0
        %2190 = vmatpush2.msra.mxu0 0.0
        %2191 = vmatprep.subr.mxu0 0.0
        %2192 = vmatpush2.msra.mxu0 0.0
        %2193 = vmatprep.subr.mxu0 0.0
        %2194 = vmatpush2.msra.mxu0 0.0
        %2195 = vmatprep.subr.mxu0 0.0
        %2196 = vmatpush2.msra.mxu0 0.0
        %2197 = vmatprep.mubr.f32.mxu0 0.0
        %2198 = vmatmul.mubr.f32.gmra.mxu0 %v598
        %v2199 = vpop.f32.mrf.mxu0
        %v2200 = vadd.f32 0.0, %v2199
        %v2201 = vpop.f32.mrf.mxu0
        %v2202 = vadd.f32 0.0, %v2201
        %2203 = vmatprep.mubr.f32.mxu0 0.0
        %2204 = vmatmul.mubr.f32.gmra.mxu0 %v601
        %v2205 = vpop.f32.mrf.mxu0
        %v2206 = vadd.f32 0.0, %v2205
        %v2207 = vpop.f32.mrf.mxu0
        %v2208 = vadd.f32 0.0, %v2207
        %2209 = vmatprep.mubr.f32.mxu0 0.0
        %2210 = vmatmul.mubr.f32.gmra.mxu0 %v604
        %v2211 = vpop.f32.mrf.mxu0
        %v2212 = vadd.f32 0.0, %v2211
        %v2213 = vpop.f32.mrf.mxu0
        %v2214 = vadd.f32 0.0, %v2213
        %2215 = vmatprep.mubr.f32.mxu0 0.0
        %2216 = vmatmul.mubr.f32.gmra.mxu0 %v607
        %v2217 = vpop.f32.mrf.mxu0
        %v2218 = vadd.f32 0.0, %v2217
        %v2219 = vpop.f32.mrf.mxu0
        %v2220 = vadd.f32 0.0, %v2219
        %2221 = vmatprep.mubr.f32.mxu0 0.0
        %2222 = vmatmul.mubr.f32.gmra.mxu0 %v610
        %v2223 = vpop.f32.mrf.mxu0
        %v2224 = vadd.f32 0.0, %v2223
        %v2225 = vpop.f32.mrf.mxu0
        %v2226 = vadd.f32 0.0, %v2225
        %2227 = vmatprep.mubr.f32.mxu0 0.0
        %2228 = vmatmul.mubr.f32.gmra.mxu0 %v613
        %v2229 = vpop.f32.mrf.mxu0
        %v2230 = vadd.f32 0.0, %v2229
        %v2231 = vpop.f32.mrf.mxu0
        %v2232 = vadd.f32 0.0, %v2231
        %2233 = vmatprep.mubr.f32.mxu0 0.0
        %2234 = vmatmul.mubr.f32.gmra.mxu0 %v616
        %v2235 = vpop.f32.mrf.mxu0
        %v2236 = vadd.f32 0.0, %v2235
        %v2237 = vpop.f32.mrf.mxu0
        %v2238 = vadd.f32 0.0, %v2237
        %2239 = vmatprep.mubr.f32.mxu0 0.0
        %2240 = vmatmul.mubr.f32.gmra.mxu0 %v619
        %v2241 = vpop.f32.mrf.mxu0
        %v2242 = vadd.f32 0.0, %v2241
        %v2243 = vpop.f32.mrf.mxu0
        %v2244 = vadd.f32 0.0, %v2243
        %2245 = vmatprep.mubr.f32.mxu0 0.0
        %2246 = vmatmul.mubr.f32.gmra.mxu0 %v622
        %v2247 = vpop.f32.mrf.mxu0
        %v2248 = vadd.f32 0.0, %v2247
        %v2249 = vpop.f32.mrf.mxu0
        %v2250 = vadd.f32 0.0, %v2249
        %2251 = vmatprep.mubr.f32.mxu0 0.0
        %2252 = vmatmul.mubr.f32.gmra.mxu0 %v625
        %v2253 = vpop.f32.mrf.mxu0
        %v2254 = vadd.f32 0.0, %v2253
        %v2255 = vpop.f32.mrf.mxu0
        %v2256 = vadd.f32 0.0, %v2255
        %2257 = vmatprep.mubr.f32.mxu0 0.0
        %2258 = vmatmul.mubr.f32.gmra.mxu0 %v628
        %v2259 = vpop.f32.mrf.mxu0
        %v2260 = vadd.f32 0.0, %v2259
        %v2261 = vpop.f32.mrf.mxu0
        %v2262 = vadd.f32 0.0, %v2261
        %2263 = vmatprep.mubr.f32.mxu0 0.0
        %2264 = vmatmul.mubr.f32.gmra.mxu0 %v631
        %v2265 = vpop.f32.mrf.mxu0
        %v2266 = vadd.f32 0.0, %v2265
        %v2267 = vpop.f32.mrf.mxu0
        %v2268 = vadd.f32 0.0, %v2267
        %2269 = vdwg.mxu0
        %2270 = vmatprep.subr.mxu0 0.0
        %2271 = vmatpush1.msra.mxu0 0.0
        %2272 = vmatprep.subr.mxu0 0.0
        %2273 = vmatpush1.msra.mxu0 0.0
        %2274 = vmatprep.subr.mxu0 0.0
        %2275 = vmatpush1.msra.mxu0 0.0
        %2276 = vmatprep.subr.mxu0 0.0
        %2277 = vmatpush1.msra.mxu0 0.0
        %2278 = vmatprep.subr.mxu0 0.0
        %2279 = vmatpush1.msra.mxu0 0.0
        %2280 = vmatprep.subr.mxu0 0.0
        %2281 = vmatpush1.msra.mxu0 0.0
        %2282 = vmatprep.subr.mxu0 0.0
        %2283 = vmatpush1.msra.mxu0 0.0
        %2284 = vmatprep.subr.mxu0 0.0
        %2285 = vmatpush1.msra.mxu0 0.0
        %2286 = vmatprep.subr.mxu0 0.0
        %2287 = vmatpush1.msra.mxu0 0.0
        %2288 = vmatprep.subr.mxu0 0.0
        %2289 = vmatpush1.msra.mxu0 0.0
        %2290 = vmatprep.subr.mxu0 0.0
        %2291 = vmatpush1.msra.mxu0 0.0
        %2292 = vmatprep.subr.mxu0 0.0
        %2293 = vmatpush1.msra.mxu0 0.0
        %2294 = vmatprep.subr.mxu0 0.0
        %2295 = vmatpush1.msra.mxu0 0.0
        %2296 = vmatprep.subr.mxu0 0.0
        %2297 = vmatpush1.msra.mxu0 0.0
        %2298 = vmatprep.subr.mxu0 %v2056
        %2299 = vmatpush1.msra.mxu0 %v2054
        %2300 = vmatprep.subr.mxu0 %v2050
        %2301 = vmatpush1.msra.mxu0 %v2048
        %2302 = vmatprep.subr.mxu0 0.0
        %2303 = vmatpush2.msra.mxu0 0.0
        %2304 = vmatprep.subr.mxu0 0.0
        %2305 = vmatpush2.msra.mxu0 0.0
        %2306 = vmatprep.subr.mxu0 0.0
        %2307 = vmatpush2.msra.mxu0 0.0
        %2308 = vmatprep.subr.mxu0 0.0
        %2309 = vmatpush2.msra.mxu0 0.0
        %2310 = vmatprep.subr.mxu0 0.0
        %2311 = vmatpush2.msra.mxu0 0.0
        %2312 = vmatprep.subr.mxu0 0.0
        %2313 = vmatpush2.msra.mxu0 0.0
        %2314 = vmatprep.subr.mxu0 0.0
        %2315 = vmatpush2.msra.mxu0 0.0
        %2316 = vmatprep.subr.mxu0 0.0
        %2317 = vmatpush2.msra.mxu0 0.0
        %2318 = vmatprep.subr.mxu0 0.0
        %2319 = vmatpush2.msra.mxu0 0.0
        %2320 = vmatprep.subr.mxu0 0.0
        %2321 = vmatpush2.msra.mxu0 0.0
        %2322 = vmatprep.subr.mxu0 0.0
        %2323 = vmatpush2.msra.mxu0 0.0
        %2324 = vmatprep.subr.mxu0 0.0
        %2325 = vmatpush2.msra.mxu0 0.0
        %2326 = vmatprep.subr.mxu0 0.0
        %2327 = vmatpush2.msra.mxu0 0.0
        %2328 = vmatprep.subr.mxu0 0.0
        %2329 = vmatpush2.msra.mxu0 0.0
        %2330 = vmatprep.subr.mxu0 0.0
        %2331 = vmatpush2.msra.mxu0 0.0
        %2332 = vmatprep.subr.mxu0 0.0
        %2333 = vmatpush2.msra.mxu0 0.0
        %2334 = vmatprep.mubr.f32.mxu0 0.0
        %2335 = vmatmul.mubr.f32.gmra.mxu0 %v598
        %v2336 = vpop.f32.mrf.mxu0
        %v2337 = vadd.f32 0.0, %v2336
        %v2338 = vpop.f32.mrf.mxu0
        %v2339 = vadd.f32 0.0, %v2338
        %2340 = vmatprep.mubr.f32.mxu0 0.0
        %2341 = vmatmul.mubr.f32.gmra.mxu0 %v601
        %v2342 = vpop.f32.mrf.mxu0
        %v2343 = vadd.f32 0.0, %v2342
        %v2344 = vpop.f32.mrf.mxu0
        %v2345 = vadd.f32 0.0, %v2344
        %2346 = vmatprep.mubr.f32.mxu0 0.0
        %2347 = vmatmul.mubr.f32.gmra.mxu0 %v604
        %v2348 = vpop.f32.mrf.mxu0
        %v2349 = vadd.f32 0.0, %v2348
        %v2350 = vpop.f32.mrf.mxu0
        %v2351 = vadd.f32 0.0, %v2350
        %2352 = vmatprep.mubr.f32.mxu0 0.0
        %2353 = vmatmul.mubr.f32.gmra.mxu0 %v607
        %v2354 = vpop.f32.mrf.mxu0
        %v2355 = vadd.f32 0.0, %v2354
        %v2356 = vpop.f32.mrf.mxu0
        %v2357 = vadd.f32 0.0, %v2356
        %2358 = vmatprep.mubr.f32.mxu0 0.0
        %2359 = vmatmul.mubr.f32.gmra.mxu0 %v610
        %v2360 = vpop.f32.mrf.mxu0
        %v2361 = vadd.f32 0.0, %v2360
        %v2362 = vpop.f32.mrf.mxu0
        %v2363 = vadd.f32 0.0, %v2362
        %2364 = vmatprep.mubr.f32.mxu0 0.0
        %2365 = vmatmul.mubr.f32.gmra.mxu0 %v613
        %v2366 = vpop.f32.mrf.mxu0
        %v2367 = vadd.f32 0.0, %v2366
        %v2368 = vpop.f32.mrf.mxu0
        %v2369 = vadd.f32 0.0, %v2368
        %2370 = vmatprep.mubr.f32.mxu0 0.0
        %2371 = vmatmul.mubr.f32.gmra.mxu0 %v616
        %v2372 = vpop.f32.mrf.mxu0
        %v2373 = vadd.f32 0.0, %v2372
        %v2374 = vpop.f32.mrf.mxu0
        %v2375 = vadd.f32 0.0, %v2374
        %2376 = vmatprep.mubr.f32.mxu0 0.0
        %2377 = vmatmul.mubr.f32.gmra.mxu0 %v619
        %v2378 = vpop.f32.mrf.mxu0
        %v2379 = vadd.f32 0.0, %v2378
        %v2380 = vpop.f32.mrf.mxu0
        %v2381 = vadd.f32 0.0, %v2380
        %2382 = vmatprep.mubr.f32.mxu0 0.0
        %2383 = vmatmul.mubr.f32.gmra.mxu0 %v622
        %v2384 = vpop.f32.mrf.mxu0
        %v2385 = vadd.f32 0.0, %v2384
        %v2386 = vpop.f32.mrf.mxu0
        %v2387 = vadd.f32 0.0, %v2386
        %2388 = vmatprep.mubr.f32.mxu0 0.0
        %2389 = vmatmul.mubr.f32.gmra.mxu0 %v625
        %v2390 = vpop.f32.mrf.mxu0
        %v2391 = vadd.f32 0.0, %v2390
        %v2392 = vpop.f32.mrf.mxu0
        %v2393 = vadd.f32 0.0, %v2392
        %2394 = vmatprep.mubr.f32.mxu0 0.0
        %2395 = vmatmul.mubr.f32.gmra.mxu0 %v628
        %v2396 = vpop.f32.mrf.mxu0
        %v2397 = vadd.f32 0.0, %v2396
        %v2398 = vpop.f32.mrf.mxu0
        %v2399 = vadd.f32 0.0, %v2398
        %2400 = vmatprep.mubr.f32.mxu0 0.0
        %2401 = vmatmul.mubr.f32.gmra.mxu0 %v631
        %v2402 = vpop.f32.mrf.mxu0
        %v2403 = vadd.f32 0.0, %v2402
        %v2404 = vpop.f32.mrf.mxu0
        %v2405 = vadd.f32 0.0, %v2404
        %2406 = vdwg.mxu0
        %2407 = vmatprep.subr.mxu0 0.0
        %2408 = vmatpush1.msra.mxu0 0.0
        %2409 = vmatprep.subr.mxu0 0.0
        %2410 = vmatpush1.msra.mxu0 0.0
        %2411 = vmatprep.subr.mxu0 0.0
        %2412 = vmatpush1.msra.mxu0 0.0
        %2413 = vmatprep.subr.mxu0 0.0
        %2414 = vmatpush1.msra.mxu0 0.0
        %2415 = vmatprep.subr.mxu0 0.0
        %2416 = vmatpush1.msra.mxu0 0.0
        %2417 = vmatprep.subr.mxu0 0.0
        %2418 = vmatpush1.msra.mxu0 0.0
        %2419 = vmatprep.subr.mxu0 0.0
        %2420 = vmatpush1.msra.mxu0 0.0
        %2421 = vmatprep.subr.mxu0 0.0
        %2422 = vmatpush1.msra.mxu0 0.0
        %2423 = vmatprep.subr.mxu0 0.0
        %2424 = vmatpush1.msra.mxu0 0.0
        %2425 = vmatprep.subr.mxu0 0.0
        %2426 = vmatpush1.msra.mxu0 0.0
        %2427 = vmatprep.subr.mxu0 0.0
        %2428 = vmatpush1.msra.mxu0 0.0
        %2429 = vmatprep.subr.mxu0 0.0
        %2430 = vmatpush1.msra.mxu0 0.0
        %2431 = vmatprep.subr.mxu0 0.0
        %2432 = vmatpush1.msra.mxu0 0.0
        %2433 = vmatprep.subr.mxu0 0.0
        %2434 = vmatpush1.msra.mxu0 0.0
        %2435 = vmatprep.subr.mxu0 0.0
        %2436 = vmatpush1.msra.mxu0 %v2130
        %2437 = vmatprep.subr.mxu0 0.0
        %2438 = vmatpush1.msra.mxu0 %v2125
        %2439 = vmatprep.subr.mxu0 0.0
        %2440 = vmatpush2.msra.mxu0 0.0
        %2441 = vmatprep.subr.mxu0 0.0
        %2442 = vmatpush2.msra.mxu0 0.0
        %2443 = vmatprep.subr.mxu0 0.0
        %2444 = vmatpush2.msra.mxu0 0.0
        %2445 = vmatprep.subr.mxu0 0.0
        %2446 = vmatpush2.msra.mxu0 0.0
        %2447 = vmatprep.subr.mxu0 0.0
        %2448 = vmatpush2.msra.mxu0 0.0
        %2449 = vmatprep.subr.mxu0 0.0
        %2450 = vmatpush2.msra.mxu0 0.0
        %2451 = vmatprep.subr.mxu0 0.0
        %2452 = vmatpush2.msra.mxu0 0.0
        %2453 = vmatprep.subr.mxu0 0.0
        %2454 = vmatpush2.msra.mxu0 0.0
        %2455 = vmatprep.subr.mxu0 0.0
        %2456 = vmatpush2.msra.mxu0 0.0
        %2457 = vmatprep.subr.mxu0 0.0
        %2458 = vmatpush2.msra.mxu0 0.0
        %2459 = vmatprep.subr.mxu0 0.0
        %2460 = vmatpush2.msra.mxu0 0.0
        %2461 = vmatprep.subr.mxu0 0.0
        %2462 = vmatpush2.msra.mxu0 0.0
        %2463 = vmatprep.subr.mxu0 0.0
        %2464 = vmatpush2.msra.mxu0 0.0
        %2465 = vmatprep.subr.mxu0 0.0
        %2466 = vmatpush2.msra.mxu0 0.0
        %2467 = vmatprep.subr.mxu0 0.0
        %2468 = vmatpush2.msra.mxu0 0.0
        %2469 = vmatprep.subr.mxu0 0.0
        %2470 = vmatpush2.msra.mxu0 0.0
        %2471 = vmatprep.mubr.f32.mxu0 0.0
        %2472 = vmatmul.mubr.f32.gmra.mxu0 %v598
        %v2473 = vpop.f32.mrf.mxu0
        %v2474 = vadd.f32 0.0, %v2473
        %v2475 = vpop.f32.mrf.mxu0
        %2476 = vmatprep.mubr.f32.mxu0 0.0
        %2477 = vmatmul.mubr.f32.gmra.mxu0 %v601
        %v2478 = vpop.f32.mrf.mxu0
        %v2479 = vadd.f32 0.0, %v2478
        %v2480 = vpop.f32.mrf.mxu0
        %2481 = vmatprep.mubr.f32.mxu0 0.0
        %2482 = vmatmul.mubr.f32.gmra.mxu0 %v604
        %v2483 = vpop.f32.mrf.mxu0
        %v2484 = vadd.f32 0.0, %v2483
        %v2485 = vpop.f32.mrf.mxu0
        %2486 = vmatprep.mubr.f32.mxu0 0.0
        %2487 = vmatmul.mubr.f32.gmra.mxu0 %v607
        %v2488 = vpop.f32.mrf.mxu0
        %v2489 = vadd.f32 0.0, %v2488
        %v2490 = vpop.f32.mrf.mxu0
        %2491 = vmatprep.mubr.f32.mxu0 0.0
        %2492 = vmatmul.mubr.f32.gmra.mxu0 %v610
        %v2493 = vpop.f32.mrf.mxu0
        %v2494 = vadd.f32 0.0, %v2493
        %v2495 = vpop.f32.mrf.mxu0
        %2496 = vmatprep.mubr.f32.mxu0 0.0
        %2497 = vmatmul.mubr.f32.gmra.mxu0 %v613
        %v2498 = vpop.f32.mrf.mxu0
        %v2499 = vadd.f32 0.0, %v2498
        %v2500 = vpop.f32.mrf.mxu0
        %2501 = vmatprep.mubr.f32.mxu0 0.0
        %2502 = vmatmul.mubr.f32.gmra.mxu0 %v616
        %v2503 = vpop.f32.mrf.mxu0
        %v2504 = vadd.f32 0.0, %v2503
        %v2505 = vpop.f32.mrf.mxu0
        %2506 = vmatprep.mubr.f32.mxu0 0.0
        %2507 = vmatmul.mubr.f32.gmra.mxu0 %v619
        %v2508 = vpop.f32.mrf.mxu0
        %v2509 = vadd.f32 0.0, %v2508
        %v2510 = vpop.f32.mrf.mxu0
        %2511 = vmatprep.mubr.f32.mxu0 0.0
        %2512 = vmatmul.mubr.f32.gmra.mxu0 %v622
        %v2513 = vpop.f32.mrf.mxu0
        %v2514 = vadd.f32 0.0, %v2513
        %v2515 = vpop.f32.mrf.mxu0
        %2516 = vmatprep.mubr.f32.mxu0 0.0
        %2517 = vmatmul.mubr.f32.gmra.mxu0 %v625
        %v2518 = vpop.f32.mrf.mxu0
        %v2519 = vadd.f32 0.0, %v2518
        %v2520 = vpop.f32.mrf.mxu0
        %2521 = vmatprep.mubr.f32.mxu0 0.0
        %2522 = vmatmul.mubr.f32.gmra.mxu0 %v628
        %v2523 = vpop.f32.mrf.mxu0
        %v2524 = vadd.f32 0.0, %v2523
        %v2525 = vpop.f32.mrf.mxu0
        %2526 = vmatprep.mubr.f32.mxu0 0.0
        %2527 = vmatmul.mubr.f32.gmra.mxu0 %v631
        %v2528 = vpop.f32.mrf.mxu0
        %v2529 = vadd.f32 0.0, %v2528
        %v2530 = vpop.f32.mrf.mxu0
        %2531 = vdwg.mxu0
        %vm2532 = vcmp.gt.f32.partialorder %v2200, %v1752
        %vm2533 = vcmp.gt.f32.partialorder %v2202, %v1753
        %vm2534 = vcmp.gt.f32.partialorder %v2337, %v1754
        %vm2535 = vcmp.gt.f32.partialorder %v2339, %v1755
        %vm2536 = vcmp.gt.f32.partialorder %v2474, %v1756
        %vm2537 = vcmp.gt.f32.partialorder %v2206, %v1757
        %vm2538 = vcmp.gt.f32.partialorder %v2208, %v1758
        %vm2539 = vcmp.gt.f32.partialorder %v2343, %v1759
        %vm2540 = vcmp.gt.f32.partialorder %v2345, %v1760
        %vm2541 = vcmp.gt.f32.partialorder %v2479, %v1761
        %vm2542 = vcmp.gt.f32.partialorder %v2212, %v1762
        %vm2543 = vcmp.gt.f32.partialorder %v2214, %v1763
        %vm2544 = vcmp.gt.f32.partialorder %v2349, %v1764
        %vm2545 = vcmp.gt.f32.partialorder %v2351, %v1765
        %vm2546 = vcmp.gt.f32.partialorder %v2484, %v1766
        %vm2547 = vcmp.gt.f32.partialorder %v2218, %v1767
        %vm2548 = vcmp.gt.f32.partialorder %v2220, %v1768
        %vm2549 = vcmp.gt.f32.partialorder %v2355, %v1769
        %vm2550 = vcmp.gt.f32.partialorder %v2357, %v1770
        %vm2551 = vcmp.gt.f32.partialorder %v2489, %v1771
        %vm2552 = vcmp.gt.f32.partialorder %v2224, %v1772
        %vm2553 = vcmp.gt.f32.partialorder %v2226, %v1773
        %vm2554 = vcmp.gt.f32.partialorder %v2361, %v1774
        %vm2555 = vcmp.gt.f32.partialorder %v2363, %v1775
        %vm2556 = vcmp.gt.f32.partialorder %v2494, %v1776
        %vm2557 = vcmp.gt.f32.partialorder %v2230, %v1777
        %vm2558 = vcmp.gt.f32.partialorder %v2232, %v1778
        %vm2559 = vcmp.gt.f32.partialorder %v2367, %v1779
        %vm2560 = vcmp.gt.f32.partialorder %v2369, %v1780
        %vm2561 = vcmp.gt.f32.partialorder %v2499, %v1781
        %vm2562 = vcmp.gt.f32.partialorder %v2236, %v1782
        %vm2563 = vcmp.gt.f32.partialorder %v2238, %v1783
        %vm2564 = vcmp.gt.f32.partialorder %v2373, %v1784
        %vm2565 = vcmp.gt.f32.partialorder %v2375, %v1785
        %vm2566 = vcmp.gt.f32.partialorder %v2504, %v1786
        %vm2567 = vcmp.gt.f32.partialorder %v2242, %v1787
        %vm2568 = vcmp.gt.f32.partialorder %v2244, %v1788
        %vm2569 = vcmp.gt.f32.partialorder %v2379, %v1789
        %vm2570 = vcmp.gt.f32.partialorder %v2381, %v1790
        %vm2571 = vcmp.gt.f32.partialorder %v2509, %v1791
        %vm2572 = vcmp.gt.f32.partialorder %v2248, %v1792
        %vm2573 = vcmp.gt.f32.partialorder %v2250, %v1793
        %vm2574 = vcmp.gt.f32.partialorder %v2385, %v1794
        %vm2575 = vcmp.gt.f32.partialorder %v2387, %v1795
        %vm2576 = vcmp.gt.f32.partialorder %v2514, %v1796
        %vm2577 = vcmp.gt.f32.partialorder %v2254, %v1797
        %vm2578 = vcmp.gt.f32.partialorder %v2256, %v1798
        %vm2579 = vcmp.gt.f32.partialorder %v2391, %v1799
        %vm2580 = vcmp.gt.f32.partialorder %v2393, %v1800
        %vm2581 = vcmp.gt.f32.partialorder %v2519, %v1801
        %vm2582 = vcmp.gt.f32.partialorder %v2260, %v1802
        %vm2583 = vcmp.gt.f32.partialorder %v2262, %v1803
        %vm2584 = vcmp.gt.f32.partialorder %v2397, %v1804
        %vm2585 = vcmp.gt.f32.partialorder %v2399, %v1805
        %vm2586 = vcmp.gt.f32.partialorder %v2524, %v1806
        %vm2587 = vcmp.gt.f32.partialorder %v2266, %v1807
        %vm2588 = vcmp.gt.f32.partialorder %v2268, %v1808
        %vm2589 = vcmp.gt.f32.partialorder %v2403, %v1809
        %vm2590 = vcmp.gt.f32.partialorder %v2405, %v1810
        %vm2591 = vcmp.gt.f32.partialorder %v2529, %v1811
        %v2592 = vsel %vm2532, %v2200, %v1752
        %v2593 = vsel %vm2533, %v2202, %v1753
        %v2594 = vsel %vm2534, %v2337, %v1754
        %v2595 = vsel %vm2535, %v2339, %v1755
        %v2596 = vsel %vm2536, %v2474, %v1756
        %v2597 = vsel %vm2537, %v2206, %v1757
        %v2598 = vsel %vm2538, %v2208, %v1758
        %v2599 = vsel %vm2539, %v2343, %v1759
        %v2600 = vsel %vm2540, %v2345, %v1760
        %v2601 = vsel %vm2541, %v2479, %v1761
        %v2602 = vsel %vm2542, %v2212, %v1762
        %v2603 = vsel %vm2543, %v2214, %v1763
        %v2604 = vsel %vm2544, %v2349, %v1764
        %v2605 = vsel %vm2545, %v2351, %v1765
        %v2606 = vsel %vm2546, %v2484, %v1766
        %v2607 = vsel %vm2547, %v2218, %v1767
        %v2608 = vsel %vm2548, %v2220, %v1768
        %v2609 = vsel %vm2549, %v2355, %v1769
        %v2610 = vsel %vm2550, %v2357, %v1770
        %v2611 = vsel %vm2551, %v2489, %v1771
        %v2612 = vsel %vm2552, %v2224, %v1772
        %v2613 = vsel %vm2553, %v2226, %v1773
        %v2614 = vsel %vm2554, %v2361, %v1774
        %v2615 = vsel %vm2555, %v2363, %v1775
        %v2616 = vsel %vm2556, %v2494, %v1776
        %v2617 = vsel %vm2557, %v2230, %v1777
        %v2618 = vsel %vm2558, %v2232, %v1778
        %v2619 = vsel %vm2559, %v2367, %v1779
        %v2620 = vsel %vm2560, %v2369, %v1780
        %v2621 = vsel %vm2561, %v2499, %v1781
        %v2622 = vsel %vm2562, %v2236, %v1782
        %v2623 = vsel %vm2563, %v2238, %v1783
        %v2624 = vsel %vm2564, %v2373, %v1784
        %v2625 = vsel %vm2565, %v2375, %v1785
        %v2626 = vsel %vm2566, %v2504, %v1786
        %v2627 = vsel %vm2567, %v2242, %v1787
        %v2628 = vsel %vm2568, %v2244, %v1788
        %v2629 = vsel %vm2569, %v2379, %v1789
        %v2630 = vsel %vm2570, %v2381, %v1790
        %v2631 = vsel %vm2571, %v2509, %v1791
        %v2632 = vsel %vm2572, %v2248, %v1792
        %v2633 = vsel %vm2573, %v2250, %v1793
        %v2634 = vsel %vm2574, %v2385, %v1794
        %v2635 = vsel %vm2575, %v2387, %v1795
        %v2636 = vsel %vm2576, %v2514, %v1796
        %v2637 = vsel %vm2577, %v2254, %v1797
        %v2638 = vsel %vm2578, %v2256, %v1798
        %v2639 = vsel %vm2579, %v2391, %v1799
        %v2640 = vsel %vm2580, %v2393, %v1800
        %v2641 = vsel %vm2581, %v2519, %v1801
        %v2642 = vsel %vm2582, %v2260, %v1802
        %v2643 = vsel %vm2583, %v2262, %v1803
        %v2644 = vsel %vm2584, %v2397, %v1804
        %v2645 = vsel %vm2585, %v2399, %v1805
        %v2646 = vsel %vm2586, %v2524, %v1806
        %v2647 = vsel %vm2587, %v2266, %v1807
        %v2648 = vsel %vm2588, %v2268, %v1808
        %v2649 = vsel %vm2589, %v2403, %v1809
        %v2650 = vsel %vm2590, %v2405, %v1810
        %v2651 = vsel %vm2591, %v2529, %v1811
        %v2652 = vsel %vm2532, 2, %v1812
        %v2653 = vsel %vm2533, 2, %v1813
        %v2654 = vsel %vm2534, 2, %v1814
        %v2655 = vsel %vm2535, 2, %v1815
        %v2656 = vsel %vm2536, 2, %v1816
        %v2657 = vsel %vm2537, 2, %v1817
        %v2658 = vsel %vm2538, 2, %v1818
        %v2659 = vsel %vm2539, 2, %v1819
        %v2660 = vsel %vm2540, 2, %v1820
        %v2661 = vsel %vm2541, 2, %v1821
        %v2662 = vsel %vm2542, 2, %v1822
        %v2663 = vsel %vm2543, 2, %v1823
        %v2664 = vsel %vm2544, 2, %v1824
        %v2665 = vsel %vm2545, 2, %v1825
        %v2666 = vsel %vm2546, 2, %v1826
        %v2667 = vsel %vm2547, 2, %v1827
        %v2668 = vsel %vm2548, 2, %v1828
        %v2669 = vsel %vm2549, 2, %v1829
        %v2670 = vsel %vm2550, 2, %v1830
        %v2671 = vsel %vm2551, 2, %v1831
        %v2672 = vsel %vm2552, 2, %v1832
        %v2673 = vsel %vm2553, 2, %v1833
        %v2674 = vsel %vm2554, 2, %v1834
        %v2675 = vsel %vm2555, 2, %v1835
        %v2676 = vsel %vm2556, 2, %v1836
        %v2677 = vsel %vm2557, 2, %v1837
        %v2678 = vsel %vm2558, 2, %v1838
        %v2679 = vsel %vm2559, 2, %v1839
        %v2680 = vsel %vm2560, 2, %v1840
        %v2681 = vsel %vm2561, 2, %v1841
        %v2682 = vsel %vm2562, 2, %v1842
        %v2683 = vsel %vm2563, 2, %v1843
        %v2684 = vsel %vm2564, 2, %v1844
        %v2685 = vsel %vm2565, 2, %v1845
        %v2686 = vsel %vm2566, 2, %v1846
        %v2687 = vsel %vm2567, 2, %v1847
        %v2688 = vsel %vm2568, 2, %v1848
        %v2689 = vsel %vm2569, 2, %v1849
        %v2690 = vsel %vm2570, 2, %v1850
        %v2691 = vsel %vm2571, 2, %v1851
        %v2692 = vsel %vm2572, 2, %v1852
        %v2693 = vsel %vm2573, 2, %v1853
        %v2694 = vsel %vm2574, 2, %v1854
        %v2695 = vsel %vm2575, 2, %v1855
        %v2696 = vsel %vm2576, 2, %v1856
        %v2697 = vsel %vm2577, 2, %v1857
        %v2698 = vsel %vm2578, 2, %v1858
        %v2699 = vsel %vm2579, 2, %v1859
        %v2700 = vsel %vm2580, 2, %v1860
        %v2701 = vsel %vm2581, 2, %v1861
        %v2702 = vsel %vm2582, 2, %v1862
        %v2703 = vsel %vm2583, 2, %v1863
        %v2704 = vsel %vm2584, 2, %v1864
        %v2705 = vsel %vm2585, 2, %v1865
        %v2706 = vsel %vm2586, 2, %v1866
        %v2707 = vsel %vm2587, 2, %v1867
        %v2708 = vsel %vm2588, 2, %v1868
        %v2709 = vsel %vm2589, 2, %v1869
        %v2710 = vsel %vm2590, 2, %v1870
        %v2711 = vsel %vm2591, 2, %v1871
        %s2712 = sld [smem:[#allocation2 + $0x180]]
        %v2713 = vstv %s2712
        %v2714 = vmul.f32 %v324, %v2713
        %v2715 = vmul.f32 %v325, %v2713
        %s2716 = sld [smem:[#allocation2 + $0x181]]
        %v2717 = vstv %s2716
        %v2718 = vmul.f32 %v327, %v2717
        %v2719 = vmul.f32 %v328, %v2717
        %v2720 = vadd.f32 %v2714, %v2718
        %v2721 = vadd.f32 %v2715, %v2719
        %s2722 = sld [smem:[#allocation2 + $0x182]]
        %v2723 = vstv %s2722
        %v2724 = vmul.f32 %v330, %v2723
        %v2725 = vmul.f32 %v331, %v2723
        %v2726 = vadd.f32 %v2720, %v2724
        %v2727 = vadd.f32 %v2721, %v2725
        %s2728 = sld [smem:[#allocation2 + $0x183]]
        %v2729 = vstv %s2728
        %v2730 = vmul.f32 %v333, %v2729
        %v2731 = vmul.f32 %v334, %v2729
        %v2732 = vadd.f32 %v2726, %v2730
        %v2733 = vadd.f32 %v2727, %v2731
        %s2734 = sld [smem:[#allocation6 + $0x3]]
        %v2735 = vstv %s2734
        %v2736 = vadd.f32 %v2732, %v2735
        %v2737 = vadd.f32 %v2733, %v2735
        %v2739 = vsel %vm361, %v2736, 0
        %v2742 = vsel %vm361, %v2737, 0
        %2744 = vmatprep.subr.mxu0 0.0
        %2745 = vmatpush1.msra.mxu0 0.0
        %2746 = vmatprep.subr.mxu0 0.0
        %2747 = vmatpush1.msra.mxu0 0.0
        %2748 = vmatprep.subr.mxu0 0.0
        %2749 = vmatpush1.msra.mxu0 0.0
        %2750 = vmatprep.subr.mxu0 0.0
        %2751 = vmatpush1.msra.mxu0 0.0
        %2752 = vmatprep.subr.mxu0 0.0
        %2753 = vmatpush1.msra.mxu0 0.0
        %2754 = vmatprep.subr.mxu0 0.0
        %2755 = vmatpush1.msra.mxu0 0.0
        %2756 = vmatprep.subr.mxu0 0.0
        %2757 = vmatpush1.msra.mxu0 0.0
        %2758 = vmatprep.subr.mxu0 0.0
        %2759 = vmatpush1.msra.mxu0 0.0
        %2760 = vmatprep.subr.mxu0 0.0
        %2761 = vmatpush1.msra.mxu0 0.0
        %2762 = vmatprep.subr.mxu0 0.0
        %2763 = vmatpush1.msra.mxu0 0.0
        %2764 = vmatprep.subr.mxu0 0.0
        %2765 = vmatpush1.msra.mxu0 0.0
        %2766 = vmatprep.subr.mxu0 0.0
        %2767 = vmatpush1.msra.mxu0 0.0
        %2768 = vmatprep.subr.mxu0 0.0
        %2769 = vmatpush1.msra.mxu0 0.0
        %2770 = vmatprep.subr.mxu0 0.0
        %2771 = vmatpush1.msra.mxu0 0.0
        %2772 = vmatprep.subr.mxu0 %v320
        %2773 = vmatpush1.msra.mxu0 %v319
        %2774 = vmatprep.subr.mxu0 %v315
        %2775 = vmatpush1.msra.mxu0 %v314
        %2776 = vmatprep.subr.mxu0 0.0
        %2777 = vmatpush2.msra.mxu0 0.0
        %2778 = vmatprep.subr.mxu0 0.0
        %2779 = vmatpush2.msra.mxu0 0.0
        %2780 = vmatprep.subr.mxu0 0.0
        %2781 = vmatpush2.msra.mxu0 0.0
        %2782 = vmatprep.subr.mxu0 0.0
        %2783 = vmatpush2.msra.mxu0 0.0
        %2784 = vmatprep.subr.mxu0 0.0
        %2785 = vmatpush2.msra.mxu0 0.0
        %2786 = vmatprep.subr.mxu0 0.0
        %2787 = vmatpush2.msra.mxu0 0.0
        %2788 = vmatprep.subr.mxu0 0.0
        %2789 = vmatpush2.msra.mxu0 0.0
        %2790 = vmatprep.subr.mxu0 0.0
        %2791 = vmatpush2.msra.mxu0 0.0
        %2792 = vmatprep.subr.mxu0 0.0
        %2793 = vmatpush2.msra.mxu0 0.0
        %2794 = vmatprep.subr.mxu0 0.0
        %2795 = vmatpush2.msra.mxu0 0.0
        %2796 = vmatprep.subr.mxu0 0.0
        %2797 = vmatpush2.msra.mxu0 0.0
        %2798 = vmatprep.subr.mxu0 0.0
        %2799 = vmatpush2.msra.mxu0 0.0
        %2800 = vmatprep.subr.mxu0 0.0
        %2801 = vmatpush2.msra.mxu0 0.0
        %2802 = vmatprep.subr.mxu0 0.0
        %2803 = vmatpush2.msra.mxu0 0.0
        %2804 = vmatprep.subr.mxu0 0.0
        %2805 = vmatpush2.msra.mxu0 0.0
        %2806 = vmatprep.subr.mxu0 0.0
        %2807 = vmatpush2.msra.mxu0 0.0
        %2808 = vmatprep.mubr.f32.mxu0 0.0
        %2809 = vmatmul.mubr.f32.gmra.mxu0 %v2739
        %v2810 = vpop.f32.mrf.mxu0
        %v2811 = vadd.f32 0.0, %v2810
        %v2812 = vpop.f32.mrf.mxu0
        %v2813 = vadd.f32 0.0, %v2812
        %2814 = vmatprep.mubr.f32.mxu0 0.0
        %2815 = vmatmul.mubr.f32.gmra.mxu0 %v2742
        %v2816 = vpop.f32.mrf.mxu0
        %v2817 = vadd.f32 0.0, %v2816
        %v2818 = vpop.f32.mrf.mxu0
        %v2819 = vadd.f32 0.0, %v2818
        %2820 = vdwg.mxu0
        %2821 = vmatprep.subr.mxu0 0.0
        %2822 = vmatpush1.msra.mxu0 0.0
        %2823 = vmatprep.subr.mxu0 0.0
        %2824 = vmatpush1.msra.mxu0 0.0
        %2825 = vmatprep.subr.mxu0 0.0
        %2826 = vmatpush1.msra.mxu0 0.0
        %2827 = vmatprep.subr.mxu0 0.0
        %2828 = vmatpush1.msra.mxu0 0.0
        %2829 = vmatprep.subr.mxu0 0.0
        %2830 = vmatpush1.msra.mxu0 0.0
        %2831 = vmatprep.subr.mxu0 0.0
        %2832 = vmatpush1.msra.mxu0 0.0
        %2833 = vmatprep.subr.mxu0 0.0
        %2834 = vmatpush1.msra.mxu0 0.0
        %2835 = vmatprep.subr.mxu0 0.0
        %2836 = vmatpush1.msra.mxu0 0.0
        %2837 = vmatprep.subr.mxu0 0.0
        %2838 = vmatpush1.msra.mxu0 0.0
        %2839 = vmatprep.subr.mxu0 0.0
        %2840 = vmatpush1.msra.mxu0 0.0
        %2841 = vmatprep.subr.mxu0 0.0
        %2842 = vmatpush1.msra.mxu0 0.0
        %2843 = vmatprep.subr.mxu0 0.0
        %2844 = vmatpush1.msra.mxu0 0.0
        %2845 = vmatprep.subr.mxu0 0.0
        %2846 = vmatpush1.msra.mxu0 0.0
        %2847 = vmatprep.subr.mxu0 0.0
        %2848 = vmatpush1.msra.mxu0 0.0
        %2849 = vmatprep.subr.mxu0 %v322
        %2850 = vmatpush1.msra.mxu0 %v321
        %2851 = vmatprep.subr.mxu0 %v317
        %2852 = vmatpush1.msra.mxu0 %v316
        %2853 = vmatprep.subr.mxu0 0.0
        %2854 = vmatpush2.msra.mxu0 0.0
        %2855 = vmatprep.subr.mxu0 0.0
        %2856 = vmatpush2.msra.mxu0 0.0
        %2857 = vmatprep.subr.mxu0 0.0
        %2858 = vmatpush2.msra.mxu0 0.0
        %2859 = vmatprep.subr.mxu0 0.0
        %2860 = vmatpush2.msra.mxu0 0.0
        %2861 = vmatprep.subr.mxu0 0.0
        %2862 = vmatpush2.msra.mxu0 0.0
        %2863 = vmatprep.subr.mxu0 0.0
        %2864 = vmatpush2.msra.mxu0 0.0
        %2865 = vmatprep.subr.mxu0 0.0
        %2866 = vmatpush2.msra.mxu0 0.0
        %2867 = vmatprep.subr.mxu0 0.0
        %2868 = vmatpush2.msra.mxu0 0.0
        %2869 = vmatprep.subr.mxu0 0.0
        %2870 = vmatpush2.msra.mxu0 0.0
        %2871 = vmatprep.subr.mxu0 0.0
        %2872 = vmatpush2.msra.mxu0 0.0
        %2873 = vmatprep.subr.mxu0 0.0
        %2874 = vmatpush2.msra.mxu0 0.0
        %2875 = vmatprep.subr.mxu0 0.0
        %2876 = vmatpush2.msra.mxu0 0.0
        %2877 = vmatprep.subr.mxu0 0.0
        %2878 = vmatpush2.msra.mxu0 0.0
        %2879 = vmatprep.subr.mxu0 0.0
        %2880 = vmatpush2.msra.mxu0 0.0
        %2881 = vmatprep.subr.mxu0 0.0
        %2882 = vmatpush2.msra.mxu0 0.0
        %2883 = vmatprep.subr.mxu0 0.0
        %2884 = vmatpush2.msra.mxu0 0.0
        %2885 = vmatprep.mubr.f32.mxu0 0.0
        %2886 = vmatmul.mubr.f32.gmra.mxu0 %v2739
        %v2887 = vpop.f32.mrf.mxu0
        %v2888 = vadd.f32 0.0, %v2887
        %v2889 = vpop.f32.mrf.mxu0
        %v2890 = vadd.f32 0.0, %v2889
        %2891 = vmatprep.mubr.f32.mxu0 0.0
        %2892 = vmatmul.mubr.f32.gmra.mxu0 %v2742
        %v2893 = vpop.f32.mrf.mxu0
        %v2894 = vadd.f32 0.0, %v2893
        %v2895 = vpop.f32.mrf.mxu0
        %v2896 = vadd.f32 0.0, %v2895
        %2897 = vdwg.mxu0
        %2898 = vmatprep.subr.mxu0 0.0
        %2899 = vmatpush1.msra.mxu0 0.0
        %2900 = vmatprep.subr.mxu0 0.0
        %2901 = vmatpush1.msra.mxu0 0.0
        %2902 = vmatprep.subr.mxu0 0.0
        %2903 = vmatpush1.msra.mxu0 0.0
        %2904 = vmatprep.subr.mxu0 0.0
        %2905 = vmatpush1.msra.mxu0 0.0
        %2906 = vmatprep.subr.mxu0 0.0
        %2907 = vmatpush1.msra.mxu0 0.0
        %2908 = vmatprep.subr.mxu0 0.0
        %2909 = vmatpush1.msra.mxu0 0.0
        %2910 = vmatprep.subr.mxu0 0.0
        %2911 = vmatpush1.msra.mxu0 0.0
        %2912 = vmatprep.subr.mxu0 0.0
        %2913 = vmatpush1.msra.mxu0 0.0
        %2914 = vmatprep.subr.mxu0 0.0
        %2915 = vmatpush1.msra.mxu0 0.0
        %2916 = vmatprep.subr.mxu0 0.0
        %2917 = vmatpush1.msra.mxu0 0.0
        %2918 = vmatprep.subr.mxu0 0.0
        %2919 = vmatpush1.msra.mxu0 0.0
        %2920 = vmatprep.subr.mxu0 0.0
        %2921 = vmatpush1.msra.mxu0 0.0
        %2922 = vmatprep.subr.mxu0 0.0
        %2923 = vmatpush1.msra.mxu0 0.0
        %2924 = vmatprep.subr.mxu0 0.0
        %2925 = vmatpush1.msra.mxu0 0.0
        %2926 = vmatprep.subr.mxu0 0.0
        %2927 = vmatpush1.msra.mxu0 %v323
        %2928 = vmatprep.subr.mxu0 0.0
        %2929 = vmatpush1.msra.mxu0 %v318
        %2930 = vmatprep.subr.mxu0 0.0
        %2931 = vmatpush2.msra.mxu0 0.0
        %2932 = vmatprep.subr.mxu0 0.0
        %2933 = vmatpush2.msra.mxu0 0.0
        %2934 = vmatprep.subr.mxu0 0.0
        %2935 = vmatpush2.msra.mxu0 0.0
        %2936 = vmatprep.subr.mxu0 0.0
        %2937 = vmatpush2.msra.mxu0 0.0
        %2938 = vmatprep.subr.mxu0 0.0
        %2939 = vmatpush2.msra.mxu0 0.0
        %2940 = vmatprep.subr.mxu0 0.0
        %2941 = vmatpush2.msra.mxu0 0.0
        %2942 = vmatprep.subr.mxu0 0.0
        %2943 = vmatpush2.msra.mxu0 0.0
        %2944 = vmatprep.subr.mxu0 0.0
        %2945 = vmatpush2.msra.mxu0 0.0
        %2946 = vmatprep.subr.mxu0 0.0
        %2947 = vmatpush2.msra.mxu0 0.0
        %2948 = vmatprep.subr.mxu0 0.0
        %2949 = vmatpush2.msra.mxu0 0.0
        %2950 = vmatprep.subr.mxu0 0.0
        %2951 = vmatpush2.msra.mxu0 0.0
        %2952 = vmatprep.subr.mxu0 0.0
        %2953 = vmatpush2.msra.mxu0 0.0
        %2954 = vmatprep.subr.mxu0 0.0
        %2955 = vmatpush2.msra.mxu0 0.0
        %2956 = vmatprep.subr.mxu0 0.0
        %2957 = vmatpush2.msra.mxu0 0.0
        %2958 = vmatprep.subr.mxu0 0.0
        %2959 = vmatpush2.msra.mxu0 0.0
        %2960 = vmatprep.subr.mxu0 0.0
        %2961 = vmatpush2.msra.mxu0 0.0
        %2962 = vmatprep.mubr.f32.mxu0 0.0
        %2963 = vmatmul.mubr.f32.gmra.mxu0 %v2739
        %v2964 = vpop.f32.mrf.mxu0
        %v2965 = vadd.f32 0.0, %v2964
        %v2966 = vpop.f32.mrf.mxu0
        %2967 = vmatprep.mubr.f32.mxu0 0.0
        %2968 = vmatmul.mubr.f32.gmra.mxu0 %v2742
        %v2969 = vpop.f32.mrf.mxu0
        %v2970 = vadd.f32 0.0, %v2969
        %v2971 = vpop.f32.mrf.mxu0
        %2972 = vdwg.mxu0
        %2973 = vmatprep.subr.mxu0 0.0
        %2974 = vmatpush1.msra.mxu0 0.0
        %2975 = vmatprep.subr.mxu0 0.0
        %2976 = vmatpush1.msra.mxu0 0.0
        %2977 = vmatprep.subr.mxu0 0.0
        %2978 = vmatpush1.msra.mxu0 0.0
        %2979 = vmatprep.subr.mxu0 0.0
        %2980 = vmatpush1.msra.mxu0 0.0
        %2981 = vmatprep.subr.mxu0 0.0
        %2982 = vmatpush1.msra.mxu0 0.0
        %2983 = vmatprep.subr.mxu0 0.0
        %2984 = vmatpush1.msra.mxu0 0.0
        %2985 = vmatprep.subr.mxu0 0.0
        %2986 = vmatpush1.msra.mxu0 0.0
        %2987 = vmatprep.subr.mxu0 0.0
        %2988 = vmatpush1.msra.mxu0 0.0
        %2989 = vmatprep.subr.mxu0 0.0
        %2990 = vmatpush1.msra.mxu0 0.0
        %2991 = vmatprep.subr.mxu0 0.0
        %2992 = vmatpush1.msra.mxu0 0.0
        %2993 = vmatprep.subr.mxu0 0.0
        %2994 = vmatpush1.msra.mxu0 0.0
        %2995 = vmatprep.subr.mxu0 0.0
        %2996 = vmatpush1.msra.mxu0 0.0
        %2997 = vmatprep.subr.mxu0 0.0
        %2998 = vmatpush1.msra.mxu0 0.0
        %2999 = vmatprep.subr.mxu0 0.0
        %3000 = vmatpush1.msra.mxu0 0.0
        %3001 = vmatprep.subr.mxu0 %v2819
        %3002 = vmatpush1.msra.mxu0 %v2817
        %3003 = vmatprep.subr.mxu0 %v2813
        %3004 = vmatpush1.msra.mxu0 %v2811
        %3005 = vmatprep.subr.mxu0 0.0
        %3006 = vmatpush2.msra.mxu0 0.0
        %3007 = vmatprep.subr.mxu0 0.0
        %3008 = vmatpush2.msra.mxu0 0.0
        %3009 = vmatprep.subr.mxu0 0.0
        %3010 = vmatpush2.msra.mxu0 0.0
        %3011 = vmatprep.subr.mxu0 0.0
        %3012 = vmatpush2.msra.mxu0 0.0
        %3013 = vmatprep.subr.mxu0 0.0
        %3014 = vmatpush2.msra.mxu0 0.0
        %3015 = vmatprep.subr.mxu0 0.0
        %3016 = vmatpush2.msra.mxu0 0.0
        %3017 = vmatprep.subr.mxu0 0.0
        %3018 = vmatpush2.msra.mxu0 0.0
        %3019 = vmatprep.subr.mxu0 0.0
        %3020 = vmatpush2.msra.mxu0 0.0
        %3021 = vmatprep.subr.mxu0 0.0
        %3022 = vmatpush2.msra.mxu0 0.0
        %3023 = vmatprep.subr.mxu0 0.0
        %3024 = vmatpush2.msra.mxu0 0.0
        %3025 = vmatprep.subr.mxu0 0.0
        %3026 = vmatpush2.msra.mxu0 0.0
        %3027 = vmatprep.subr.mxu0 0.0
        %3028 = vmatpush2.msra.mxu0 0.0
        %3029 = vmatprep.subr.mxu0 0.0
        %3030 = vmatpush2.msra.mxu0 0.0
        %3031 = vmatprep.subr.mxu0 0.0
        %3032 = vmatpush2.msra.mxu0 0.0
        %3033 = vmatprep.subr.mxu0 0.0
        %3034 = vmatpush2.msra.mxu0 0.0
        %3035 = vmatprep.subr.mxu0 0.0
        %3036 = vmatpush2.msra.mxu0 0.0
        %3037 = vmatprep.mubr.f32.mxu0 0.0
        %3038 = vmatmul.mubr.f32.gmra.mxu0 %v598
        %v3039 = vpop.f32.mrf.mxu0
        %v3040 = vadd.f32 0.0, %v3039
        %v3041 = vpop.f32.mrf.mxu0
        %v3042 = vadd.f32 0.0, %v3041
        %3043 = vmatprep.mubr.f32.mxu0 0.0
        %3044 = vmatmul.mubr.f32.gmra.mxu0 %v601
        %v3045 = vpop.f32.mrf.mxu0
        %v3046 = vadd.f32 0.0, %v3045
        %v3047 = vpop.f32.mrf.mxu0
        %v3048 = vadd.f32 0.0, %v3047
        %3049 = vmatprep.mubr.f32.mxu0 0.0
        %3050 = vmatmul.mubr.f32.gmra.mxu0 %v604
        %v3051 = vpop.f32.mrf.mxu0
        %v3052 = vadd.f32 0.0, %v3051
        %v3053 = vpop.f32.mrf.mxu0
        %v3054 = vadd.f32 0.0, %v3053
        %3055 = vmatprep.mubr.f32.mxu0 0.0
        %3056 = vmatmul.mubr.f32.gmra.mxu0 %v607
        %v3057 = vpop.f32.mrf.mxu0
        %v3058 = vadd.f32 0.0, %v3057
        %v3059 = vpop.f32.mrf.mxu0
        %v3060 = vadd.f32 0.0, %v3059
        %3061 = vmatprep.mubr.f32.mxu0 0.0
        %3062 = vmatmul.mubr.f32.gmra.mxu0 %v610
        %v3063 = vpop.f32.mrf.mxu0
        %v3064 = vadd.f32 0.0, %v3063
        %v3065 = vpop.f32.mrf.mxu0
        %v3066 = vadd.f32 0.0, %v3065
        %3067 = vmatprep.mubr.f32.mxu0 0.0
        %3068 = vmatmul.mubr.f32.gmra.mxu0 %v613
        %v3069 = vpop.f32.mrf.mxu0
        %v3070 = vadd.f32 0.0, %v3069
        %v3071 = vpop.f32.mrf.mxu0
        %v3072 = vadd.f32 0.0, %v3071
        %3073 = vmatprep.mubr.f32.mxu0 0.0
        %3074 = vmatmul.mubr.f32.gmra.mxu0 %v616
        %v3075 = vpop.f32.mrf.mxu0
        %v3076 = vadd.f32 0.0, %v3075
        %v3077 = vpop.f32.mrf.mxu0
        %v3078 = vadd.f32 0.0, %v3077
        %3079 = vmatprep.mubr.f32.mxu0 0.0
        %3080 = vmatmul.mubr.f32.gmra.mxu0 %v619
        %v3081 = vpop.f32.mrf.mxu0
        %v3082 = vadd.f32 0.0, %v3081
        %v3083 = vpop.f32.mrf.mxu0
        %v3084 = vadd.f32 0.0, %v3083
        %3085 = vmatprep.mubr.f32.mxu0 0.0
        %3086 = vmatmul.mubr.f32.gmra.mxu0 %v622
        %v3087 = vpop.f32.mrf.mxu0
        %v3088 = vadd.f32 0.0, %v3087
        %v3089 = vpop.f32.mrf.mxu0
        %v3090 = vadd.f32 0.0, %v3089
        %3091 = vmatprep.mubr.f32.mxu0 0.0
        %3092 = vmatmul.mubr.f32.gmra.mxu0 %v625
        %v3093 = vpop.f32.mrf.mxu0
        %v3094 = vadd.f32 0.0, %v3093
        %v3095 = vpop.f32.mrf.mxu0
        %v3096 = vadd.f32 0.0, %v3095
        %3097 = vmatprep.mubr.f32.mxu0 0.0
        %3098 = vmatmul.mubr.f32.gmra.mxu0 %v628
        %v3099 = vpop.f32.mrf.mxu0
        %v3100 = vadd.f32 0.0, %v3099
        %v3101 = vpop.f32.mrf.mxu0
        %v3102 = vadd.f32 0.0, %v3101
        %3103 = vmatprep.mubr.f32.mxu0 0.0
        %3104 = vmatmul.mubr.f32.gmra.mxu0 %v631
        %v3105 = vpop.f32.mrf.mxu0
        %v3106 = vadd.f32 0.0, %v3105
        %v3107 = vpop.f32.mrf.mxu0
        %v3108 = vadd.f32 0.0, %v3107
        %3109 = vdwg.mxu0
        %3110 = vmatprep.subr.mxu0 0.0
        %3111 = vmatpush1.msra.mxu0 0.0
        %3112 = vmatprep.subr.mxu0 0.0
        %3113 = vmatpush1.msra.mxu0 0.0
        %3114 = vmatprep.subr.mxu0 0.0
        %3115 = vmatpush1.msra.mxu0 0.0
        %3116 = vmatprep.subr.mxu0 0.0
        %3117 = vmatpush1.msra.mxu0 0.0
        %3118 = vmatprep.subr.mxu0 0.0
        %3119 = vmatpush1.msra.mxu0 0.0
        %3120 = vmatprep.subr.mxu0 0.0
        %3121 = vmatpush1.msra.mxu0 0.0
        %3122 = vmatprep.subr.mxu0 0.0
        %3123 = vmatpush1.msra.mxu0 0.0
        %3124 = vmatprep.subr.mxu0 0.0
        %3125 = vmatpush1.msra.mxu0 0.0
        %3126 = vmatprep.subr.mxu0 0.0
        %3127 = vmatpush1.msra.mxu0 0.0
        %3128 = vmatprep.subr.mxu0 0.0
        %3129 = vmatpush1.msra.mxu0 0.0
        %3130 = vmatprep.subr.mxu0 0.0
        %3131 = vmatpush1.msra.mxu0 0.0
        %3132 = vmatprep.subr.mxu0 0.0
        %3133 = vmatpush1.msra.mxu0 0.0
        %3134 = vmatprep.subr.mxu0 0.0
        %3135 = vmatpush1.msra.mxu0 0.0
        %3136 = vmatprep.subr.mxu0 0.0
        %3137 = vmatpush1.msra.mxu0 0.0
        %3138 = vmatprep.subr.mxu0 %v2896
        %3139 = vmatpush1.msra.mxu0 %v2894
        %3140 = vmatprep.subr.mxu0 %v2890
        %3141 = vmatpush1.msra.mxu0 %v2888
        %3142 = vmatprep.subr.mxu0 0.0
        %3143 = vmatpush2.msra.mxu0 0.0
        %3144 = vmatprep.subr.mxu0 0.0
        %3145 = vmatpush2.msra.mxu0 0.0
        %3146 = vmatprep.subr.mxu0 0.0
        %3147 = vmatpush2.msra.mxu0 0.0
        %3148 = vmatprep.subr.mxu0 0.0
        %3149 = vmatpush2.msra.mxu0 0.0
        %3150 = vmatprep.subr.mxu0 0.0
        %3151 = vmatpush2.msra.mxu0 0.0
        %3152 = vmatprep.subr.mxu0 0.0
        %3153 = vmatpush2.msra.mxu0 0.0
        %3154 = vmatprep.subr.mxu0 0.0
        %3155 = vmatpush2.msra.mxu0 0.0
        %3156 = vmatprep.subr.mxu0 0.0
        %3157 = vmatpush2.msra.mxu0 0.0
        %3158 = vmatprep.subr.mxu0 0.0
        %3159 = vmatpush2.msra.mxu0 0.0
        %3160 = vmatprep.subr.mxu0 0.0
        %3161 = vmatpush2.msra.mxu0 0.0
        %3162 = vmatprep.subr.mxu0 0.0
        %3163 = vmatpush2.msra.mxu0 0.0
        %3164 = vmatprep.subr.mxu0 0.0
        %3165 = vmatpush2.msra.mxu0 0.0
        %3166 = vmatprep.subr.mxu0 0.0
        %3167 = vmatpush2.msra.mxu0 0.0
        %3168 = vmatprep.subr.mxu0 0.0
        %3169 = vmatpush2.msra.mxu0 0.0
        %3170 = vmatprep.subr.mxu0 0.0
        %3171 = vmatpush2.msra.mxu0 0.0
        %3172 = vmatprep.subr.mxu0 0.0
        %3173 = vmatpush2.msra.mxu0 0.0
        %3174 = vmatprep.mubr.f32.mxu0 0.0
        %3175 = vmatmul.mubr.f32.gmra.mxu0 %v598
        %v3176 = vpop.f32.mrf.mxu0
        %v3177 = vadd.f32 0.0, %v3176
        %v3178 = vpop.f32.mrf.mxu0
        %v3179 = vadd.f32 0.0, %v3178
        %3180 = vmatprep.mubr.f32.mxu0 0.0
        %3181 = vmatmul.mubr.f32.gmra.mxu0 %v601
        %v3182 = vpop.f32.mrf.mxu0
        %v3183 = vadd.f32 0.0, %v3182
        %v3184 = vpop.f32.mrf.mxu0
        %v3185 = vadd.f32 0.0, %v3184
        %3186 = vmatprep.mubr.f32.mxu0 0.0
        %3187 = vmatmul.mubr.f32.gmra.mxu0 %v604
        %v3188 = vpop.f32.mrf.mxu0
        %v3189 = vadd.f32 0.0, %v3188
        %v3190 = vpop.f32.mrf.mxu0
        %v3191 = vadd.f32 0.0, %v3190
        %3192 = vmatprep.mubr.f32.mxu0 0.0
        %3193 = vmatmul.mubr.f32.gmra.mxu0 %v607
        %v3194 = vpop.f32.mrf.mxu0
        %v3195 = vadd.f32 0.0, %v3194
        %v3196 = vpop.f32.mrf.mxu0
        %v3197 = vadd.f32 0.0, %v3196
        %3198 = vmatprep.mubr.f32.mxu0 0.0
        %3199 = vmatmul.mubr.f32.gmra.mxu0 %v610
        %v3200 = vpop.f32.mrf.mxu0
        %v3201 = vadd.f32 0.0, %v3200
        %v3202 = vpop.f32.mrf.mxu0
        %v3203 = vadd.f32 0.0, %v3202
        %3204 = vmatprep.mubr.f32.mxu0 0.0
        %3205 = vmatmul.mubr.f32.gmra.mxu0 %v613
        %v3206 = vpop.f32.mrf.mxu0
        %v3207 = vadd.f32 0.0, %v3206
        %v3208 = vpop.f32.mrf.mxu0
        %v3209 = vadd.f32 0.0, %v3208
        %3210 = vmatprep.mubr.f32.mxu0 0.0
        %3211 = vmatmul.mubr.f32.gmra.mxu0 %v616
        %v3212 = vpop.f32.mrf.mxu0
        %v3213 = vadd.f32 0.0, %v3212
        %v3214 = vpop.f32.mrf.mxu0
        %v3215 = vadd.f32 0.0, %v3214
        %3216 = vmatprep.mubr.f32.mxu0 0.0
        %3217 = vmatmul.mubr.f32.gmra.mxu0 %v619
        %v3218 = vpop.f32.mrf.mxu0
        %v3219 = vadd.f32 0.0, %v3218
        %v3220 = vpop.f32.mrf.mxu0
        %v3221 = vadd.f32 0.0, %v3220
        %3222 = vmatprep.mubr.f32.mxu0 0.0
        %3223 = vmatmul.mubr.f32.gmra.mxu0 %v622
        %v3224 = vpop.f32.mrf.mxu0
        %v3225 = vadd.f32 0.0, %v3224
        %v3226 = vpop.f32.mrf.mxu0
        %v3227 = vadd.f32 0.0, %v3226
        %3228 = vmatprep.mubr.f32.mxu0 0.0
        %3229 = vmatmul.mubr.f32.gmra.mxu0 %v625
        %v3230 = vpop.f32.mrf.mxu0
        %v3231 = vadd.f32 0.0, %v3230
        %v3232 = vpop.f32.mrf.mxu0
        %v3233 = vadd.f32 0.0, %v3232
        %3234 = vmatprep.mubr.f32.mxu0 0.0
        %3235 = vmatmul.mubr.f32.gmra.mxu0 %v628
        %v3236 = vpop.f32.mrf.mxu0
        %v3237 = vadd.f32 0.0, %v3236
        %v3238 = vpop.f32.mrf.mxu0
        %v3239 = vadd.f32 0.0, %v3238
        %3240 = vmatprep.mubr.f32.mxu0 0.0
        %3241 = vmatmul.mubr.f32.gmra.mxu0 %v631
        %v3242 = vpop.f32.mrf.mxu0
        %v3243 = vadd.f32 0.0, %v3242
        %v3244 = vpop.f32.mrf.mxu0
        %v3245 = vadd.f32 0.0, %v3244
        %3246 = vdwg.mxu0
        %3247 = vmatprep.subr.mxu0 0.0
        %3248 = vmatpush1.msra.mxu0 0.0
        %3249 = vmatprep.subr.mxu0 0.0
        %3250 = vmatpush1.msra.mxu0 0.0
        %3251 = vmatprep.subr.mxu0 0.0
        %3252 = vmatpush1.msra.mxu0 0.0
        %3253 = vmatprep.subr.mxu0 0.0
        %3254 = vmatpush1.msra.mxu0 0.0
        %3255 = vmatprep.subr.mxu0 0.0
        %3256 = vmatpush1.msra.mxu0 0.0
        %3257 = vmatprep.subr.mxu0 0.0
        %3258 = vmatpush1.msra.mxu0 0.0
        %3259 = vmatprep.subr.mxu0 0.0
        %3260 = vmatpush1.msra.mxu0 0.0
        %3261 = vmatprep.subr.mxu0 0.0
        %3262 = vmatpush1.msra.mxu0 0.0
        %3263 = vmatprep.subr.mxu0 0.0
        %3264 = vmatpush1.msra.mxu0 0.0
        %3265 = vmatprep.subr.mxu0 0.0
        %3266 = vmatpush1.msra.mxu0 0.0
        %3267 = vmatprep.subr.mxu0 0.0
        %3268 = vmatpush1.msra.mxu0 0.0
        %3269 = vmatprep.subr.mxu0 0.0
        %3270 = vmatpush1.msra.mxu0 0.0
        %3271 = vmatprep.subr.mxu0 0.0
        %3272 = vmatpush1.msra.mxu0 0.0
        %3273 = vmatprep.subr.mxu0 0.0
        %3274 = vmatpush1.msra.mxu0 0.0
        %3275 = vmatprep.subr.mxu0 0.0
        %3276 = vmatpush1.msra.mxu0 %v2970
        %3277 = vmatprep.subr.mxu0 0.0
        %3278 = vmatpush1.msra.mxu0 %v2965
        %3279 = vmatprep.subr.mxu0 0.0
        %3280 = vmatpush2.msra.mxu0 0.0
        %3281 = vmatprep.subr.mxu0 0.0
        %3282 = vmatpush2.msra.mxu0 0.0
        %3283 = vmatprep.subr.mxu0 0.0
        %3284 = vmatpush2.msra.mxu0 0.0
        %3285 = vmatprep.subr.mxu0 0.0
        %3286 = vmatpush2.msra.mxu0 0.0
        %3287 = vmatprep.subr.mxu0 0.0
        %3288 = vmatpush2.msra.mxu0 0.0
        %3289 = vmatprep.subr.mxu0 0.0
        %3290 = vmatpush2.msra.mxu0 0.0
        %3291 = vmatprep.subr.mxu0 0.0
        %3292 = vmatpush2.msra.mxu0 0.0
        %3293 = vmatprep.subr.mxu0 0.0
        %3294 = vmatpush2.msra.mxu0 0.0
        %3295 = vmatprep.subr.mxu0 0.0
        %3296 = vmatpush2.msra.mxu0 0.0
        %3297 = vmatprep.subr.mxu0 0.0
        %3298 = vmatpush2.msra.mxu0 0.0
        %3299 = vmatprep.subr.mxu0 0.0
        %3300 = vmatpush2.msra.mxu0 0.0
        %3301 = vmatprep.subr.mxu0 0.0
        %3302 = vmatpush2.msra.mxu0 0.0
        %3303 = vmatprep.subr.mxu0 0.0
        %3304 = vmatpush2.msra.mxu0 0.0
        %3305 = vmatprep.subr.mxu0 0.0
        %3306 = vmatpush2.msra.mxu0 0.0
        %3307 = vmatprep.subr.mxu0 0.0
        %3308 = vmatpush2.msra.mxu0 0.0
        %3309 = vmatprep.subr.mxu0 0.0
        %3310 = vmatpush2.msra.mxu0 0.0
        %3311 = vmatprep.mubr.f32.mxu0 0.0
        %3312 = vmatmul.mubr.f32.gmra.mxu0 %v598
        %v3313 = vpop.f32.mrf.mxu0
        %v3314 = vadd.f32 0.0, %v3313
        %v3315 = vpop.f32.mrf.mxu0
        %3316 = vmatprep.mubr.f32.mxu0 0.0
        %3317 = vmatmul.mubr.f32.gmra.mxu0 %v601
        %v3318 = vpop.f32.mrf.mxu0
        %v3319 = vadd.f32 0.0, %v3318
        %v3320 = vpop.f32.mrf.mxu0
        %3321 = vmatprep.mubr.f32.mxu0 0.0
        %3322 = vmatmul.mubr.f32.gmra.mxu0 %v604
        %v3323 = vpop.f32.mrf.mxu0
        %v3324 = vadd.f32 0.0, %v3323
        %v3325 = vpop.f32.mrf.mxu0
        %3326 = vmatprep.mubr.f32.mxu0 0.0
        %3327 = vmatmul.mubr.f32.gmra.mxu0 %v607
        %v3328 = vpop.f32.mrf.mxu0
        %v3329 = vadd.f32 0.0, %v3328
        %v3330 = vpop.f32.mrf.mxu0
        %3331 = vmatprep.mubr.f32.mxu0 0.0
        %3332 = vmatmul.mubr.f32.gmra.mxu0 %v610
        %v3333 = vpop.f32.mrf.mxu0
        %v3334 = vadd.f32 0.0, %v3333
        %v3335 = vpop.f32.mrf.mxu0
        %3336 = vmatprep.mubr.f32.mxu0 0.0
        %3337 = vmatmul.mubr.f32.gmra.mxu0 %v613
        %v3338 = vpop.f32.mrf.mxu0
        %v3339 = vadd.f32 0.0, %v3338
        %v3340 = vpop.f32.mrf.mxu0
        %3341 = vmatprep.mubr.f32.mxu0 0.0
        %3342 = vmatmul.mubr.f32.gmra.mxu0 %v616
        %v3343 = vpop.f32.mrf.mxu0
        %v3344 = vadd.f32 0.0, %v3343
        %v3345 = vpop.f32.mrf.mxu0
        %3346 = vmatprep.mubr.f32.mxu0 0.0
        %3347 = vmatmul.mubr.f32.gmra.mxu0 %v619
        %v3348 = vpop.f32.mrf.mxu0
        %v3349 = vadd.f32 0.0, %v3348
        %v3350 = vpop.f32.mrf.mxu0
        %3351 = vmatprep.mubr.f32.mxu0 0.0
        %3352 = vmatmul.mubr.f32.gmra.mxu0 %v622
        %v3353 = vpop.f32.mrf.mxu0
        %v3354 = vadd.f32 0.0, %v3353
        %v3355 = vpop.f32.mrf.mxu0
        %3356 = vmatprep.mubr.f32.mxu0 0.0
        %3357 = vmatmul.mubr.f32.gmra.mxu0 %v625
        %v3358 = vpop.f32.mrf.mxu0
        %v3359 = vadd.f32 0.0, %v3358
        %v3360 = vpop.f32.mrf.mxu0
        %3361 = vmatprep.mubr.f32.mxu0 0.0
        %3362 = vmatmul.mubr.f32.gmra.mxu0 %v628
        %v3363 = vpop.f32.mrf.mxu0
        %v3364 = vadd.f32 0.0, %v3363
        %v3365 = vpop.f32.mrf.mxu0
        %3366 = vmatprep.mubr.f32.mxu0 0.0
        %3367 = vmatmul.mubr.f32.gmra.mxu0 %v631
        %v3368 = vpop.f32.mrf.mxu0
        %v3369 = vadd.f32 0.0, %v3368
        %v3370 = vpop.f32.mrf.mxu0
        %3371 = vdwg.mxu0
        %vm3372 = vcmp.gt.f32.partialorder %v3040, %v2592
        %vm3373 = vcmp.gt.f32.partialorder %v3042, %v2593
        %vm3374 = vcmp.gt.f32.partialorder %v3177, %v2594
        %vm3375 = vcmp.gt.f32.partialorder %v3179, %v2595
        %vm3376 = vcmp.gt.f32.partialorder %v3314, %v2596
        %vm3377 = vcmp.gt.f32.partialorder %v3046, %v2597
        %vm3378 = vcmp.gt.f32.partialorder %v3048, %v2598
        %vm3379 = vcmp.gt.f32.partialorder %v3183, %v2599
        %vm3380 = vcmp.gt.f32.partialorder %v3185, %v2600
        %vm3381 = vcmp.gt.f32.partialorder %v3319, %v2601
        %vm3382 = vcmp.gt.f32.partialorder %v3052, %v2602
        %vm3383 = vcmp.gt.f32.partialorder %v3054, %v2603
        %vm3384 = vcmp.gt.f32.partialorder %v3189, %v2604
        %vm3385 = vcmp.gt.f32.partialorder %v3191, %v2605
        %vm3386 = vcmp.gt.f32.partialorder %v3324, %v2606
        %vm3387 = vcmp.gt.f32.partialorder %v3058, %v2607
        %vm3388 = vcmp.gt.f32.partialorder %v3060, %v2608
        %vm3389 = vcmp.gt.f32.partialorder %v3195, %v2609
        %vm3390 = vcmp.gt.f32.partialorder %v3197, %v2610
        %vm3391 = vcmp.gt.f32.partialorder %v3329, %v2611
        %vm3392 = vcmp.gt.f32.partialorder %v3064, %v2612
        %vm3393 = vcmp.gt.f32.partialorder %v3066, %v2613
        %vm3394 = vcmp.gt.f32.partialorder %v3201, %v2614
        %vm3395 = vcmp.gt.f32.partialorder %v3203, %v2615
        %vm3396 = vcmp.gt.f32.partialorder %v3334, %v2616
        %vm3397 = vcmp.gt.f32.partialorder %v3070, %v2617
        %vm3398 = vcmp.gt.f32.partialorder %v3072, %v2618
        %vm3399 = vcmp.gt.f32.partialorder %v3207, %v2619
        %vm3400 = vcmp.gt.f32.partialorder %v3209, %v2620
        %vm3401 = vcmp.gt.f32.partialorder %v3339, %v2621
        %vm3402 = vcmp.gt.f32.partialorder %v3076, %v2622
        %vm3403 = vcmp.gt.f32.partialorder %v3078, %v2623
        %vm3404 = vcmp.gt.f32.partialorder %v3213, %v2624
        %vm3405 = vcmp.gt.f32.partialorder %v3215, %v2625
        %vm3406 = vcmp.gt.f32.partialorder %v3344, %v2626
        %vm3407 = vcmp.gt.f32.partialorder %v3082, %v2627
        %vm3408 = vcmp.gt.f32.partialorder %v3084, %v2628
        %vm3409 = vcmp.gt.f32.partialorder %v3219, %v2629
        %vm3410 = vcmp.gt.f32.partialorder %v3221, %v2630
        %vm3411 = vcmp.gt.f32.partialorder %v3349, %v2631
        %vm3412 = vcmp.gt.f32.partialorder %v3088, %v2632
        %vm3413 = vcmp.gt.f32.partialorder %v3090, %v2633
        %vm3414 = vcmp.gt.f32.partialorder %v3225, %v2634
        %vm3415 = vcmp.gt.f32.partialorder %v3227, %v2635
        %vm3416 = vcmp.gt.f32.partialorder %v3354, %v2636
        %vm3417 = vcmp.gt.f32.partialorder %v3094, %v2637
        %vm3418 = vcmp.gt.f32.partialorder %v3096, %v2638
        %vm3419 = vcmp.gt.f32.partialorder %v3231, %v2639
        %vm3420 = vcmp.gt.f32.partialorder %v3233, %v2640
        %vm3421 = vcmp.gt.f32.partialorder %v3359, %v2641
        %vm3422 = vcmp.gt.f32.partialorder %v3100, %v2642
        %vm3423 = vcmp.gt.f32.partialorder %v3102, %v2643
        %vm3424 = vcmp.gt.f32.partialorder %v3237, %v2644
        %vm3425 = vcmp.gt.f32.partialorder %v3239, %v2645
        %vm3426 = vcmp.gt.f32.partialorder %v3364, %v2646
        %vm3427 = vcmp.gt.f32.partialorder %v3106, %v2647
        %vm3428 = vcmp.gt.f32.partialorder %v3108, %v2648
        %vm3429 = vcmp.gt.f32.partialorder %v3243, %v2649
        %vm3430 = vcmp.gt.f32.partialorder %v3245, %v2650
        %vm3431 = vcmp.gt.f32.partialorder %v3369, %v2651
        %v3432 = vsel %vm3372, %v3040, %v2592
        %v3433 = vsel %vm3373, %v3042, %v2593
        %v3434 = vsel %vm3374, %v3177, %v2594
        %v3435 = vsel %vm3375, %v3179, %v2595
        %v3436 = vsel %vm3376, %v3314, %v2596
        %v3437 = vsel %vm3377, %v3046, %v2597
        %v3438 = vsel %vm3378, %v3048, %v2598
        %v3439 = vsel %vm3379, %v3183, %v2599
        %v3440 = vsel %vm3380, %v3185, %v2600
        %v3441 = vsel %vm3381, %v3319, %v2601
        %v3442 = vsel %vm3382, %v3052, %v2602
        %v3443 = vsel %vm3383, %v3054, %v2603
        %v3444 = vsel %vm3384, %v3189, %v2604
        %v3445 = vsel %vm3385, %v3191, %v2605
        %v3446 = vsel %vm3386, %v3324, %v2606
        %v3447 = vsel %vm3387, %v3058, %v2607
        %v3448 = vsel %vm3388, %v3060, %v2608
        %v3449 = vsel %vm3389, %v3195, %v2609
        %v3450 = vsel %vm3390, %v3197, %v2610
        %v3451 = vsel %vm3391, %v3329, %v2611
        %v3452 = vsel %vm3392, %v3064, %v2612
        %v3453 = vsel %vm3393, %v3066, %v2613
        %v3454 = vsel %vm3394, %v3201, %v2614
        %v3455 = vsel %vm3395, %v3203, %v2615
        %v3456 = vsel %vm3396, %v3334, %v2616
        %v3457 = vsel %vm3397, %v3070, %v2617
        %v3458 = vsel %vm3398, %v3072, %v2618
        %v3459 = vsel %vm3399, %v3207, %v2619
        %v3460 = vsel %vm3400, %v3209, %v2620
        %v3461 = vsel %vm3401, %v3339, %v2621
        %v3462 = vsel %vm3402, %v3076, %v2622
        %v3463 = vsel %vm3403, %v3078, %v2623
        %v3464 = vsel %vm3404, %v3213, %v2624
        %v3465 = vsel %vm3405, %v3215, %v2625
        %v3466 = vsel %vm3406, %v3344, %v2626
        %v3467 = vsel %vm3407, %v3082, %v2627
        %v3468 = vsel %vm3408, %v3084, %v2628
        %v3469 = vsel %vm3409, %v3219, %v2629
        %v3470 = vsel %vm3410, %v3221, %v2630
        %v3471 = vsel %vm3411, %v3349, %v2631
        %v3472 = vsel %vm3412, %v3088, %v2632
        %v3473 = vsel %vm3413, %v3090, %v2633
        %v3474 = vsel %vm3414, %v3225, %v2634
        %v3475 = vsel %vm3415, %v3227, %v2635
        %v3476 = vsel %vm3416, %v3354, %v2636
        %v3477 = vsel %vm3417, %v3094, %v2637
        %v3478 = vsel %vm3418, %v3096, %v2638
        %v3479 = vsel %vm3419, %v3231, %v2639
        %v3480 = vsel %vm3420, %v3233, %v2640
        %v3481 = vsel %vm3421, %v3359, %v2641
        %v3482 = vsel %vm3422, %v3100, %v2642
        %v3483 = vsel %vm3423, %v3102, %v2643
        %v3484 = vsel %vm3424, %v3237, %v2644
        %v3485 = vsel %vm3425, %v3239, %v2645
        %v3486 = vsel %vm3426, %v3364, %v2646
        %v3487 = vsel %vm3427, %v3106, %v2647
        %v3488 = vsel %vm3428, %v3108, %v2648
        %v3489 = vsel %vm3429, %v3243, %v2649
        %v3490 = vsel %vm3430, %v3245, %v2650
        %v3491 = vsel %vm3431, %v3369, %v2651
        %v3492 = vsel %vm3372, 3, %v2652
        %v3493 = vsel %vm3373, 3, %v2653
        %v3494 = vsel %vm3374, 3, %v2654
        %v3495 = vsel %vm3375, 3, %v2655
        %v3496 = vsel %vm3376, 3, %v2656
        %v3497 = vsel %vm3377, 3, %v2657
        %v3498 = vsel %vm3378, 3, %v2658
        %v3499 = vsel %vm3379, 3, %v2659
        %v3500 = vsel %vm3380, 3, %v2660
        %v3501 = vsel %vm3381, 3, %v2661
        %v3502 = vsel %vm3382, 3, %v2662
        %v3503 = vsel %vm3383, 3, %v2663
        %v3504 = vsel %vm3384, 3, %v2664
        %v3505 = vsel %vm3385, 3, %v2665
        %v3506 = vsel %vm3386, 3, %v2666
        %v3507 = vsel %vm3387, 3, %v2667
        %v3508 = vsel %vm3388, 3, %v2668
        %v3509 = vsel %vm3389, 3, %v2669
        %v3510 = vsel %vm3390, 3, %v2670
        %v3511 = vsel %vm3391, 3, %v2671
        %v3512 = vsel %vm3392, 3, %v2672
        %v3513 = vsel %vm3393, 3, %v2673
        %v3514 = vsel %vm3394, 3, %v2674
        %v3515 = vsel %vm3395, 3, %v2675
        %v3516 = vsel %vm3396, 3, %v2676
        %v3517 = vsel %vm3397, 3, %v2677
        %v3518 = vsel %vm3398, 3, %v2678
        %v3519 = vsel %vm3399, 3, %v2679
        %v3520 = vsel %vm3400, 3, %v2680
        %v3521 = vsel %vm3401, 3, %v2681
        %v3522 = vsel %vm3402, 3, %v2682
        %v3523 = vsel %vm3403, 3, %v2683
        %v3524 = vsel %vm3404, 3, %v2684
        %v3525 = vsel %vm3405, 3, %v2685
        %v3526 = vsel %vm3406, 3, %v2686
        %v3527 = vsel %vm3407, 3, %v2687
        %v3528 = vsel %vm3408, 3, %v2688
        %v3529 = vsel %vm3409, 3, %v2689
        %v3530 = vsel %vm3410, 3, %v2690
        %v3531 = vsel %vm3411, 3, %v2691
        %v3532 = vsel %vm3412, 3, %v2692
        %v3533 = vsel %vm3413, 3, %v2693
        %v3534 = vsel %vm3414, 3, %v2694
        %v3535 = vsel %vm3415, 3, %v2695
        %v3536 = vsel %vm3416, 3, %v2696
        %v3537 = vsel %vm3417, 3, %v2697
        %v3538 = vsel %vm3418, 3, %v2698
        %v3539 = vsel %vm3419, 3, %v2699
        %v3540 = vsel %vm3420, 3, %v2700
        %v3541 = vsel %vm3421, 3, %v2701
        %v3542 = vsel %vm3422, 3, %v2702
        %v3543 = vsel %vm3423, 3, %v2703
        %v3544 = vsel %vm3424, 3, %v2704
        %v3545 = vsel %vm3425, 3, %v2705
        %v3546 = vsel %vm3426, 3, %v2706
        %v3547 = vsel %vm3427, 3, %v2707
        %v3548 = vsel %vm3428, 3, %v2708
        %v3549 = vsel %vm3429, 3, %v2709
        %v3550 = vsel %vm3430, 3, %v2710
        %v3551 = vsel %vm3431, 3, %v2711
        %s3552 = sld [smem:[#allocation2 + $0x200]]
        %v3553 = vstv %s3552
        %v3554 = vmul.f32 %v324, %v3553
        %v3555 = vmul.f32 %v325, %v3553
        %s3556 = sld [smem:[#allocation2 + $0x201]]
        %v3557 = vstv %s3556
        %v3558 = vmul.f32 %v327, %v3557
        %v3559 = vmul.f32 %v328, %v3557
        %v3560 = vadd.f32 %v3554, %v3558
        %v3561 = vadd.f32 %v3555, %v3559
        %s3562 = sld [smem:[#allocation2 + $0x202]]
        %v3563 = vstv %s3562
        %v3564 = vmul.f32 %v330, %v3563
        %v3565 = vmul.f32 %v331, %v3563
        %v3566 = vadd.f32 %v3560, %v3564
        %v3567 = vadd.f32 %v3561, %v3565
        %s3568 = sld [smem:[#allocation2 + $0x203]]
        %v3569 = vstv %s3568
        %v3570 = vmul.f32 %v333, %v3569
        %v3571 = vmul.f32 %v334, %v3569
        %v3572 = vadd.f32 %v3566, %v3570
        %v3573 = vadd.f32 %v3567, %v3571
        %s3574 = sld [smem:[#allocation6 + $0x4]]
        %v3575 = vstv %s3574
        %v3576 = vadd.f32 %v3572, %v3575
        %v3577 = vadd.f32 %v3573, %v3575
        %v3579 = vsel %vm361, %v3576, 0
        %v3582 = vsel %vm361, %v3577, 0
        %3584 = vmatprep.subr.mxu0 0.0
        %3585 = vmatpush1.msra.mxu0 0.0
        %3586 = vmatprep.subr.mxu0 0.0
        %3587 = vmatpush1.msra.mxu0 0.0
        %3588 = vmatprep.subr.mxu0 0.0
        %3589 = vmatpush1.msra.mxu0 0.0
        %3590 = vmatprep.subr.mxu0 0.0
        %3591 = vmatpush1.msra.mxu0 0.0
        %3592 = vmatprep.subr.mxu0 0.0
        %3593 = vmatpush1.msra.mxu0 0.0
        %3594 = vmatprep.subr.mxu0 0.0
        %3595 = vmatpush1.msra.mxu0 0.0
        %3596 = vmatprep.subr.mxu0 0.0
        %3597 = vmatpush1.msra.mxu0 0.0
        %3598 = vmatprep.subr.mxu0 0.0
        %3599 = vmatpush1.msra.mxu0 0.0
        %3600 = vmatprep.subr.mxu0 0.0
        %3601 = vmatpush1.msra.mxu0 0.0
        %3602 = vmatprep.subr.mxu0 0.0
        %3603 = vmatpush1.msra.mxu0 0.0
        %3604 = vmatprep.subr.mxu0 0.0
        %3605 = vmatpush1.msra.mxu0 0.0
        %3606 = vmatprep.subr.mxu0 0.0
        %3607 = vmatpush1.msra.mxu0 0.0
        %3608 = vmatprep.subr.mxu0 0.0
        %3609 = vmatpush1.msra.mxu0 0.0
        %3610 = vmatprep.subr.mxu0 0.0
        %3611 = vmatpush1.msra.mxu0 0.0
        %3612 = vmatprep.subr.mxu0 %v320
        %3613 = vmatpush1.msra.mxu0 %v319
        %3614 = vmatprep.subr.mxu0 %v315
        %3615 = vmatpush1.msra.mxu0 %v314
        %3616 = vmatprep.subr.mxu0 0.0
        %3617 = vmatpush2.msra.mxu0 0.0
        %3618 = vmatprep.subr.mxu0 0.0
        %3619 = vmatpush2.msra.mxu0 0.0
        %3620 = vmatprep.subr.mxu0 0.0
        %3621 = vmatpush2.msra.mxu0 0.0
        %3622 = vmatprep.subr.mxu0 0.0
        %3623 = vmatpush2.msra.mxu0 0.0
        %3624 = vmatprep.subr.mxu0 0.0
        %3625 = vmatpush2.msra.mxu0 0.0
        %3626 = vmatprep.subr.mxu0 0.0
        %3627 = vmatpush2.msra.mxu0 0.0
        %3628 = vmatprep.subr.mxu0 0.0
        %3629 = vmatpush2.msra.mxu0 0.0
        %3630 = vmatprep.subr.mxu0 0.0
        %3631 = vmatpush2.msra.mxu0 0.0
        %3632 = vmatprep.subr.mxu0 0.0
        %3633 = vmatpush2.msra.mxu0 0.0
        %3634 = vmatprep.subr.mxu0 0.0
        %3635 = vmatpush2.msra.mxu0 0.0
        %3636 = vmatprep.subr.mxu0 0.0
        %3637 = vmatpush2.msra.mxu0 0.0
        %3638 = vmatprep.subr.mxu0 0.0
        %3639 = vmatpush2.msra.mxu0 0.0
        %3640 = vmatprep.subr.mxu0 0.0
        %3641 = vmatpush2.msra.mxu0 0.0
        %3642 = vmatprep.subr.mxu0 0.0
        %3643 = vmatpush2.msra.mxu0 0.0
        %3644 = vmatprep.subr.mxu0 0.0
        %3645 = vmatpush2.msra.mxu0 0.0
        %3646 = vmatprep.subr.mxu0 0.0
        %3647 = vmatpush2.msra.mxu0 0.0
        %3648 = vmatprep.mubr.f32.mxu0 0.0
        %3649 = vmatmul.mubr.f32.gmra.mxu0 %v3579
        %v3650 = vpop.f32.mrf.mxu0
        %v3651 = vadd.f32 0.0, %v3650
        %v3652 = vpop.f32.mrf.mxu0
        %v3653 = vadd.f32 0.0, %v3652
        %3654 = vmatprep.mubr.f32.mxu0 0.0
        %3655 = vmatmul.mubr.f32.gmra.mxu0 %v3582
        %v3656 = vpop.f32.mrf.mxu0
        %v3657 = vadd.f32 0.0, %v3656
        %v3658 = vpop.f32.mrf.mxu0
        %v3659 = vadd.f32 0.0, %v3658
        %3660 = vdwg.mxu0
        %3661 = vmatprep.subr.mxu0 0.0
        %3662 = vmatpush1.msra.mxu0 0.0
        %3663 = vmatprep.subr.mxu0 0.0
        %3664 = vmatpush1.msra.mxu0 0.0
        %3665 = vmatprep.subr.mxu0 0.0
        %3666 = vmatpush1.msra.mxu0 0.0
        %3667 = vmatprep.subr.mxu0 0.0
        %3668 = vmatpush1.msra.mxu0 0.0
        %3669 = vmatprep.subr.mxu0 0.0
        %3670 = vmatpush1.msra.mxu0 0.0
        %3671 = vmatprep.subr.mxu0 0.0
        %3672 = vmatpush1.msra.mxu0 0.0
        %3673 = vmatprep.subr.mxu0 0.0
        %3674 = vmatpush1.msra.mxu0 0.0
        %3675 = vmatprep.subr.mxu0 0.0
        %3676 = vmatpush1.msra.mxu0 0.0
        %3677 = vmatprep.subr.mxu0 0.0
        %3678 = vmatpush1.msra.mxu0 0.0
        %3679 = vmatprep.subr.mxu0 0.0
        %3680 = vmatpush1.msra.mxu0 0.0
        %3681 = vmatprep.subr.mxu0 0.0
        %3682 = vmatpush1.msra.mxu0 0.0
        %3683 = vmatprep.subr.mxu0 0.0
        %3684 = vmatpush1.msra.mxu0 0.0
        %3685 = vmatprep.subr.mxu0 0.0
        %3686 = vmatpush1.msra.mxu0 0.0
        %3687 = vmatprep.subr.mxu0 0.0
        %3688 = vmatpush1.msra.mxu0 0.0
        %3689 = vmatprep.subr.mxu0 %v322
        %3690 = vmatpush1.msra.mxu0 %v321
        %3691 = vmatprep.subr.mxu0 %v317
        %3692 = vmatpush1.msra.mxu0 %v316
        %3693 = vmatprep.subr.mxu0 0.0
        %3694 = vmatpush2.msra.mxu0 0.0
        %3695 = vmatprep.subr.mxu0 0.0
        %3696 = vmatpush2.msra.mxu0 0.0
        %3697 = vmatprep.subr.mxu0 0.0
        %3698 = vmatpush2.msra.mxu0 0.0
        %3699 = vmatprep.subr.mxu0 0.0
        %3700 = vmatpush2.msra.mxu0 0.0
        %3701 = vmatprep.subr.mxu0 0.0
        %3702 = vmatpush2.msra.mxu0 0.0
        %3703 = vmatprep.subr.mxu0 0.0
        %3704 = vmatpush2.msra.mxu0 0.0
        %3705 = vmatprep.subr.mxu0 0.0
        %3706 = vmatpush2.msra.mxu0 0.0
        %3707 = vmatprep.subr.mxu0 0.0
        %3708 = vmatpush2.msra.mxu0 0.0
        %3709 = vmatprep.subr.mxu0 0.0
        %3710 = vmatpush2.msra.mxu0 0.0
        %3711 = vmatprep.subr.mxu0 0.0
        %3712 = vmatpush2.msra.mxu0 0.0
        %3713 = vmatprep.subr.mxu0 0.0
        %3714 = vmatpush2.msra.mxu0 0.0
        %3715 = vmatprep.subr.mxu0 0.0
        %3716 = vmatpush2.msra.mxu0 0.0
        %3717 = vmatprep.subr.mxu0 0.0
        %3718 = vmatpush2.msra.mxu0 0.0
        %3719 = vmatprep.subr.mxu0 0.0
        %3720 = vmatpush2.msra.mxu0 0.0
        %3721 = vmatprep.subr.mxu0 0.0
        %3722 = vmatpush2.msra.mxu0 0.0
        %3723 = vmatprep.subr.mxu0 0.0
        %3724 = vmatpush2.msra.mxu0 0.0
        %3725 = vmatprep.mubr.f32.mxu0 0.0
        %3726 = vmatmul.mubr.f32.gmra.mxu0 %v3579
        %v3727 = vpop.f32.mrf.mxu0
        %v3728 = vadd.f32 0.0, %v3727
        %v3729 = vpop.f32.mrf.mxu0
        %v3730 = vadd.f32 0.0, %v3729
        %3731 = vmatprep.mubr.f32.mxu0 0.0
        %3732 = vmatmul.mubr.f32.gmra.mxu0 %v3582
        %v3733 = vpop.f32.mrf.mxu0
        %v3734 = vadd.f32 0.0, %v3733
        %v3735 = vpop.f32.mrf.mxu0
        %v3736 = vadd.f32 0.0, %v3735
        %3737 = vdwg.mxu0
        %3738 = vmatprep.subr.mxu0 0.0
        %3739 = vmatpush1.msra.mxu0 0.0
        %3740 = vmatprep.subr.mxu0 0.0
        %3741 = vmatpush1.msra.mxu0 0.0
        %3742 = vmatprep.subr.mxu0 0.0
        %3743 = vmatpush1.msra.mxu0 0.0
        %3744 = vmatprep.subr.mxu0 0.0
        %3745 = vmatpush1.msra.mxu0 0.0
        %3746 = vmatprep.subr.mxu0 0.0
        %3747 = vmatpush1.msra.mxu0 0.0
        %3748 = vmatprep.subr.mxu0 0.0
        %3749 = vmatpush1.msra.mxu0 0.0
        %3750 = vmatprep.subr.mxu0 0.0
        %3751 = vmatpush1.msra.mxu0 0.0
        %3752 = vmatprep.subr.mxu0 0.0
        %3753 = vmatpush1.msra.mxu0 0.0
        %3754 = vmatprep.subr.mxu0 0.0
        %3755 = vmatpush1.msra.mxu0 0.0
        %3756 = vmatprep.subr.mxu0 0.0
        %3757 = vmatpush1.msra.mxu0 0.0
        %3758 = vmatprep.subr.mxu0 0.0
        %3759 = vmatpush1.msra.mxu0 0.0
        %3760 = vmatprep.subr.mxu0 0.0
        %3761 = vmatpush1.msra.mxu0 0.0
        %3762 = vmatprep.subr.mxu0 0.0
        %3763 = vmatpush1.msra.mxu0 0.0
        %3764 = vmatprep.subr.mxu0 0.0
        %3765 = vmatpush1.msra.mxu0 0.0
        %3766 = vmatprep.subr.mxu0 0.0
        %3767 = vmatpush1.msra.mxu0 %v323
        %3768 = vmatprep.subr.mxu0 0.0
        %3769 = vmatpush1.msra.mxu0 %v318
        %3770 = vmatprep.subr.mxu0 0.0
        %3771 = vmatpush2.msra.mxu0 0.0
        %3772 = vmatprep.subr.mxu0 0.0
        %3773 = vmatpush2.msra.mxu0 0.0
        %3774 = vmatprep.subr.mxu0 0.0
        %3775 = vmatpush2.msra.mxu0 0.0
        %3776 = vmatprep.subr.mxu0 0.0
        %3777 = vmatpush2.msra.mxu0 0.0
        %3778 = vmatprep.subr.mxu0 0.0
        %3779 = vmatpush2.msra.mxu0 0.0
        %3780 = vmatprep.subr.mxu0 0.0
        %3781 = vmatpush2.msra.mxu0 0.0
        %3782 = vmatprep.subr.mxu0 0.0
        %3783 = vmatpush2.msra.mxu0 0.0
        %3784 = vmatprep.subr.mxu0 0.0
        %3785 = vmatpush2.msra.mxu0 0.0
        %3786 = vmatprep.subr.mxu0 0.0
        %3787 = vmatpush2.msra.mxu0 0.0
        %3788 = vmatprep.subr.mxu0 0.0
        %3789 = vmatpush2.msra.mxu0 0.0
        %3790 = vmatprep.subr.mxu0 0.0
        %3791 = vmatpush2.msra.mxu0 0.0
        %3792 = vmatprep.subr.mxu0 0.0
        %3793 = vmatpush2.msra.mxu0 0.0
        %3794 = vmatprep.subr.mxu0 0.0
        %3795 = vmatpush2.msra.mxu0 0.0
        %3796 = vmatprep.subr.mxu0 0.0
        %3797 = vmatpush2.msra.mxu0 0.0
        %3798 = vmatprep.subr.mxu0 0.0
        %3799 = vmatpush2.msra.mxu0 0.0
        %3800 = vmatprep.subr.mxu0 0.0
        %3801 = vmatpush2.msra.mxu0 0.0
        %3802 = vmatprep.mubr.f32.mxu0 0.0
        %3803 = vmatmul.mubr.f32.gmra.mxu0 %v3579
        %v3804 = vpop.f32.mrf.mxu0
        %v3805 = vadd.f32 0.0, %v3804
        %v3806 = vpop.f32.mrf.mxu0
        %3807 = vmatprep.mubr.f32.mxu0 0.0
        %3808 = vmatmul.mubr.f32.gmra.mxu0 %v3582
        %v3809 = vpop.f32.mrf.mxu0
        %v3810 = vadd.f32 0.0, %v3809
        %v3811 = vpop.f32.mrf.mxu0
        %3812 = vdwg.mxu0
        %3813 = vmatprep.subr.mxu0 0.0
        %3814 = vmatpush1.msra.mxu0 0.0
        %3815 = vmatprep.subr.mxu0 0.0
        %3816 = vmatpush1.msra.mxu0 0.0
        %3817 = vmatprep.subr.mxu0 0.0
        %3818 = vmatpush1.msra.mxu0 0.0
        %3819 = vmatprep.subr.mxu0 0.0
        %3820 = vmatpush1.msra.mxu0 0.0
        %3821 = vmatprep.subr.mxu0 0.0
        %3822 = vmatpush1.msra.mxu0 0.0
        %3823 = vmatprep.subr.mxu0 0.0
        %3824 = vmatpush1.msra.mxu0 0.0
        %3825 = vmatprep.subr.mxu0 0.0
        %3826 = vmatpush1.msra.mxu0 0.0
        %3827 = vmatprep.subr.mxu0 0.0
        %3828 = vmatpush1.msra.mxu0 0.0
        %3829 = vmatprep.subr.mxu0 0.0
        %3830 = vmatpush1.msra.mxu0 0.0
        %3831 = vmatprep.subr.mxu0 0.0
        %3832 = vmatpush1.msra.mxu0 0.0
        %3833 = vmatprep.subr.mxu0 0.0
        %3834 = vmatpush1.msra.mxu0 0.0
        %3835 = vmatprep.subr.mxu0 0.0
        %3836 = vmatpush1.msra.mxu0 0.0
        %3837 = vmatprep.subr.mxu0 0.0
        %3838 = vmatpush1.msra.mxu0 0.0
        %3839 = vmatprep.subr.mxu0 0.0
        %3840 = vmatpush1.msra.mxu0 0.0
        %3841 = vmatprep.subr.mxu0 %v3659
        %3842 = vmatpush1.msra.mxu0 %v3657
        %3843 = vmatprep.subr.mxu0 %v3653
        %3844 = vmatpush1.msra.mxu0 %v3651
        %3845 = vmatprep.subr.mxu0 0.0
        %3846 = vmatpush2.msra.mxu0 0.0
        %3847 = vmatprep.subr.mxu0 0.0
        %3848 = vmatpush2.msra.mxu0 0.0
        %3849 = vmatprep.subr.mxu0 0.0
        %3850 = vmatpush2.msra.mxu0 0.0
        %3851 = vmatprep.subr.mxu0 0.0
        %3852 = vmatpush2.msra.mxu0 0.0
        %3853 = vmatprep.subr.mxu0 0.0
        %3854 = vmatpush2.msra.mxu0 0.0
        %3855 = vmatprep.subr.mxu0 0.0
        %3856 = vmatpush2.msra.mxu0 0.0
        %3857 = vmatprep.subr.mxu0 0.0
        %3858 = vmatpush2.msra.mxu0 0.0
        %3859 = vmatprep.subr.mxu0 0.0
        %3860 = vmatpush2.msra.mxu0 0.0
        %3861 = vmatprep.subr.mxu0 0.0
        %3862 = vmatpush2.msra.mxu0 0.0
        %3863 = vmatprep.subr.mxu0 0.0
        %3864 = vmatpush2.msra.mxu0 0.0
        %3865 = vmatprep.subr.mxu0 0.0
        %3866 = vmatpush2.msra.mxu0 0.0
        %3867 = vmatprep.subr.mxu0 0.0
        %3868 = vmatpush2.msra.mxu0 0.0
        %3869 = vmatprep.subr.mxu0 0.0
        %3870 = vmatpush2.msra.mxu0 0.0
        %3871 = vmatprep.subr.mxu0 0.0
        %3872 = vmatpush2.msra.mxu0 0.0
        %3873 = vmatprep.subr.mxu0 0.0
        %3874 = vmatpush2.msra.mxu0 0.0
        %3875 = vmatprep.subr.mxu0 0.0
        %3876 = vmatpush2.msra.mxu0 0.0
        %3877 = vmatprep.mubr.f32.mxu0 0.0
        %3878 = vmatmul.mubr.f32.gmra.mxu0 %v598
        %v3879 = vpop.f32.mrf.mxu0
        %v3880 = vadd.f32 0.0, %v3879
        %v3881 = vpop.f32.mrf.mxu0
        %v3882 = vadd.f32 0.0, %v3881
        %3883 = vmatprep.mubr.f32.mxu0 0.0
        %3884 = vmatmul.mubr.f32.gmra.mxu0 %v601
        %v3885 = vpop.f32.mrf.mxu0
        %v3886 = vadd.f32 0.0, %v3885
        %v3887 = vpop.f32.mrf.mxu0
        %v3888 = vadd.f32 0.0, %v3887
        %3889 = vmatprep.mubr.f32.mxu0 0.0
        %3890 = vmatmul.mubr.f32.gmra.mxu0 %v604
        %v3891 = vpop.f32.mrf.mxu0
        %v3892 = vadd.f32 0.0, %v3891
        %v3893 = vpop.f32.mrf.mxu0
        %v3894 = vadd.f32 0.0, %v3893
        %3895 = vmatprep.mubr.f32.mxu0 0.0
        %3896 = vmatmul.mubr.f32.gmra.mxu0 %v607
        %v3897 = vpop.f32.mrf.mxu0
        %v3898 = vadd.f32 0.0, %v3897
        %v3899 = vpop.f32.mrf.mxu0
        %v3900 = vadd.f32 0.0, %v3899
        %3901 = vmatprep.mubr.f32.mxu0 0.0
        %3902 = vmatmul.mubr.f32.gmra.mxu0 %v610
        %v3903 = vpop.f32.mrf.mxu0
        %v3904 = vadd.f32 0.0, %v3903
        %v3905 = vpop.f32.mrf.mxu0
        %v3906 = vadd.f32 0.0, %v3905
        %3907 = vmatprep.mubr.f32.mxu0 0.0
        %3908 = vmatmul.mubr.f32.gmra.mxu0 %v613
        %v3909 = vpop.f32.mrf.mxu0
        %v3910 = vadd.f32 0.0, %v3909
        %v3911 = vpop.f32.mrf.mxu0
        %v3912 = vadd.f32 0.0, %v3911
        %3913 = vmatprep.mubr.f32.mxu0 0.0
        %3914 = vmatmul.mubr.f32.gmra.mxu0 %v616
        %v3915 = vpop.f32.mrf.mxu0
        %v3916 = vadd.f32 0.0, %v3915
        %v3917 = vpop.f32.mrf.mxu0
        %v3918 = vadd.f32 0.0, %v3917
        %3919 = vmatprep.mubr.f32.mxu0 0.0
        %3920 = vmatmul.mubr.f32.gmra.mxu0 %v619
        %v3921 = vpop.f32.mrf.mxu0
        %v3922 = vadd.f32 0.0, %v3921
        %v3923 = vpop.f32.mrf.mxu0
        %v3924 = vadd.f32 0.0, %v3923
        %3925 = vmatprep.mubr.f32.mxu0 0.0
        %3926 = vmatmul.mubr.f32.gmra.mxu0 %v622
        %v3927 = vpop.f32.mrf.mxu0
        %v3928 = vadd.f32 0.0, %v3927
        %v3929 = vpop.f32.mrf.mxu0
        %v3930 = vadd.f32 0.0, %v3929
        %3931 = vmatprep.mubr.f32.mxu0 0.0
        %3932 = vmatmul.mubr.f32.gmra.mxu0 %v625
        %v3933 = vpop.f32.mrf.mxu0
        %v3934 = vadd.f32 0.0, %v3933
        %v3935 = vpop.f32.mrf.mxu0
        %v3936 = vadd.f32 0.0, %v3935
        %3937 = vmatprep.mubr.f32.mxu0 0.0
        %3938 = vmatmul.mubr.f32.gmra.mxu0 %v628
        %v3939 = vpop.f32.mrf.mxu0
        %v3940 = vadd.f32 0.0, %v3939
        %v3941 = vpop.f32.mrf.mxu0
        %v3942 = vadd.f32 0.0, %v3941
        %3943 = vmatprep.mubr.f32.mxu0 0.0
        %3944 = vmatmul.mubr.f32.gmra.mxu0 %v631
        %v3945 = vpop.f32.mrf.mxu0
        %v3946 = vadd.f32 0.0, %v3945
        %v3947 = vpop.f32.mrf.mxu0
        %v3948 = vadd.f32 0.0, %v3947
        %3949 = vdwg.mxu0
        %3950 = vmatprep.subr.mxu0 0.0
        %3951 = vmatpush1.msra.mxu0 0.0
        %3952 = vmatprep.subr.mxu0 0.0
        %3953 = vmatpush1.msra.mxu0 0.0
        %3954 = vmatprep.subr.mxu0 0.0
        %3955 = vmatpush1.msra.mxu0 0.0
        %3956 = vmatprep.subr.mxu0 0.0
        %3957 = vmatpush1.msra.mxu0 0.0
        %3958 = vmatprep.subr.mxu0 0.0
        %3959 = vmatpush1.msra.mxu0 0.0
        %3960 = vmatprep.subr.mxu0 0.0
        %3961 = vmatpush1.msra.mxu0 0.0
        %3962 = vmatprep.subr.mxu0 0.0
        %3963 = vmatpush1.msra.mxu0 0.0
        %3964 = vmatprep.subr.mxu0 0.0
        %3965 = vmatpush1.msra.mxu0 0.0
        %3966 = vmatprep.subr.mxu0 0.0
        %3967 = vmatpush1.msra.mxu0 0.0
        %3968 = vmatprep.subr.mxu0 0.0
        %3969 = vmatpush1.msra.mxu0 0.0
        %3970 = vmatprep.subr.mxu0 0.0
        %3971 = vmatpush1.msra.mxu0 0.0
        %3972 = vmatprep.subr.mxu0 0.0
        %3973 = vmatpush1.msra.mxu0 0.0
        %3974 = vmatprep.subr.mxu0 0.0
        %3975 = vmatpush1.msra.mxu0 0.0
        %3976 = vmatprep.subr.mxu0 0.0
        %3977 = vmatpush1.msra.mxu0 0.0
        %3978 = vmatprep.subr.mxu0 %v3736
        %3979 = vmatpush1.msra.mxu0 %v3734
        %3980 = vmatprep.subr.mxu0 %v3730
        %3981 = vmatpush1.msra.mxu0 %v3728
        %3982 = vmatprep.subr.mxu0 0.0
        %3983 = vmatpush2.msra.mxu0 0.0
        %3984 = vmatprep.subr.mxu0 0.0
        %3985 = vmatpush2.msra.mxu0 0.0
        %3986 = vmatprep.subr.mxu0 0.0
        %3987 = vmatpush2.msra.mxu0 0.0
        %3988 = vmatprep.subr.mxu0 0.0
        %3989 = vmatpush2.msra.mxu0 0.0
        %3990 = vmatprep.subr.mxu0 0.0
        %3991 = vmatpush2.msra.mxu0 0.0
        %3992 = vmatprep.subr.mxu0 0.0
        %3993 = vmatpush2.msra.mxu0 0.0
        %3994 = vmatprep.subr.mxu0 0.0
        %3995 = vmatpush2.msra.mxu0 0.0
        %3996 = vmatprep.subr.mxu0 0.0
        %3997 = vmatpush2.msra.mxu0 0.0
        %3998 = vmatprep.subr.mxu0 0.0
        %3999 = vmatpush2.msra.mxu0 0.0
        %4000 = vmatprep.subr.mxu0 0.0
        %4001 = vmatpush2.msra.mxu0 0.0
        %4002 = vmatprep.subr.mxu0 0.0
        %4003 = vmatpush2.msra.mxu0 0.0
        %4004 = vmatprep.subr.mxu0 0.0
        %4005 = vmatpush2.msra.mxu0 0.0
        %4006 = vmatprep.subr.mxu0 0.0
        %4007 = vmatpush2.msra.mxu0 0.0
        %4008 = vmatprep.subr.mxu0 0.0
        %4009 = vmatpush2.msra.mxu0 0.0
        %4010 = vmatprep.subr.mxu0 0.0
        %4011 = vmatpush2.msra.mxu0 0.0
        %4012 = vmatprep.subr.mxu0 0.0
        %4013 = vmatpush2.msra.mxu0 0.0
        %4014 = vmatprep.mubr.f32.mxu0 0.0
        %4015 = vmatmul.mubr.f32.gmra.mxu0 %v598
        %v4016 = vpop.f32.mrf.mxu0
        %v4017 = vadd.f32 0.0, %v4016
        %v4018 = vpop.f32.mrf.mxu0
        %v4019 = vadd.f32 0.0, %v4018
        %4020 = vmatprep.mubr.f32.mxu0 0.0
        %4021 = vmatmul.mubr.f32.gmra.mxu0 %v601
        %v4022 = vpop.f32.mrf.mxu0
        %v4023 = vadd.f32 0.0, %v4022
        %v4024 = vpop.f32.mrf.mxu0
        %v4025 = vadd.f32 0.0, %v4024
        %4026 = vmatprep.mubr.f32.mxu0 0.0
        %4027 = vmatmul.mubr.f32.gmra.mxu0 %v604
        %v4028 = vpop.f32.mrf.mxu0
        %v4029 = vadd.f32 0.0, %v4028
        %v4030 = vpop.f32.mrf.mxu0
        %v4031 = vadd.f32 0.0, %v4030
        %4032 = vmatprep.mubr.f32.mxu0 0.0
        %4033 = vmatmul.mubr.f32.gmra.mxu0 %v607
        %v4034 = vpop.f32.mrf.mxu0
        %v4035 = vadd.f32 0.0, %v4034
        %v4036 = vpop.f32.mrf.mxu0
        %v4037 = vadd.f32 0.0, %v4036
        %4038 = vmatprep.mubr.f32.mxu0 0.0
        %4039 = vmatmul.mubr.f32.gmra.mxu0 %v610
        %v4040 = vpop.f32.mrf.mxu0
        %v4041 = vadd.f32 0.0, %v4040
        %v4042 = vpop.f32.mrf.mxu0
        %v4043 = vadd.f32 0.0, %v4042
        %4044 = vmatprep.mubr.f32.mxu0 0.0
        %4045 = vmatmul.mubr.f32.gmra.mxu0 %v613
        %v4046 = vpop.f32.mrf.mxu0
        %v4047 = vadd.f32 0.0, %v4046
        %v4048 = vpop.f32.mrf.mxu0
        %v4049 = vadd.f32 0.0, %v4048
        %4050 = vmatprep.mubr.f32.mxu0 0.0
        %4051 = vmatmul.mubr.f32.gmra.mxu0 %v616
        %v4052 = vpop.f32.mrf.mxu0
        %v4053 = vadd.f32 0.0, %v4052
        %v4054 = vpop.f32.mrf.mxu0
        %v4055 = vadd.f32 0.0, %v4054
        %4056 = vmatprep.mubr.f32.mxu0 0.0
        %4057 = vmatmul.mubr.f32.gmra.mxu0 %v619
        %v4058 = vpop.f32.mrf.mxu0
        %v4059 = vadd.f32 0.0, %v4058
        %v4060 = vpop.f32.mrf.mxu0
        %v4061 = vadd.f32 0.0, %v4060
        %4062 = vmatprep.mubr.f32.mxu0 0.0
        %4063 = vmatmul.mubr.f32.gmra.mxu0 %v622
        %v4064 = vpop.f32.mrf.mxu0
        %v4065 = vadd.f32 0.0, %v4064
        %v4066 = vpop.f32.mrf.mxu0
        %v4067 = vadd.f32 0.0, %v4066
        %4068 = vmatprep.mubr.f32.mxu0 0.0
        %4069 = vmatmul.mubr.f32.gmra.mxu0 %v625
        %v4070 = vpop.f32.mrf.mxu0
        %v4071 = vadd.f32 0.0, %v4070
        %v4072 = vpop.f32.mrf.mxu0
        %v4073 = vadd.f32 0.0, %v4072
        %4074 = vmatprep.mubr.f32.mxu0 0.0
        %4075 = vmatmul.mubr.f32.gmra.mxu0 %v628
        %v4076 = vpop.f32.mrf.mxu0
        %v4077 = vadd.f32 0.0, %v4076
        %v4078 = vpop.f32.mrf.mxu0
        %v4079 = vadd.f32 0.0, %v4078
        %4080 = vmatprep.mubr.f32.mxu0 0.0
        %4081 = vmatmul.mubr.f32.gmra.mxu0 %v631
        %v4082 = vpop.f32.mrf.mxu0
        %v4083 = vadd.f32 0.0, %v4082
        %v4084 = vpop.f32.mrf.mxu0
        %v4085 = vadd.f32 0.0, %v4084
        %4086 = vdwg.mxu0
        %4087 = vmatprep.subr.mxu0 0.0
        %4088 = vmatpush1.msra.mxu0 0.0
        %4089 = vmatprep.subr.mxu0 0.0
        %4090 = vmatpush1.msra.mxu0 0.0
        %4091 = vmatprep.subr.mxu0 0.0
        %4092 = vmatpush1.msra.mxu0 0.0
        %4093 = vmatprep.subr.mxu0 0.0
        %4094 = vmatpush1.msra.mxu0 0.0
        %4095 = vmatprep.subr.mxu0 0.0
        %4096 = vmatpush1.msra.mxu0 0.0
        %4097 = vmatprep.subr.mxu0 0.0
        %4098 = vmatpush1.msra.mxu0 0.0
        %4099 = vmatprep.subr.mxu0 0.0
        %4100 = vmatpush1.msra.mxu0 0.0
        %4101 = vmatprep.subr.mxu0 0.0
        %4102 = vmatpush1.msra.mxu0 0.0
        %4103 = vmatprep.subr.mxu0 0.0
        %4104 = vmatpush1.msra.mxu0 0.0
        %4105 = vmatprep.subr.mxu0 0.0
        %4106 = vmatpush1.msra.mxu0 0.0
        %4107 = vmatprep.subr.mxu0 0.0
        %4108 = vmatpush1.msra.mxu0 0.0
        %4109 = vmatprep.subr.mxu0 0.0
        %4110 = vmatpush1.msra.mxu0 0.0
        %4111 = vmatprep.subr.mxu0 0.0
        %4112 = vmatpush1.msra.mxu0 0.0
        %4113 = vmatprep.subr.mxu0 0.0
        %4114 = vmatpush1.msra.mxu0 0.0
        %4115 = vmatprep.subr.mxu0 0.0
        %4116 = vmatpush1.msra.mxu0 %v3810
        %4117 = vmatprep.subr.mxu0 0.0
        %4118 = vmatpush1.msra.mxu0 %v3805
        %4119 = vmatprep.subr.mxu0 0.0
        %4120 = vmatpush2.msra.mxu0 0.0
        %4121 = vmatprep.subr.mxu0 0.0
        %4122 = vmatpush2.msra.mxu0 0.0
        %4123 = vmatprep.subr.mxu0 0.0
        %4124 = vmatpush2.msra.mxu0 0.0
        %4125 = vmatprep.subr.mxu0 0.0
        %4126 = vmatpush2.msra.mxu0 0.0
        %4127 = vmatprep.subr.mxu0 0.0
        %4128 = vmatpush2.msra.mxu0 0.0
        %4129 = vmatprep.subr.mxu0 0.0
        %4130 = vmatpush2.msra.mxu0 0.0
        %4131 = vmatprep.subr.mxu0 0.0
        %4132 = vmatpush2.msra.mxu0 0.0
        %4133 = vmatprep.subr.mxu0 0.0
        %4134 = vmatpush2.msra.mxu0 0.0
        %4135 = vmatprep.subr.mxu0 0.0
        %4136 = vmatpush2.msra.mxu0 0.0
        %4137 = vmatprep.subr.mxu0 0.0
        %4138 = vmatpush2.msra.mxu0 0.0
        %4139 = vmatprep.subr.mxu0 0.0
        %4140 = vmatpush2.msra.mxu0 0.0
        %4141 = vmatprep.subr.mxu0 0.0
        %4142 = vmatpush2.msra.mxu0 0.0
        %4143 = vmatprep.subr.mxu0 0.0
        %4144 = vmatpush2.msra.mxu0 0.0
        %4145 = vmatprep.subr.mxu0 0.0
        %4146 = vmatpush2.msra.mxu0 0.0
        %4147 = vmatprep.subr.mxu0 0.0
        %4148 = vmatpush2.msra.mxu0 0.0
        %4149 = vmatprep.subr.mxu0 0.0
        %4150 = vmatpush2.msra.mxu0 0.0
        %4151 = vmatprep.mubr.f32.mxu0 0.0
        %4152 = vmatmul.mubr.f32.gmra.mxu0 %v598
        %v4153 = vpop.f32.mrf.mxu0
        %v4154 = vadd.f32 0.0, %v4153
        %v4155 = vpop.f32.mrf.mxu0
        %4156 = vmatprep.mubr.f32.mxu0 0.0
        %4157 = vmatmul.mubr.f32.gmra.mxu0 %v601
        %v4158 = vpop.f32.mrf.mxu0
        %v4159 = vadd.f32 0.0, %v4158
        %v4160 = vpop.f32.mrf.mxu0
        %4161 = vmatprep.mubr.f32.mxu0 0.0
        %4162 = vmatmul.mubr.f32.gmra.mxu0 %v604
        %v4163 = vpop.f32.mrf.mxu0
        %v4164 = vadd.f32 0.0, %v4163
        %v4165 = vpop.f32.mrf.mxu0
        %4166 = vmatprep.mubr.f32.mxu0 0.0
        %4167 = vmatmul.mubr.f32.gmra.mxu0 %v607
        %v4168 = vpop.f32.mrf.mxu0
        %v4169 = vadd.f32 0.0, %v4168
        %v4170 = vpop.f32.mrf.mxu0
        %4171 = vmatprep.mubr.f32.mxu0 0.0
        %4172 = vmatmul.mubr.f32.gmra.mxu0 %v610
        %v4173 = vpop.f32.mrf.mxu0
        %v4174 = vadd.f32 0.0, %v4173
        %v4175 = vpop.f32.mrf.mxu0
        %4176 = vmatprep.mubr.f32.mxu0 0.0
        %4177 = vmatmul.mubr.f32.gmra.mxu0 %v613
        %v4178 = vpop.f32.mrf.mxu0
        %v4179 = vadd.f32 0.0, %v4178
        %v4180 = vpop.f32.mrf.mxu0
        %4181 = vmatprep.mubr.f32.mxu0 0.0
        %4182 = vmatmul.mubr.f32.gmra.mxu0 %v616
        %v4183 = vpop.f32.mrf.mxu0
        %v4184 = vadd.f32 0.0, %v4183
        %v4185 = vpop.f32.mrf.mxu0
        %4186 = vmatprep.mubr.f32.mxu0 0.0
        %4187 = vmatmul.mubr.f32.gmra.mxu0 %v619
        %v4188 = vpop.f32.mrf.mxu0
        %v4189 = vadd.f32 0.0, %v4188
        %v4190 = vpop.f32.mrf.mxu0
        %4191 = vmatprep.mubr.f32.mxu0 0.0
        %4192 = vmatmul.mubr.f32.gmra.mxu0 %v622
        %v4193 = vpop.f32.mrf.mxu0
        %v4194 = vadd.f32 0.0, %v4193
        %v4195 = vpop.f32.mrf.mxu0
        %4196 = vmatprep.mubr.f32.mxu0 0.0
        %4197 = vmatmul.mubr.f32.gmra.mxu0 %v625
        %v4198 = vpop.f32.mrf.mxu0
        %v4199 = vadd.f32 0.0, %v4198
        %v4200 = vpop.f32.mrf.mxu0
        %4201 = vmatprep.mubr.f32.mxu0 0.0
        %4202 = vmatmul.mubr.f32.gmra.mxu0 %v628
        %v4203 = vpop.f32.mrf.mxu0
        %v4204 = vadd.f32 0.0, %v4203
        %v4205 = vpop.f32.mrf.mxu0
        %4206 = vmatprep.mubr.f32.mxu0 0.0
        %4207 = vmatmul.mubr.f32.gmra.mxu0 %v631
        %v4208 = vpop.f32.mrf.mxu0
        %v4209 = vadd.f32 0.0, %v4208
        %v4210 = vpop.f32.mrf.mxu0
        %4211 = vdwg.mxu0
        %vm4212 = vcmp.gt.f32.partialorder %v3880, %v3432
        %vm4213 = vcmp.gt.f32.partialorder %v3882, %v3433
        %vm4214 = vcmp.gt.f32.partialorder %v4017, %v3434
        %vm4215 = vcmp.gt.f32.partialorder %v4019, %v3435
        %vm4216 = vcmp.gt.f32.partialorder %v4154, %v3436
        %vm4217 = vcmp.gt.f32.partialorder %v3886, %v3437
        %vm4218 = vcmp.gt.f32.partialorder %v3888, %v3438
        %vm4219 = vcmp.gt.f32.partialorder %v4023, %v3439
        %vm4220 = vcmp.gt.f32.partialorder %v4025, %v3440
        %vm4221 = vcmp.gt.f32.partialorder %v4159, %v3441
        %vm4222 = vcmp.gt.f32.partialorder %v3892, %v3442
        %vm4223 = vcmp.gt.f32.partialorder %v3894, %v3443
        %vm4224 = vcmp.gt.f32.partialorder %v4029, %v3444
        %vm4225 = vcmp.gt.f32.partialorder %v4031, %v3445
        %vm4226 = vcmp.gt.f32.partialorder %v4164, %v3446
        %vm4227 = vcmp.gt.f32.partialorder %v3898, %v3447
        %vm4228 = vcmp.gt.f32.partialorder %v3900, %v3448
        %vm4229 = vcmp.gt.f32.partialorder %v4035, %v3449
        %vm4230 = vcmp.gt.f32.partialorder %v4037, %v3450
        %vm4231 = vcmp.gt.f32.partialorder %v4169, %v3451
        %vm4232 = vcmp.gt.f32.partialorder %v3904, %v3452
        %vm4233 = vcmp.gt.f32.partialorder %v3906, %v3453
        %vm4234 = vcmp.gt.f32.partialorder %v4041, %v3454
        %vm4235 = vcmp.gt.f32.partialorder %v4043, %v3455
        %vm4236 = vcmp.gt.f32.partialorder %v4174, %v3456
        %vm4237 = vcmp.gt.f32.partialorder %v3910, %v3457
        %vm4238 = vcmp.gt.f32.partialorder %v3912, %v3458
        %vm4239 = vcmp.gt.f32.partialorder %v4047, %v3459
        %vm4240 = vcmp.gt.f32.partialorder %v4049, %v3460
        %vm4241 = vcmp.gt.f32.partialorder %v4179, %v3461
        %vm4242 = vcmp.gt.f32.partialorder %v3916, %v3462
        %vm4243 = vcmp.gt.f32.partialorder %v3918, %v3463
        %vm4244 = vcmp.gt.f32.partialorder %v4053, %v3464
        %vm4245 = vcmp.gt.f32.partialorder %v4055, %v3465
        %vm4246 = vcmp.gt.f32.partialorder %v4184, %v3466
        %vm4247 = vcmp.gt.f32.partialorder %v3922, %v3467
        %vm4248 = vcmp.gt.f32.partialorder %v3924, %v3468
        %vm4249 = vcmp.gt.f32.partialorder %v4059, %v3469
        %vm4250 = vcmp.gt.f32.partialorder %v4061, %v3470
        %vm4251 = vcmp.gt.f32.partialorder %v4189, %v3471
        %vm4252 = vcmp.gt.f32.partialorder %v3928, %v3472
        %vm4253 = vcmp.gt.f32.partialorder %v3930, %v3473
        %vm4254 = vcmp.gt.f32.partialorder %v4065, %v3474
        %vm4255 = vcmp.gt.f32.partialorder %v4067, %v3475
        %vm4256 = vcmp.gt.f32.partialorder %v4194, %v3476
        %vm4257 = vcmp.gt.f32.partialorder %v3934, %v3477
        %vm4258 = vcmp.gt.f32.partialorder %v3936, %v3478
        %vm4259 = vcmp.gt.f32.partialorder %v4071, %v3479
        %vm4260 = vcmp.gt.f32.partialorder %v4073, %v3480
        %vm4261 = vcmp.gt.f32.partialorder %v4199, %v3481
        %vm4262 = vcmp.gt.f32.partialorder %v3940, %v3482
        %vm4263 = vcmp.gt.f32.partialorder %v3942, %v3483
        %vm4264 = vcmp.gt.f32.partialorder %v4077, %v3484
        %vm4265 = vcmp.gt.f32.partialorder %v4079, %v3485
        %vm4266 = vcmp.gt.f32.partialorder %v4204, %v3486
        %vm4267 = vcmp.gt.f32.partialorder %v3946, %v3487
        %vm4268 = vcmp.gt.f32.partialorder %v3948, %v3488
        %vm4269 = vcmp.gt.f32.partialorder %v4083, %v3489
        %vm4270 = vcmp.gt.f32.partialorder %v4085, %v3490
        %vm4271 = vcmp.gt.f32.partialorder %v4209, %v3491
        %v4272 = vsel %vm4212, %v3880, %v3432
        %v4273 = vsel %vm4213, %v3882, %v3433
        %v4274 = vsel %vm4214, %v4017, %v3434
        %v4275 = vsel %vm4215, %v4019, %v3435
        %v4276 = vsel %vm4216, %v4154, %v3436
        %v4277 = vsel %vm4217, %v3886, %v3437
        %v4278 = vsel %vm4218, %v3888, %v3438
        %v4279 = vsel %vm4219, %v4023, %v3439
        %v4280 = vsel %vm4220, %v4025, %v3440
        %v4281 = vsel %vm4221, %v4159, %v3441
        %v4282 = vsel %vm4222, %v3892, %v3442
        %v4283 = vsel %vm4223, %v3894, %v3443
        %v4284 = vsel %vm4224, %v4029, %v3444
        %v4285 = vsel %vm4225, %v4031, %v3445
        %v4286 = vsel %vm4226, %v4164, %v3446
        %v4287 = vsel %vm4227, %v3898, %v3447
        %v4288 = vsel %vm4228, %v3900, %v3448
        %v4289 = vsel %vm4229, %v4035, %v3449
        %v4290 = vsel %vm4230, %v4037, %v3450
        %v4291 = vsel %vm4231, %v4169, %v3451
        %v4292 = vsel %vm4232, %v3904, %v3452
        %v4293 = vsel %vm4233, %v3906, %v3453
        %v4294 = vsel %vm4234, %v4041, %v3454
        %v4295 = vsel %vm4235, %v4043, %v3455
        %v4296 = vsel %vm4236, %v4174, %v3456
        %v4297 = vsel %vm4237, %v3910, %v3457
        %v4298 = vsel %vm4238, %v3912, %v3458
        %v4299 = vsel %vm4239, %v4047, %v3459
        %v4300 = vsel %vm4240, %v4049, %v3460
        %v4301 = vsel %vm4241, %v4179, %v3461
        %v4302 = vsel %vm4242, %v3916, %v3462
        %v4303 = vsel %vm4243, %v3918, %v3463
        %v4304 = vsel %vm4244, %v4053, %v3464
        %v4305 = vsel %vm4245, %v4055, %v3465
        %v4306 = vsel %vm4246, %v4184, %v3466
        %v4307 = vsel %vm4247, %v3922, %v3467
        %v4308 = vsel %vm4248, %v3924, %v3468
        %v4309 = vsel %vm4249, %v4059, %v3469
        %v4310 = vsel %vm4250, %v4061, %v3470
        %v4311 = vsel %vm4251, %v4189, %v3471
        %v4312 = vsel %vm4252, %v3928, %v3472
        %v4313 = vsel %vm4253, %v3930, %v3473
        %v4314 = vsel %vm4254, %v4065, %v3474
        %v4315 = vsel %vm4255, %v4067, %v3475
        %v4316 = vsel %vm4256, %v4194, %v3476
        %v4317 = vsel %vm4257, %v3934, %v3477
        %v4318 = vsel %vm4258, %v3936, %v3478
        %v4319 = vsel %vm4259, %v4071, %v3479
        %v4320 = vsel %vm4260, %v4073, %v3480
        %v4321 = vsel %vm4261, %v4199, %v3481
        %v4322 = vsel %vm4262, %v3940, %v3482
        %v4323 = vsel %vm4263, %v3942, %v3483
        %v4324 = vsel %vm4264, %v4077, %v3484
        %v4325 = vsel %vm4265, %v4079, %v3485
        %v4326 = vsel %vm4266, %v4204, %v3486
        %v4327 = vsel %vm4267, %v3946, %v3487
        %v4328 = vsel %vm4268, %v3948, %v3488
        %v4329 = vsel %vm4269, %v4083, %v3489
        %v4330 = vsel %vm4270, %v4085, %v3490
        %v4331 = vsel %vm4271, %v4209, %v3491
        %v4332 = vsel %vm4212, 4, %v3492
        %v4333 = vsel %vm4213, 4, %v3493
        %v4334 = vsel %vm4214, 4, %v3494
        %v4335 = vsel %vm4215, 4, %v3495
        %v4336 = vsel %vm4216, 4, %v3496
        %v4337 = vsel %vm4217, 4, %v3497
        %v4338 = vsel %vm4218, 4, %v3498
        %v4339 = vsel %vm4219, 4, %v3499
        %v4340 = vsel %vm4220, 4, %v3500
        %v4341 = vsel %vm4221, 4, %v3501
        %v4342 = vsel %vm4222, 4, %v3502
        %v4343 = vsel %vm4223, 4, %v3503
        %v4344 = vsel %vm4224, 4, %v3504
        %v4345 = vsel %vm4225, 4, %v3505
        %v4346 = vsel %vm4226, 4, %v3506
        %v4347 = vsel %vm4227, 4, %v3507
        %v4348 = vsel %vm4228, 4, %v3508
        %v4349 = vsel %vm4229, 4, %v3509
        %v4350 = vsel %vm4230, 4, %v3510
        %v4351 = vsel %vm4231, 4, %v3511
        %v4352 = vsel %vm4232, 4, %v3512
        %v4353 = vsel %vm4233, 4, %v3513
        %v4354 = vsel %vm4234, 4, %v3514
        %v4355 = vsel %vm4235, 4, %v3515
        %v4356 = vsel %vm4236, 4, %v3516
        %v4357 = vsel %vm4237, 4, %v3517
        %v4358 = vsel %vm4238, 4, %v3518
        %v4359 = vsel %vm4239, 4, %v3519
        %v4360 = vsel %vm4240, 4, %v3520
        %v4361 = vsel %vm4241, 4, %v3521
        %v4362 = vsel %vm4242, 4, %v3522
        %v4363 = vsel %vm4243, 4, %v3523
        %v4364 = vsel %vm4244, 4, %v3524
        %v4365 = vsel %vm4245, 4, %v3525
        %v4366 = vsel %vm4246, 4, %v3526
        %v4367 = vsel %vm4247, 4, %v3527
        %v4368 = vsel %vm4248, 4, %v3528
        %v4369 = vsel %vm4249, 4, %v3529
        %v4370 = vsel %vm4250, 4, %v3530
        %v4371 = vsel %vm4251, 4, %v3531
        %v4372 = vsel %vm4252, 4, %v3532
        %v4373 = vsel %vm4253, 4, %v3533
        %v4374 = vsel %vm4254, 4, %v3534
        %v4375 = vsel %vm4255, 4, %v3535
        %v4376 = vsel %vm4256, 4, %v3536
        %v4377 = vsel %vm4257, 4, %v3537
        %v4378 = vsel %vm4258, 4, %v3538
        %v4379 = vsel %vm4259, 4, %v3539
        %v4380 = vsel %vm4260, 4, %v3540
        %v4381 = vsel %vm4261, 4, %v3541
        %v4382 = vsel %vm4262, 4, %v3542
        %v4383 = vsel %vm4263, 4, %v3543
        %v4384 = vsel %vm4264, 4, %v3544
        %v4385 = vsel %vm4265, 4, %v3545
        %v4386 = vsel %vm4266, 4, %v3546
        %v4387 = vsel %vm4267, 4, %v3547
        %v4388 = vsel %vm4268, 4, %v3548
        %v4389 = vsel %vm4269, 4, %v3549
        %v4390 = vsel %vm4270, 4, %v3550
        %v4391 = vsel %vm4271, 4, %v3551
        %s4392 = sld [smem:[#allocation2 + $0x280]]
        %v4393 = vstv %s4392
        %v4394 = vmul.f32 %v324, %v4393
        %v4395 = vmul.f32 %v325, %v4393
        %s4396 = sld [smem:[#allocation2 + $0x281]]
        %v4397 = vstv %s4396
        %v4398 = vmul.f32 %v327, %v4397
        %v4399 = vmul.f32 %v328, %v4397
        %v4400 = vadd.f32 %v4394, %v4398
        %v4401 = vadd.f32 %v4395, %v4399
        %s4402 = sld [smem:[#allocation2 + $0x282]]
        %v4403 = vstv %s4402
        %v4404 = vmul.f32 %v330, %v4403
        %v4405 = vmul.f32 %v331, %v4403
        %v4406 = vadd.f32 %v4400, %v4404
        %v4407 = vadd.f32 %v4401, %v4405
        %s4408 = sld [smem:[#allocation2 + $0x283]]
        %v4409 = vstv %s4408
        %v4410 = vmul.f32 %v333, %v4409
        %v4411 = vmul.f32 %v334, %v4409
        %v4412 = vadd.f32 %v4406, %v4410
        %v4413 = vadd.f32 %v4407, %v4411
        %s4414 = sld [smem:[#allocation6 + $0x5]]
        %v4415 = vstv %s4414
        %v4416 = vadd.f32 %v4412, %v4415
        %v4417 = vadd.f32 %v4413, %v4415
        %v4419 = vsel %vm361, %v4416, 0
        %v4422 = vsel %vm361, %v4417, 0
        %4424 = vmatprep.subr.mxu0 0.0
        %4425 = vmatpush1.msra.mxu0 0.0
        %4426 = vmatprep.subr.mxu0 0.0
        %4427 = vmatpush1.msra.mxu0 0.0
        %4428 = vmatprep.subr.mxu0 0.0
        %4429 = vmatpush1.msra.mxu0 0.0
        %4430 = vmatprep.subr.mxu0 0.0
        %4431 = vmatpush1.msra.mxu0 0.0
        %4432 = vmatprep.subr.mxu0 0.0
        %4433 = vmatpush1.msra.mxu0 0.0
        %4434 = vmatprep.subr.mxu0 0.0
        %4435 = vmatpush1.msra.mxu0 0.0
        %4436 = vmatprep.subr.mxu0 0.0
        %4437 = vmatpush1.msra.mxu0 0.0
        %4438 = vmatprep.subr.mxu0 0.0
        %4439 = vmatpush1.msra.mxu0 0.0
        %4440 = vmatprep.subr.mxu0 0.0
        %4441 = vmatpush1.msra.mxu0 0.0
        %4442 = vmatprep.subr.mxu0 0.0
        %4443 = vmatpush1.msra.mxu0 0.0
        %4444 = vmatprep.subr.mxu0 0.0
        %4445 = vmatpush1.msra.mxu0 0.0
        %4446 = vmatprep.subr.mxu0 0.0
        %4447 = vmatpush1.msra.mxu0 0.0
        %4448 = vmatprep.subr.mxu0 0.0
        %4449 = vmatpush1.msra.mxu0 0.0
        %4450 = vmatprep.subr.mxu0 0.0
        %4451 = vmatpush1.msra.mxu0 0.0
        %4452 = vmatprep.subr.mxu0 %v320
        %4453 = vmatpush1.msra.mxu0 %v319
        %4454 = vmatprep.subr.mxu0 %v315
        %4455 = vmatpush1.msra.mxu0 %v314
        %4456 = vmatprep.subr.mxu0 0.0
        %4457 = vmatpush2.msra.mxu0 0.0
        %4458 = vmatprep.subr.mxu0 0.0
        %4459 = vmatpush2.msra.mxu0 0.0
        %4460 = vmatprep.subr.mxu0 0.0
        %4461 = vmatpush2.msra.mxu0 0.0
        %4462 = vmatprep.subr.mxu0 0.0
        %4463 = vmatpush2.msra.mxu0 0.0
        %4464 = vmatprep.subr.mxu0 0.0
        %4465 = vmatpush2.msra.mxu0 0.0
        %4466 = vmatprep.subr.mxu0 0.0
        %4467 = vmatpush2.msra.mxu0 0.0
        %4468 = vmatprep.subr.mxu0 0.0
        %4469 = vmatpush2.msra.mxu0 0.0
        %4470 = vmatprep.subr.mxu0 0.0
        %4471 = vmatpush2.msra.mxu0 0.0
        %4472 = vmatprep.subr.mxu0 0.0
        %4473 = vmatpush2.msra.mxu0 0.0
        %4474 = vmatprep.subr.mxu0 0.0
        %4475 = vmatpush2.msra.mxu0 0.0
        %4476 = vmatprep.subr.mxu0 0.0
        %4477 = vmatpush2.msra.mxu0 0.0
        %4478 = vmatprep.subr.mxu0 0.0
        %4479 = vmatpush2.msra.mxu0 0.0
        %4480 = vmatprep.subr.mxu0 0.0
        %4481 = vmatpush2.msra.mxu0 0.0
        %4482 = vmatprep.subr.mxu0 0.0
        %4483 = vmatpush2.msra.mxu0 0.0
        %4484 = vmatprep.subr.mxu0 0.0
        %4485 = vmatpush2.msra.mxu0 0.0
        %4486 = vmatprep.subr.mxu0 0.0
        %4487 = vmatpush2.msra.mxu0 0.0
        %4488 = vmatprep.mubr.f32.mxu0 0.0
        %4489 = vmatmul.mubr.f32.gmra.mxu0 %v4419
        %v4490 = vpop.f32.mrf.mxu0
        %v4491 = vadd.f32 0.0, %v4490
        %v4492 = vpop.f32.mrf.mxu0
        %v4493 = vadd.f32 0.0, %v4492
        %4494 = vmatprep.mubr.f32.mxu0 0.0
        %4495 = vmatmul.mubr.f32.gmra.mxu0 %v4422
        %v4496 = vpop.f32.mrf.mxu0
        %v4497 = vadd.f32 0.0, %v4496
        %v4498 = vpop.f32.mrf.mxu0
        %v4499 = vadd.f32 0.0, %v4498
        %4500 = vdwg.mxu0
        %4501 = vmatprep.subr.mxu0 0.0
        %4502 = vmatpush1.msra.mxu0 0.0
        %4503 = vmatprep.subr.mxu0 0.0
        %4504 = vmatpush1.msra.mxu0 0.0
        %4505 = vmatprep.subr.mxu0 0.0
        %4506 = vmatpush1.msra.mxu0 0.0
        %4507 = vmatprep.subr.mxu0 0.0
        %4508 = vmatpush1.msra.mxu0 0.0
        %4509 = vmatprep.subr.mxu0 0.0
        %4510 = vmatpush1.msra.mxu0 0.0
        %4511 = vmatprep.subr.mxu0 0.0
        %4512 = vmatpush1.msra.mxu0 0.0
        %4513 = vmatprep.subr.mxu0 0.0
        %4514 = vmatpush1.msra.mxu0 0.0
        %4515 = vmatprep.subr.mxu0 0.0
        %4516 = vmatpush1.msra.mxu0 0.0
        %4517 = vmatprep.subr.mxu0 0.0
        %4518 = vmatpush1.msra.mxu0 0.0
        %4519 = vmatprep.subr.mxu0 0.0
        %4520 = vmatpush1.msra.mxu0 0.0
        %4521 = vmatprep.subr.mxu0 0.0
        %4522 = vmatpush1.msra.mxu0 0.0
        %4523 = vmatprep.subr.mxu0 0.0
        %4524 = vmatpush1.msra.mxu0 0.0
        %4525 = vmatprep.subr.mxu0 0.0
        %4526 = vmatpush1.msra.mxu0 0.0
        %4527 = vmatprep.subr.mxu0 0.0
        %4528 = vmatpush1.msra.mxu0 0.0
        %4529 = vmatprep.subr.mxu0 %v322
        %4530 = vmatpush1.msra.mxu0 %v321
        %4531 = vmatprep.subr.mxu0 %v317
        %4532 = vmatpush1.msra.mxu0 %v316
        %4533 = vmatprep.subr.mxu0 0.0
        %4534 = vmatpush2.msra.mxu0 0.0
        %4535 = vmatprep.subr.mxu0 0.0
        %4536 = vmatpush2.msra.mxu0 0.0
        %4537 = vmatprep.subr.mxu0 0.0
        %4538 = vmatpush2.msra.mxu0 0.0
        %4539 = vmatprep.subr.mxu0 0.0
        %4540 = vmatpush2.msra.mxu0 0.0
        %4541 = vmatprep.subr.mxu0 0.0
        %4542 = vmatpush2.msra.mxu0 0.0
        %4543 = vmatprep.subr.mxu0 0.0
        %4544 = vmatpush2.msra.mxu0 0.0
        %4545 = vmatprep.subr.mxu0 0.0
        %4546 = vmatpush2.msra.mxu0 0.0
        %4547 = vmatprep.subr.mxu0 0.0
        %4548 = vmatpush2.msra.mxu0 0.0
        %4549 = vmatprep.subr.mxu0 0.0
        %4550 = vmatpush2.msra.mxu0 0.0
        %4551 = vmatprep.subr.mxu0 0.0
        %4552 = vmatpush2.msra.mxu0 0.0
        %4553 = vmatprep.subr.mxu0 0.0
        %4554 = vmatpush2.msra.mxu0 0.0
        %4555 = vmatprep.subr.mxu0 0.0
        %4556 = vmatpush2.msra.mxu0 0.0
        %4557 = vmatprep.subr.mxu0 0.0
        %4558 = vmatpush2.msra.mxu0 0.0
        %4559 = vmatprep.subr.mxu0 0.0
        %4560 = vmatpush2.msra.mxu0 0.0
        %4561 = vmatprep.subr.mxu0 0.0
        %4562 = vmatpush2.msra.mxu0 0.0
        %4563 = vmatprep.subr.mxu0 0.0
        %4564 = vmatpush2.msra.mxu0 0.0
        %4565 = vmatprep.mubr.f32.mxu0 0.0
        %4566 = vmatmul.mubr.f32.gmra.mxu0 %v4419
        %v4567 = vpop.f32.mrf.mxu0
        %v4568 = vadd.f32 0.0, %v4567
        %v4569 = vpop.f32.mrf.mxu0
        %v4570 = vadd.f32 0.0, %v4569
        %4571 = vmatprep.mubr.f32.mxu0 0.0
        %4572 = vmatmul.mubr.f32.gmra.mxu0 %v4422
        %v4573 = vpop.f32.mrf.mxu0
        %v4574 = vadd.f32 0.0, %v4573
        %v4575 = vpop.f32.mrf.mxu0
        %v4576 = vadd.f32 0.0, %v4575
        %4577 = vdwg.mxu0
        %4578 = vmatprep.subr.mxu0 0.0
        %4579 = vmatpush1.msra.mxu0 0.0
        %4580 = vmatprep.subr.mxu0 0.0
        %4581 = vmatpush1.msra.mxu0 0.0
        %4582 = vmatprep.subr.mxu0 0.0
        %4583 = vmatpush1.msra.mxu0 0.0
        %4584 = vmatprep.subr.mxu0 0.0
        %4585 = vmatpush1.msra.mxu0 0.0
        %4586 = vmatprep.subr.mxu0 0.0
        %4587 = vmatpush1.msra.mxu0 0.0
        %4588 = vmatprep.subr.mxu0 0.0
        %4589 = vmatpush1.msra.mxu0 0.0
        %4590 = vmatprep.subr.mxu0 0.0
        %4591 = vmatpush1.msra.mxu0 0.0
        %4592 = vmatprep.subr.mxu0 0.0
        %4593 = vmatpush1.msra.mxu0 0.0
        %4594 = vmatprep.subr.mxu0 0.0
        %4595 = vmatpush1.msra.mxu0 0.0
        %4596 = vmatprep.subr.mxu0 0.0
        %4597 = vmatpush1.msra.mxu0 0.0
        %4598 = vmatprep.subr.mxu0 0.0
        %4599 = vmatpush1.msra.mxu0 0.0
        %4600 = vmatprep.subr.mxu0 0.0
        %4601 = vmatpush1.msra.mxu0 0.0
        %4602 = vmatprep.subr.mxu0 0.0
        %4603 = vmatpush1.msra.mxu0 0.0
        %4604 = vmatprep.subr.mxu0 0.0
        %4605 = vmatpush1.msra.mxu0 0.0
        %4606 = vmatprep.subr.mxu0 0.0
        %4607 = vmatpush1.msra.mxu0 %v323
        %4608 = vmatprep.subr.mxu0 0.0
        %4609 = vmatpush1.msra.mxu0 %v318
        %4610 = vmatprep.subr.mxu0 0.0
        %4611 = vmatpush2.msra.mxu0 0.0
        %4612 = vmatprep.subr.mxu0 0.0
        %4613 = vmatpush2.msra.mxu0 0.0
        %4614 = vmatprep.subr.mxu0 0.0
        %4615 = vmatpush2.msra.mxu0 0.0
        %4616 = vmatprep.subr.mxu0 0.0
        %4617 = vmatpush2.msra.mxu0 0.0
        %4618 = vmatprep.subr.mxu0 0.0
        %4619 = vmatpush2.msra.mxu0 0.0
        %4620 = vmatprep.subr.mxu0 0.0
        %4621 = vmatpush2.msra.mxu0 0.0
        %4622 = vmatprep.subr.mxu0 0.0
        %4623 = vmatpush2.msra.mxu0 0.0
        %4624 = vmatprep.subr.mxu0 0.0
        %4625 = vmatpush2.msra.mxu0 0.0
        %4626 = vmatprep.subr.mxu0 0.0
        %4627 = vmatpush2.msra.mxu0 0.0
        %4628 = vmatprep.subr.mxu0 0.0
        %4629 = vmatpush2.msra.mxu0 0.0
        %4630 = vmatprep.subr.mxu0 0.0
        %4631 = vmatpush2.msra.mxu0 0.0
        %4632 = vmatprep.subr.mxu0 0.0
        %4633 = vmatpush2.msra.mxu0 0.0
        %4634 = vmatprep.subr.mxu0 0.0
        %4635 = vmatpush2.msra.mxu0 0.0
        %4636 = vmatprep.subr.mxu0 0.0
        %4637 = vmatpush2.msra.mxu0 0.0
        %4638 = vmatprep.subr.mxu0 0.0
        %4639 = vmatpush2.msra.mxu0 0.0
        %4640 = vmatprep.subr.mxu0 0.0
        %4641 = vmatpush2.msra.mxu0 0.0
        %4642 = vmatprep.mubr.f32.mxu0 0.0
        %4643 = vmatmul.mubr.f32.gmra.mxu0 %v4419
        %v4644 = vpop.f32.mrf.mxu0
        %v4645 = vadd.f32 0.0, %v4644
        %v4646 = vpop.f32.mrf.mxu0
        %4647 = vmatprep.mubr.f32.mxu0 0.0
        %4648 = vmatmul.mubr.f32.gmra.mxu0 %v4422
        %v4649 = vpop.f32.mrf.mxu0
        %v4650 = vadd.f32 0.0, %v4649
        %v4651 = vpop.f32.mrf.mxu0
        %4652 = vdwg.mxu0
        %4653 = vmatprep.subr.mxu0 0.0
        %4654 = vmatpush1.msra.mxu0 0.0
        %4655 = vmatprep.subr.mxu0 0.0
        %4656 = vmatpush1.msra.mxu0 0.0
        %4657 = vmatprep.subr.mxu0 0.0
        %4658 = vmatpush1.msra.mxu0 0.0
        %4659 = vmatprep.subr.mxu0 0.0
        %4660 = vmatpush1.msra.mxu0 0.0
        %4661 = vmatprep.subr.mxu0 0.0
        %4662 = vmatpush1.msra.mxu0 0.0
        %4663 = vmatprep.subr.mxu0 0.0
        %4664 = vmatpush1.msra.mxu0 0.0
        %4665 = vmatprep.subr.mxu0 0.0
        %4666 = vmatpush1.msra.mxu0 0.0
        %4667 = vmatprep.subr.mxu0 0.0
        %4668 = vmatpush1.msra.mxu0 0.0
        %4669 = vmatprep.subr.mxu0 0.0
        %4670 = vmatpush1.msra.mxu0 0.0
        %4671 = vmatprep.subr.mxu0 0.0
        %4672 = vmatpush1.msra.mxu0 0.0
        %4673 = vmatprep.subr.mxu0 0.0
        %4674 = vmatpush1.msra.mxu0 0.0
        %4675 = vmatprep.subr.mxu0 0.0
        %4676 = vmatpush1.msra.mxu0 0.0
        %4677 = vmatprep.subr.mxu0 0.0
        %4678 = vmatpush1.msra.mxu0 0.0
        %4679 = vmatprep.subr.mxu0 0.0
        %4680 = vmatpush1.msra.mxu0 0.0
        %4681 = vmatprep.subr.mxu0 %v4499
        %4682 = vmatpush1.msra.mxu0 %v4497
        %4683 = vmatprep.subr.mxu0 %v4493
        %4684 = vmatpush1.msra.mxu0 %v4491
        %4685 = vmatprep.subr.mxu0 0.0
        %4686 = vmatpush2.msra.mxu0 0.0
        %4687 = vmatprep.subr.mxu0 0.0
        %4688 = vmatpush2.msra.mxu0 0.0
        %4689 = vmatprep.subr.mxu0 0.0
        %4690 = vmatpush2.msra.mxu0 0.0
        %4691 = vmatprep.subr.mxu0 0.0
        %4692 = vmatpush2.msra.mxu0 0.0
        %4693 = vmatprep.subr.mxu0 0.0
        %4694 = vmatpush2.msra.mxu0 0.0
        %4695 = vmatprep.subr.mxu0 0.0
        %4696 = vmatpush2.msra.mxu0 0.0
        %4697 = vmatprep.subr.mxu0 0.0
        %4698 = vmatpush2.msra.mxu0 0.0
        %4699 = vmatprep.subr.mxu0 0.0
        %4700 = vmatpush2.msra.mxu0 0.0
        %4701 = vmatprep.subr.mxu0 0.0
        %4702 = vmatpush2.msra.mxu0 0.0
        %4703 = vmatprep.subr.mxu0 0.0
        %4704 = vmatpush2.msra.mxu0 0.0
        %4705 = vmatprep.subr.mxu0 0.0
        %4706 = vmatpush2.msra.mxu0 0.0
        %4707 = vmatprep.subr.mxu0 0.0
        %4708 = vmatpush2.msra.mxu0 0.0
        %4709 = vmatprep.subr.mxu0 0.0
        %4710 = vmatpush2.msra.mxu0 0.0
        %4711 = vmatprep.subr.mxu0 0.0
        %4712 = vmatpush2.msra.mxu0 0.0
        %4713 = vmatprep.subr.mxu0 0.0
        %4714 = vmatpush2.msra.mxu0 0.0
        %4715 = vmatprep.subr.mxu0 0.0
        %4716 = vmatpush2.msra.mxu0 0.0
        %4717 = vmatprep.mubr.f32.mxu0 0.0
        %4718 = vmatmul.mubr.f32.gmra.mxu0 %v598
        %v4719 = vpop.f32.mrf.mxu0
        %v4720 = vadd.f32 0.0, %v4719
        %v4721 = vpop.f32.mrf.mxu0
        %v4722 = vadd.f32 0.0, %v4721
        %4723 = vmatprep.mubr.f32.mxu0 0.0
        %4724 = vmatmul.mubr.f32.gmra.mxu0 %v601
        %v4725 = vpop.f32.mrf.mxu0
        %v4726 = vadd.f32 0.0, %v4725
        %v4727 = vpop.f32.mrf.mxu0
        %v4728 = vadd.f32 0.0, %v4727
        %4729 = vmatprep.mubr.f32.mxu0 0.0
        %4730 = vmatmul.mubr.f32.gmra.mxu0 %v604
        %v4731 = vpop.f32.mrf.mxu0
        %v4732 = vadd.f32 0.0, %v4731
        %v4733 = vpop.f32.mrf.mxu0
        %v4734 = vadd.f32 0.0, %v4733
        %4735 = vmatprep.mubr.f32.mxu0 0.0
        %4736 = vmatmul.mubr.f32.gmra.mxu0 %v607
        %v4737 = vpop.f32.mrf.mxu0
        %v4738 = vadd.f32 0.0, %v4737
        %v4739 = vpop.f32.mrf.mxu0
        %v4740 = vadd.f32 0.0, %v4739
        %4741 = vmatprep.mubr.f32.mxu0 0.0
        %4742 = vmatmul.mubr.f32.gmra.mxu0 %v610
        %v4743 = vpop.f32.mrf.mxu0
        %v4744 = vadd.f32 0.0, %v4743
        %v4745 = vpop.f32.mrf.mxu0
        %v4746 = vadd.f32 0.0, %v4745
        %4747 = vmatprep.mubr.f32.mxu0 0.0
        %4748 = vmatmul.mubr.f32.gmra.mxu0 %v613
        %v4749 = vpop.f32.mrf.mxu0
        %v4750 = vadd.f32 0.0, %v4749
        %v4751 = vpop.f32.mrf.mxu0
        %v4752 = vadd.f32 0.0, %v4751
        %4753 = vmatprep.mubr.f32.mxu0 0.0
        %4754 = vmatmul.mubr.f32.gmra.mxu0 %v616
        %v4755 = vpop.f32.mrf.mxu0
        %v4756 = vadd.f32 0.0, %v4755
        %v4757 = vpop.f32.mrf.mxu0
        %v4758 = vadd.f32 0.0, %v4757
        %4759 = vmatprep.mubr.f32.mxu0 0.0
        %4760 = vmatmul.mubr.f32.gmra.mxu0 %v619
        %v4761 = vpop.f32.mrf.mxu0
        %v4762 = vadd.f32 0.0, %v4761
        %v4763 = vpop.f32.mrf.mxu0
        %v4764 = vadd.f32 0.0, %v4763
        %4765 = vmatprep.mubr.f32.mxu0 0.0
        %4766 = vmatmul.mubr.f32.gmra.mxu0 %v622
        %v4767 = vpop.f32.mrf.mxu0
        %v4768 = vadd.f32 0.0, %v4767
        %v4769 = vpop.f32.mrf.mxu0
        %v4770 = vadd.f32 0.0, %v4769
        %4771 = vmatprep.mubr.f32.mxu0 0.0
        %4772 = vmatmul.mubr.f32.gmra.mxu0 %v625
        %v4773 = vpop.f32.mrf.mxu0
        %v4774 = vadd.f32 0.0, %v4773
        %v4775 = vpop.f32.mrf.mxu0
        %v4776 = vadd.f32 0.0, %v4775
        %4777 = vmatprep.mubr.f32.mxu0 0.0
        %4778 = vmatmul.mubr.f32.gmra.mxu0 %v628
        %v4779 = vpop.f32.mrf.mxu0
        %v4780 = vadd.f32 0.0, %v4779
        %v4781 = vpop.f32.mrf.mxu0
        %v4782 = vadd.f32 0.0, %v4781
        %4783 = vmatprep.mubr.f32.mxu0 0.0
        %4784 = vmatmul.mubr.f32.gmra.mxu0 %v631
        %v4785 = vpop.f32.mrf.mxu0
        %v4786 = vadd.f32 0.0, %v4785
        %v4787 = vpop.f32.mrf.mxu0
        %v4788 = vadd.f32 0.0, %v4787
        %4789 = vdwg.mxu0
        %4790 = vmatprep.subr.mxu0 0.0
        %4791 = vmatpush1.msra.mxu0 0.0
        %4792 = vmatprep.subr.mxu0 0.0
        %4793 = vmatpush1.msra.mxu0 0.0
        %4794 = vmatprep.subr.mxu0 0.0
        %4795 = vmatpush1.msra.mxu0 0.0
        %4796 = vmatprep.subr.mxu0 0.0
        %4797 = vmatpush1.msra.mxu0 0.0
        %4798 = vmatprep.subr.mxu0 0.0
        %4799 = vmatpush1.msra.mxu0 0.0
        %4800 = vmatprep.subr.mxu0 0.0
        %4801 = vmatpush1.msra.mxu0 0.0
        %4802 = vmatprep.subr.mxu0 0.0
        %4803 = vmatpush1.msra.mxu0 0.0
        %4804 = vmatprep.subr.mxu0 0.0
        %4805 = vmatpush1.msra.mxu0 0.0
        %4806 = vmatprep.subr.mxu0 0.0
        %4807 = vmatpush1.msra.mxu0 0.0
        %4808 = vmatprep.subr.mxu0 0.0
        %4809 = vmatpush1.msra.mxu0 0.0
        %4810 = vmatprep.subr.mxu0 0.0
        %4811 = vmatpush1.msra.mxu0 0.0
        %4812 = vmatprep.subr.mxu0 0.0
        %4813 = vmatpush1.msra.mxu0 0.0
        %4814 = vmatprep.subr.mxu0 0.0
        %4815 = vmatpush1.msra.mxu0 0.0
        %4816 = vmatprep.subr.mxu0 0.0
        %4817 = vmatpush1.msra.mxu0 0.0
        %4818 = vmatprep.subr.mxu0 %v4576
        %4819 = vmatpush1.msra.mxu0 %v4574
        %4820 = vmatprep.subr.mxu0 %v4570
        %4821 = vmatpush1.msra.mxu0 %v4568
        %4822 = vmatprep.subr.mxu0 0.0
        %4823 = vmatpush2.msra.mxu0 0.0
        %4824 = vmatprep.subr.mxu0 0.0
        %4825 = vmatpush2.msra.mxu0 0.0
        %4826 = vmatprep.subr.mxu0 0.0
        %4827 = vmatpush2.msra.mxu0 0.0
        %4828 = vmatprep.subr.mxu0 0.0
        %4829 = vmatpush2.msra.mxu0 0.0
        %4830 = vmatprep.subr.mxu0 0.0
        %4831 = vmatpush2.msra.mxu0 0.0
        %4832 = vmatprep.subr.mxu0 0.0
        %4833 = vmatpush2.msra.mxu0 0.0
        %4834 = vmatprep.subr.mxu0 0.0
        %4835 = vmatpush2.msra.mxu0 0.0
        %4836 = vmatprep.subr.mxu0 0.0
        %4837 = vmatpush2.msra.mxu0 0.0
        %4838 = vmatprep.subr.mxu0 0.0
        %4839 = vmatpush2.msra.mxu0 0.0
        %4840 = vmatprep.subr.mxu0 0.0
        %4841 = vmatpush2.msra.mxu0 0.0
        %4842 = vmatprep.subr.mxu0 0.0
        %4843 = vmatpush2.msra.mxu0 0.0
        %4844 = vmatprep.subr.mxu0 0.0
        %4845 = vmatpush2.msra.mxu0 0.0
        %4846 = vmatprep.subr.mxu0 0.0
        %4847 = vmatpush2.msra.mxu0 0.0
        %4848 = vmatprep.subr.mxu0 0.0
        %4849 = vmatpush2.msra.mxu0 0.0
        %4850 = vmatprep.subr.mxu0 0.0
        %4851 = vmatpush2.msra.mxu0 0.0
        %4852 = vmatprep.subr.mxu0 0.0
        %4853 = vmatpush2.msra.mxu0 0.0
        %4854 = vmatprep.mubr.f32.mxu0 0.0
        %4855 = vmatmul.mubr.f32.gmra.mxu0 %v598
        %v4856 = vpop.f32.mrf.mxu0
        %v4857 = vadd.f32 0.0, %v4856
        %v4858 = vpop.f32.mrf.mxu0
        %v4859 = vadd.f32 0.0, %v4858
        %4860 = vmatprep.mubr.f32.mxu0 0.0
        %4861 = vmatmul.mubr.f32.gmra.mxu0 %v601
        %v4862 = vpop.f32.mrf.mxu0
        %v4863 = vadd.f32 0.0, %v4862
        %v4864 = vpop.f32.mrf.mxu0
        %v4865 = vadd.f32 0.0, %v4864
        %4866 = vmatprep.mubr.f32.mxu0 0.0
        %4867 = vmatmul.mubr.f32.gmra.mxu0 %v604
        %v4868 = vpop.f32.mrf.mxu0
        %v4869 = vadd.f32 0.0, %v4868
        %v4870 = vpop.f32.mrf.mxu0
        %v4871 = vadd.f32 0.0, %v4870
        %4872 = vmatprep.mubr.f32.mxu0 0.0
        %4873 = vmatmul.mubr.f32.gmra.mxu0 %v607
        %v4874 = vpop.f32.mrf.mxu0
        %v4875 = vadd.f32 0.0, %v4874
        %v4876 = vpop.f32.mrf.mxu0
        %v4877 = vadd.f32 0.0, %v4876
        %4878 = vmatprep.mubr.f32.mxu0 0.0
        %4879 = vmatmul.mubr.f32.gmra.mxu0 %v610
        %v4880 = vpop.f32.mrf.mxu0
        %v4881 = vadd.f32 0.0, %v4880
        %v4882 = vpop.f32.mrf.mxu0
        %v4883 = vadd.f32 0.0, %v4882
        %4884 = vmatprep.mubr.f32.mxu0 0.0
        %4885 = vmatmul.mubr.f32.gmra.mxu0 %v613
        %v4886 = vpop.f32.mrf.mxu0
        %v4887 = vadd.f32 0.0, %v4886
        %v4888 = vpop.f32.mrf.mxu0
        %v4889 = vadd.f32 0.0, %v4888
        %4890 = vmatprep.mubr.f32.mxu0 0.0
        %4891 = vmatmul.mubr.f32.gmra.mxu0 %v616
        %v4892 = vpop.f32.mrf.mxu0
        %v4893 = vadd.f32 0.0, %v4892
        %v4894 = vpop.f32.mrf.mxu0
        %v4895 = vadd.f32 0.0, %v4894
        %4896 = vmatprep.mubr.f32.mxu0 0.0
        %4897 = vmatmul.mubr.f32.gmra.mxu0 %v619
        %v4898 = vpop.f32.mrf.mxu0
        %v4899 = vadd.f32 0.0, %v4898
        %v4900 = vpop.f32.mrf.mxu0
        %v4901 = vadd.f32 0.0, %v4900
        %4902 = vmatprep.mubr.f32.mxu0 0.0
        %4903 = vmatmul.mubr.f32.gmra.mxu0 %v622
        %v4904 = vpop.f32.mrf.mxu0
        %v4905 = vadd.f32 0.0, %v4904
        %v4906 = vpop.f32.mrf.mxu0
        %v4907 = vadd.f32 0.0, %v4906
        %4908 = vmatprep.mubr.f32.mxu0 0.0
        %4909 = vmatmul.mubr.f32.gmra.mxu0 %v625
        %v4910 = vpop.f32.mrf.mxu0
        %v4911 = vadd.f32 0.0, %v4910
        %v4912 = vpop.f32.mrf.mxu0
        %v4913 = vadd.f32 0.0, %v4912
        %4914 = vmatprep.mubr.f32.mxu0 0.0
        %4915 = vmatmul.mubr.f32.gmra.mxu0 %v628
        %v4916 = vpop.f32.mrf.mxu0
        %v4917 = vadd.f32 0.0, %v4916
        %v4918 = vpop.f32.mrf.mxu0
        %v4919 = vadd.f32 0.0, %v4918
        %4920 = vmatprep.mubr.f32.mxu0 0.0
        %4921 = vmatmul.mubr.f32.gmra.mxu0 %v631
        %v4922 = vpop.f32.mrf.mxu0
        %v4923 = vadd.f32 0.0, %v4922
        %v4924 = vpop.f32.mrf.mxu0
        %v4925 = vadd.f32 0.0, %v4924
        %4926 = vdwg.mxu0
        %4927 = vmatprep.subr.mxu0 0.0
        %4928 = vmatpush1.msra.mxu0 0.0
        %4929 = vmatprep.subr.mxu0 0.0
        %4930 = vmatpush1.msra.mxu0 0.0
        %4931 = vmatprep.subr.mxu0 0.0
        %4932 = vmatpush1.msra.mxu0 0.0
        %4933 = vmatprep.subr.mxu0 0.0
        %4934 = vmatpush1.msra.mxu0 0.0
        %4935 = vmatprep.subr.mxu0 0.0
        %4936 = vmatpush1.msra.mxu0 0.0
        %4937 = vmatprep.subr.mxu0 0.0
        %4938 = vmatpush1.msra.mxu0 0.0
        %4939 = vmatprep.subr.mxu0 0.0
        %4940 = vmatpush1.msra.mxu0 0.0
        %4941 = vmatprep.subr.mxu0 0.0
        %4942 = vmatpush1.msra.mxu0 0.0
        %4943 = vmatprep.subr.mxu0 0.0
        %4944 = vmatpush1.msra.mxu0 0.0
        %4945 = vmatprep.subr.mxu0 0.0
        %4946 = vmatpush1.msra.mxu0 0.0
        %4947 = vmatprep.subr.mxu0 0.0
        %4948 = vmatpush1.msra.mxu0 0.0
        %4949 = vmatprep.subr.mxu0 0.0
        %4950 = vmatpush1.msra.mxu0 0.0
        %4951 = vmatprep.subr.mxu0 0.0
        %4952 = vmatpush1.msra.mxu0 0.0
        %4953 = vmatprep.subr.mxu0 0.0
        %4954 = vmatpush1.msra.mxu0 0.0
        %4955 = vmatprep.subr.mxu0 0.0
        %4956 = vmatpush1.msra.mxu0 %v4650
        %4957 = vmatprep.subr.mxu0 0.0
        %4958 = vmatpush1.msra.mxu0 %v4645
        %4959 = vmatprep.subr.mxu0 0.0
        %4960 = vmatpush2.msra.mxu0 0.0
        %4961 = vmatprep.subr.mxu0 0.0
        %4962 = vmatpush2.msra.mxu0 0.0
        %4963 = vmatprep.subr.mxu0 0.0
        %4964 = vmatpush2.msra.mxu0 0.0
        %4965 = vmatprep.subr.mxu0 0.0
        %4966 = vmatpush2.msra.mxu0 0.0
        %4967 = vmatprep.subr.mxu0 0.0
        %4968 = vmatpush2.msra.mxu0 0.0
        %4969 = vmatprep.subr.mxu0 0.0
        %4970 = vmatpush2.msra.mxu0 0.0
        %4971 = vmatprep.subr.mxu0 0.0
        %4972 = vmatpush2.msra.mxu0 0.0
        %4973 = vmatprep.subr.mxu0 0.0
        %4974 = vmatpush2.msra.mxu0 0.0
        %4975 = vmatprep.subr.mxu0 0.0
        %4976 = vmatpush2.msra.mxu0 0.0
        %4977 = vmatprep.subr.mxu0 0.0
        %4978 = vmatpush2.msra.mxu0 0.0
        %4979 = vmatprep.subr.mxu0 0.0
        %4980 = vmatpush2.msra.mxu0 0.0
        %4981 = vmatprep.subr.mxu0 0.0
        %4982 = vmatpush2.msra.mxu0 0.0
        %4983 = vmatprep.subr.mxu0 0.0
        %4984 = vmatpush2.msra.mxu0 0.0
        %4985 = vmatprep.subr.mxu0 0.0
        %4986 = vmatpush2.msra.mxu0 0.0
        %4987 = vmatprep.subr.mxu0 0.0
        %4988 = vmatpush2.msra.mxu0 0.0
        %4989 = vmatprep.subr.mxu0 0.0
        %4990 = vmatpush2.msra.mxu0 0.0
        %4991 = vmatprep.mubr.f32.mxu0 0.0
        %4992 = vmatmul.mubr.f32.gmra.mxu0 %v598
        %v4993 = vpop.f32.mrf.mxu0
        %v4994 = vadd.f32 0.0, %v4993
        %v4995 = vpop.f32.mrf.mxu0
        %4996 = vmatprep.mubr.f32.mxu0 0.0
        %4997 = vmatmul.mubr.f32.gmra.mxu0 %v601
        %v4998 = vpop.f32.mrf.mxu0
        %v4999 = vadd.f32 0.0, %v4998
        %v5000 = vpop.f32.mrf.mxu0
        %5001 = vmatprep.mubr.f32.mxu0 0.0
        %5002 = vmatmul.mubr.f32.gmra.mxu0 %v604
        %v5003 = vpop.f32.mrf.mxu0
        %v5004 = vadd.f32 0.0, %v5003
        %v5005 = vpop.f32.mrf.mxu0
        %5006 = vmatprep.mubr.f32.mxu0 0.0
        %5007 = vmatmul.mubr.f32.gmra.mxu0 %v607
        %v5008 = vpop.f32.mrf.mxu0
        %v5009 = vadd.f32 0.0, %v5008
        %v5010 = vpop.f32.mrf.mxu0
        %5011 = vmatprep.mubr.f32.mxu0 0.0
        %5012 = vmatmul.mubr.f32.gmra.mxu0 %v610
        %v5013 = vpop.f32.mrf.mxu0
        %v5014 = vadd.f32 0.0, %v5013
        %v5015 = vpop.f32.mrf.mxu0
        %5016 = vmatprep.mubr.f32.mxu0 0.0
        %5017 = vmatmul.mubr.f32.gmra.mxu0 %v613
        %v5018 = vpop.f32.mrf.mxu0
        %v5019 = vadd.f32 0.0, %v5018
        %v5020 = vpop.f32.mrf.mxu0
        %5021 = vmatprep.mubr.f32.mxu0 0.0
        %5022 = vmatmul.mubr.f32.gmra.mxu0 %v616
        %v5023 = vpop.f32.mrf.mxu0
        %v5024 = vadd.f32 0.0, %v5023
        %v5025 = vpop.f32.mrf.mxu0
        %5026 = vmatprep.mubr.f32.mxu0 0.0
        %5027 = vmatmul.mubr.f32.gmra.mxu0 %v619
        %v5028 = vpop.f32.mrf.mxu0
        %v5029 = vadd.f32 0.0, %v5028
        %v5030 = vpop.f32.mrf.mxu0
        %5031 = vmatprep.mubr.f32.mxu0 0.0
        %5032 = vmatmul.mubr.f32.gmra.mxu0 %v622
        %v5033 = vpop.f32.mrf.mxu0
        %v5034 = vadd.f32 0.0, %v5033
        %v5035 = vpop.f32.mrf.mxu0
        %5036 = vmatprep.mubr.f32.mxu0 0.0
        %5037 = vmatmul.mubr.f32.gmra.mxu0 %v625
        %v5038 = vpop.f32.mrf.mxu0
        %v5039 = vadd.f32 0.0, %v5038
        %v5040 = vpop.f32.mrf.mxu0
        %5041 = vmatprep.mubr.f32.mxu0 0.0
        %5042 = vmatmul.mubr.f32.gmra.mxu0 %v628
        %v5043 = vpop.f32.mrf.mxu0
        %v5044 = vadd.f32 0.0, %v5043
        %v5045 = vpop.f32.mrf.mxu0
        %5046 = vmatprep.mubr.f32.mxu0 0.0
        %5047 = vmatmul.mubr.f32.gmra.mxu0 %v631
        %v5048 = vpop.f32.mrf.mxu0
        %v5049 = vadd.f32 0.0, %v5048
        %v5050 = vpop.f32.mrf.mxu0
        %5051 = vdwg.mxu0
        %vm5052 = vcmp.gt.f32.partialorder %v4720, %v4272
        %vm5053 = vcmp.gt.f32.partialorder %v4722, %v4273
        %vm5054 = vcmp.gt.f32.partialorder %v4857, %v4274
        %vm5055 = vcmp.gt.f32.partialorder %v4859, %v4275
        %vm5056 = vcmp.gt.f32.partialorder %v4994, %v4276
        %vm5057 = vcmp.gt.f32.partialorder %v4726, %v4277
        %vm5058 = vcmp.gt.f32.partialorder %v4728, %v4278
        %vm5059 = vcmp.gt.f32.partialorder %v4863, %v4279
        %vm5060 = vcmp.gt.f32.partialorder %v4865, %v4280
        %vm5061 = vcmp.gt.f32.partialorder %v4999, %v4281
        %vm5062 = vcmp.gt.f32.partialorder %v4732, %v4282
        %vm5063 = vcmp.gt.f32.partialorder %v4734, %v4283
        %vm5064 = vcmp.gt.f32.partialorder %v4869, %v4284
        %vm5065 = vcmp.gt.f32.partialorder %v4871, %v4285
        %vm5066 = vcmp.gt.f32.partialorder %v5004, %v4286
        %vm5067 = vcmp.gt.f32.partialorder %v4738, %v4287
        %vm5068 = vcmp.gt.f32.partialorder %v4740, %v4288
        %vm5069 = vcmp.gt.f32.partialorder %v4875, %v4289
        %vm5070 = vcmp.gt.f32.partialorder %v4877, %v4290
        %vm5071 = vcmp.gt.f32.partialorder %v5009, %v4291
        %vm5072 = vcmp.gt.f32.partialorder %v4744, %v4292
        %vm5073 = vcmp.gt.f32.partialorder %v4746, %v4293
        %vm5074 = vcmp.gt.f32.partialorder %v4881, %v4294
        %vm5075 = vcmp.gt.f32.partialorder %v4883, %v4295
        %vm5076 = vcmp.gt.f32.partialorder %v5014, %v4296
        %vm5077 = vcmp.gt.f32.partialorder %v4750, %v4297
        %vm5078 = vcmp.gt.f32.partialorder %v4752, %v4298
        %vm5079 = vcmp.gt.f32.partialorder %v4887, %v4299
        %vm5080 = vcmp.gt.f32.partialorder %v4889, %v4300
        %vm5081 = vcmp.gt.f32.partialorder %v5019, %v4301
        %vm5082 = vcmp.gt.f32.partialorder %v4756, %v4302
        %vm5083 = vcmp.gt.f32.partialorder %v4758, %v4303
        %vm5084 = vcmp.gt.f32.partialorder %v4893, %v4304
        %vm5085 = vcmp.gt.f32.partialorder %v4895, %v4305
        %vm5086 = vcmp.gt.f32.partialorder %v5024, %v4306
        %vm5087 = vcmp.gt.f32.partialorder %v4762, %v4307
        %vm5088 = vcmp.gt.f32.partialorder %v4764, %v4308
        %vm5089 = vcmp.gt.f32.partialorder %v4899, %v4309
        %vm5090 = vcmp.gt.f32.partialorder %v4901, %v4310
        %vm5091 = vcmp.gt.f32.partialorder %v5029, %v4311
        %vm5092 = vcmp.gt.f32.partialorder %v4768, %v4312
        %vm5093 = vcmp.gt.f32.partialorder %v4770, %v4313
        %vm5094 = vcmp.gt.f32.partialorder %v4905, %v4314
        %vm5095 = vcmp.gt.f32.partialorder %v4907, %v4315
        %vm5096 = vcmp.gt.f32.partialorder %v5034, %v4316
        %vm5097 = vcmp.gt.f32.partialorder %v4774, %v4317
        %vm5098 = vcmp.gt.f32.partialorder %v4776, %v4318
        %vm5099 = vcmp.gt.f32.partialorder %v4911, %v4319
        %vm5100 = vcmp.gt.f32.partialorder %v4913, %v4320
        %vm5101 = vcmp.gt.f32.partialorder %v5039, %v4321
        %vm5102 = vcmp.gt.f32.partialorder %v4780, %v4322
        %vm5103 = vcmp.gt.f32.partialorder %v4782, %v4323
        %vm5104 = vcmp.gt.f32.partialorder %v4917, %v4324
        %vm5105 = vcmp.gt.f32.partialorder %v4919, %v4325
        %vm5106 = vcmp.gt.f32.partialorder %v5044, %v4326
        %vm5107 = vcmp.gt.f32.partialorder %v4786, %v4327
        %vm5108 = vcmp.gt.f32.partialorder %v4788, %v4328
        %vm5109 = vcmp.gt.f32.partialorder %v4923, %v4329
        %vm5110 = vcmp.gt.f32.partialorder %v4925, %v4330
        %vm5111 = vcmp.gt.f32.partialorder %v5049, %v4331
        %v5112 = vsel %vm5052, %v4720, %v4272
        %v5113 = vsel %vm5053, %v4722, %v4273
        %v5114 = vsel %vm5054, %v4857, %v4274
        %v5115 = vsel %vm5055, %v4859, %v4275
        %v5116 = vsel %vm5056, %v4994, %v4276
        %v5117 = vsel %vm5057, %v4726, %v4277
        %v5118 = vsel %vm5058, %v4728, %v4278
        %v5119 = vsel %vm5059, %v4863, %v4279
        %v5120 = vsel %vm5060, %v4865, %v4280
        %v5121 = vsel %vm5061, %v4999, %v4281
        %v5122 = vsel %vm5062, %v4732, %v4282
        %v5123 = vsel %vm5063, %v4734, %v4283
        %v5124 = vsel %vm5064, %v4869, %v4284
        %v5125 = vsel %vm5065, %v4871, %v4285
        %v5126 = vsel %vm5066, %v5004, %v4286
        %v5127 = vsel %vm5067, %v4738, %v4287
        %v5128 = vsel %vm5068, %v4740, %v4288
        %v5129 = vsel %vm5069, %v4875, %v4289
        %v5130 = vsel %vm5070, %v4877, %v4290
        %v5131 = vsel %vm5071, %v5009, %v4291
        %v5132 = vsel %vm5072, %v4744, %v4292
        %v5133 = vsel %vm5073, %v4746, %v4293
        %v5134 = vsel %vm5074, %v4881, %v4294
        %v5135 = vsel %vm5075, %v4883, %v4295
        %v5136 = vsel %vm5076, %v5014, %v4296
        %v5137 = vsel %vm5077, %v4750, %v4297
        %v5138 = vsel %vm5078, %v4752, %v4298
        %v5139 = vsel %vm5079, %v4887, %v4299
        %v5140 = vsel %vm5080, %v4889, %v4300
        %v5141 = vsel %vm5081, %v5019, %v4301
        %v5142 = vsel %vm5082, %v4756, %v4302
        %v5143 = vsel %vm5083, %v4758, %v4303
        %v5144 = vsel %vm5084, %v4893, %v4304
        %v5145 = vsel %vm5085, %v4895, %v4305
        %v5146 = vsel %vm5086, %v5024, %v4306
        %v5147 = vsel %vm5087, %v4762, %v4307
        %v5148 = vsel %vm5088, %v4764, %v4308
        %v5149 = vsel %vm5089, %v4899, %v4309
        %v5150 = vsel %vm5090, %v4901, %v4310
        %v5151 = vsel %vm5091, %v5029, %v4311
        %v5152 = vsel %vm5092, %v4768, %v4312
        %v5153 = vsel %vm5093, %v4770, %v4313
        %v5154 = vsel %vm5094, %v4905, %v4314
        %v5155 = vsel %vm5095, %v4907, %v4315
        %v5156 = vsel %vm5096, %v5034, %v4316
        %v5157 = vsel %vm5097, %v4774, %v4317
        %v5158 = vsel %vm5098, %v4776, %v4318
        %v5159 = vsel %vm5099, %v4911, %v4319
        %v5160 = vsel %vm5100, %v4913, %v4320
        %v5161 = vsel %vm5101, %v5039, %v4321
        %v5162 = vsel %vm5102, %v4780, %v4322
        %v5163 = vsel %vm5103, %v4782, %v4323
        %v5164 = vsel %vm5104, %v4917, %v4324
        %v5165 = vsel %vm5105, %v4919, %v4325
        %v5166 = vsel %vm5106, %v5044, %v4326
        %v5167 = vsel %vm5107, %v4786, %v4327
        %v5168 = vsel %vm5108, %v4788, %v4328
        %v5169 = vsel %vm5109, %v4923, %v4329
        %v5170 = vsel %vm5110, %v4925, %v4330
        %v5171 = vsel %vm5111, %v5049, %v4331
        %v5172 = vsel %vm5052, 5, %v4332
        %v5173 = vsel %vm5053, 5, %v4333
        %v5174 = vsel %vm5054, 5, %v4334
        %v5175 = vsel %vm5055, 5, %v4335
        %v5176 = vsel %vm5056, 5, %v4336
        %v5177 = vsel %vm5057, 5, %v4337
        %v5178 = vsel %vm5058, 5, %v4338
        %v5179 = vsel %vm5059, 5, %v4339
        %v5180 = vsel %vm5060, 5, %v4340
        %v5181 = vsel %vm5061, 5, %v4341
        %v5182 = vsel %vm5062, 5, %v4342
        %v5183 = vsel %vm5063, 5, %v4343
        %v5184 = vsel %vm5064, 5, %v4344
        %v5185 = vsel %vm5065, 5, %v4345
        %v5186 = vsel %vm5066, 5, %v4346
        %v5187 = vsel %vm5067, 5, %v4347
        %v5188 = vsel %vm5068, 5, %v4348
        %v5189 = vsel %vm5069, 5, %v4349
        %v5190 = vsel %vm5070, 5, %v4350
        %v5191 = vsel %vm5071, 5, %v4351
        %v5192 = vsel %vm5072, 5, %v4352
        %v5193 = vsel %vm5073, 5, %v4353
        %v5194 = vsel %vm5074, 5, %v4354
        %v5195 = vsel %vm5075, 5, %v4355
        %v5196 = vsel %vm5076, 5, %v4356
        %v5197 = vsel %vm5077, 5, %v4357
        %v5198 = vsel %vm5078, 5, %v4358
        %v5199 = vsel %vm5079, 5, %v4359
        %v5200 = vsel %vm5080, 5, %v4360
        %v5201 = vsel %vm5081, 5, %v4361
        %v5202 = vsel %vm5082, 5, %v4362
        %v5203 = vsel %vm5083, 5, %v4363
        %v5204 = vsel %vm5084, 5, %v4364
        %v5205 = vsel %vm5085, 5, %v4365
        %v5206 = vsel %vm5086, 5, %v4366
        %v5207 = vsel %vm5087, 5, %v4367
        %v5208 = vsel %vm5088, 5, %v4368
        %v5209 = vsel %vm5089, 5, %v4369
        %v5210 = vsel %vm5090, 5, %v4370
        %v5211 = vsel %vm5091, 5, %v4371
        %v5212 = vsel %vm5092, 5, %v4372
        %v5213 = vsel %vm5093, 5, %v4373
        %v5214 = vsel %vm5094, 5, %v4374
        %v5215 = vsel %vm5095, 5, %v4375
        %v5216 = vsel %vm5096, 5, %v4376
        %v5217 = vsel %vm5097, 5, %v4377
        %v5218 = vsel %vm5098, 5, %v4378
        %v5219 = vsel %vm5099, 5, %v4379
        %v5220 = vsel %vm5100, 5, %v4380
        %v5221 = vsel %vm5101, 5, %v4381
        %v5222 = vsel %vm5102, 5, %v4382
        %v5223 = vsel %vm5103, 5, %v4383
        %v5224 = vsel %vm5104, 5, %v4384
        %v5225 = vsel %vm5105, 5, %v4385
        %v5226 = vsel %vm5106, 5, %v4386
        %v5227 = vsel %vm5107, 5, %v4387
        %v5228 = vsel %vm5108, 5, %v4388
        %v5229 = vsel %vm5109, 5, %v4389
        %v5230 = vsel %vm5110, 5, %v4390
        %v5231 = vsel %vm5111, 5, %v4391
        %s5232 = sld [smem:[#allocation2 + $0x300]]
        %v5233 = vstv %s5232
        %v5234 = vmul.f32 %v324, %v5233
        %v5235 = vmul.f32 %v325, %v5233
        %s5236 = sld [smem:[#allocation2 + $0x301]]
        %v5237 = vstv %s5236
        %v5238 = vmul.f32 %v327, %v5237
        %v5239 = vmul.f32 %v328, %v5237
        %v5240 = vadd.f32 %v5234, %v5238
        %v5241 = vadd.f32 %v5235, %v5239
        %s5242 = sld [smem:[#allocation2 + $0x302]]
        %v5243 = vstv %s5242
        %v5244 = vmul.f32 %v330, %v5243
        %v5245 = vmul.f32 %v331, %v5243
        %v5246 = vadd.f32 %v5240, %v5244
        %v5247 = vadd.f32 %v5241, %v5245
        %s5248 = sld [smem:[#allocation2 + $0x303]]
        %v5249 = vstv %s5248
        %v5250 = vmul.f32 %v333, %v5249
        %v5251 = vmul.f32 %v334, %v5249
        %v5252 = vadd.f32 %v5246, %v5250
        %v5253 = vadd.f32 %v5247, %v5251
        %s5254 = sld [smem:[#allocation6 + $0x6]]
        %v5255 = vstv %s5254
        %v5256 = vadd.f32 %v5252, %v5255
        %v5257 = vadd.f32 %v5253, %v5255
        %v5259 = vsel %vm361, %v5256, 0
        %v5262 = vsel %vm361, %v5257, 0
        %5264 = vmatprep.subr.mxu0 0.0
        %5265 = vmatpush1.msra.mxu0 0.0
        %5266 = vmatprep.subr.mxu0 0.0
        %5267 = vmatpush1.msra.mxu0 0.0
        %5268 = vmatprep.subr.mxu0 0.0
        %5269 = vmatpush1.msra.mxu0 0.0
        %5270 = vmatprep.subr.mxu0 0.0
        %5271 = vmatpush1.msra.mxu0 0.0
        %5272 = vmatprep.subr.mxu0 0.0
        %5273 = vmatpush1.msra.mxu0 0.0
        %5274 = vmatprep.subr.mxu0 0.0
        %5275 = vmatpush1.msra.mxu0 0.0
        %5276 = vmatprep.subr.mxu0 0.0
        %5277 = vmatpush1.msra.mxu0 0.0
        %5278 = vmatprep.subr.mxu0 0.0
        %5279 = vmatpush1.msra.mxu0 0.0
        %5280 = vmatprep.subr.mxu0 0.0
        %5281 = vmatpush1.msra.mxu0 0.0
        %5282 = vmatprep.subr.mxu0 0.0
        %5283 = vmatpush1.msra.mxu0 0.0
        %5284 = vmatprep.subr.mxu0 0.0
        %5285 = vmatpush1.msra.mxu0 0.0
        %5286 = vmatprep.subr.mxu0 0.0
        %5287 = vmatpush1.msra.mxu0 0.0
        %5288 = vmatprep.subr.mxu0 0.0
        %5289 = vmatpush1.msra.mxu0 0.0
        %5290 = vmatprep.subr.mxu0 0.0
        %5291 = vmatpush1.msra.mxu0 0.0
        %5292 = vmatprep.subr.mxu0 %v320
        %5293 = vmatpush1.msra.mxu0 %v319
        %5294 = vmatprep.subr.mxu0 %v315
        %5295 = vmatpush1.msra.mxu0 %v314
        %5296 = vmatprep.subr.mxu0 0.0
        %5297 = vmatpush2.msra.mxu0 0.0
        %5298 = vmatprep.subr.mxu0 0.0
        %5299 = vmatpush2.msra.mxu0 0.0
        %5300 = vmatprep.subr.mxu0 0.0
        %5301 = vmatpush2.msra.mxu0 0.0
        %5302 = vmatprep.subr.mxu0 0.0
        %5303 = vmatpush2.msra.mxu0 0.0
        %5304 = vmatprep.subr.mxu0 0.0
        %5305 = vmatpush2.msra.mxu0 0.0
        %5306 = vmatprep.subr.mxu0 0.0
        %5307 = vmatpush2.msra.mxu0 0.0
        %5308 = vmatprep.subr.mxu0 0.0
        %5309 = vmatpush2.msra.mxu0 0.0
        %5310 = vmatprep.subr.mxu0 0.0
        %5311 = vmatpush2.msra.mxu0 0.0
        %5312 = vmatprep.subr.mxu0 0.0
        %5313 = vmatpush2.msra.mxu0 0.0
        %5314 = vmatprep.subr.mxu0 0.0
        %5315 = vmatpush2.msra.mxu0 0.0
        %5316 = vmatprep.subr.mxu0 0.0
        %5317 = vmatpush2.msra.mxu0 0.0
        %5318 = vmatprep.subr.mxu0 0.0
        %5319 = vmatpush2.msra.mxu0 0.0
        %5320 = vmatprep.subr.mxu0 0.0
        %5321 = vmatpush2.msra.mxu0 0.0
        %5322 = vmatprep.subr.mxu0 0.0
        %5323 = vmatpush2.msra.mxu0 0.0
        %5324 = vmatprep.subr.mxu0 0.0
        %5325 = vmatpush2.msra.mxu0 0.0
        %5326 = vmatprep.subr.mxu0 0.0
        %5327 = vmatpush2.msra.mxu0 0.0
        %5328 = vmatprep.mubr.f32.mxu0 0.0
        %5329 = vmatmul.mubr.f32.gmra.mxu0 %v5259
        %v5330 = vpop.f32.mrf.mxu0
        %v5331 = vadd.f32 0.0, %v5330
        %v5332 = vpop.f32.mrf.mxu0
        %v5333 = vadd.f32 0.0, %v5332
        %5334 = vmatprep.mubr.f32.mxu0 0.0
        %5335 = vmatmul.mubr.f32.gmra.mxu0 %v5262
        %v5336 = vpop.f32.mrf.mxu0
        %v5337 = vadd.f32 0.0, %v5336
        %v5338 = vpop.f32.mrf.mxu0
        %v5339 = vadd.f32 0.0, %v5338
        %5340 = vdwg.mxu0
        %5341 = vmatprep.subr.mxu0 0.0
        %5342 = vmatpush1.msra.mxu0 0.0
        %5343 = vmatprep.subr.mxu0 0.0
        %5344 = vmatpush1.msra.mxu0 0.0
        %5345 = vmatprep.subr.mxu0 0.0
        %5346 = vmatpush1.msra.mxu0 0.0
        %5347 = vmatprep.subr.mxu0 0.0
        %5348 = vmatpush1.msra.mxu0 0.0
        %5349 = vmatprep.subr.mxu0 0.0
        %5350 = vmatpush1.msra.mxu0 0.0
        %5351 = vmatprep.subr.mxu0 0.0
        %5352 = vmatpush1.msra.mxu0 0.0
        %5353 = vmatprep.subr.mxu0 0.0
        %5354 = vmatpush1.msra.mxu0 0.0
        %5355 = vmatprep.subr.mxu0 0.0
        %5356 = vmatpush1.msra.mxu0 0.0
        %5357 = vmatprep.subr.mxu0 0.0
        %5358 = vmatpush1.msra.mxu0 0.0
        %5359 = vmatprep.subr.mxu0 0.0
        %5360 = vmatpush1.msra.mxu0 0.0
        %5361 = vmatprep.subr.mxu0 0.0
        %5362 = vmatpush1.msra.mxu0 0.0
        %5363 = vmatprep.subr.mxu0 0.0
        %5364 = vmatpush1.msra.mxu0 0.0
        %5365 = vmatprep.subr.mxu0 0.0
        %5366 = vmatpush1.msra.mxu0 0.0
        %5367 = vmatprep.subr.mxu0 0.0
        %5368 = vmatpush1.msra.mxu0 0.0
        %5369 = vmatprep.subr.mxu0 %v322
        %5370 = vmatpush1.msra.mxu0 %v321
        %5371 = vmatprep.subr.mxu0 %v317
        %5372 = vmatpush1.msra.mxu0 %v316
        %5373 = vmatprep.subr.mxu0 0.0
        %5374 = vmatpush2.msra.mxu0 0.0
        %5375 = vmatprep.subr.mxu0 0.0
        %5376 = vmatpush2.msra.mxu0 0.0
        %5377 = vmatprep.subr.mxu0 0.0
        %5378 = vmatpush2.msra.mxu0 0.0
        %5379 = vmatprep.subr.mxu0 0.0
        %5380 = vmatpush2.msra.mxu0 0.0
        %5381 = vmatprep.subr.mxu0 0.0
        %5382 = vmatpush2.msra.mxu0 0.0
        %5383 = vmatprep.subr.mxu0 0.0
        %5384 = vmatpush2.msra.mxu0 0.0
        %5385 = vmatprep.subr.mxu0 0.0
        %5386 = vmatpush2.msra.mxu0 0.0
        %5387 = vmatprep.subr.mxu0 0.0
        %5388 = vmatpush2.msra.mxu0 0.0
        %5389 = vmatprep.subr.mxu0 0.0
        %5390 = vmatpush2.msra.mxu0 0.0
        %5391 = vmatprep.subr.mxu0 0.0
        %5392 = vmatpush2.msra.mxu0 0.0
        %5393 = vmatprep.subr.mxu0 0.0
        %5394 = vmatpush2.msra.mxu0 0.0
        %5395 = vmatprep.subr.mxu0 0.0
        %5396 = vmatpush2.msra.mxu0 0.0
        %5397 = vmatprep.subr.mxu0 0.0
        %5398 = vmatpush2.msra.mxu0 0.0
        %5399 = vmatprep.subr.mxu0 0.0
        %5400 = vmatpush2.msra.mxu0 0.0
        %5401 = vmatprep.subr.mxu0 0.0
        %5402 = vmatpush2.msra.mxu0 0.0
        %5403 = vmatprep.subr.mxu0 0.0
        %5404 = vmatpush2.msra.mxu0 0.0
        %5405 = vmatprep.mubr.f32.mxu0 0.0
        %5406 = vmatmul.mubr.f32.gmra.mxu0 %v5259
        %v5407 = vpop.f32.mrf.mxu0
        %v5408 = vadd.f32 0.0, %v5407
        %v5409 = vpop.f32.mrf.mxu0
        %v5410 = vadd.f32 0.0, %v5409
        %5411 = vmatprep.mubr.f32.mxu0 0.0
        %5412 = vmatmul.mubr.f32.gmra.mxu0 %v5262
        %v5413 = vpop.f32.mrf.mxu0
        %v5414 = vadd.f32 0.0, %v5413
        %v5415 = vpop.f32.mrf.mxu0
        %v5416 = vadd.f32 0.0, %v5415
        %5417 = vdwg.mxu0
        %5418 = vmatprep.subr.mxu0 0.0
        %5419 = vmatpush1.msra.mxu0 0.0
        %5420 = vmatprep.subr.mxu0 0.0
        %5421 = vmatpush1.msra.mxu0 0.0
        %5422 = vmatprep.subr.mxu0 0.0
        %5423 = vmatpush1.msra.mxu0 0.0
        %5424 = vmatprep.subr.mxu0 0.0
        %5425 = vmatpush1.msra.mxu0 0.0
        %5426 = vmatprep.subr.mxu0 0.0
        %5427 = vmatpush1.msra.mxu0 0.0
        %5428 = vmatprep.subr.mxu0 0.0
        %5429 = vmatpush1.msra.mxu0 0.0
        %5430 = vmatprep.subr.mxu0 0.0
        %5431 = vmatpush1.msra.mxu0 0.0
        %5432 = vmatprep.subr.mxu0 0.0
        %5433 = vmatpush1.msra.mxu0 0.0
        %5434 = vmatprep.subr.mxu0 0.0
        %5435 = vmatpush1.msra.mxu0 0.0
        %5436 = vmatprep.subr.mxu0 0.0
        %5437 = vmatpush1.msra.mxu0 0.0
        %5438 = vmatprep.subr.mxu0 0.0
        %5439 = vmatpush1.msra.mxu0 0.0
        %5440 = vmatprep.subr.mxu0 0.0
        %5441 = vmatpush1.msra.mxu0 0.0
        %5442 = vmatprep.subr.mxu0 0.0
        %5443 = vmatpush1.msra.mxu0 0.0
        %5444 = vmatprep.subr.mxu0 0.0
        %5445 = vmatpush1.msra.mxu0 0.0
        %5446 = vmatprep.subr.mxu0 0.0
        %5447 = vmatpush1.msra.mxu0 %v323
        %5448 = vmatprep.subr.mxu0 0.0
        %5449 = vmatpush1.msra.mxu0 %v318
        %5450 = vmatprep.subr.mxu0 0.0
        %5451 = vmatpush2.msra.mxu0 0.0
        %5452 = vmatprep.subr.mxu0 0.0
        %5453 = vmatpush2.msra.mxu0 0.0
        %5454 = vmatprep.subr.mxu0 0.0
        %5455 = vmatpush2.msra.mxu0 0.0
        %5456 = vmatprep.subr.mxu0 0.0
        %5457 = vmatpush2.msra.mxu0 0.0
        %5458 = vmatprep.subr.mxu0 0.0
        %5459 = vmatpush2.msra.mxu0 0.0
        %5460 = vmatprep.subr.mxu0 0.0
        %5461 = vmatpush2.msra.mxu0 0.0
        %5462 = vmatprep.subr.mxu0 0.0
        %5463 = vmatpush2.msra.mxu0 0.0
        %5464 = vmatprep.subr.mxu0 0.0
        %5465 = vmatpush2.msra.mxu0 0.0
        %5466 = vmatprep.subr.mxu0 0.0
        %5467 = vmatpush2.msra.mxu0 0.0
        %5468 = vmatprep.subr.mxu0 0.0
        %5469 = vmatpush2.msra.mxu0 0.0
        %5470 = vmatprep.subr.mxu0 0.0
        %5471 = vmatpush2.msra.mxu0 0.0
        %5472 = vmatprep.subr.mxu0 0.0
        %5473 = vmatpush2.msra.mxu0 0.0
        %5474 = vmatprep.subr.mxu0 0.0
        %5475 = vmatpush2.msra.mxu0 0.0
        %5476 = vmatprep.subr.mxu0 0.0
        %5477 = vmatpush2.msra.mxu0 0.0
        %5478 = vmatprep.subr.mxu0 0.0
        %5479 = vmatpush2.msra.mxu0 0.0
        %5480 = vmatprep.subr.mxu0 0.0
        %5481 = vmatpush2.msra.mxu0 0.0
        %5482 = vmatprep.mubr.f32.mxu0 0.0
        %5483 = vmatmul.mubr.f32.gmra.mxu0 %v5259
        %v5484 = vpop.f32.mrf.mxu0
        %v5485 = vadd.f32 0.0, %v5484
        %v5486 = vpop.f32.mrf.mxu0
        %5487 = vmatprep.mubr.f32.mxu0 0.0
        %5488 = vmatmul.mubr.f32.gmra.mxu0 %v5262
        %v5489 = vpop.f32.mrf.mxu0
        %v5490 = vadd.f32 0.0, %v5489
        %v5491 = vpop.f32.mrf.mxu0
        %5492 = vdwg.mxu0
        %5493 = vmatprep.subr.mxu0 0.0
        %5494 = vmatpush1.msra.mxu0 0.0
        %5495 = vmatprep.subr.mxu0 0.0
        %5496 = vmatpush1.msra.mxu0 0.0
        %5497 = vmatprep.subr.mxu0 0.0
        %5498 = vmatpush1.msra.mxu0 0.0
        %5499 = vmatprep.subr.mxu0 0.0
        %5500 = vmatpush1.msra.mxu0 0.0
        %5501 = vmatprep.subr.mxu0 0.0
        %5502 = vmatpush1.msra.mxu0 0.0
        %5503 = vmatprep.subr.mxu0 0.0
        %5504 = vmatpush1.msra.mxu0 0.0
        %5505 = vmatprep.subr.mxu0 0.0
        %5506 = vmatpush1.msra.mxu0 0.0
        %5507 = vmatprep.subr.mxu0 0.0
        %5508 = vmatpush1.msra.mxu0 0.0
        %5509 = vmatprep.subr.mxu0 0.0
        %5510 = vmatpush1.msra.mxu0 0.0
        %5511 = vmatprep.subr.mxu0 0.0
        %5512 = vmatpush1.msra.mxu0 0.0
        %5513 = vmatprep.subr.mxu0 0.0
        %5514 = vmatpush1.msra.mxu0 0.0
        %5515 = vmatprep.subr.mxu0 0.0
        %5516 = vmatpush1.msra.mxu0 0.0
        %5517 = vmatprep.subr.mxu0 0.0
        %5518 = vmatpush1.msra.mxu0 0.0
        %5519 = vmatprep.subr.mxu0 0.0
        %5520 = vmatpush1.msra.mxu0 0.0
        %5521 = vmatprep.subr.mxu0 %v5339
        %5522 = vmatpush1.msra.mxu0 %v5337
        %5523 = vmatprep.subr.mxu0 %v5333
        %5524 = vmatpush1.msra.mxu0 %v5331
        %5525 = vmatprep.subr.mxu0 0.0
        %5526 = vmatpush2.msra.mxu0 0.0
        %5527 = vmatprep.subr.mxu0 0.0
        %5528 = vmatpush2.msra.mxu0 0.0
        %5529 = vmatprep.subr.mxu0 0.0
        %5530 = vmatpush2.msra.mxu0 0.0
        %5531 = vmatprep.subr.mxu0 0.0
        %5532 = vmatpush2.msra.mxu0 0.0
        %5533 = vmatprep.subr.mxu0 0.0
        %5534 = vmatpush2.msra.mxu0 0.0
        %5535 = vmatprep.subr.mxu0 0.0
        %5536 = vmatpush2.msra.mxu0 0.0
        %5537 = vmatprep.subr.mxu0 0.0
        %5538 = vmatpush2.msra.mxu0 0.0
        %5539 = vmatprep.subr.mxu0 0.0
        %5540 = vmatpush2.msra.mxu0 0.0
        %5541 = vmatprep.subr.mxu0 0.0
        %5542 = vmatpush2.msra.mxu0 0.0
        %5543 = vmatprep.subr.mxu0 0.0
        %5544 = vmatpush2.msra.mxu0 0.0
        %5545 = vmatprep.subr.mxu0 0.0
        %5546 = vmatpush2.msra.mxu0 0.0
        %5547 = vmatprep.subr.mxu0 0.0
        %5548 = vmatpush2.msra.mxu0 0.0
        %5549 = vmatprep.subr.mxu0 0.0
        %5550 = vmatpush2.msra.mxu0 0.0
        %5551 = vmatprep.subr.mxu0 0.0
        %5552 = vmatpush2.msra.mxu0 0.0
        %5553 = vmatprep.subr.mxu0 0.0
        %5554 = vmatpush2.msra.mxu0 0.0
        %5555 = vmatprep.subr.mxu0 0.0
        %5556 = vmatpush2.msra.mxu0 0.0
        %5557 = vmatprep.mubr.f32.mxu0 0.0
        %5558 = vmatmul.mubr.f32.gmra.mxu0 %v598
        %v5559 = vpop.f32.mrf.mxu0
        %v5560 = vadd.f32 0.0, %v5559
        %v5561 = vpop.f32.mrf.mxu0
        %v5562 = vadd.f32 0.0, %v5561
        %5563 = vmatprep.mubr.f32.mxu0 0.0
        %5564 = vmatmul.mubr.f32.gmra.mxu0 %v601
        %v5565 = vpop.f32.mrf.mxu0
        %v5566 = vadd.f32 0.0, %v5565
        %v5567 = vpop.f32.mrf.mxu0
        %v5568 = vadd.f32 0.0, %v5567
        %5569 = vmatprep.mubr.f32.mxu0 0.0
        %5570 = vmatmul.mubr.f32.gmra.mxu0 %v604
        %v5571 = vpop.f32.mrf.mxu0
        %v5572 = vadd.f32 0.0, %v5571
        %v5573 = vpop.f32.mrf.mxu0
        %v5574 = vadd.f32 0.0, %v5573
        %5575 = vmatprep.mubr.f32.mxu0 0.0
        %5576 = vmatmul.mubr.f32.gmra.mxu0 %v607
        %v5577 = vpop.f32.mrf.mxu0
        %v5578 = vadd.f32 0.0, %v5577
        %v5579 = vpop.f32.mrf.mxu0
        %v5580 = vadd.f32 0.0, %v5579
        %5581 = vmatprep.mubr.f32.mxu0 0.0
        %5582 = vmatmul.mubr.f32.gmra.mxu0 %v610
        %v5583 = vpop.f32.mrf.mxu0
        %v5584 = vadd.f32 0.0, %v5583
        %v5585 = vpop.f32.mrf.mxu0
        %v5586 = vadd.f32 0.0, %v5585
        %5587 = vmatprep.mubr.f32.mxu0 0.0
        %5588 = vmatmul.mubr.f32.gmra.mxu0 %v613
        %v5589 = vpop.f32.mrf.mxu0
        %v5590 = vadd.f32 0.0, %v5589
        %v5591 = vpop.f32.mrf.mxu0
        %v5592 = vadd.f32 0.0, %v5591
        %5593 = vmatprep.mubr.f32.mxu0 0.0
        %5594 = vmatmul.mubr.f32.gmra.mxu0 %v616
        %v5595 = vpop.f32.mrf.mxu0
        %v5596 = vadd.f32 0.0, %v5595
        %v5597 = vpop.f32.mrf.mxu0
        %v5598 = vadd.f32 0.0, %v5597
        %5599 = vmatprep.mubr.f32.mxu0 0.0
        %5600 = vmatmul.mubr.f32.gmra.mxu0 %v619
        %v5601 = vpop.f32.mrf.mxu0
        %v5602 = vadd.f32 0.0, %v5601
        %v5603 = vpop.f32.mrf.mxu0
        %v5604 = vadd.f32 0.0, %v5603
        %5605 = vmatprep.mubr.f32.mxu0 0.0
        %5606 = vmatmul.mubr.f32.gmra.mxu0 %v622
        %v5607 = vpop.f32.mrf.mxu0
        %v5608 = vadd.f32 0.0, %v5607
        %v5609 = vpop.f32.mrf.mxu0
        %v5610 = vadd.f32 0.0, %v5609
        %5611 = vmatprep.mubr.f32.mxu0 0.0
        %5612 = vmatmul.mubr.f32.gmra.mxu0 %v625
        %v5613 = vpop.f32.mrf.mxu0
        %v5614 = vadd.f32 0.0, %v5613
        %v5615 = vpop.f32.mrf.mxu0
        %v5616 = vadd.f32 0.0, %v5615
        %5617 = vmatprep.mubr.f32.mxu0 0.0
        %5618 = vmatmul.mubr.f32.gmra.mxu0 %v628
        %v5619 = vpop.f32.mrf.mxu0
        %v5620 = vadd.f32 0.0, %v5619
        %v5621 = vpop.f32.mrf.mxu0
        %v5622 = vadd.f32 0.0, %v5621
        %5623 = vmatprep.mubr.f32.mxu0 0.0
        %5624 = vmatmul.mubr.f32.gmra.mxu0 %v631
        %v5625 = vpop.f32.mrf.mxu0
        %v5626 = vadd.f32 0.0, %v5625
        %v5627 = vpop.f32.mrf.mxu0
        %v5628 = vadd.f32 0.0, %v5627
        %5629 = vdwg.mxu0
        %5630 = vmatprep.subr.mxu0 0.0
        %5631 = vmatpush1.msra.mxu0 0.0
        %5632 = vmatprep.subr.mxu0 0.0
        %5633 = vmatpush1.msra.mxu0 0.0
        %5634 = vmatprep.subr.mxu0 0.0
        %5635 = vmatpush1.msra.mxu0 0.0
        %5636 = vmatprep.subr.mxu0 0.0
        %5637 = vmatpush1.msra.mxu0 0.0
        %5638 = vmatprep.subr.mxu0 0.0
        %5639 = vmatpush1.msra.mxu0 0.0
        %5640 = vmatprep.subr.mxu0 0.0
        %5641 = vmatpush1.msra.mxu0 0.0
        %5642 = vmatprep.subr.mxu0 0.0
        %5643 = vmatpush1.msra.mxu0 0.0
        %5644 = vmatprep.subr.mxu0 0.0
        %5645 = vmatpush1.msra.mxu0 0.0
        %5646 = vmatprep.subr.mxu0 0.0
        %5647 = vmatpush1.msra.mxu0 0.0
        %5648 = vmatprep.subr.mxu0 0.0
        %5649 = vmatpush1.msra.mxu0 0.0
        %5650 = vmatprep.subr.mxu0 0.0
        %5651 = vmatpush1.msra.mxu0 0.0
        %5652 = vmatprep.subr.mxu0 0.0
        %5653 = vmatpush1.msra.mxu0 0.0
        %5654 = vmatprep.subr.mxu0 0.0
        %5655 = vmatpush1.msra.mxu0 0.0
        %5656 = vmatprep.subr.mxu0 0.0
        %5657 = vmatpush1.msra.mxu0 0.0
        %5658 = vmatprep.subr.mxu0 %v5416
        %5659 = vmatpush1.msra.mxu0 %v5414
        %5660 = vmatprep.subr.mxu0 %v5410
        %5661 = vmatpush1.msra.mxu0 %v5408
        %5662 = vmatprep.subr.mxu0 0.0
        %5663 = vmatpush2.msra.mxu0 0.0
        %5664 = vmatprep.subr.mxu0 0.0
        %5665 = vmatpush2.msra.mxu0 0.0
        %5666 = vmatprep.subr.mxu0 0.0
        %5667 = vmatpush2.msra.mxu0 0.0
        %5668 = vmatprep.subr.mxu0 0.0
        %5669 = vmatpush2.msra.mxu0 0.0
        %5670 = vmatprep.subr.mxu0 0.0
        %5671 = vmatpush2.msra.mxu0 0.0
        %5672 = vmatprep.subr.mxu0 0.0
        %5673 = vmatpush2.msra.mxu0 0.0
        %5674 = vmatprep.subr.mxu0 0.0
        %5675 = vmatpush2.msra.mxu0 0.0
        %5676 = vmatprep.subr.mxu0 0.0
        %5677 = vmatpush2.msra.mxu0 0.0
        %5678 = vmatprep.subr.mxu0 0.0
        %5679 = vmatpush2.msra.mxu0 0.0
        %5680 = vmatprep.subr.mxu0 0.0
        %5681 = vmatpush2.msra.mxu0 0.0
        %5682 = vmatprep.subr.mxu0 0.0
        %5683 = vmatpush2.msra.mxu0 0.0
        %5684 = vmatprep.subr.mxu0 0.0
        %5685 = vmatpush2.msra.mxu0 0.0
        %5686 = vmatprep.subr.mxu0 0.0
        %5687 = vmatpush2.msra.mxu0 0.0
        %5688 = vmatprep.subr.mxu0 0.0
        %5689 = vmatpush2.msra.mxu0 0.0
        %5690 = vmatprep.subr.mxu0 0.0
        %5691 = vmatpush2.msra.mxu0 0.0
        %5692 = vmatprep.subr.mxu0 0.0
        %5693 = vmatpush2.msra.mxu0 0.0
        %5694 = vmatprep.mubr.f32.mxu0 0.0
        %5695 = vmatmul.mubr.f32.gmra.mxu0 %v598
        %v5696 = vpop.f32.mrf.mxu0
        %v5697 = vadd.f32 0.0, %v5696
        %v5698 = vpop.f32.mrf.mxu0
        %v5699 = vadd.f32 0.0, %v5698
        %5700 = vmatprep.mubr.f32.mxu0 0.0
        %5701 = vmatmul.mubr.f32.gmra.mxu0 %v601
        %v5702 = vpop.f32.mrf.mxu0
        %v5703 = vadd.f32 0.0, %v5702
        %v5704 = vpop.f32.mrf.mxu0
        %v5705 = vadd.f32 0.0, %v5704
        %5706 = vmatprep.mubr.f32.mxu0 0.0
        %5707 = vmatmul.mubr.f32.gmra.mxu0 %v604
        %v5708 = vpop.f32.mrf.mxu0
        %v5709 = vadd.f32 0.0, %v5708
        %v5710 = vpop.f32.mrf.mxu0
        %v5711 = vadd.f32 0.0, %v5710
        %5712 = vmatprep.mubr.f32.mxu0 0.0
        %5713 = vmatmul.mubr.f32.gmra.mxu0 %v607
        %v5714 = vpop.f32.mrf.mxu0
        %v5715 = vadd.f32 0.0, %v5714
        %v5716 = vpop.f32.mrf.mxu0
        %v5717 = vadd.f32 0.0, %v5716
        %5718 = vmatprep.mubr.f32.mxu0 0.0
        %5719 = vmatmul.mubr.f32.gmra.mxu0 %v610
        %v5720 = vpop.f32.mrf.mxu0
        %v5721 = vadd.f32 0.0, %v5720
        %v5722 = vpop.f32.mrf.mxu0
        %v5723 = vadd.f32 0.0, %v5722
        %5724 = vmatprep.mubr.f32.mxu0 0.0
        %5725 = vmatmul.mubr.f32.gmra.mxu0 %v613
        %v5726 = vpop.f32.mrf.mxu0
        %v5727 = vadd.f32 0.0, %v5726
        %v5728 = vpop.f32.mrf.mxu0
        %v5729 = vadd.f32 0.0, %v5728
        %5730 = vmatprep.mubr.f32.mxu0 0.0
        %5731 = vmatmul.mubr.f32.gmra.mxu0 %v616
        %v5732 = vpop.f32.mrf.mxu0
        %v5733 = vadd.f32 0.0, %v5732
        %v5734 = vpop.f32.mrf.mxu0
        %v5735 = vadd.f32 0.0, %v5734
        %5736 = vmatprep.mubr.f32.mxu0 0.0
        %5737 = vmatmul.mubr.f32.gmra.mxu0 %v619
        %v5738 = vpop.f32.mrf.mxu0
        %v5739 = vadd.f32 0.0, %v5738
        %v5740 = vpop.f32.mrf.mxu0
        %v5741 = vadd.f32 0.0, %v5740
        %5742 = vmatprep.mubr.f32.mxu0 0.0
        %5743 = vmatmul.mubr.f32.gmra.mxu0 %v622
        %v5744 = vpop.f32.mrf.mxu0
        %v5745 = vadd.f32 0.0, %v5744
        %v5746 = vpop.f32.mrf.mxu0
        %v5747 = vadd.f32 0.0, %v5746
        %5748 = vmatprep.mubr.f32.mxu0 0.0
        %5749 = vmatmul.mubr.f32.gmra.mxu0 %v625
        %v5750 = vpop.f32.mrf.mxu0
        %v5751 = vadd.f32 0.0, %v5750
        %v5752 = vpop.f32.mrf.mxu0
        %v5753 = vadd.f32 0.0, %v5752
        %5754 = vmatprep.mubr.f32.mxu0 0.0
        %5755 = vmatmul.mubr.f32.gmra.mxu0 %v628
        %v5756 = vpop.f32.mrf.mxu0
        %v5757 = vadd.f32 0.0, %v5756
        %v5758 = vpop.f32.mrf.mxu0
        %v5759 = vadd.f32 0.0, %v5758
        %5760 = vmatprep.mubr.f32.mxu0 0.0
        %5761 = vmatmul.mubr.f32.gmra.mxu0 %v631
        %v5762 = vpop.f32.mrf.mxu0
        %v5763 = vadd.f32 0.0, %v5762
        %v5764 = vpop.f32.mrf.mxu0
        %v5765 = vadd.f32 0.0, %v5764
        %5766 = vdwg.mxu0
        %5767 = vmatprep.subr.mxu0 0.0
        %5768 = vmatpush1.msra.mxu0 0.0
        %5769 = vmatprep.subr.mxu0 0.0
        %5770 = vmatpush1.msra.mxu0 0.0
        %5771 = vmatprep.subr.mxu0 0.0
        %5772 = vmatpush1.msra.mxu0 0.0
        %5773 = vmatprep.subr.mxu0 0.0
        %5774 = vmatpush1.msra.mxu0 0.0
        %5775 = vmatprep.subr.mxu0 0.0
        %5776 = vmatpush1.msra.mxu0 0.0
        %5777 = vmatprep.subr.mxu0 0.0
        %5778 = vmatpush1.msra.mxu0 0.0
        %5779 = vmatprep.subr.mxu0 0.0
        %5780 = vmatpush1.msra.mxu0 0.0
        %5781 = vmatprep.subr.mxu0 0.0
        %5782 = vmatpush1.msra.mxu0 0.0
        %5783 = vmatprep.subr.mxu0 0.0
        %5784 = vmatpush1.msra.mxu0 0.0
        %5785 = vmatprep.subr.mxu0 0.0
        %5786 = vmatpush1.msra.mxu0 0.0
        %5787 = vmatprep.subr.mxu0 0.0
        %5788 = vmatpush1.msra.mxu0 0.0
        %5789 = vmatprep.subr.mxu0 0.0
        %5790 = vmatpush1.msra.mxu0 0.0
        %5791 = vmatprep.subr.mxu0 0.0
        %5792 = vmatpush1.msra.mxu0 0.0
        %5793 = vmatprep.subr.mxu0 0.0
        %5794 = vmatpush1.msra.mxu0 0.0
        %5795 = vmatprep.subr.mxu0 0.0
        %5796 = vmatpush1.msra.mxu0 %v5490
        %5797 = vmatprep.subr.mxu0 0.0
        %5798 = vmatpush1.msra.mxu0 %v5485
        %5799 = vmatprep.subr.mxu0 0.0
        %5800 = vmatpush2.msra.mxu0 0.0
        %5801 = vmatprep.subr.mxu0 0.0
        %5802 = vmatpush2.msra.mxu0 0.0
        %5803 = vmatprep.subr.mxu0 0.0
        %5804 = vmatpush2.msra.mxu0 0.0
        %5805 = vmatprep.subr.mxu0 0.0
        %5806 = vmatpush2.msra.mxu0 0.0
        %5807 = vmatprep.subr.mxu0 0.0
        %5808 = vmatpush2.msra.mxu0 0.0
        %5809 = vmatprep.subr.mxu0 0.0
        %5810 = vmatpush2.msra.mxu0 0.0
        %5811 = vmatprep.subr.mxu0 0.0
        %5812 = vmatpush2.msra.mxu0 0.0
        %5813 = vmatprep.subr.mxu0 0.0
        %5814 = vmatpush2.msra.mxu0 0.0
        %5815 = vmatprep.subr.mxu0 0.0
        %5816 = vmatpush2.msra.mxu0 0.0
        %5817 = vmatprep.subr.mxu0 0.0
        %5818 = vmatpush2.msra.mxu0 0.0
        %5819 = vmatprep.subr.mxu0 0.0
        %5820 = vmatpush2.msra.mxu0 0.0
        %5821 = vmatprep.subr.mxu0 0.0
        %5822 = vmatpush2.msra.mxu0 0.0
        %5823 = vmatprep.subr.mxu0 0.0
        %5824 = vmatpush2.msra.mxu0 0.0
        %5825 = vmatprep.subr.mxu0 0.0
        %5826 = vmatpush2.msra.mxu0 0.0
        %5827 = vmatprep.subr.mxu0 0.0
        %5828 = vmatpush2.msra.mxu0 0.0
        %5829 = vmatprep.subr.mxu0 0.0
        %5830 = vmatpush2.msra.mxu0 0.0
        %5831 = vmatprep.mubr.f32.mxu0 0.0
        %5832 = vmatmul.mubr.f32.gmra.mxu0 %v598
        %v5833 = vpop.f32.mrf.mxu0
        %v5834 = vadd.f32 0.0, %v5833
        %v5835 = vpop.f32.mrf.mxu0
        %5836 = vmatprep.mubr.f32.mxu0 0.0
        %5837 = vmatmul.mubr.f32.gmra.mxu0 %v601
        %v5838 = vpop.f32.mrf.mxu0
        %v5839 = vadd.f32 0.0, %v5838
        %v5840 = vpop.f32.mrf.mxu0
        %5841 = vmatprep.mubr.f32.mxu0 0.0
        %5842 = vmatmul.mubr.f32.gmra.mxu0 %v604
        %v5843 = vpop.f32.mrf.mxu0
        %v5844 = vadd.f32 0.0, %v5843
        %v5845 = vpop.f32.mrf.mxu0
        %5846 = vmatprep.mubr.f32.mxu0 0.0
        %5847 = vmatmul.mubr.f32.gmra.mxu0 %v607
        %v5848 = vpop.f32.mrf.mxu0
        %v5849 = vadd.f32 0.0, %v5848
        %v5850 = vpop.f32.mrf.mxu0
        %5851 = vmatprep.mubr.f32.mxu0 0.0
        %5852 = vmatmul.mubr.f32.gmra.mxu0 %v610
        %v5853 = vpop.f32.mrf.mxu0
        %v5854 = vadd.f32 0.0, %v5853
        %v5855 = vpop.f32.mrf.mxu0
        %5856 = vmatprep.mubr.f32.mxu0 0.0
        %5857 = vmatmul.mubr.f32.gmra.mxu0 %v613
        %v5858 = vpop.f32.mrf.mxu0
        %v5859 = vadd.f32 0.0, %v5858
        %v5860 = vpop.f32.mrf.mxu0
        %5861 = vmatprep.mubr.f32.mxu0 0.0
        %5862 = vmatmul.mubr.f32.gmra.mxu0 %v616
        %v5863 = vpop.f32.mrf.mxu0
        %v5864 = vadd.f32 0.0, %v5863
        %v5865 = vpop.f32.mrf.mxu0
        %5866 = vmatprep.mubr.f32.mxu0 0.0
        %5867 = vmatmul.mubr.f32.gmra.mxu0 %v619
        %v5868 = vpop.f32.mrf.mxu0
        %v5869 = vadd.f32 0.0, %v5868
        %v5870 = vpop.f32.mrf.mxu0
        %5871 = vmatprep.mubr.f32.mxu0 0.0
        %5872 = vmatmul.mubr.f32.gmra.mxu0 %v622
        %v5873 = vpop.f32.mrf.mxu0
        %v5874 = vadd.f32 0.0, %v5873
        %v5875 = vpop.f32.mrf.mxu0
        %5876 = vmatprep.mubr.f32.mxu0 0.0
        %5877 = vmatmul.mubr.f32.gmra.mxu0 %v625
        %v5878 = vpop.f32.mrf.mxu0
        %v5879 = vadd.f32 0.0, %v5878
        %v5880 = vpop.f32.mrf.mxu0
        %5881 = vmatprep.mubr.f32.mxu0 0.0
        %5882 = vmatmul.mubr.f32.gmra.mxu0 %v628
        %v5883 = vpop.f32.mrf.mxu0
        %v5884 = vadd.f32 0.0, %v5883
        %v5885 = vpop.f32.mrf.mxu0
        %5886 = vmatprep.mubr.f32.mxu0 0.0
        %5887 = vmatmul.mubr.f32.gmra.mxu0 %v631
        %v5888 = vpop.f32.mrf.mxu0
        %v5889 = vadd.f32 0.0, %v5888
        %v5890 = vpop.f32.mrf.mxu0
        %5891 = vdwg.mxu0
        %vm5892 = vcmp.gt.f32.partialorder %v5560, %v5112
        %vm5893 = vcmp.gt.f32.partialorder %v5562, %v5113
        %vm5894 = vcmp.gt.f32.partialorder %v5697, %v5114
        %vm5895 = vcmp.gt.f32.partialorder %v5699, %v5115
        %vm5896 = vcmp.gt.f32.partialorder %v5834, %v5116
        %vm5897 = vcmp.gt.f32.partialorder %v5566, %v5117
        %vm5898 = vcmp.gt.f32.partialorder %v5568, %v5118
        %vm5899 = vcmp.gt.f32.partialorder %v5703, %v5119
        %vm5900 = vcmp.gt.f32.partialorder %v5705, %v5120
        %vm5901 = vcmp.gt.f32.partialorder %v5839, %v5121
        %vm5902 = vcmp.gt.f32.partialorder %v5572, %v5122
        %vm5903 = vcmp.gt.f32.partialorder %v5574, %v5123
        %vm5904 = vcmp.gt.f32.partialorder %v5709, %v5124
        %vm5905 = vcmp.gt.f32.partialorder %v5711, %v5125
        %vm5906 = vcmp.gt.f32.partialorder %v5844, %v5126
        %vm5907 = vcmp.gt.f32.partialorder %v5578, %v5127
        %vm5908 = vcmp.gt.f32.partialorder %v5580, %v5128
        %vm5909 = vcmp.gt.f32.partialorder %v5715, %v5129
        %vm5910 = vcmp.gt.f32.partialorder %v5717, %v5130
        %vm5911 = vcmp.gt.f32.partialorder %v5849, %v5131
        %vm5912 = vcmp.gt.f32.partialorder %v5584, %v5132
        %vm5913 = vcmp.gt.f32.partialorder %v5586, %v5133
        %vm5914 = vcmp.gt.f32.partialorder %v5721, %v5134
        %vm5915 = vcmp.gt.f32.partialorder %v5723, %v5135
        %vm5916 = vcmp.gt.f32.partialorder %v5854, %v5136
        %vm5917 = vcmp.gt.f32.partialorder %v5590, %v5137
        %vm5918 = vcmp.gt.f32.partialorder %v5592, %v5138
        %vm5919 = vcmp.gt.f32.partialorder %v5727, %v5139
        %vm5920 = vcmp.gt.f32.partialorder %v5729, %v5140
        %vm5921 = vcmp.gt.f32.partialorder %v5859, %v5141
        %vm5922 = vcmp.gt.f32.partialorder %v5596, %v5142
        %vm5923 = vcmp.gt.f32.partialorder %v5598, %v5143
        %vm5924 = vcmp.gt.f32.partialorder %v5733, %v5144
        %vm5925 = vcmp.gt.f32.partialorder %v5735, %v5145
        %vm5926 = vcmp.gt.f32.partialorder %v5864, %v5146
        %vm5927 = vcmp.gt.f32.partialorder %v5602, %v5147
        %vm5928 = vcmp.gt.f32.partialorder %v5604, %v5148
        %vm5929 = vcmp.gt.f32.partialorder %v5739, %v5149
        %vm5930 = vcmp.gt.f32.partialorder %v5741, %v5150
        %vm5931 = vcmp.gt.f32.partialorder %v5869, %v5151
        %vm5932 = vcmp.gt.f32.partialorder %v5608, %v5152
        %vm5933 = vcmp.gt.f32.partialorder %v5610, %v5153
        %vm5934 = vcmp.gt.f32.partialorder %v5745, %v5154
        %vm5935 = vcmp.gt.f32.partialorder %v5747, %v5155
        %vm5936 = vcmp.gt.f32.partialorder %v5874, %v5156
        %vm5937 = vcmp.gt.f32.partialorder %v5614, %v5157
        %vm5938 = vcmp.gt.f32.partialorder %v5616, %v5158
        %vm5939 = vcmp.gt.f32.partialorder %v5751, %v5159
        %vm5940 = vcmp.gt.f32.partialorder %v5753, %v5160
        %vm5941 = vcmp.gt.f32.partialorder %v5879, %v5161
        %vm5942 = vcmp.gt.f32.partialorder %v5620, %v5162
        %vm5943 = vcmp.gt.f32.partialorder %v5622, %v5163
        %vm5944 = vcmp.gt.f32.partialorder %v5757, %v5164
        %vm5945 = vcmp.gt.f32.partialorder %v5759, %v5165
        %vm5946 = vcmp.gt.f32.partialorder %v5884, %v5166
        %vm5947 = vcmp.gt.f32.partialorder %v5626, %v5167
        %vm5948 = vcmp.gt.f32.partialorder %v5628, %v5168
        %vm5949 = vcmp.gt.f32.partialorder %v5763, %v5169
        %vm5950 = vcmp.gt.f32.partialorder %v5765, %v5170
        %vm5951 = vcmp.gt.f32.partialorder %v5889, %v5171
        %v5952 = vsel %vm5892, %v5560, %v5112
        %v5953 = vsel %vm5893, %v5562, %v5113
        %v5954 = vsel %vm5894, %v5697, %v5114
        %v5955 = vsel %vm5895, %v5699, %v5115
        %v5956 = vsel %vm5896, %v5834, %v5116
        %v5957 = vsel %vm5897, %v5566, %v5117
        %v5958 = vsel %vm5898, %v5568, %v5118
        %v5959 = vsel %vm5899, %v5703, %v5119
        %v5960 = vsel %vm5900, %v5705, %v5120
        %v5961 = vsel %vm5901, %v5839, %v5121
        %v5962 = vsel %vm5902, %v5572, %v5122
        %v5963 = vsel %vm5903, %v5574, %v5123
        %v5964 = vsel %vm5904, %v5709, %v5124
        %v5965 = vsel %vm5905, %v5711, %v5125
        %v5966 = vsel %vm5906, %v5844, %v5126
        %v5967 = vsel %vm5907, %v5578, %v5127
        %v5968 = vsel %vm5908, %v5580, %v5128
        %v5969 = vsel %vm5909, %v5715, %v5129
        %v5970 = vsel %vm5910, %v5717, %v5130
        %v5971 = vsel %vm5911, %v5849, %v5131
        %v5972 = vsel %vm5912, %v5584, %v5132
        %v5973 = vsel %vm5913, %v5586, %v5133
        %v5974 = vsel %vm5914, %v5721, %v5134
        %v5975 = vsel %vm5915, %v5723, %v5135
        %v5976 = vsel %vm5916, %v5854, %v5136
        %v5977 = vsel %vm5917, %v5590, %v5137
        %v5978 = vsel %vm5918, %v5592, %v5138
        %v5979 = vsel %vm5919, %v5727, %v5139
        %v5980 = vsel %vm5920, %v5729, %v5140
        %v5981 = vsel %vm5921, %v5859, %v5141
        %v5982 = vsel %vm5922, %v5596, %v5142
        %v5983 = vsel %vm5923, %v5598, %v5143
        %v5984 = vsel %vm5924, %v5733, %v5144
        %v5985 = vsel %vm5925, %v5735, %v5145
        %v5986 = vsel %vm5926, %v5864, %v5146
        %v5987 = vsel %vm5927, %v5602, %v5147
        %v5988 = vsel %vm5928, %v5604, %v5148
        %v5989 = vsel %vm5929, %v5739, %v5149
        %v5990 = vsel %vm5930, %v5741, %v5150
        %v5991 = vsel %vm5931, %v5869, %v5151
        %v5992 = vsel %vm5932, %v5608, %v5152
        %v5993 = vsel %vm5933, %v5610, %v5153
        %v5994 = vsel %vm5934, %v5745, %v5154
        %v5995 = vsel %vm5935, %v5747, %v5155
        %v5996 = vsel %vm5936, %v5874, %v5156
        %v5997 = vsel %vm5937, %v5614, %v5157
        %v5998 = vsel %vm5938, %v5616, %v5158
        %v5999 = vsel %vm5939, %v5751, %v5159
        %v6000 = vsel %vm5940, %v5753, %v5160
        %v6001 = vsel %vm5941, %v5879, %v5161
        %v6002 = vsel %vm5942, %v5620, %v5162
        %v6003 = vsel %vm5943, %v5622, %v5163
        %v6004 = vsel %vm5944, %v5757, %v5164
        %v6005 = vsel %vm5945, %v5759, %v5165
        %v6006 = vsel %vm5946, %v5884, %v5166
        %v6007 = vsel %vm5947, %v5626, %v5167
        %v6008 = vsel %vm5948, %v5628, %v5168
        %v6009 = vsel %vm5949, %v5763, %v5169
        %v6010 = vsel %vm5950, %v5765, %v5170
        %v6011 = vsel %vm5951, %v5889, %v5171
        %v6012 = vsel %vm5892, 6, %v5172
        %v6013 = vsel %vm5893, 6, %v5173
        %v6014 = vsel %vm5894, 6, %v5174
        %v6015 = vsel %vm5895, 6, %v5175
        %v6016 = vsel %vm5896, 6, %v5176
        %v6017 = vsel %vm5897, 6, %v5177
        %v6018 = vsel %vm5898, 6, %v5178
        %v6019 = vsel %vm5899, 6, %v5179
        %v6020 = vsel %vm5900, 6, %v5180
        %v6021 = vsel %vm5901, 6, %v5181
        %v6022 = vsel %vm5902, 6, %v5182
        %v6023 = vsel %vm5903, 6, %v5183
        %v6024 = vsel %vm5904, 6, %v5184
        %v6025 = vsel %vm5905, 6, %v5185
        %v6026 = vsel %vm5906, 6, %v5186
        %v6027 = vsel %vm5907, 6, %v5187
        %v6028 = vsel %vm5908, 6, %v5188
        %v6029 = vsel %vm5909, 6, %v5189
        %v6030 = vsel %vm5910, 6, %v5190
        %v6031 = vsel %vm5911, 6, %v5191
        %v6032 = vsel %vm5912, 6, %v5192
        %v6033 = vsel %vm5913, 6, %v5193
        %v6034 = vsel %vm5914, 6, %v5194
        %v6035 = vsel %vm5915, 6, %v5195
        %v6036 = vsel %vm5916, 6, %v5196
        %v6037 = vsel %vm5917, 6, %v5197
        %v6038 = vsel %vm5918, 6, %v5198
        %v6039 = vsel %vm5919, 6, %v5199
        %v6040 = vsel %vm5920, 6, %v5200
        %v6041 = vsel %vm5921, 6, %v5201
        %v6042 = vsel %vm5922, 6, %v5202
        %v6043 = vsel %vm5923, 6, %v5203
        %v6044 = vsel %vm5924, 6, %v5204
        %v6045 = vsel %vm5925, 6, %v5205
        %v6046 = vsel %vm5926, 6, %v5206
        %v6047 = vsel %vm5927, 6, %v5207
        %v6048 = vsel %vm5928, 6, %v5208
        %v6049 = vsel %vm5929, 6, %v5209
        %v6050 = vsel %vm5930, 6, %v5210
        %v6051 = vsel %vm5931, 6, %v5211
        %v6052 = vsel %vm5932, 6, %v5212
        %v6053 = vsel %vm5933, 6, %v5213
        %v6054 = vsel %vm5934, 6, %v5214
        %v6055 = vsel %vm5935, 6, %v5215
        %v6056 = vsel %vm5936, 6, %v5216
        %v6057 = vsel %vm5937, 6, %v5217
        %v6058 = vsel %vm5938, 6, %v5218
        %v6059 = vsel %vm5939, 6, %v5219
        %v6060 = vsel %vm5940, 6, %v5220
        %v6061 = vsel %vm5941, 6, %v5221
        %v6062 = vsel %vm5942, 6, %v5222
        %v6063 = vsel %vm5943, 6, %v5223
        %v6064 = vsel %vm5944, 6, %v5224
        %v6065 = vsel %vm5945, 6, %v5225
        %v6066 = vsel %vm5946, 6, %v5226
        %v6067 = vsel %vm5947, 6, %v5227
        %v6068 = vsel %vm5948, 6, %v5228
        %v6069 = vsel %vm5949, 6, %v5229
        %v6070 = vsel %vm5950, 6, %v5230
        %v6071 = vsel %vm5951, 6, %v5231
        %s6072 = sld [smem:[#allocation2 + $0x380]]
        %v6073 = vstv %s6072
        %v6074 = vmul.f32 %v324, %v6073
        %v6075 = vmul.f32 %v325, %v6073
        %s6076 = sld [smem:[#allocation2 + $0x381]]
        %v6077 = vstv %s6076
        %v6078 = vmul.f32 %v327, %v6077
        %v6079 = vmul.f32 %v328, %v6077
        %v6080 = vadd.f32 %v6074, %v6078
        %v6081 = vadd.f32 %v6075, %v6079
        %s6082 = sld [smem:[#allocation2 + $0x382]]
        %v6083 = vstv %s6082
        %v6084 = vmul.f32 %v330, %v6083
        %v6085 = vmul.f32 %v331, %v6083
        %v6086 = vadd.f32 %v6080, %v6084
        %v6087 = vadd.f32 %v6081, %v6085
        %s6088 = sld [smem:[#allocation2 + $0x383]]
        %v6089 = vstv %s6088
        %v6090 = vmul.f32 %v333, %v6089
        %v6091 = vmul.f32 %v334, %v6089
        %v6092 = vadd.f32 %v6086, %v6090
        %v6093 = vadd.f32 %v6087, %v6091
        %s6094 = sld [smem:[#allocation6 + $0x7]]
        %v6095 = vstv %s6094
        %v6096 = vadd.f32 %v6092, %v6095
        %v6097 = vadd.f32 %v6093, %v6095
        %v6099 = vsel %vm361, %v6096, 0
        %v6102 = vsel %vm361, %v6097, 0
        %6104 = vmatprep.subr.mxu0 0.0
        %6105 = vmatpush1.msra.mxu0 0.0
        %6106 = vmatprep.subr.mxu0 0.0
        %6107 = vmatpush1.msra.mxu0 0.0
        %6108 = vmatprep.subr.mxu0 0.0
        %6109 = vmatpush1.msra.mxu0 0.0
        %6110 = vmatprep.subr.mxu0 0.0
        %6111 = vmatpush1.msra.mxu0 0.0
        %6112 = vmatprep.subr.mxu0 0.0
        %6113 = vmatpush1.msra.mxu0 0.0
        %6114 = vmatprep.subr.mxu0 0.0
        %6115 = vmatpush1.msra.mxu0 0.0
        %6116 = vmatprep.subr.mxu0 0.0
        %6117 = vmatpush1.msra.mxu0 0.0
        %6118 = vmatprep.subr.mxu0 0.0
        %6119 = vmatpush1.msra.mxu0 0.0
        %6120 = vmatprep.subr.mxu0 0.0
        %6121 = vmatpush1.msra.mxu0 0.0
        %6122 = vmatprep.subr.mxu0 0.0
        %6123 = vmatpush1.msra.mxu0 0.0
        %6124 = vmatprep.subr.mxu0 0.0
        %6125 = vmatpush1.msra.mxu0 0.0
        %6126 = vmatprep.subr.mxu0 0.0
        %6127 = vmatpush1.msra.mxu0 0.0
        %6128 = vmatprep.subr.mxu0 0.0
        %6129 = vmatpush1.msra.mxu0 0.0
        %6130 = vmatprep.subr.mxu0 0.0
        %6131 = vmatpush1.msra.mxu0 0.0
        %6132 = vmatprep.subr.mxu0 %v320
        %6133 = vmatpush1.msra.mxu0 %v319
        %6134 = vmatprep.subr.mxu0 %v315
        %6135 = vmatpush1.msra.mxu0 %v314
        %6136 = vmatprep.subr.mxu0 0.0
        %6137 = vmatpush2.msra.mxu0 0.0
        %6138 = vmatprep.subr.mxu0 0.0
        %6139 = vmatpush2.msra.mxu0 0.0
        %6140 = vmatprep.subr.mxu0 0.0
        %6141 = vmatpush2.msra.mxu0 0.0
        %6142 = vmatprep.subr.mxu0 0.0
        %6143 = vmatpush2.msra.mxu0 0.0
        %6144 = vmatprep.subr.mxu0 0.0
        %6145 = vmatpush2.msra.mxu0 0.0
        %6146 = vmatprep.subr.mxu0 0.0
        %6147 = vmatpush2.msra.mxu0 0.0
        %6148 = vmatprep.subr.mxu0 0.0
        %6149 = vmatpush2.msra.mxu0 0.0
        %6150 = vmatprep.subr.mxu0 0.0
        %6151 = vmatpush2.msra.mxu0 0.0
        %6152 = vmatprep.subr.mxu0 0.0
        %6153 = vmatpush2.msra.mxu0 0.0
        %6154 = vmatprep.subr.mxu0 0.0
        %6155 = vmatpush2.msra.mxu0 0.0
        %6156 = vmatprep.subr.mxu0 0.0
        %6157 = vmatpush2.msra.mxu0 0.0
        %6158 = vmatprep.subr.mxu0 0.0
        %6159 = vmatpush2.msra.mxu0 0.0
        %6160 = vmatprep.subr.mxu0 0.0
        %6161 = vmatpush2.msra.mxu0 0.0
        %6162 = vmatprep.subr.mxu0 0.0
        %6163 = vmatpush2.msra.mxu0 0.0
        %6164 = vmatprep.subr.mxu0 0.0
        %6165 = vmatpush2.msra.mxu0 0.0
        %6166 = vmatprep.subr.mxu0 0.0
        %6167 = vmatpush2.msra.mxu0 0.0
        %6168 = vmatprep.mubr.f32.mxu0 0.0
        %6169 = vmatmul.mubr.f32.gmra.mxu0 %v6099
        %v6170 = vpop.f32.mrf.mxu0
        %v6171 = vadd.f32 0.0, %v6170
        %v6172 = vpop.f32.mrf.mxu0
        %v6173 = vadd.f32 0.0, %v6172
        %6174 = vmatprep.mubr.f32.mxu0 0.0
        %6175 = vmatmul.mubr.f32.gmra.mxu0 %v6102
        %v6176 = vpop.f32.mrf.mxu0
        %v6177 = vadd.f32 0.0, %v6176
        %v6178 = vpop.f32.mrf.mxu0
        %v6179 = vadd.f32 0.0, %v6178
        %6180 = vdwg.mxu0
        %6181 = vmatprep.subr.mxu0 0.0
        %6182 = vmatpush1.msra.mxu0 0.0
        %6183 = vmatprep.subr.mxu0 0.0
        %6184 = vmatpush1.msra.mxu0 0.0
        %6185 = vmatprep.subr.mxu0 0.0
        %6186 = vmatpush1.msra.mxu0 0.0
        %6187 = vmatprep.subr.mxu0 0.0
        %6188 = vmatpush1.msra.mxu0 0.0
        %6189 = vmatprep.subr.mxu0 0.0
        %6190 = vmatpush1.msra.mxu0 0.0
        %6191 = vmatprep.subr.mxu0 0.0
        %6192 = vmatpush1.msra.mxu0 0.0
        %6193 = vmatprep.subr.mxu0 0.0
        %6194 = vmatpush1.msra.mxu0 0.0
        %6195 = vmatprep.subr.mxu0 0.0
        %6196 = vmatpush1.msra.mxu0 0.0
        %6197 = vmatprep.subr.mxu0 0.0
        %6198 = vmatpush1.msra.mxu0 0.0
        %6199 = vmatprep.subr.mxu0 0.0
        %6200 = vmatpush1.msra.mxu0 0.0
        %6201 = vmatprep.subr.mxu0 0.0
        %6202 = vmatpush1.msra.mxu0 0.0
        %6203 = vmatprep.subr.mxu0 0.0
        %6204 = vmatpush1.msra.mxu0 0.0
        %6205 = vmatprep.subr.mxu0 0.0
        %6206 = vmatpush1.msra.mxu0 0.0
        %6207 = vmatprep.subr.mxu0 0.0
        %6208 = vmatpush1.msra.mxu0 0.0
        %6209 = vmatprep.subr.mxu0 %v322
        %6210 = vmatpush1.msra.mxu0 %v321
        %6211 = vmatprep.subr.mxu0 %v317
        %6212 = vmatpush1.msra.mxu0 %v316
        %6213 = vmatprep.subr.mxu0 0.0
        %6214 = vmatpush2.msra.mxu0 0.0
        %6215 = vmatprep.subr.mxu0 0.0
        %6216 = vmatpush2.msra.mxu0 0.0
        %6217 = vmatprep.subr.mxu0 0.0
        %6218 = vmatpush2.msra.mxu0 0.0
        %6219 = vmatprep.subr.mxu0 0.0
        %6220 = vmatpush2.msra.mxu0 0.0
        %6221 = vmatprep.subr.mxu0 0.0
        %6222 = vmatpush2.msra.mxu0 0.0
        %6223 = vmatprep.subr.mxu0 0.0
        %6224 = vmatpush2.msra.mxu0 0.0
        %6225 = vmatprep.subr.mxu0 0.0
        %6226 = vmatpush2.msra.mxu0 0.0
        %6227 = vmatprep.subr.mxu0 0.0
        %6228 = vmatpush2.msra.mxu0 0.0
        %6229 = vmatprep.subr.mxu0 0.0
        %6230 = vmatpush2.msra.mxu0 0.0
        %6231 = vmatprep.subr.mxu0 0.0
        %6232 = vmatpush2.msra.mxu0 0.0
        %6233 = vmatprep.subr.mxu0 0.0
        %6234 = vmatpush2.msra.mxu0 0.0
        %6235 = vmatprep.subr.mxu0 0.0
        %6236 = vmatpush2.msra.mxu0 0.0
        %6237 = vmatprep.subr.mxu0 0.0
        %6238 = vmatpush2.msra.mxu0 0.0
        %6239 = vmatprep.subr.mxu0 0.0
        %6240 = vmatpush2.msra.mxu0 0.0
        %6241 = vmatprep.subr.mxu0 0.0
        %6242 = vmatpush2.msra.mxu0 0.0
        %6243 = vmatprep.subr.mxu0 0.0
        %6244 = vmatpush2.msra.mxu0 0.0
        %6245 = vmatprep.mubr.f32.mxu0 0.0
        %6246 = vmatmul.mubr.f32.gmra.mxu0 %v6099
        %v6247 = vpop.f32.mrf.mxu0
        %v6248 = vadd.f32 0.0, %v6247
        %v6249 = vpop.f32.mrf.mxu0
        %v6250 = vadd.f32 0.0, %v6249
        %6251 = vmatprep.mubr.f32.mxu0 0.0
        %6252 = vmatmul.mubr.f32.gmra.mxu0 %v6102
        %v6253 = vpop.f32.mrf.mxu0
        %v6254 = vadd.f32 0.0, %v6253
        %v6255 = vpop.f32.mrf.mxu0
        %v6256 = vadd.f32 0.0, %v6255
        %6257 = vdwg.mxu0
        %6258 = vmatprep.subr.mxu0 0.0
        %6259 = vmatpush1.msra.mxu0 0.0
        %6260 = vmatprep.subr.mxu0 0.0
        %6261 = vmatpush1.msra.mxu0 0.0
        %6262 = vmatprep.subr.mxu0 0.0
        %6263 = vmatpush1.msra.mxu0 0.0
        %6264 = vmatprep.subr.mxu0 0.0
        %6265 = vmatpush1.msra.mxu0 0.0
        %6266 = vmatprep.subr.mxu0 0.0
        %6267 = vmatpush1.msra.mxu0 0.0
        %6268 = vmatprep.subr.mxu0 0.0
        %6269 = vmatpush1.msra.mxu0 0.0
        %6270 = vmatprep.subr.mxu0 0.0
        %6271 = vmatpush1.msra.mxu0 0.0
        %6272 = vmatprep.subr.mxu0 0.0
        %6273 = vmatpush1.msra.mxu0 0.0
        %6274 = vmatprep.subr.mxu0 0.0
        %6275 = vmatpush1.msra.mxu0 0.0
        %6276 = vmatprep.subr.mxu0 0.0
        %6277 = vmatpush1.msra.mxu0 0.0
        %6278 = vmatprep.subr.mxu0 0.0
        %6279 = vmatpush1.msra.mxu0 0.0
        %6280 = vmatprep.subr.mxu0 0.0
        %6281 = vmatpush1.msra.mxu0 0.0
        %6282 = vmatprep.subr.mxu0 0.0
        %6283 = vmatpush1.msra.mxu0 0.0
        %6284 = vmatprep.subr.mxu0 0.0
        %6285 = vmatpush1.msra.mxu0 0.0
        %6286 = vmatprep.subr.mxu0 0.0
        %6287 = vmatpush1.msra.mxu0 %v323
        %6288 = vmatprep.subr.mxu0 0.0
        %6289 = vmatpush1.msra.mxu0 %v318
        %6290 = vmatprep.subr.mxu0 0.0
        %6291 = vmatpush2.msra.mxu0 0.0
        %6292 = vmatprep.subr.mxu0 0.0
        %6293 = vmatpush2.msra.mxu0 0.0
        %6294 = vmatprep.subr.mxu0 0.0
        %6295 = vmatpush2.msra.mxu0 0.0
        %6296 = vmatprep.subr.mxu0 0.0
        %6297 = vmatpush2.msra.mxu0 0.0
        %6298 = vmatprep.subr.mxu0 0.0
        %6299 = vmatpush2.msra.mxu0 0.0
        %6300 = vmatprep.subr.mxu0 0.0
        %6301 = vmatpush2.msra.mxu0 0.0
        %6302 = vmatprep.subr.mxu0 0.0
        %6303 = vmatpush2.msra.mxu0 0.0
        %6304 = vmatprep.subr.mxu0 0.0
        %6305 = vmatpush2.msra.mxu0 0.0
        %6306 = vmatprep.subr.mxu0 0.0
        %6307 = vmatpush2.msra.mxu0 0.0
        %6308 = vmatprep.subr.mxu0 0.0
        %6309 = vmatpush2.msra.mxu0 0.0
        %6310 = vmatprep.subr.mxu0 0.0
        %6311 = vmatpush2.msra.mxu0 0.0
        %6312 = vmatprep.subr.mxu0 0.0
        %6313 = vmatpush2.msra.mxu0 0.0
        %6314 = vmatprep.subr.mxu0 0.0
        %6315 = vmatpush2.msra.mxu0 0.0
        %6316 = vmatprep.subr.mxu0 0.0
        %6317 = vmatpush2.msra.mxu0 0.0
        %6318 = vmatprep.subr.mxu0 0.0
        %6319 = vmatpush2.msra.mxu0 0.0
        %6320 = vmatprep.subr.mxu0 0.0
        %6321 = vmatpush2.msra.mxu0 0.0
        %6322 = vmatprep.mubr.f32.mxu0 0.0
        %6323 = vmatmul.mubr.f32.gmra.mxu0 %v6099
        %v6324 = vpop.f32.mrf.mxu0
        %v6325 = vadd.f32 0.0, %v6324
        %v6326 = vpop.f32.mrf.mxu0
        %6327 = vmatprep.mubr.f32.mxu0 0.0
        %6328 = vmatmul.mubr.f32.gmra.mxu0 %v6102
        %v6329 = vpop.f32.mrf.mxu0
        %v6330 = vadd.f32 0.0, %v6329
        %v6331 = vpop.f32.mrf.mxu0
        %6332 = vdwg.mxu0
        %6333 = vmatprep.subr.mxu0 0.0
        %6334 = vmatpush1.msra.mxu0 0.0
        %6335 = vmatprep.subr.mxu0 0.0
        %6336 = vmatpush1.msra.mxu0 0.0
        %6337 = vmatprep.subr.mxu0 0.0
        %6338 = vmatpush1.msra.mxu0 0.0
        %6339 = vmatprep.subr.mxu0 0.0
        %6340 = vmatpush1.msra.mxu0 0.0
        %6341 = vmatprep.subr.mxu0 0.0
        %6342 = vmatpush1.msra.mxu0 0.0
        %6343 = vmatprep.subr.mxu0 0.0
        %6344 = vmatpush1.msra.mxu0 0.0
        %6345 = vmatprep.subr.mxu0 0.0
        %6346 = vmatpush1.msra.mxu0 0.0
        %6347 = vmatprep.subr.mxu0 0.0
        %6348 = vmatpush1.msra.mxu0 0.0
        %6349 = vmatprep.subr.mxu0 0.0
        %6350 = vmatpush1.msra.mxu0 0.0
        %6351 = vmatprep.subr.mxu0 0.0
        %6352 = vmatpush1.msra.mxu0 0.0
        %6353 = vmatprep.subr.mxu0 0.0
        %6354 = vmatpush1.msra.mxu0 0.0
        %6355 = vmatprep.subr.mxu0 0.0
        %6356 = vmatpush1.msra.mxu0 0.0
        %6357 = vmatprep.subr.mxu0 0.0
        %6358 = vmatpush1.msra.mxu0 0.0
        %6359 = vmatprep.subr.mxu0 0.0
        %6360 = vmatpush1.msra.mxu0 0.0
        %6361 = vmatprep.subr.mxu0 %v6179
        %6362 = vmatpush1.msra.mxu0 %v6177
        %6363 = vmatprep.subr.mxu0 %v6173
        %6364 = vmatpush1.msra.mxu0 %v6171
        %6365 = vmatprep.subr.mxu0 0.0
        %6366 = vmatpush2.msra.mxu0 0.0
        %6367 = vmatprep.subr.mxu0 0.0
        %6368 = vmatpush2.msra.mxu0 0.0
        %6369 = vmatprep.subr.mxu0 0.0
        %6370 = vmatpush2.msra.mxu0 0.0
        %6371 = vmatprep.subr.mxu0 0.0
        %6372 = vmatpush2.msra.mxu0 0.0
        %6373 = vmatprep.subr.mxu0 0.0
        %6374 = vmatpush2.msra.mxu0 0.0
        %6375 = vmatprep.subr.mxu0 0.0
        %6376 = vmatpush2.msra.mxu0 0.0
        %6377 = vmatprep.subr.mxu0 0.0
        %6378 = vmatpush2.msra.mxu0 0.0
        %6379 = vmatprep.subr.mxu0 0.0
        %6380 = vmatpush2.msra.mxu0 0.0
        %6381 = vmatprep.subr.mxu0 0.0
        %6382 = vmatpush2.msra.mxu0 0.0
        %6383 = vmatprep.subr.mxu0 0.0
        %6384 = vmatpush2.msra.mxu0 0.0
        %6385 = vmatprep.subr.mxu0 0.0
        %6386 = vmatpush2.msra.mxu0 0.0
        %6387 = vmatprep.subr.mxu0 0.0
        %6388 = vmatpush2.msra.mxu0 0.0
        %6389 = vmatprep.subr.mxu0 0.0
        %6390 = vmatpush2.msra.mxu0 0.0
        %6391 = vmatprep.subr.mxu0 0.0
        %6392 = vmatpush2.msra.mxu0 0.0
        %6393 = vmatprep.subr.mxu0 0.0
        %6394 = vmatpush2.msra.mxu0 0.0
        %6395 = vmatprep.subr.mxu0 0.0
        %6396 = vmatpush2.msra.mxu0 0.0
        %6397 = vmatprep.mubr.f32.mxu0 0.0
        %6398 = vmatmul.mubr.f32.gmra.mxu0 %v598
        %v6399 = vpop.f32.mrf.mxu0
        %v6400 = vadd.f32 0.0, %v6399
        %v6401 = vpop.f32.mrf.mxu0
        %v6402 = vadd.f32 0.0, %v6401
        %6403 = vmatprep.mubr.f32.mxu0 0.0
        %6404 = vmatmul.mubr.f32.gmra.mxu0 %v601
        %v6405 = vpop.f32.mrf.mxu0
        %v6406 = vadd.f32 0.0, %v6405
        %v6407 = vpop.f32.mrf.mxu0
        %v6408 = vadd.f32 0.0, %v6407
        %6409 = vmatprep.mubr.f32.mxu0 0.0
        %6410 = vmatmul.mubr.f32.gmra.mxu0 %v604
        %v6411 = vpop.f32.mrf.mxu0
        %v6412 = vadd.f32 0.0, %v6411
        %v6413 = vpop.f32.mrf.mxu0
        %v6414 = vadd.f32 0.0, %v6413
        %6415 = vmatprep.mubr.f32.mxu0 0.0
        %6416 = vmatmul.mubr.f32.gmra.mxu0 %v607
        %v6417 = vpop.f32.mrf.mxu0
        %v6418 = vadd.f32 0.0, %v6417
        %v6419 = vpop.f32.mrf.mxu0
        %v6420 = vadd.f32 0.0, %v6419
        %6421 = vmatprep.mubr.f32.mxu0 0.0
        %6422 = vmatmul.mubr.f32.gmra.mxu0 %v610
        %v6423 = vpop.f32.mrf.mxu0
        %v6424 = vadd.f32 0.0, %v6423
        %v6425 = vpop.f32.mrf.mxu0
        %v6426 = vadd.f32 0.0, %v6425
        %6427 = vmatprep.mubr.f32.mxu0 0.0
        %6428 = vmatmul.mubr.f32.gmra.mxu0 %v613
        %v6429 = vpop.f32.mrf.mxu0
        %v6430 = vadd.f32 0.0, %v6429
        %v6431 = vpop.f32.mrf.mxu0
        %v6432 = vadd.f32 0.0, %v6431
        %6433 = vmatprep.mubr.f32.mxu0 0.0
        %6434 = vmatmul.mubr.f32.gmra.mxu0 %v616
        %v6435 = vpop.f32.mrf.mxu0
        %v6436 = vadd.f32 0.0, %v6435
        %v6437 = vpop.f32.mrf.mxu0
        %v6438 = vadd.f32 0.0, %v6437
        %6439 = vmatprep.mubr.f32.mxu0 0.0
        %6440 = vmatmul.mubr.f32.gmra.mxu0 %v619
        %v6441 = vpop.f32.mrf.mxu0
        %v6442 = vadd.f32 0.0, %v6441
        %v6443 = vpop.f32.mrf.mxu0
        %v6444 = vadd.f32 0.0, %v6443
        %6445 = vmatprep.mubr.f32.mxu0 0.0
        %6446 = vmatmul.mubr.f32.gmra.mxu0 %v622
        %v6447 = vpop.f32.mrf.mxu0
        %v6448 = vadd.f32 0.0, %v6447
        %v6449 = vpop.f32.mrf.mxu0
        %v6450 = vadd.f32 0.0, %v6449
        %6451 = vmatprep.mubr.f32.mxu0 0.0
        %6452 = vmatmul.mubr.f32.gmra.mxu0 %v625
        %v6453 = vpop.f32.mrf.mxu0
        %v6454 = vadd.f32 0.0, %v6453
        %v6455 = vpop.f32.mrf.mxu0
        %v6456 = vadd.f32 0.0, %v6455
        %6457 = vmatprep.mubr.f32.mxu0 0.0
        %6458 = vmatmul.mubr.f32.gmra.mxu0 %v628
        %v6459 = vpop.f32.mrf.mxu0
        %v6460 = vadd.f32 0.0, %v6459
        %v6461 = vpop.f32.mrf.mxu0
        %v6462 = vadd.f32 0.0, %v6461
        %6463 = vmatprep.mubr.f32.mxu0 0.0
        %6464 = vmatmul.mubr.f32.gmra.mxu0 %v631
        %v6465 = vpop.f32.mrf.mxu0
        %v6466 = vadd.f32 0.0, %v6465
        %v6467 = vpop.f32.mrf.mxu0
        %v6468 = vadd.f32 0.0, %v6467
        %6469 = vdwg.mxu0
        %6470 = vmatprep.subr.mxu0 0.0
        %6471 = vmatpush1.msra.mxu0 0.0
        %6472 = vmatprep.subr.mxu0 0.0
        %6473 = vmatpush1.msra.mxu0 0.0
        %6474 = vmatprep.subr.mxu0 0.0
        %6475 = vmatpush1.msra.mxu0 0.0
        %6476 = vmatprep.subr.mxu0 0.0
        %6477 = vmatpush1.msra.mxu0 0.0
        %6478 = vmatprep.subr.mxu0 0.0
        %6479 = vmatpush1.msra.mxu0 0.0
        %6480 = vmatprep.subr.mxu0 0.0
        %6481 = vmatpush1.msra.mxu0 0.0
        %6482 = vmatprep.subr.mxu0 0.0
        %6483 = vmatpush1.msra.mxu0 0.0
        %6484 = vmatprep.subr.mxu0 0.0
        %6485 = vmatpush1.msra.mxu0 0.0
        %6486 = vmatprep.subr.mxu0 0.0
        %6487 = vmatpush1.msra.mxu0 0.0
        %6488 = vmatprep.subr.mxu0 0.0
        %6489 = vmatpush1.msra.mxu0 0.0
        %6490 = vmatprep.subr.mxu0 0.0
        %6491 = vmatpush1.msra.mxu0 0.0
        %6492 = vmatprep.subr.mxu0 0.0
        %6493 = vmatpush1.msra.mxu0 0.0
        %6494 = vmatprep.subr.mxu0 0.0
        %6495 = vmatpush1.msra.mxu0 0.0
        %6496 = vmatprep.subr.mxu0 0.0
        %6497 = vmatpush1.msra.mxu0 0.0
        %6498 = vmatprep.subr.mxu0 %v6256
        %6499 = vmatpush1.msra.mxu0 %v6254
        %6500 = vmatprep.subr.mxu0 %v6250
        %6501 = vmatpush1.msra.mxu0 %v6248
        %6502 = vmatprep.subr.mxu0 0.0
        %6503 = vmatpush2.msra.mxu0 0.0
        %6504 = vmatprep.subr.mxu0 0.0
        %6505 = vmatpush2.msra.mxu0 0.0
        %6506 = vmatprep.subr.mxu0 0.0
        %6507 = vmatpush2.msra.mxu0 0.0
        %6508 = vmatprep.subr.mxu0 0.0
        %6509 = vmatpush2.msra.mxu0 0.0
        %6510 = vmatprep.subr.mxu0 0.0
        %6511 = vmatpush2.msra.mxu0 0.0
        %6512 = vmatprep.subr.mxu0 0.0
        %6513 = vmatpush2.msra.mxu0 0.0
        %6514 = vmatprep.subr.mxu0 0.0
        %6515 = vmatpush2.msra.mxu0 0.0
        %6516 = vmatprep.subr.mxu0 0.0
        %6517 = vmatpush2.msra.mxu0 0.0
        %6518 = vmatprep.subr.mxu0 0.0
        %6519 = vmatpush2.msra.mxu0 0.0
        %6520 = vmatprep.subr.mxu0 0.0
        %6521 = vmatpush2.msra.mxu0 0.0
        %6522 = vmatprep.subr.mxu0 0.0
        %6523 = vmatpush2.msra.mxu0 0.0
        %6524 = vmatprep.subr.mxu0 0.0
        %6525 = vmatpush2.msra.mxu0 0.0
        %6526 = vmatprep.subr.mxu0 0.0
        %6527 = vmatpush2.msra.mxu0 0.0
        %6528 = vmatprep.subr.mxu0 0.0
        %6529 = vmatpush2.msra.mxu0 0.0
        %6530 = vmatprep.subr.mxu0 0.0
        %6531 = vmatpush2.msra.mxu0 0.0
        %6532 = vmatprep.subr.mxu0 0.0
        %6533 = vmatpush2.msra.mxu0 0.0
        %6534 = vmatprep.mubr.f32.mxu0 0.0
        %6535 = vmatmul.mubr.f32.gmra.mxu0 %v598
        %v6536 = vpop.f32.mrf.mxu0
        %v6537 = vadd.f32 0.0, %v6536
        %v6538 = vpop.f32.mrf.mxu0
        %v6539 = vadd.f32 0.0, %v6538
        %6540 = vmatprep.mubr.f32.mxu0 0.0
        %6541 = vmatmul.mubr.f32.gmra.mxu0 %v601
        %v6542 = vpop.f32.mrf.mxu0
        %v6543 = vadd.f32 0.0, %v6542
        %v6544 = vpop.f32.mrf.mxu0
        %v6545 = vadd.f32 0.0, %v6544
        %6546 = vmatprep.mubr.f32.mxu0 0.0
        %6547 = vmatmul.mubr.f32.gmra.mxu0 %v604
        %v6548 = vpop.f32.mrf.mxu0
        %v6549 = vadd.f32 0.0, %v6548
        %v6550 = vpop.f32.mrf.mxu0
        %v6551 = vadd.f32 0.0, %v6550
        %6552 = vmatprep.mubr.f32.mxu0 0.0
        %6553 = vmatmul.mubr.f32.gmra.mxu0 %v607
        %v6554 = vpop.f32.mrf.mxu0
        %v6555 = vadd.f32 0.0, %v6554
        %v6556 = vpop.f32.mrf.mxu0
        %v6557 = vadd.f32 0.0, %v6556
        %6558 = vmatprep.mubr.f32.mxu0 0.0
        %6559 = vmatmul.mubr.f32.gmra.mxu0 %v610
        %v6560 = vpop.f32.mrf.mxu0
        %v6561 = vadd.f32 0.0, %v6560
        %v6562 = vpop.f32.mrf.mxu0
        %v6563 = vadd.f32 0.0, %v6562
        %6564 = vmatprep.mubr.f32.mxu0 0.0
        %6565 = vmatmul.mubr.f32.gmra.mxu0 %v613
        %v6566 = vpop.f32.mrf.mxu0
        %v6567 = vadd.f32 0.0, %v6566
        %v6568 = vpop.f32.mrf.mxu0
        %v6569 = vadd.f32 0.0, %v6568
        %6570 = vmatprep.mubr.f32.mxu0 0.0
        %6571 = vmatmul.mubr.f32.gmra.mxu0 %v616
        %v6572 = vpop.f32.mrf.mxu0
        %v6573 = vadd.f32 0.0, %v6572
        %v6574 = vpop.f32.mrf.mxu0
        %v6575 = vadd.f32 0.0, %v6574
        %6576 = vmatprep.mubr.f32.mxu0 0.0
        %6577 = vmatmul.mubr.f32.gmra.mxu0 %v619
        %v6578 = vpop.f32.mrf.mxu0
        %v6579 = vadd.f32 0.0, %v6578
        %v6580 = vpop.f32.mrf.mxu0
        %v6581 = vadd.f32 0.0, %v6580
        %6582 = vmatprep.mubr.f32.mxu0 0.0
        %6583 = vmatmul.mubr.f32.gmra.mxu0 %v622
        %v6584 = vpop.f32.mrf.mxu0
        %v6585 = vadd.f32 0.0, %v6584
        %v6586 = vpop.f32.mrf.mxu0
        %v6587 = vadd.f32 0.0, %v6586
        %6588 = vmatprep.mubr.f32.mxu0 0.0
        %6589 = vmatmul.mubr.f32.gmra.mxu0 %v625
        %v6590 = vpop.f32.mrf.mxu0
        %v6591 = vadd.f32 0.0, %v6590
        %v6592 = vpop.f32.mrf.mxu0
        %v6593 = vadd.f32 0.0, %v6592
        %6594 = vmatprep.mubr.f32.mxu0 0.0
        %6595 = vmatmul.mubr.f32.gmra.mxu0 %v628
        %v6596 = vpop.f32.mrf.mxu0
        %v6597 = vadd.f32 0.0, %v6596
        %v6598 = vpop.f32.mrf.mxu0
        %v6599 = vadd.f32 0.0, %v6598
        %6600 = vmatprep.mubr.f32.mxu0 0.0
        %6601 = vmatmul.mubr.f32.gmra.mxu0 %v631
        %v6602 = vpop.f32.mrf.mxu0
        %v6603 = vadd.f32 0.0, %v6602
        %v6604 = vpop.f32.mrf.mxu0
        %v6605 = vadd.f32 0.0, %v6604
        %6606 = vdwg.mxu0
        %6607 = vmatprep.subr.mxu0 0.0
        %6608 = vmatpush1.msra.mxu0 0.0
        %6609 = vmatprep.subr.mxu0 0.0
        %6610 = vmatpush1.msra.mxu0 0.0
        %6611 = vmatprep.subr.mxu0 0.0
        %6612 = vmatpush1.msra.mxu0 0.0
        %6613 = vmatprep.subr.mxu0 0.0
        %6614 = vmatpush1.msra.mxu0 0.0
        %6615 = vmatprep.subr.mxu0 0.0
        %6616 = vmatpush1.msra.mxu0 0.0
        %6617 = vmatprep.subr.mxu0 0.0
        %6618 = vmatpush1.msra.mxu0 0.0
        %6619 = vmatprep.subr.mxu0 0.0
        %6620 = vmatpush1.msra.mxu0 0.0
        %6621 = vmatprep.subr.mxu0 0.0
        %6622 = vmatpush1.msra.mxu0 0.0
        %6623 = vmatprep.subr.mxu0 0.0
        %6624 = vmatpush1.msra.mxu0 0.0
        %6625 = vmatprep.subr.mxu0 0.0
        %6626 = vmatpush1.msra.mxu0 0.0
        %6627 = vmatprep.subr.mxu0 0.0
        %6628 = vmatpush1.msra.mxu0 0.0
        %6629 = vmatprep.subr.mxu0 0.0
        %6630 = vmatpush1.msra.mxu0 0.0
        %6631 = vmatprep.subr.mxu0 0.0
        %6632 = vmatpush1.msra.mxu0 0.0
        %6633 = vmatprep.subr.mxu0 0.0
        %6634 = vmatpush1.msra.mxu0 0.0
        %6635 = vmatprep.subr.mxu0 0.0
        %6636 = vmatpush1.msra.mxu0 %v6330
        %6637 = vmatprep.subr.mxu0 0.0
        %6638 = vmatpush1.msra.mxu0 %v6325
        %6639 = vmatprep.subr.mxu0 0.0
        %6640 = vmatpush2.msra.mxu0 0.0
        %6641 = vmatprep.subr.mxu0 0.0
        %6642 = vmatpush2.msra.mxu0 0.0
        %6643 = vmatprep.subr.mxu0 0.0
        %6644 = vmatpush2.msra.mxu0 0.0
        %6645 = vmatprep.subr.mxu0 0.0
        %6646 = vmatpush2.msra.mxu0 0.0
        %6647 = vmatprep.subr.mxu0 0.0
        %6648 = vmatpush2.msra.mxu0 0.0
        %6649 = vmatprep.subr.mxu0 0.0
        %6650 = vmatpush2.msra.mxu0 0.0
        %6651 = vmatprep.subr.mxu0 0.0
        %6652 = vmatpush2.msra.mxu0 0.0
        %6653 = vmatprep.subr.mxu0 0.0
        %6654 = vmatpush2.msra.mxu0 0.0
        %6655 = vmatprep.subr.mxu0 0.0
        %6656 = vmatpush2.msra.mxu0 0.0
        %6657 = vmatprep.subr.mxu0 0.0
        %6658 = vmatpush2.msra.mxu0 0.0
        %6659 = vmatprep.subr.mxu0 0.0
        %6660 = vmatpush2.msra.mxu0 0.0
        %6661 = vmatprep.subr.mxu0 0.0
        %6662 = vmatpush2.msra.mxu0 0.0
        %6663 = vmatprep.subr.mxu0 0.0
        %6664 = vmatpush2.msra.mxu0 0.0
        %6665 = vmatprep.subr.mxu0 0.0
        %6666 = vmatpush2.msra.mxu0 0.0
        %6667 = vmatprep.subr.mxu0 0.0
        %6668 = vmatpush2.msra.mxu0 0.0
        %6669 = vmatprep.subr.mxu0 0.0
        %6670 = vmatpush2.msra.mxu0 0.0
        %6671 = vmatprep.mubr.f32.mxu0 0.0
        %6672 = vmatmul.mubr.f32.gmra.mxu0 %v598
        %v6673 = vpop.f32.mrf.mxu0
        %v6674 = vadd.f32 0.0, %v6673
        %v6675 = vpop.f32.mrf.mxu0
        %6676 = vmatprep.mubr.f32.mxu0 0.0
        %6677 = vmatmul.mubr.f32.gmra.mxu0 %v601
        %v6678 = vpop.f32.mrf.mxu0
        %v6679 = vadd.f32 0.0, %v6678
        %v6680 = vpop.f32.mrf.mxu0
        %6681 = vmatprep.mubr.f32.mxu0 0.0
        %6682 = vmatmul.mubr.f32.gmra.mxu0 %v604
        %v6683 = vpop.f32.mrf.mxu0
        %v6684 = vadd.f32 0.0, %v6683
        %v6685 = vpop.f32.mrf.mxu0
        %6686 = vmatprep.mubr.f32.mxu0 0.0
        %6687 = vmatmul.mubr.f32.gmra.mxu0 %v607
        %v6688 = vpop.f32.mrf.mxu0
        %v6689 = vadd.f32 0.0, %v6688
        %v6690 = vpop.f32.mrf.mxu0
        %6691 = vmatprep.mubr.f32.mxu0 0.0
        %6692 = vmatmul.mubr.f32.gmra.mxu0 %v610
        %v6693 = vpop.f32.mrf.mxu0
        %v6694 = vadd.f32 0.0, %v6693
        %v6695 = vpop.f32.mrf.mxu0
        %6696 = vmatprep.mubr.f32.mxu0 0.0
        %6697 = vmatmul.mubr.f32.gmra.mxu0 %v613
        %v6698 = vpop.f32.mrf.mxu0
        %v6699 = vadd.f32 0.0, %v6698
        %v6700 = vpop.f32.mrf.mxu0
        %6701 = vmatprep.mubr.f32.mxu0 0.0
        %6702 = vmatmul.mubr.f32.gmra.mxu0 %v616
        %v6703 = vpop.f32.mrf.mxu0
        %v6704 = vadd.f32 0.0, %v6703
        %v6705 = vpop.f32.mrf.mxu0
        %6706 = vmatprep.mubr.f32.mxu0 0.0
        %6707 = vmatmul.mubr.f32.gmra.mxu0 %v619
        %v6708 = vpop.f32.mrf.mxu0
        %v6709 = vadd.f32 0.0, %v6708
        %v6710 = vpop.f32.mrf.mxu0
        %6711 = vmatprep.mubr.f32.mxu0 0.0
        %6712 = vmatmul.mubr.f32.gmra.mxu0 %v622
        %v6713 = vpop.f32.mrf.mxu0
        %v6714 = vadd.f32 0.0, %v6713
        %v6715 = vpop.f32.mrf.mxu0
        %6716 = vmatprep.mubr.f32.mxu0 0.0
        %6717 = vmatmul.mubr.f32.gmra.mxu0 %v625
        %v6718 = vpop.f32.mrf.mxu0
        %v6719 = vadd.f32 0.0, %v6718
        %v6720 = vpop.f32.mrf.mxu0
        %6721 = vmatprep.mubr.f32.mxu0 0.0
        %6722 = vmatmul.mubr.f32.gmra.mxu0 %v628
        %v6723 = vpop.f32.mrf.mxu0
        %v6724 = vadd.f32 0.0, %v6723
        %v6725 = vpop.f32.mrf.mxu0
        %6726 = vmatprep.mubr.f32.mxu0 0.0
        %6727 = vmatmul.mubr.f32.gmra.mxu0 %v631
        %v6728 = vpop.f32.mrf.mxu0
        %v6729 = vadd.f32 0.0, %v6728
        %v6730 = vpop.f32.mrf.mxu0
        %6731 = vdwg.mxu0
        %vm6732 = vcmp.gt.f32.partialorder %v6400, %v5952
        %vm6733 = vcmp.gt.f32.partialorder %v6402, %v5953
        %vm6734 = vcmp.gt.f32.partialorder %v6537, %v5954
        %vm6735 = vcmp.gt.f32.partialorder %v6539, %v5955
        %vm6736 = vcmp.gt.f32.partialorder %v6674, %v5956
        %vm6737 = vcmp.gt.f32.partialorder %v6406, %v5957
        %vm6738 = vcmp.gt.f32.partialorder %v6408, %v5958
        %vm6739 = vcmp.gt.f32.partialorder %v6543, %v5959
        %vm6740 = vcmp.gt.f32.partialorder %v6545, %v5960
        %vm6741 = vcmp.gt.f32.partialorder %v6679, %v5961
        %vm6742 = vcmp.gt.f32.partialorder %v6412, %v5962
        %vm6743 = vcmp.gt.f32.partialorder %v6414, %v5963
        %vm6744 = vcmp.gt.f32.partialorder %v6549, %v5964
        %vm6745 = vcmp.gt.f32.partialorder %v6551, %v5965
        %vm6746 = vcmp.gt.f32.partialorder %v6684, %v5966
        %vm6747 = vcmp.gt.f32.partialorder %v6418, %v5967
        %vm6748 = vcmp.gt.f32.partialorder %v6420, %v5968
        %vm6749 = vcmp.gt.f32.partialorder %v6555, %v5969
        %vm6750 = vcmp.gt.f32.partialorder %v6557, %v5970
        %vm6751 = vcmp.gt.f32.partialorder %v6689, %v5971
        %vm6752 = vcmp.gt.f32.partialorder %v6424, %v5972
        %vm6753 = vcmp.gt.f32.partialorder %v6426, %v5973
        %vm6754 = vcmp.gt.f32.partialorder %v6561, %v5974
        %vm6755 = vcmp.gt.f32.partialorder %v6563, %v5975
        %vm6756 = vcmp.gt.f32.partialorder %v6694, %v5976
        %vm6757 = vcmp.gt.f32.partialorder %v6430, %v5977
        %vm6758 = vcmp.gt.f32.partialorder %v6432, %v5978
        %vm6759 = vcmp.gt.f32.partialorder %v6567, %v5979
        %vm6760 = vcmp.gt.f32.partialorder %v6569, %v5980
        %vm6761 = vcmp.gt.f32.partialorder %v6699, %v5981
        %vm6762 = vcmp.gt.f32.partialorder %v6436, %v5982
        %vm6763 = vcmp.gt.f32.partialorder %v6438, %v5983
        %vm6764 = vcmp.gt.f32.partialorder %v6573, %v5984
        %vm6765 = vcmp.gt.f32.partialorder %v6575, %v5985
        %vm6766 = vcmp.gt.f32.partialorder %v6704, %v5986
        %vm6767 = vcmp.gt.f32.partialorder %v6442, %v5987
        %vm6768 = vcmp.gt.f32.partialorder %v6444, %v5988
        %vm6769 = vcmp.gt.f32.partialorder %v6579, %v5989
        %vm6770 = vcmp.gt.f32.partialorder %v6581, %v5990
        %vm6771 = vcmp.gt.f32.partialorder %v6709, %v5991
        %vm6772 = vcmp.gt.f32.partialorder %v6448, %v5992
        %vm6773 = vcmp.gt.f32.partialorder %v6450, %v5993
        %vm6774 = vcmp.gt.f32.partialorder %v6585, %v5994
        %vm6775 = vcmp.gt.f32.partialorder %v6587, %v5995
        %vm6776 = vcmp.gt.f32.partialorder %v6714, %v5996
        %vm6777 = vcmp.gt.f32.partialorder %v6454, %v5997
        %vm6778 = vcmp.gt.f32.partialorder %v6456, %v5998
        %vm6779 = vcmp.gt.f32.partialorder %v6591, %v5999
        %vm6780 = vcmp.gt.f32.partialorder %v6593, %v6000
        %vm6781 = vcmp.gt.f32.partialorder %v6719, %v6001
        %vm6782 = vcmp.gt.f32.partialorder %v6460, %v6002
        %vm6783 = vcmp.gt.f32.partialorder %v6462, %v6003
        %vm6784 = vcmp.gt.f32.partialorder %v6597, %v6004
        %vm6785 = vcmp.gt.f32.partialorder %v6599, %v6005
        %vm6786 = vcmp.gt.f32.partialorder %v6724, %v6006
        %vm6787 = vcmp.gt.f32.partialorder %v6466, %v6007
        %vm6788 = vcmp.gt.f32.partialorder %v6468, %v6008
        %vm6789 = vcmp.gt.f32.partialorder %v6603, %v6009
        %vm6790 = vcmp.gt.f32.partialorder %v6605, %v6010
        %vm6791 = vcmp.gt.f32.partialorder %v6729, %v6011
        %v6792 = vsel %vm6732, 7, %v6012
        %v6793 = vsel %vm6733, 7, %v6013
        %v6794 = vsel %vm6734, 7, %v6014
        %v6795 = vsel %vm6735, 7, %v6015
        %v6796 = vsel %vm6736, 7, %v6016
        %v6797 = vsel %vm6737, 7, %v6017
        %v6798 = vsel %vm6738, 7, %v6018
        %v6799 = vsel %vm6739, 7, %v6019
        %v6800 = vsel %vm6740, 7, %v6020
        %v6801 = vsel %vm6741, 7, %v6021
        %v6802 = vsel %vm6742, 7, %v6022
        %v6803 = vsel %vm6743, 7, %v6023
        %v6804 = vsel %vm6744, 7, %v6024
        %v6805 = vsel %vm6745, 7, %v6025
        %v6806 = vsel %vm6746, 7, %v6026
        %v6807 = vsel %vm6747, 7, %v6027
        %v6808 = vsel %vm6748, 7, %v6028
        %v6809 = vsel %vm6749, 7, %v6029
        %v6810 = vsel %vm6750, 7, %v6030
        %v6811 = vsel %vm6751, 7, %v6031
        %v6812 = vsel %vm6752, 7, %v6032
        %v6813 = vsel %vm6753, 7, %v6033
        %v6814 = vsel %vm6754, 7, %v6034
        %v6815 = vsel %vm6755, 7, %v6035
        %v6816 = vsel %vm6756, 7, %v6036
        %v6817 = vsel %vm6757, 7, %v6037
        %v6818 = vsel %vm6758, 7, %v6038
        %v6819 = vsel %vm6759, 7, %v6039
        %v6820 = vsel %vm6760, 7, %v6040
        %v6821 = vsel %vm6761, 7, %v6041
        %v6822 = vsel %vm6762, 7, %v6042
        %v6823 = vsel %vm6763, 7, %v6043
        %v6824 = vsel %vm6764, 7, %v6044
        %v6825 = vsel %vm6765, 7, %v6045
        %v6826 = vsel %vm6766, 7, %v6046
        %v6827 = vsel %vm6767, 7, %v6047
        %v6828 = vsel %vm6768, 7, %v6048
        %v6829 = vsel %vm6769, 7, %v6049
        %v6830 = vsel %vm6770, 7, %v6050
        %v6831 = vsel %vm6771, 7, %v6051
        %v6832 = vsel %vm6772, 7, %v6052
        %v6833 = vsel %vm6773, 7, %v6053
        %v6834 = vsel %vm6774, 7, %v6054
        %v6835 = vsel %vm6775, 7, %v6055
        %v6836 = vsel %vm6776, 7, %v6056
        %v6837 = vsel %vm6777, 7, %v6057
        %v6838 = vsel %vm6778, 7, %v6058
        %v6839 = vsel %vm6779, 7, %v6059
        %v6840 = vsel %vm6780, 7, %v6060
        %v6841 = vsel %vm6781, 7, %v6061
        %v6842 = vsel %vm6782, 7, %v6062
        %v6843 = vsel %vm6783, 7, %v6063
        %v6844 = vsel %vm6784, 7, %v6064
        %v6845 = vsel %vm6785, 7, %v6065
        %v6846 = vsel %vm6786, 7, %v6066
        %v6847 = vsel %vm6787, 7, %v6067
        %v6848 = vsel %vm6788, 7, %v6068
        %v6849 = vsel %vm6789, 7, %v6069
        %v6850 = vsel %vm6790, 7, %v6070
        %v6851 = vsel %vm6791, 7, %v6071
        %6852 = vst [vmem:[%s289] sm:$0xff] %v6792
        %6853 = vst [vmem:[%s289 + $0x8] sm:$0xff] %v6793
        %6854 = vst [vmem:[%s289 + $0x10] sm:$0xff] %v6794
        %6855 = vst [vmem:[%s289 + $0x18] sm:$0xff] %v6795
        %6856 = vst [vmem:[%s289 + $0x20] sm:$0xff] %v6796
        %6857 = vst [vmem:[%s289 + $0x28] sm:$0xff] %v6797
        %6858 = vst [vmem:[%s289 + $0x30] sm:$0xff] %v6798
        %6859 = vst [vmem:[%s289 + $0x38] sm:$0xff] %v6799
        %6860 = vst [vmem:[%s289 + $0x40] sm:$0xff] %v6800
        %6861 = vst [vmem:[%s289 + $0x48] sm:$0xff] %v6801
        %6862 = vst [vmem:[%s289 + $0x50] sm:$0xff] %v6802
        %6863 = vst [vmem:[%s289 + $0x58] sm:$0xff] %v6803
        %6864 = vst [vmem:[%s289 + $0x60] sm:$0xff] %v6804
        %6865 = vst [vmem:[%s289 + $0x68] sm:$0xff] %v6805
        %6866 = vst [vmem:[%s289 + $0x70] sm:$0xff] %v6806
        %6867 = vst [vmem:[%s289 + $0x78] sm:$0xff] %v6807
        %6868 = vst [vmem:[%s289 + $0x80] sm:$0xff] %v6808
        %6869 = vst [vmem:[%s289 + $0x88] sm:$0xff] %v6809
        %6870 = vst [vmem:[%s289 + $0x90] sm:$0xff] %v6810
        %6871 = vst [vmem:[%s289 + $0x98] sm:$0xff] %v6811
        %6872 = vst [vmem:[%s289 + $0xa0] sm:$0xff] %v6812
        %6873 = vst [vmem:[%s289 + $0xa8] sm:$0xff] %v6813
        %6874 = vst [vmem:[%s289 + $0xb0] sm:$0xff] %v6814
        %6875 = vst [vmem:[%s289 + $0xb8] sm:$0xff] %v6815
        %6876 = vst [vmem:[%s289 + $0xc0] sm:$0xff] %v6816
        %6877 = vst [vmem:[%s289 + $0xc8] sm:$0xff] %v6817
        %6878 = vst [vmem:[%s289 + $0xd0] sm:$0xff] %v6818
        %6879 = vst [vmem:[%s289 + $0xd8] sm:$0xff] %v6819
        %6880 = vst [vmem:[%s289 + $0xe0] sm:$0xff] %v6820
        %6881 = vst [vmem:[%s289 + $0xe8] sm:$0xff] %v6821
        %6882 = vst [vmem:[%s289 + $0xf0] sm:$0xff] %v6822
        %6883 = vst [vmem:[%s289 + $0xf8] sm:$0xff] %v6823
        %6884 = vst [vmem:[%s289 + $0x100] sm:$0xff] %v6824
        %6885 = vst [vmem:[%s289 + $0x108] sm:$0xff] %v6825
        %6886 = vst [vmem:[%s289 + $0x110] sm:$0xff] %v6826
        %6887 = vst [vmem:[%s289 + $0x118] sm:$0xff] %v6827
        %6888 = vst [vmem:[%s289 + $0x120] sm:$0xff] %v6828
        %6889 = vst [vmem:[%s289 + $0x128] sm:$0xff] %v6829
        %6890 = vst [vmem:[%s289 + $0x130] sm:$0xff] %v6830
        %6891 = vst [vmem:[%s289 + $0x138] sm:$0xff] %v6831
        %6892 = vst [vmem:[%s289 + $0x140] sm:$0xff] %v6832
        %6893 = vst [vmem:[%s289 + $0x148] sm:$0xff] %v6833
        %6894 = vst [vmem:[%s289 + $0x150] sm:$0xff] %v6834
        %6895 = vst [vmem:[%s289 + $0x158] sm:$0xff] %v6835
        %6896 = vst [vmem:[%s289 + $0x160] sm:$0xff] %v6836
        %6897 = vst [vmem:[%s289 + $0x168] sm:$0xff] %v6837
        %6898 = vst [vmem:[%s289 + $0x170] sm:$0xff] %v6838
        %6899 = vst [vmem:[%s289 + $0x178] sm:$0xff] %v6839
        %6900 = vst [vmem:[%s289 + $0x180] sm:$0xff] %v6840
        %6901 = vst [vmem:[%s289 + $0x188] sm:$0xff] %v6841
        %6902 = vst [vmem:[%s289 + $0x190] sm:$0xff] %v6842
        %6903 = vst [vmem:[%s289 + $0x198] sm:$0xff] %v6843
        %6904 = vst [vmem:[%s289 + $0x1a0] sm:$0xff] %v6844
        %6905 = vst [vmem:[%s289 + $0x1a8] sm:$0xff] %v6845
        %6906 = vst [vmem:[%s289 + $0x1b0] sm:$0xff] %v6846
        %6907 = vst [vmem:[%s289 + $0x1b8] sm:$0xff] %v6847
        %6908 = vst [vmem:[%s289 + $0x1c0] sm:$0xff] %v6848
        %6909 = vst [vmem:[%s289 + $0x1c8] sm:$0xff] %v6849
        %6910 = vst [vmem:[%s289 + $0x1d0] sm:$0xff] %v6850
        %6911 = vst [vmem:[%s289 + $0x1d8] sm:$0xff] %v6851
        %s6912 = sand.u32 %s159, 1
        %s6913 = scalar_lea.sflag [#allocation4], %s6912
        %s6914 = sand.u32 %s159, 1
        %s6915 = smul.addr %s6914, 480
        %s6916 = scalar_lea.vmem [#allocation9], %s6915
        // Predicated region
        $region53: #{onnx_net_forward.1} parent=39 // pred_check
          %p6917 = pneg %p169
        $region54: #{onnx_net_forward.1} parent=39 // pred_check_branch
          %6919 = sbr.rel (%p6917) target = $region56
        $region55: #{onnx_net_forward.1} parent=39 // pred_region
          %s6920 = smul.u32 12, %s27
          %s6922 = ssub.s32 7680, 7680
          %6923 = vsyncadd %s6913, %s6922
          %s6924 = smul.addr %s6920, 5
          %s6925 = smul.addr %s26, 300
          %s6926 = sadd.s32 %s6924, %s6925
          %s6927 = smul.addr %s6926, 128
          %s6928 = scalar_lea.hbm %s5, %s6927
          %s6929 = sshll.u32 %s6916, 4
          %s6930 = int_to_ptr.vmem [resolvable:$true] %s6929
          %6935 = dma.vmem_to_hbm [thread:$0]  %s6930, 7680, %s6928, %s6913, 640, 640, 40
        $region56: #{onnx_net_forward.1} parent=39 // pred_fallthru
          _
      $region40: #{onnx_net_forward.1} parent=5 // pred_fallthru
        _
      %p6936 = scmp.le.s32.totalorder 2, %s17
      // Predicated region
      $region57: #{onnx_net_forward.1} parent=5 // pred_check
        %p6937 = pneg %p6936
      $region58: #{onnx_net_forward.1} parent=5 // pred_check_branch
        %6939 = sbr.rel (%p6937) target = $region60
      $region59: #{onnx_net_forward.1} parent=5 // pred_region
        %s6940 = ssub.s32 %s17, 2
        // Predicated region
        $region61: #{onnx_net_forward.1} parent=59 // pred_check
          %p6941 = pneg %p175
        $region62: #{onnx_net_forward.1} parent=59 // pred_check_branch
          %6943 = sbr.rel (%p6941) target = $region64
        $region63: #{onnx_net_forward.1} parent=59 // pred_region
          %s6944 = sand.u32 %s160, 1
          %s6945 = scalar_lea.sflag [#allocation4], %s6944
          %s6946 = sand.u32 %s160, 1
          %s6947 = smul.addr %s6946, 480
          %s6948 = scalar_lea.vmem [#allocation9], %s6947
          %6949 = dma.done %s6945, 7680
        $region64: #{onnx_net_forward.1} parent=59 // pred_fallthru
          _
      $region60: #{onnx_net_forward.1} parent=5 // pred_fallthru
        _
    $region6: #{onnx_net_forward.1} parent=1 // loop_footer
      %s21 = sadd.s32 1, %s17
    $region7: #{onnx_net_forward.1} parent=1 // loop_footer_branch
      %16 = sbr.rel target = $region3
    $region8: #{onnx_net_forward.1} parent=1 // loop_exit
      _
    %6950 = vsyncpa [#allocation3], 1
    %s6951 = scalar_lea.sflag [#allocation3], 1
    %6952 = vsyncpa %s6951, 1
    %6953 = vsyncpa [#allocation4], 1
    %s6954 = scalar_lea.sflag [#allocation4], 1
    %6955 = vsyncpa %s6954, 1
    %6956 = vsyncpa [#allocation5], 1
    %s6957 = scalar_lea.sflag [#allocation5], 1
    %6958 = vsyncpa %s6957, 1
    %6959 = vsyncpa [#allocation7], 1

</llo_original>
